<compile_context>
chip_gen: v7x
topology: tpu7x:2x2x1
jax: 0.10.0
libtpu: 0.0.40
codegen_flags: <defaults>
</compile_context>

<pallas_src>
import functools
import math

import jax
import jax.numpy as jnp
from jax.experimental import pallas as pl
from jax.experimental.pallas import tpu as pltpu

# ---------------- configuration (scaled-down, shapes implied by the module) -------------
CFG = dict(
    C=3,            # image channels
    IMG=16,         # image height/width
    PATCH=8,        # patch size  -> 2x2 = 4 patches, seq = 5 with CLS token
    D=32,           # vit hidden dim ("vit_features")
    VIT_HEADS=4,    # heads inside the ViT encoder
    LAYERS=2,       # encoder depth
    MLP=128,        # encoder MLP dim (4 * D)
    MED_IN=4,       # num_medical_features
    MED_OUT=128,    # medical_processor output dim (fixed by the module)
    NUM_CLASSES=2,
)
COMBINED = CFG["D"] + CFG["MED_OUT"]   # 160
PAD_OUT = 128                          # lane-dense padded logits width (sliced on host)
LN_EPS = 1e-6                          # torchvision vit_b_16 LayerNorm eps


# ------------------------------- in-kernel helpers --------------------------------------
def _gelu(x):
    # exact erf GELU (PyTorch nn.GELU default)
    return 0.5 * x * (1.0 + jax.lax.erf(x * (2.0 ** -0.5)))


def _layernorm(x, g, b, eps=LN_EPS):
    mu = jnp.mean(x, axis=-1, keepdims=True)
    var = jnp.mean(jnp.square(x - mu), axis=-1, keepdims=True)
    return (x - mu) * jax.lax.rsqrt(var + eps) * g + b


def _softmax_rows(s):
    s = s - jnp.max(s, axis=-1, keepdims=True)
    e = jnp.exp(s)
    return e * pl.reciprocal(jnp.sum(e, axis=-1, keepdims=True), approx=True)


# ------------------------------- fused forward kernel -----------------------------------
def _fused_forward_kernel(*refs, treedef, n_params, B, S, D, H, Dh, scale):
    patches_ref, tok_add_ref, med_ref = refs[0], refs[1], refs[2]
    param_refs = refs[3:3 + n_params]
    out_ref = refs[3 + n_params]

    p = jax.tree_util.tree_unflatten(treedef, [r[...] for r in param_refs])
    tok_add = tok_add_ref[...]                    # (S, D): cls / pos / conv-bias additive term
    wp = p["patch_proj"]["w"]                     # (C*P*P, D); bias folded into tok_add

    # ---- patch embedding + token assembly (B is tiny -> fully unrolled) ----
    xs = []
    for b in range(B):
        pb = patches_ref[b]                       # (S, C*P*P); CLS row is zeros
        xs.append(jnp.dot(pb, wp, preferred_element_type=jnp.float32) + tok_add)

    # ---- ViT encoder: pre-LN blocks, dropout = identity (eval) ----
    for layer in p["layers"]:
        wqkv, bqkv = layer["wqkv"], layer["bqkv"]
        wo, bo = layer["wo"], layer["bo"]
        w1, b1 = layer["mlp1"]["w"], layer["mlp1"]["b"]
        w2, b2 = layer["mlp2"]["w"], layer["mlp2"]["b"]
        new_xs = []
        for b in range(B):
            x = xs[b]                             # (S, D)
            y = _layernorm(x, layer["ln1_g"], layer["ln1_b"])
            # fused QKV projection: one MXU pass, 3D-wide (lane-dense) output
            qkv = jnp.dot(y, wqkv, preferred_element_type=jnp.float32) + bqkv   # (S, 3D)
            attn = jnp.zeros((S, D), jnp.float32)
            for h in range(H):                    # heads via static lane slices; merge folded into Wo
                c = h * Dh
                q = qkv[:, c:c + Dh]
                k = qkv[:, D + c:D + c + Dh]
                v = qkv[:, 2 * D + c:2 * D + c + Dh]
                s = jax.lax.dot_general(q, k, (((1,), (1,)), ((), ())),
                                        preferred_element_type=jnp.float32) * scale
                o_h = jnp.dot(_softmax_rows(s), v, preferred_element_type=jnp.float32)
                attn = attn + jnp.dot(o_h, wo[c:c + Dh, :],
                                      preferred_element_type=jnp.float32)
            x = x + attn + bo                     # attention residual
            z = _layernorm(x, layer["ln2_g"], layer["ln2_b"])
            z = _gelu(jnp.dot(z, w1, preferred_element_type=jnp.float32) + b1)
            z = jnp.dot(z, w2, preferred_element_type=jnp.float32) + b2
            new_xs.append(x + z)                  # MLP residual
        xs = new_xs

    # ---- heads: CLS readout, medical MLP, fusion attention (algebraic), classifier ----
    fwv, fbv = p["fuse_wv"], p["fuse_bv"]
    fwo, fbo = p["fuse_wo"], p["fuse_bo"]
    for b in range(B):
        x = _layernorm(xs[b], p["ln_g"], p["ln_b"])
        vis = x[0:1, :]                           # (1, D) CLS token ("heads.head = Identity")

        m = med_ref[b]                            # (1, MED_IN)
        m = jnp.maximum(jnp.dot(m, p["med1"]["w"], preferred_element_type=jnp.float32)
                        + p["med1"]["b"], 0.0)
        m = jnp.maximum(jnp.dot(m, p["med2"]["w"], preferred_element_type=jnp.float32)
                        + p["med2"]["b"], 0.0)    # (1, 128)

        # fusion self-attention over a length-1 sequence: softmax over one key is identically 1,
        # so attention == out_proj(v_proj([vis | med])).  The concat is avoided by splitting the
        # V projection into its visual / medical row blocks (exact).
        av = (jnp.dot(vis, fwv[:D, :], preferred_element_type=jnp.float32)
              + jnp.dot(m, fwv[D:, :], preferred_element_type=jnp.float32) + fbv)
        att = jnp.dot(av, fwo, preferred_element_type=jnp.float32) + fbo      # (1, COMBINED)

        h1 = jnp.maximum(jnp.dot(att, p["f1"]["w"], preferred_element_type=jnp.float32)
                         + p["f1"]["b"], 0.0)     # (1, 512)
        h2 = jnp.maximum(jnp.dot(h1, p["f2"]["w"], preferred_element_type=jnp.float32)
                         + p["f2"]["b"], 0.0)     # (1, 256)
        logits = jnp.dot(h2, p["f3"]["w"], preferred_element_type=jnp.float32) \
            + p["f3"]["b"]                        # (1, PAD_OUT) lane-dense padded store
        out_ref[b] = logits


# ------------------------------- wrapper (XLA layout plumbing) ---------------------------
def extract_patches(images, patch):
    """Conv2d(k=stride=patch) patch embedding == matmul over flattened (c, kh, kw) patches."""
    B, C, H, W = images.shape
    nh, nw = H // patch, W // patch
    x = images.reshape(B, C, nh, patch, nw, patch)
    x = x.transpose(0, 2, 4, 1, 3, 5)             # (B, nh, nw, C, p, p)
    return x.reshape(B, nh * nw, C * patch * patch)


def forward(params, images, medical_features):
    D, P, H = CFG["D"], CFG["PATCH"], CFG["VIT_HEADS"]
    B = images.shape[0]

    patches = extract_patches(images.astype(jnp.float32), P)          # (B, Np, C*P*P)
    Np, CPP = patches.shape[1], patches.shape[2]
    S = Np + 1

    # XLA-side layout plumbing: zero "patch" row for the CLS slot + additive token term
    # (cls token on slot 0, conv bias on patch slots, plus positional embedding).
    patches_tok = jnp.concatenate(
        [jnp.zeros((B, 1, CPP), jnp.float32), patches], axis=1)       # (B, S, C*P*P)
    tok_add = jnp.concatenate(
        [params["cls"], jnp.broadcast_to(params["patch_proj"]["b"], (Np, D))],
        axis=0) + params["pos"]                                        # (S, D)
    med3 = medical_features.astype(jnp.float32).reshape(B, 1, CFG["MED_IN"])

    leaves, treedef = jax.tree_util.tree_flatten(params)
    kernel = functools.partial(
        _fused_forward_kernel, treedef=treedef, n_params=len(leaves),
        B=B, S=S, D=D, H=H, Dh=D // H, scale=1.0 / math.sqrt(D // H))

    n_inputs = 3 + len(leaves)
    out = pl.pallas_call(
        kernel,
        out_shape=jax.ShapeDtypeStruct((B, 1, PAD_OUT), jnp.float32),
        in_specs=[pl.BlockSpec(memory_space=pltpu.MemorySpace.VMEM)] * n_inputs,
        out_specs=pl.BlockSpec(memory_space=pltpu.MemorySpace.VMEM),
    )(patches_tok, tok_add, med3, *leaves)
    return out.reshape(B, PAD_OUT)[:, :CFG["NUM_CLASSES"]]             # slice padded logits


# ------------------------------- deterministic init ------------------------------------
def init_params(key):
    D, P, C = CFG["D"], CFG["PATCH"], CFG["C"]
    n_patches = (CFG["IMG"] // P) ** 2
    seq = n_patches + 1
    keys = iter(jax.random.split(key, 64))

    def dense(kin, kout, pad_to=None):
        k1, k2 = jax.random.split(next(keys))
        w = 0.02 * jax.random.normal(k1, (kin, kout), jnp.float32)
        b = 0.02 * jax.random.normal(k2, (kout,), jnp.float32).reshape(1, kout)
        if pad_to is not None and pad_to > kout:
            w = jnp.pad(w, ((0, 0), (0, pad_to - kout)))
            b = jnp.pad(b, ((0, 0), (0, pad_to - kout)))
        return {"w": w, "b": b}

    layers = []
    for _ in range(CFG["LAYERS"]):
        qkv = dense(D, 3 * D)      # fused Q/K/V projection
        proj = dense(D, D)
        layers.append({
            "ln1_g": jnp.ones((1, D), jnp.float32), "ln1_b": jnp.zeros((1, D), jnp.float32),
            "wqkv": qkv["w"], "bqkv": qkv["b"],
            "wo": proj["w"], "bo": proj["b"],
            "ln2_g": jnp.ones((1, D), jnp.float32), "ln2_b": jnp.zeros((1, D), jnp.float32),
            "mlp1": dense(D, CFG["MLP"]), "mlp2": dense(CFG["MLP"], D),
        })

    fuse_v = dense(COMBINED, COMBINED)
    fuse_o = dense(COMBINED, COMBINED)
    return {
        "patch_proj": dense(C * P * P, D),
        "cls": 0.02 * jax.random.normal(next(keys), (1, D), jnp.float32),
        "pos": 0.02 * jax.random.normal(next(keys), (seq, D), jnp.float32),
        "layers": layers,
        "ln_g": jnp.ones((1, D), jnp.float32), "ln_b": jnp.zeros((1, D), jnp.float32),
        "med1": dense(CFG["MED_IN"], 64), "med2": dense(64, CFG["MED_OUT"]),
        # Fusion nn.MultiheadAttention over a length-1 sequence: only the V and output
        # projections influence the result (softmax over a single key == 1), so the
        # q/k projection parameters are omitted with zero numeric change.
        "fuse_wv": fuse_v["w"], "fuse_bv": fuse_v["b"],
        "fuse_wo": fuse_o["w"], "fuse_bo": fuse_o["b"],
        "f1": dense(COMBINED, 512), "f2": dense(512, 256),
        "f3": dense(256, CFG["NUM_CLASSES"], pad_to=PAD_OUT),   # lane-dense padded logits
    }


# ------------------------------------- main ---------------------------------------------
if __name__ == "__main__":
    root = jax.random.PRNGKey(0)
    pkey, ikey, mkey = jax.random.split(root, 3)
    params = init_params(pkey)
    images = jax.random.normal(ikey, (2, CFG["C"], CFG["IMG"], CFG["IMG"]), jnp.float32)
    medical = jax.random.normal(mkey, (2, CFG["MED_IN"]), jnp.float32)

    out = jax.jit(forward)(params, images, medical)
    out = jax.block_until_ready(out)
    assert out.shape == (2, CFG["NUM_CLASSES"]) and out.dtype == jnp.float32
    print("KERNEL_OK")
</pallas_src>

<mosaic_0001>
module attributes {stable_mosaic.version = 11 : i64} {
  func.func @_fused_forward_kernel(%arg0: memref<2x5x192xf32, #tpu.memory_space<vmem>>, %arg1: memref<5x32xf32, #tpu.memory_space<vmem>>, %arg2: memref<2x1x4xf32, #tpu.memory_space<vmem>>, %arg3: memref<1x32xf32, #tpu.memory_space<vmem>>, %arg4: memref<1x512xf32, #tpu.memory_space<vmem>>, %arg5: memref<160x512xf32, #tpu.memory_space<vmem>>, %arg6: memref<1x256xf32, #tpu.memory_space<vmem>>, %arg7: memref<512x256xf32, #tpu.memory_space<vmem>>, %arg8: memref<1x128xf32, #tpu.memory_space<vmem>>, %arg9: memref<256x128xf32, #tpu.memory_space<vmem>>, %arg10: memref<1x160xf32, #tpu.memory_space<vmem>>, %arg11: memref<1x160xf32, #tpu.memory_space<vmem>>, %arg12: memref<160x160xf32, #tpu.memory_space<vmem>>, %arg13: memref<160x160xf32, #tpu.memory_space<vmem>>, %arg14: memref<1x32xf32, #tpu.memory_space<vmem>>, %arg15: memref<1x96xf32, #tpu.memory_space<vmem>>, %arg16: memref<1x32xf32, #tpu.memory_space<vmem>>, %arg17: memref<1x32xf32, #tpu.memory_space<vmem>>, %arg18: memref<1x32xf32, #tpu.memory_space<vmem>>, %arg19: memref<1x32xf32, #tpu.memory_space<vmem>>, %arg20: memref<1x128xf32, #tpu.memory_space<vmem>>, %arg21: memref<32x128xf32, #tpu.memory_space<vmem>>, %arg22: memref<1x32xf32, #tpu.memory_space<vmem>>, %arg23: memref<128x32xf32, #tpu.memory_space<vmem>>, %arg24: memref<32x32xf32, #tpu.memory_space<vmem>>, %arg25: memref<32x96xf32, #tpu.memory_space<vmem>>, %arg26: memref<1x32xf32, #tpu.memory_space<vmem>>, %arg27: memref<1x96xf32, #tpu.memory_space<vmem>>, %arg28: memref<1x32xf32, #tpu.memory_space<vmem>>, %arg29: memref<1x32xf32, #tpu.memory_space<vmem>>, %arg30: memref<1x32xf32, #tpu.memory_space<vmem>>, %arg31: memref<1x32xf32, #tpu.memory_space<vmem>>, %arg32: memref<1x128xf32, #tpu.memory_space<vmem>>, %arg33: memref<32x128xf32, #tpu.memory_space<vmem>>, %arg34: memref<1x32xf32, #tpu.memory_space<vmem>>, %arg35: memref<128x32xf32, #tpu.memory_space<vmem>>, %arg36: memref<32x32xf32, #tpu.memory_space<vmem>>, %arg37: memref<32x96xf32, #tpu.memory_space<vmem>>, %arg38: memref<1x32xf32, #tpu.memory_space<vmem>>, %arg39: memref<1x32xf32, #tpu.memory_space<vmem>>, %arg40: memref<1x64xf32, #tpu.memory_space<vmem>>, %arg41: memref<4x64xf32, #tpu.memory_space<vmem>>, %arg42: memref<1x128xf32, #tpu.memory_space<vmem>>, %arg43: memref<64x128xf32, #tpu.memory_space<vmem>>, %arg44: memref<1x32xf32, #tpu.memory_space<vmem>>, %arg45: memref<192x32xf32, #tpu.memory_space<vmem>>, %arg46: memref<5x32xf32, #tpu.memory_space<vmem>>, %arg47: memref<2x1x128xf32, #tpu.memory_space<vmem>>) attributes {dimension_semantics = [], scalar_prefetch = 0 : i64, scratch_operands = 0 : i64, tpu.core_type = #tpu.core_type<tc>} {
    %c0 = arith.constant 0 : index
    %c0_0 = arith.constant 0 : index
    %0 = vector.load %arg4[%c0, %c0_0] : memref<1x512xf32, #tpu.memory_space<vmem>>, vector<1x512xf32>
    %c0_1 = arith.constant 0 : index
    %c0_2 = arith.constant 0 : index
    %1 = vector.load %arg5[%c0_1, %c0_2] : memref<160x512xf32, #tpu.memory_space<vmem>>, vector<160x512xf32>
    %c0_3 = arith.constant 0 : index
    %c0_4 = arith.constant 0 : index
    %2 = vector.load %arg6[%c0_3, %c0_4] : memref<1x256xf32, #tpu.memory_space<vmem>>, vector<1x256xf32>
    %c0_5 = arith.constant 0 : index
    %c0_6 = arith.constant 0 : index
    %3 = vector.load %arg7[%c0_5, %c0_6] : memref<512x256xf32, #tpu.memory_space<vmem>>, vector<512x256xf32>
    %c0_7 = arith.constant 0 : index
    %c0_8 = arith.constant 0 : index
    %4 = vector.load %arg8[%c0_7, %c0_8] : memref<1x128xf32, #tpu.memory_space<vmem>>, vector<1x128xf32>
    %c0_9 = arith.constant 0 : index
    %c0_10 = arith.constant 0 : index
    %5 = vector.load %arg9[%c0_9, %c0_10] : memref<256x128xf32, #tpu.memory_space<vmem>>, vector<256x128xf32>
    %c0_11 = arith.constant 0 : index
    %c0_12 = arith.constant 0 : index
    %6 = vector.load %arg10[%c0_11, %c0_12] : memref<1x160xf32, #tpu.memory_space<vmem>>, vector<1x160xf32>
    %c0_13 = arith.constant 0 : index
    %c0_14 = arith.constant 0 : index
    %7 = vector.load %arg11[%c0_13, %c0_14] : memref<1x160xf32, #tpu.memory_space<vmem>>, vector<1x160xf32>
    %c0_15 = arith.constant 0 : index
    %c0_16 = arith.constant 0 : index
    %8 = vector.load %arg12[%c0_15, %c0_16] : memref<160x160xf32, #tpu.memory_space<vmem>>, vector<160x160xf32>
    %c0_17 = arith.constant 0 : index
    %c0_18 = arith.constant 0 : index
    %9 = vector.load %arg13[%c0_17, %c0_18] : memref<160x160xf32, #tpu.memory_space<vmem>>, vector<160x160xf32>
    %c0_19 = arith.constant 0 : index
    %c0_20 = arith.constant 0 : index
    %10 = vector.load %arg14[%c0_19, %c0_20] : memref<1x32xf32, #tpu.memory_space<vmem>>, vector<1x32xf32>
    %c0_21 = arith.constant 0 : index
    %c0_22 = arith.constant 0 : index
    %11 = vector.load %arg15[%c0_21, %c0_22] : memref<1x96xf32, #tpu.memory_space<vmem>>, vector<1x96xf32>
    %c0_23 = arith.constant 0 : index
    %c0_24 = arith.constant 0 : index
    %12 = vector.load %arg16[%c0_23, %c0_24] : memref<1x32xf32, #tpu.memory_space<vmem>>, vector<1x32xf32>
    %c0_25 = arith.constant 0 : index
    %c0_26 = arith.constant 0 : index
    %13 = vector.load %arg17[%c0_25, %c0_26] : memref<1x32xf32, #tpu.memory_space<vmem>>, vector<1x32xf32>
    %c0_27 = arith.constant 0 : index
    %c0_28 = arith.constant 0 : index
    %14 = vector.load %arg18[%c0_27, %c0_28] : memref<1x32xf32, #tpu.memory_space<vmem>>, vector<1x32xf32>
    %c0_29 = arith.constant 0 : index
    %c0_30 = arith.constant 0 : index
    %15 = vector.load %arg19[%c0_29, %c0_30] : memref<1x32xf32, #tpu.memory_space<vmem>>, vector<1x32xf32>
    %c0_31 = arith.constant 0 : index
    %c0_32 = arith.constant 0 : index
    %16 = vector.load %arg20[%c0_31, %c0_32] : memref<1x128xf32, #tpu.memory_space<vmem>>, vector<1x128xf32>
    %c0_33 = arith.constant 0 : index
    %c0_34 = arith.constant 0 : index
    %17 = vector.load %arg21[%c0_33, %c0_34] : memref<32x128xf32, #tpu.memory_space<vmem>>, vector<32x128xf32>
    %c0_35 = arith.constant 0 : index
    %c0_36 = arith.constant 0 : index
    %18 = vector.load %arg22[%c0_35, %c0_36] : memref<1x32xf32, #tpu.memory_space<vmem>>, vector<1x32xf32>
    %c0_37 = arith.constant 0 : index
    %c0_38 = arith.constant 0 : index
    %19 = vector.load %arg23[%c0_37, %c0_38] : memref<128x32xf32, #tpu.memory_space<vmem>>, vector<128x32xf32>
    %c0_39 = arith.constant 0 : index
    %c0_40 = arith.constant 0 : index
    %20 = vector.load %arg24[%c0_39, %c0_40] : memref<32x32xf32, #tpu.memory_space<vmem>>, vector<32x32xf32>
    %c0_41 = arith.constant 0 : index
    %c0_42 = arith.constant 0 : index
    %21 = vector.load %arg25[%c0_41, %c0_42] : memref<32x96xf32, #tpu.memory_space<vmem>>, vector<32x96xf32>
    %c0_43 = arith.constant 0 : index
    %c0_44 = arith.constant 0 : index
    %22 = vector.load %arg26[%c0_43, %c0_44] : memref<1x32xf32, #tpu.memory_space<vmem>>, vector<1x32xf32>
    %c0_45 = arith.constant 0 : index
    %c0_46 = arith.constant 0 : index
    %23 = vector.load %arg27[%c0_45, %c0_46] : memref<1x96xf32, #tpu.memory_space<vmem>>, vector<1x96xf32>
    %c0_47 = arith.constant 0 : index
    %c0_48 = arith.constant 0 : index
    %24 = vector.load %arg28[%c0_47, %c0_48] : memref<1x32xf32, #tpu.memory_space<vmem>>, vector<1x32xf32>
    %c0_49 = arith.constant 0 : index
    %c0_50 = arith.constant 0 : index
    %25 = vector.load %arg29[%c0_49, %c0_50] : memref<1x32xf32, #tpu.memory_space<vmem>>, vector<1x32xf32>
    %c0_51 = arith.constant 0 : index
    %c0_52 = arith.constant 0 : index
    %26 = vector.load %arg30[%c0_51, %c0_52] : memref<1x32xf32, #tpu.memory_space<vmem>>, vector<1x32xf32>
    %c0_53 = arith.constant 0 : index
    %c0_54 = arith.constant 0 : index
    %27 = vector.load %arg31[%c0_53, %c0_54] : memref<1x32xf32, #tpu.memory_space<vmem>>, vector<1x32xf32>
    %c0_55 = arith.constant 0 : index
    %c0_56 = arith.constant 0 : index
    %28 = vector.load %arg32[%c0_55, %c0_56] : memref<1x128xf32, #tpu.memory_space<vmem>>, vector<1x128xf32>
    %c0_57 = arith.constant 0 : index
    %c0_58 = arith.constant 0 : index
    %29 = vector.load %arg33[%c0_57, %c0_58] : memref<32x128xf32, #tpu.memory_space<vmem>>, vector<32x128xf32>
    %c0_59 = arith.constant 0 : index
    %c0_60 = arith.constant 0 : index
    %30 = vector.load %arg34[%c0_59, %c0_60] : memref<1x32xf32, #tpu.memory_space<vmem>>, vector<1x32xf32>
    %c0_61 = arith.constant 0 : index
    %c0_62 = arith.constant 0 : index
    %31 = vector.load %arg35[%c0_61, %c0_62] : memref<128x32xf32, #tpu.memory_space<vmem>>, vector<128x32xf32>
    %c0_63 = arith.constant 0 : index
    %c0_64 = arith.constant 0 : index
    %32 = vector.load %arg36[%c0_63, %c0_64] : memref<32x32xf32, #tpu.memory_space<vmem>>, vector<32x32xf32>
    %c0_65 = arith.constant 0 : index
    %c0_66 = arith.constant 0 : index
    %33 = vector.load %arg37[%c0_65, %c0_66] : memref<32x96xf32, #tpu.memory_space<vmem>>, vector<32x96xf32>
    %c0_67 = arith.constant 0 : index
    %c0_68 = arith.constant 0 : index
    %34 = vector.load %arg38[%c0_67, %c0_68] : memref<1x32xf32, #tpu.memory_space<vmem>>, vector<1x32xf32>
    %c0_69 = arith.constant 0 : index
    %c0_70 = arith.constant 0 : index
    %35 = vector.load %arg39[%c0_69, %c0_70] : memref<1x32xf32, #tpu.memory_space<vmem>>, vector<1x32xf32>
    %c0_71 = arith.constant 0 : index
    %c0_72 = arith.constant 0 : index
    %36 = vector.load %arg40[%c0_71, %c0_72] : memref<1x64xf32, #tpu.memory_space<vmem>>, vector<1x64xf32>
    %c0_73 = arith.constant 0 : index
    %c0_74 = arith.constant 0 : index
    %37 = vector.load %arg41[%c0_73, %c0_74] : memref<4x64xf32, #tpu.memory_space<vmem>>, vector<4x64xf32>
    %c0_75 = arith.constant 0 : index
    %c0_76 = arith.constant 0 : index
    %38 = vector.load %arg42[%c0_75, %c0_76] : memref<1x128xf32, #tpu.memory_space<vmem>>, vector<1x128xf32>
    %c0_77 = arith.constant 0 : index
    %c0_78 = arith.constant 0 : index
    %39 = vector.load %arg43[%c0_77, %c0_78] : memref<64x128xf32, #tpu.memory_space<vmem>>, vector<64x128xf32>
    %c0_79 = arith.constant 0 : index
    %c0_80 = arith.constant 0 : index
    %40 = vector.load %arg45[%c0_79, %c0_80] : memref<192x32xf32, #tpu.memory_space<vmem>>, vector<192x32xf32>
    %c0_81 = arith.constant 0 : index
    %c0_82 = arith.constant 0 : index
    %41 = vector.load %arg1[%c0_81, %c0_82] : memref<5x32xf32, #tpu.memory_space<vmem>>, vector<5x32xf32>
    %c0_83 = arith.constant 0 : index
    %c0_84 = arith.constant 0 : index
    %c0_85 = arith.constant 0 : index
    %42 = vector.load %arg0[%c0_83, %c0_84, %c0_85] : memref<2x5x192xf32, #tpu.memory_space<vmem>>, vector<1x5x192xf32>
    %43 = vector.shape_cast %42 : vector<1x5x192xf32> to vector<5x192xf32>
    %cst = arith.constant dense<0.000000e+00> : vector<5x32xf32>
    %44 = tpu.matmul %43, %40, %cst {dimension_numbers = #tpu.dot_dimension_numbers<[1], [0], [0], [1], [0, 0, 1, 1], [], []>} : vector<5x192xf32>, vector<192x32xf32>, vector<5x32xf32> -> vector<5x32xf32>
    %45 = arith.addf %44, %41 : vector<5x32xf32>
    %c1 = arith.constant 1 : index
    %c0_86 = arith.constant 0 : index
    %c0_87 = arith.constant 0 : index
    %46 = vector.load %arg0[%c1, %c0_86, %c0_87] : memref<2x5x192xf32, #tpu.memory_space<vmem>>, vector<1x5x192xf32>
    %47 = vector.shape_cast %46 : vector<1x5x192xf32> to vector<5x192xf32>
    %cst_88 = arith.constant dense<0.000000e+00> : vector<5x32xf32>
    %48 = tpu.matmul %47, %40, %cst_88 {dimension_numbers = #tpu.dot_dimension_numbers<[1], [0], [0], [1], [0, 0, 1, 1], [], []>} : vector<5x192xf32>, vector<192x32xf32>, vector<5x32xf32> -> vector<5x32xf32>
    %49 = arith.addf %48, %41 : vector<5x32xf32>
    %cst_89 = arith.constant dense<0.000000e+00> : vector<5xf32>
    %50 = vector.multi_reduction <add>, %45, %cst_89 [1] : vector<5x32xf32> to vector<5xf32>
    %51 = vector.shape_cast %50 : vector<5xf32> to vector<5x1xf32>
    %cst_90 = arith.constant 3.200000e+01 : f32
    %52 = vector.broadcast %cst_90 : f32 to vector<5x1xf32>
    %53 = arith.divf %51, %52 : vector<5x1xf32>
    %54 = vector.broadcast %53 : vector<5x1xf32> to vector<5x32xf32>
    %55 = arith.subf %45, %54 : vector<5x32xf32>
    %56 = arith.mulf %55, %55 : vector<5x32xf32>
    %cst_91 = arith.constant dense<0.000000e+00> : vector<5xf32>
    %57 = vector.multi_reduction <add>, %56, %cst_91 [1] : vector<5x32xf32> to vector<5xf32>
    %58 = vector.shape_cast %57 : vector<5xf32> to vector<5x1xf32>
    %cst_92 = arith.constant 3.200000e+01 : f32
    %59 = vector.broadcast %cst_92 : f32 to vector<5x1xf32>
    %60 = arith.divf %58, %59 : vector<5x1xf32>
    %61 = vector.broadcast %53 : vector<5x1xf32> to vector<5x32xf32>
    %62 = arith.subf %45, %61 : vector<5x32xf32>
    %cst_93 = arith.constant 9.99999997E-7 : f32
    %63 = vector.broadcast %cst_93 : f32 to vector<5x1xf32>
    %64 = arith.addf %60, %63 : vector<5x1xf32>
    %65 = math.rsqrt %64 : vector<5x1xf32>
    %66 = vector.broadcast %65 : vector<5x1xf32> to vector<5x32xf32>
    %67 = arith.mulf %62, %66 : vector<5x32xf32>
    %68 = vector.broadcast %13 : vector<1x32xf32> to vector<5x32xf32>
    %69 = arith.mulf %67, %68 : vector<5x32xf32>
    %70 = vector.broadcast %12 : vector<1x32xf32> to vector<5x32xf32>
    %71 = arith.addf %69, %70 : vector<5x32xf32>
    %cst_94 = arith.constant dense<0.000000e+00> : vector<5x96xf32>
    %72 = tpu.matmul %71, %21, %cst_94 {dimension_numbers = #tpu.dot_dimension_numbers<[1], [0], [0], [1], [0, 0, 1, 1], [], []>} : vector<5x32xf32>, vector<32x96xf32>, vector<5x96xf32> -> vector<5x96xf32>
    %73 = vector.broadcast %11 : vector<1x96xf32> to vector<5x96xf32>
    %74 = arith.addf %72, %73 : vector<5x96xf32>
    %cst_95 = arith.constant 0.000000e+00 : f32
    %75 = vector.broadcast %cst_95 : f32 to vector<5x32xf32>
    %76 = vector.extract_strided_slice %74 {offsets = [0, 0], sizes = [5, 8], strides = [1, 1]} : vector<5x96xf32> to vector<5x8xf32>
    %77 = vector.extract_strided_slice %74 {offsets = [0, 32], sizes = [5, 8], strides = [1, 1]} : vector<5x96xf32> to vector<5x8xf32>
    %78 = vector.extract_strided_slice %74 {offsets = [0, 64], sizes = [5, 8], strides = [1, 1]} : vector<5x96xf32> to vector<5x8xf32>
    %cst_96 = arith.constant dense<0.000000e+00> : vector<5x5xf32>
    %79 = tpu.matmul %76, %77, %cst_96 {dimension_numbers = #tpu.dot_dimension_numbers<[1], [1], [0], [0], [0, 0, 1, 0], [], []>} : vector<5x8xf32>, vector<5x8xf32>, vector<5x5xf32> -> vector<5x5xf32>
    %cst_97 = arith.constant 0.353553385 : f32
    %80 = vector.broadcast %cst_97 : f32 to vector<5x5xf32>
    %81 = arith.mulf %79, %80 : vector<5x5xf32>
    %cst_98 = arith.constant dense<0xFF800000> : vector<5xf32>
    %82 = vector.multi_reduction <maximumf>, %81, %cst_98 [1] : vector<5x5xf32> to vector<5xf32>
    %83 = vector.shape_cast %82 : vector<5xf32> to vector<5x1xf32>
    %84 = vector.broadcast %83 : vector<5x1xf32> to vector<5x5xf32>
    %85 = arith.subf %81, %84 : vector<5x5xf32>
    %86 = math.exp %85 : vector<5x5xf32>
    %cst_99 = arith.constant dense<0.000000e+00> : vector<5xf32>
    %87 = vector.multi_reduction <add>, %86, %cst_99 [1] : vector<5x5xf32> to vector<5xf32>
    %88 = vector.shape_cast %87 : vector<5xf32> to vector<5x1xf32>
    %89 = tpu.reciprocal %88 {approx = true} : vector<5x1xf32> -> vector<5x1xf32>
    %90 = vector.broadcast %89 : vector<5x1xf32> to vector<5x5xf32>
    %91 = arith.mulf %86, %90 : vector<5x5xf32>
    %cst_100 = arith.constant dense<0.000000e+00> : vector<5x8xf32>
    %92 = tpu.matmul %91, %78, %cst_100 {dimension_numbers = #tpu.dot_dimension_numbers<[1], [0], [0], [1], [0, 0, 1, 1], [], []>} : vector<5x5xf32>, vector<5x8xf32>, vector<5x8xf32> -> vector<5x8xf32>
    %93 = vector.extract_strided_slice %20 {offsets = [0, 0], sizes = [8, 32], strides = [1, 1]} : vector<32x32xf32> to vector<8x32xf32>
    %cst_101 = arith.constant dense<0.000000e+00> : vector<5x32xf32>
    %94 = tpu.matmul %92, %93, %cst_101 {dimension_numbers = #tpu.dot_dimension_numbers<[1], [0], [0], [1], [0, 0, 1, 1], [], []>} : vector<5x8xf32>, vector<8x32xf32>, vector<5x32xf32> -> vector<5x32xf32>
    %95 = arith.addf %75, %94 : vector<5x32xf32>
    %96 = vector.extract_strided_slice %74 {offsets = [0, 8], sizes = [5, 8], strides = [1, 1]} : vector<5x96xf32> to vector<5x8xf32>
    %97 = vector.extract_strided_slice %74 {offsets = [0, 40], sizes = [5, 8], strides = [1, 1]} : vector<5x96xf32> to vector<5x8xf32>
    %98 = vector.extract_strided_slice %74 {offsets = [0, 72], sizes = [5, 8], strides = [1, 1]} : vector<5x96xf32> to vector<5x8xf32>
    %cst_102 = arith.constant dense<0.000000e+00> : vector<5x5xf32>
    %99 = tpu.matmul %96, %97, %cst_102 {dimension_numbers = #tpu.dot_dimension_numbers<[1], [1], [0], [0], [0, 0, 1, 0], [], []>} : vector<5x8xf32>, vector<5x8xf32>, vector<5x5xf32> -> vector<5x5xf32>
    %cst_103 = arith.constant 0.353553385 : f32
    %100 = vector.broadcast %cst_103 : f32 to vector<5x5xf32>
    %101 = arith.mulf %99, %100 : vector<5x5xf32>
    %cst_104 = arith.constant dense<0xFF800000> : vector<5xf32>
    %102 = vector.multi_reduction <maximumf>, %101, %cst_104 [1] : vector<5x5xf32> to vector<5xf32>
    %103 = vector.shape_cast %102 : vector<5xf32> to vector<5x1xf32>
    %104 = vector.broadcast %103 : vector<5x1xf32> to vector<5x5xf32>
    %105 = arith.subf %101, %104 : vector<5x5xf32>
    %106 = math.exp %105 : vector<5x5xf32>
    %cst_105 = arith.constant dense<0.000000e+00> : vector<5xf32>
    %107 = vector.multi_reduction <add>, %106, %cst_105 [1] : vector<5x5xf32> to vector<5xf32>
    %108 = vector.shape_cast %107 : vector<5xf32> to vector<5x1xf32>
    %109 = tpu.reciprocal %108 {approx = true} : vector<5x1xf32> -> vector<5x1xf32>
    %110 = vector.broadcast %109 : vector<5x1xf32> to vector<5x5xf32>
    %111 = arith.mulf %106, %110 : vector<5x5xf32>
    %cst_106 = arith.constant dense<0.000000e+00> : vector<5x8xf32>
    %112 = tpu.matmul %111, %98, %cst_106 {dimension_numbers = #tpu.dot_dimension_numbers<[1], [0], [0], [1], [0, 0, 1, 1], [], []>} : vector<5x5xf32>, vector<5x8xf32>, vector<5x8xf32> -> vector<5x8xf32>
    %113 = vector.extract_strided_slice %20 {offsets = [8, 0], sizes = [8, 32], strides = [1, 1]} : vector<32x32xf32> to vector<8x32xf32>
    %cst_107 = arith.constant dense<0.000000e+00> : vector<5x32xf32>
    %114 = tpu.matmul %112, %113, %cst_107 {dimension_numbers = #tpu.dot_dimension_numbers<[1], [0], [0], [1], [0, 0, 1, 1], [], []>} : vector<5x8xf32>, vector<8x32xf32>, vector<5x32xf32> -> vector<5x32xf32>
    %115 = arith.addf %95, %114 : vector<5x32xf32>
    %116 = vector.extract_strided_slice %74 {offsets = [0, 16], sizes = [5, 8], strides = [1, 1]} : vector<5x96xf32> to vector<5x8xf32>
    %117 = vector.extract_strided_slice %74 {offsets = [0, 48], sizes = [5, 8], strides = [1, 1]} : vector<5x96xf32> to vector<5x8xf32>
    %118 = vector.extract_strided_slice %74 {offsets = [0, 80], sizes = [5, 8], strides = [1, 1]} : vector<5x96xf32> to vector<5x8xf32>
    %cst_108 = arith.constant dense<0.000000e+00> : vector<5x5xf32>
    %119 = tpu.matmul %116, %117, %cst_108 {dimension_numbers = #tpu.dot_dimension_numbers<[1], [1], [0], [0], [0, 0, 1, 0], [], []>} : vector<5x8xf32>, vector<5x8xf32>, vector<5x5xf32> -> vector<5x5xf32>
    %cst_109 = arith.constant 0.353553385 : f32
    %120 = vector.broadcast %cst_109 : f32 to vector<5x5xf32>
    %121 = arith.mulf %119, %120 : vector<5x5xf32>
    %cst_110 = arith.constant dense<0xFF800000> : vector<5xf32>
    %122 = vector.multi_reduction <maximumf>, %121, %cst_110 [1] : vector<5x5xf32> to vector<5xf32>
    %123 = vector.shape_cast %122 : vector<5xf32> to vector<5x1xf32>
    %124 = vector.broadcast %123 : vector<5x1xf32> to vector<5x5xf32>
    %125 = arith.subf %121, %124 : vector<5x5xf32>
    %126 = math.exp %125 : vector<5x5xf32>
    %cst_111 = arith.constant dense<0.000000e+00> : vector<5xf32>
    %127 = vector.multi_reduction <add>, %126, %cst_111 [1] : vector<5x5xf32> to vector<5xf32>
    %128 = vector.shape_cast %127 : vector<5xf32> to vector<5x1xf32>
    %129 = tpu.reciprocal %128 {approx = true} : vector<5x1xf32> -> vector<5x1xf32>
    %130 = vector.broadcast %129 : vector<5x1xf32> to vector<5x5xf32>
    %131 = arith.mulf %126, %130 : vector<5x5xf32>
    %cst_112 = arith.constant dense<0.000000e+00> : vector<5x8xf32>
    %132 = tpu.matmul %131, %118, %cst_112 {dimension_numbers = #tpu.dot_dimension_numbers<[1], [0], [0], [1], [0, 0, 1, 1], [], []>} : vector<5x5xf32>, vector<5x8xf32>, vector<5x8xf32> -> vector<5x8xf32>
    %133 = vector.extract_strided_slice %20 {offsets = [16, 0], sizes = [8, 32], strides = [1, 1]} : vector<32x32xf32> to vector<8x32xf32>
    %cst_113 = arith.constant dense<0.000000e+00> : vector<5x32xf32>
    %134 = tpu.matmul %132, %133, %cst_113 {dimension_numbers = #tpu.dot_dimension_numbers<[1], [0], [0], [1], [0, 0, 1, 1], [], []>} : vector<5x8xf32>, vector<8x32xf32>, vector<5x32xf32> -> vector<5x32xf32>
    %135 = arith.addf %115, %134 : vector<5x32xf32>
    %136 = vector.extract_strided_slice %74 {offsets = [0, 24], sizes = [5, 8], strides = [1, 1]} : vector<5x96xf32> to vector<5x8xf32>
    %137 = vector.extract_strided_slice %74 {offsets = [0, 56], sizes = [5, 8], strides = [1, 1]} : vector<5x96xf32> to vector<5x8xf32>
    %138 = vector.extract_strided_slice %74 {offsets = [0, 88], sizes = [5, 8], strides = [1, 1]} : vector<5x96xf32> to vector<5x8xf32>
    %cst_114 = arith.constant dense<0.000000e+00> : vector<5x5xf32>
    %139 = tpu.matmul %136, %137, %cst_114 {dimension_numbers = #tpu.dot_dimension_numbers<[1], [1], [0], [0], [0, 0, 1, 0], [], []>} : vector<5x8xf32>, vector<5x8xf32>, vector<5x5xf32> -> vector<5x5xf32>
    %cst_115 = arith.constant 0.353553385 : f32
    %140 = vector.broadcast %cst_115 : f32 to vector<5x5xf32>
    %141 = arith.mulf %139, %140 : vector<5x5xf32>
    %cst_116 = arith.constant dense<0xFF800000> : vector<5xf32>
    %142 = vector.multi_reduction <maximumf>, %141, %cst_116 [1] : vector<5x5xf32> to vector<5xf32>
    %143 = vector.shape_cast %142 : vector<5xf32> to vector<5x1xf32>
    %144 = vector.broadcast %143 : vector<5x1xf32> to vector<5x5xf32>
    %145 = arith.subf %141, %144 : vector<5x5xf32>
    %146 = math.exp %145 : vector<5x5xf32>
    %cst_117 = arith.constant dense<0.000000e+00> : vector<5xf32>
    %147 = vector.multi_reduction <add>, %146, %cst_117 [1] : vector<5x5xf32> to vector<5xf32>
    %148 = vector.shape_cast %147 : vector<5xf32> to vector<5x1xf32>
    %149 = tpu.reciprocal %148 {approx = true} : vector<5x1xf32> -> vector<5x1xf32>
    %150 = vector.broadcast %149 : vector<5x1xf32> to vector<5x5xf32>
    %151 = arith.mulf %146, %150 : vector<5x5xf32>
    %cst_118 = arith.constant dense<0.000000e+00> : vector<5x8xf32>
    %152 = tpu.matmul %151, %138, %cst_118 {dimension_numbers = #tpu.dot_dimension_numbers<[1], [0], [0], [1], [0, 0, 1, 1], [], []>} : vector<5x5xf32>, vector<5x8xf32>, vector<5x8xf32> -> vector<5x8xf32>
    %153 = vector.extract_strided_slice %20 {offsets = [24, 0], sizes = [8, 32], strides = [1, 1]} : vector<32x32xf32> to vector<8x32xf32>
    %cst_119 = arith.constant dense<0.000000e+00> : vector<5x32xf32>
    %154 = tpu.matmul %152, %153, %cst_119 {dimension_numbers = #tpu.dot_dimension_numbers<[1], [0], [0], [1], [0, 0, 1, 1], [], []>} : vector<5x8xf32>, vector<8x32xf32>, vector<5x32xf32> -> vector<5x32xf32>
    %155 = arith.addf %135, %154 : vector<5x32xf32>
    %156 = arith.addf %45, %155 : vector<5x32xf32>
    %157 = vector.broadcast %10 : vector<1x32xf32> to vector<5x32xf32>
    %158 = arith.addf %156, %157 : vector<5x32xf32>
    %cst_120 = arith.constant dense<0.000000e+00> : vector<5xf32>
    %159 = vector.multi_reduction <add>, %158, %cst_120 [1] : vector<5x32xf32> to vector<5xf32>
    %160 = vector.shape_cast %159 : vector<5xf32> to vector<5x1xf32>
    %cst_121 = arith.constant 3.200000e+01 : f32
    %161 = vector.broadcast %cst_121 : f32 to vector<5x1xf32>
    %162 = arith.divf %160, %161 : vector<5x1xf32>
    %163 = vector.broadcast %162 : vector<5x1xf32> to vector<5x32xf32>
    %164 = arith.subf %158, %163 : vector<5x32xf32>
    %165 = arith.mulf %164, %164 : vector<5x32xf32>
    %cst_122 = arith.constant dense<0.000000e+00> : vector<5xf32>
    %166 = vector.multi_reduction <add>, %165, %cst_122 [1] : vector<5x32xf32> to vector<5xf32>
    %167 = vector.shape_cast %166 : vector<5xf32> to vector<5x1xf32>
    %cst_123 = arith.constant 3.200000e+01 : f32
    %168 = vector.broadcast %cst_123 : f32 to vector<5x1xf32>
    %169 = arith.divf %167, %168 : vector<5x1xf32>
    %170 = vector.broadcast %162 : vector<5x1xf32> to vector<5x32xf32>
    %171 = arith.subf %158, %170 : vector<5x32xf32>
    %cst_124 = arith.constant 9.99999997E-7 : f32
    %172 = vector.broadcast %cst_124 : f32 to vector<5x1xf32>
    %173 = arith.addf %169, %172 : vector<5x1xf32>
    %174 = math.rsqrt %173 : vector<5x1xf32>
    %175 = vector.broadcast %174 : vector<5x1xf32> to vector<5x32xf32>
    %176 = arith.mulf %171, %175 : vector<5x32xf32>
    %177 = vector.broadcast %15 : vector<1x32xf32> to vector<5x32xf32>
    %178 = arith.mulf %176, %177 : vector<5x32xf32>
    %179 = vector.broadcast %14 : vector<1x32xf32> to vector<5x32xf32>
    %180 = arith.addf %178, %179 : vector<5x32xf32>
    %cst_125 = arith.constant dense<0.000000e+00> : vector<5x128xf32>
    %181 = tpu.matmul %180, %17, %cst_125 {dimension_numbers = #tpu.dot_dimension_numbers<[1], [0], [0], [1], [0, 0, 1, 1], [], []>} : vector<5x32xf32>, vector<32x128xf32>, vector<5x128xf32> -> vector<5x128xf32>
    %182 = vector.broadcast %16 : vector<1x128xf32> to vector<5x128xf32>
    %183 = arith.addf %181, %182 : vector<5x128xf32>
    %cst_126 = arith.constant 5.000000e-01 : f32
    %184 = vector.broadcast %cst_126 : f32 to vector<5x128xf32>
    %185 = arith.mulf %184, %183 : vector<5x128xf32>
    %cst_127 = arith.constant 0.707106769 : f32
    %186 = vector.broadcast %cst_127 : f32 to vector<5x128xf32>
    %187 = arith.mulf %183, %186 : vector<5x128xf32>
    %188 = math.erf %187 : vector<5x128xf32>
    %cst_128 = arith.constant 1.000000e+00 : f32
    %189 = vector.broadcast %cst_128 : f32 to vector<5x128xf32>
    %190 = arith.addf %189, %188 : vector<5x128xf32>
    %191 = arith.mulf %185, %190 : vector<5x128xf32>
    %cst_129 = arith.constant dense<0.000000e+00> : vector<5x32xf32>
    %192 = tpu.matmul %191, %19, %cst_129 {dimension_numbers = #tpu.dot_dimension_numbers<[1], [0], [0], [1], [0, 0, 1, 1], [], []>} : vector<5x128xf32>, vector<128x32xf32>, vector<5x32xf32> -> vector<5x32xf32>
    %193 = vector.broadcast %18 : vector<1x32xf32> to vector<5x32xf32>
    %194 = arith.addf %192, %193 : vector<5x32xf32>
    %195 = arith.addf %158, %194 : vector<5x32xf32>
    %cst_130 = arith.constant dense<0.000000e+00> : vector<5xf32>
    %196 = vector.multi_reduction <add>, %49, %cst_130 [1] : vector<5x32xf32> to vector<5xf32>
    %197 = vector.shape_cast %196 : vector<5xf32> to vector<5x1xf32>
    %cst_131 = arith.constant 3.200000e+01 : f32
    %198 = vector.broadcast %cst_131 : f32 to vector<5x1xf32>
    %199 = arith.divf %197, %198 : vector<5x1xf32>
    %200 = vector.broadcast %199 : vector<5x1xf32> to vector<5x32xf32>
    %201 = arith.subf %49, %200 : vector<5x32xf32>
    %202 = arith.mulf %201, %201 : vector<5x32xf32>
    %cst_132 = arith.constant dense<0.000000e+00> : vector<5xf32>
    %203 = vector.multi_reduction <add>, %202, %cst_132 [1] : vector<5x32xf32> to vector<5xf32>
    %204 = vector.shape_cast %203 : vector<5xf32> to vector<5x1xf32>
    %cst_133 = arith.constant 3.200000e+01 : f32
    %205 = vector.broadcast %cst_133 : f32 to vector<5x1xf32>
    %206 = arith.divf %204, %205 : vector<5x1xf32>
    %207 = vector.broadcast %199 : vector<5x1xf32> to vector<5x32xf32>
    %208 = arith.subf %49, %207 : vector<5x32xf32>
    %cst_134 = arith.constant 9.99999997E-7 : f32
    %209 = vector.broadcast %cst_134 : f32 to vector<5x1xf32>
    %210 = arith.addf %206, %209 : vector<5x1xf32>
    %211 = math.rsqrt %210 : vector<5x1xf32>
    %212 = vector.broadcast %211 : vector<5x1xf32> to vector<5x32xf32>
    %213 = arith.mulf %208, %212 : vector<5x32xf32>
    %214 = vector.broadcast %13 : vector<1x32xf32> to vector<5x32xf32>
    %215 = arith.mulf %213, %214 : vector<5x32xf32>
    %216 = vector.broadcast %12 : vector<1x32xf32> to vector<5x32xf32>
    %217 = arith.addf %215, %216 : vector<5x32xf32>
    %cst_135 = arith.constant dense<0.000000e+00> : vector<5x96xf32>
    %218 = tpu.matmul %217, %21, %cst_135 {dimension_numbers = #tpu.dot_dimension_numbers<[1], [0], [0], [1], [0, 0, 1, 1], [], []>} : vector<5x32xf32>, vector<32x96xf32>, vector<5x96xf32> -> vector<5x96xf32>
    %219 = vector.broadcast %11 : vector<1x96xf32> to vector<5x96xf32>
    %220 = arith.addf %218, %219 : vector<5x96xf32>
    %cst_136 = arith.constant 0.000000e+00 : f32
    %221 = vector.broadcast %cst_136 : f32 to vector<5x32xf32>
    %222 = vector.extract_strided_slice %220 {offsets = [0, 0], sizes = [5, 8], strides = [1, 1]} : vector<5x96xf32> to vector<5x8xf32>
    %223 = vector.extract_strided_slice %220 {offsets = [0, 32], sizes = [5, 8], strides = [1, 1]} : vector<5x96xf32> to vector<5x8xf32>
    %224 = vector.extract_strided_slice %220 {offsets = [0, 64], sizes = [5, 8], strides = [1, 1]} : vector<5x96xf32> to vector<5x8xf32>
    %cst_137 = arith.constant dense<0.000000e+00> : vector<5x5xf32>
    %225 = tpu.matmul %222, %223, %cst_137 {dimension_numbers = #tpu.dot_dimension_numbers<[1], [1], [0], [0], [0, 0, 1, 0], [], []>} : vector<5x8xf32>, vector<5x8xf32>, vector<5x5xf32> -> vector<5x5xf32>
    %cst_138 = arith.constant 0.353553385 : f32
    %226 = vector.broadcast %cst_138 : f32 to vector<5x5xf32>
    %227 = arith.mulf %225, %226 : vector<5x5xf32>
    %cst_139 = arith.constant dense<0xFF800000> : vector<5xf32>
    %228 = vector.multi_reduction <maximumf>, %227, %cst_139 [1] : vector<5x5xf32> to vector<5xf32>
    %229 = vector.shape_cast %228 : vector<5xf32> to vector<5x1xf32>
    %230 = vector.broadcast %229 : vector<5x1xf32> to vector<5x5xf32>
    %231 = arith.subf %227, %230 : vector<5x5xf32>
    %232 = math.exp %231 : vector<5x5xf32>
    %cst_140 = arith.constant dense<0.000000e+00> : vector<5xf32>
    %233 = vector.multi_reduction <add>, %232, %cst_140 [1] : vector<5x5xf32> to vector<5xf32>
    %234 = vector.shape_cast %233 : vector<5xf32> to vector<5x1xf32>
    %235 = tpu.reciprocal %234 {approx = true} : vector<5x1xf32> -> vector<5x1xf32>
    %236 = vector.broadcast %235 : vector<5x1xf32> to vector<5x5xf32>
    %237 = arith.mulf %232, %236 : vector<5x5xf32>
    %cst_141 = arith.constant dense<0.000000e+00> : vector<5x8xf32>
    %238 = tpu.matmul %237, %224, %cst_141 {dimension_numbers = #tpu.dot_dimension_numbers<[1], [0], [0], [1], [0, 0, 1, 1], [], []>} : vector<5x5xf32>, vector<5x8xf32>, vector<5x8xf32> -> vector<5x8xf32>
    %239 = vector.extract_strided_slice %20 {offsets = [0, 0], sizes = [8, 32], strides = [1, 1]} : vector<32x32xf32> to vector<8x32xf32>
    %cst_142 = arith.constant dense<0.000000e+00> : vector<5x32xf32>
    %240 = tpu.matmul %238, %239, %cst_142 {dimension_numbers = #tpu.dot_dimension_numbers<[1], [0], [0], [1], [0, 0, 1, 1], [], []>} : vector<5x8xf32>, vector<8x32xf32>, vector<5x32xf32> -> vector<5x32xf32>
    %241 = arith.addf %221, %240 : vector<5x32xf32>
    %242 = vector.extract_strided_slice %220 {offsets = [0, 8], sizes = [5, 8], strides = [1, 1]} : vector<5x96xf32> to vector<5x8xf32>
    %243 = vector.extract_strided_slice %220 {offsets = [0, 40], sizes = [5, 8], strides = [1, 1]} : vector<5x96xf32> to vector<5x8xf32>
    %244 = vector.extract_strided_slice %220 {offsets = [0, 72], sizes = [5, 8], strides = [1, 1]} : vector<5x96xf32> to vector<5x8xf32>
    %cst_143 = arith.constant dense<0.000000e+00> : vector<5x5xf32>
    %245 = tpu.matmul %242, %243, %cst_143 {dimension_numbers = #tpu.dot_dimension_numbers<[1], [1], [0], [0], [0, 0, 1, 0], [], []>} : vector<5x8xf32>, vector<5x8xf32>, vector<5x5xf32> -> vector<5x5xf32>
    %cst_144 = arith.constant 0.353553385 : f32
    %246 = vector.broadcast %cst_144 : f32 to vector<5x5xf32>
    %247 = arith.mulf %245, %246 : vector<5x5xf32>
    %cst_145 = arith.constant dense<0xFF800000> : vector<5xf32>
    %248 = vector.multi_reduction <maximumf>, %247, %cst_145 [1] : vector<5x5xf32> to vector<5xf32>
    %249 = vector.shape_cast %248 : vector<5xf32> to vector<5x1xf32>
    %250 = vector.broadcast %249 : vector<5x1xf32> to vector<5x5xf32>
    %251 = arith.subf %247, %250 : vector<5x5xf32>
    %252 = math.exp %251 : vector<5x5xf32>
    %cst_146 = arith.constant dense<0.000000e+00> : vector<5xf32>
    %253 = vector.multi_reduction <add>, %252, %cst_146 [1] : vector<5x5xf32> to vector<5xf32>
    %254 = vector.shape_cast %253 : vector<5xf32> to vector<5x1xf32>
    %255 = tpu.reciprocal %254 {approx = true} : vector<5x1xf32> -> vector<5x1xf32>
    %256 = vector.broadcast %255 : vector<5x1xf32> to vector<5x5xf32>
    %257 = arith.mulf %252, %256 : vector<5x5xf32>
    %cst_147 = arith.constant dense<0.000000e+00> : vector<5x8xf32>
    %258 = tpu.matmul %257, %244, %cst_147 {dimension_numbers = #tpu.dot_dimension_numbers<[1], [0], [0], [1], [0, 0, 1, 1], [], []>} : vector<5x5xf32>, vector<5x8xf32>, vector<5x8xf32> -> vector<5x8xf32>
    %259 = vector.extract_strided_slice %20 {offsets = [8, 0], sizes = [8, 32], strides = [1, 1]} : vector<32x32xf32> to vector<8x32xf32>
    %cst_148 = arith.constant dense<0.000000e+00> : vector<5x32xf32>
    %260 = tpu.matmul %258, %259, %cst_148 {dimension_numbers = #tpu.dot_dimension_numbers<[1], [0], [0], [1], [0, 0, 1, 1], [], []>} : vector<5x8xf32>, vector<8x32xf32>, vector<5x32xf32> -> vector<5x32xf32>
    %261 = arith.addf %241, %260 : vector<5x32xf32>
    %262 = vector.extract_strided_slice %220 {offsets = [0, 16], sizes = [5, 8], strides = [1, 1]} : vector<5x96xf32> to vector<5x8xf32>
    %263 = vector.extract_strided_slice %220 {offsets = [0, 48], sizes = [5, 8], strides = [1, 1]} : vector<5x96xf32> to vector<5x8xf32>
    %264 = vector.extract_strided_slice %220 {offsets = [0, 80], sizes = [5, 8], strides = [1, 1]} : vector<5x96xf32> to vector<5x8xf32>
    %cst_149 = arith.constant dense<0.000000e+00> : vector<5x5xf32>
    %265 = tpu.matmul %262, %263, %cst_149 {dimension_numbers = #tpu.dot_dimension_numbers<[1], [1], [0], [0], [0, 0, 1, 0], [], []>} : vector<5x8xf32>, vector<5x8xf32>, vector<5x5xf32> -> vector<5x5xf32>
    %cst_150 = arith.constant 0.353553385 : f32
    %266 = vector.broadcast %cst_150 : f32 to vector<5x5xf32>
    %267 = arith.mulf %265, %266 : vector<5x5xf32>
    %cst_151 = arith.constant dense<0xFF800000> : vector<5xf32>
    %268 = vector.multi_reduction <maximumf>, %267, %cst_151 [1] : vector<5x5xf32> to vector<5xf32>
    %269 = vector.shape_cast %268 : vector<5xf32> to vector<5x1xf32>
    %270 = vector.broadcast %269 : vector<5x1xf32> to vector<5x5xf32>
    %271 = arith.subf %267, %270 : vector<5x5xf32>
    %272 = math.exp %271 : vector<5x5xf32>
    %cst_152 = arith.constant dense<0.000000e+00> : vector<5xf32>
    %273 = vector.multi_reduction <add>, %272, %cst_152 [1] : vector<5x5xf32> to vector<5xf32>
    %274 = vector.shape_cast %273 : vector<5xf32> to vector<5x1xf32>
    %275 = tpu.reciprocal %274 {approx = true} : vector<5x1xf32> -> vector<5x1xf32>
    %276 = vector.broadcast %275 : vector<5x1xf32> to vector<5x5xf32>
    %277 = arith.mulf %272, %276 : vector<5x5xf32>
    %cst_153 = arith.constant dense<0.000000e+00> : vector<5x8xf32>
    %278 = tpu.matmul %277, %264, %cst_153 {dimension_numbers = #tpu.dot_dimension_numbers<[1], [0], [0], [1], [0, 0, 1, 1], [], []>} : vector<5x5xf32>, vector<5x8xf32>, vector<5x8xf32> -> vector<5x8xf32>
    %279 = vector.extract_strided_slice %20 {offsets = [16, 0], sizes = [8, 32], strides = [1, 1]} : vector<32x32xf32> to vector<8x32xf32>
    %cst_154 = arith.constant dense<0.000000e+00> : vector<5x32xf32>
    %280 = tpu.matmul %278, %279, %cst_154 {dimension_numbers = #tpu.dot_dimension_numbers<[1], [0], [0], [1], [0, 0, 1, 1], [], []>} : vector<5x8xf32>, vector<8x32xf32>, vector<5x32xf32> -> vector<5x32xf32>
    %281 = arith.addf %261, %280 : vector<5x32xf32>
    %282 = vector.extract_strided_slice %220 {offsets = [0, 24], sizes = [5, 8], strides = [1, 1]} : vector<5x96xf32> to vector<5x8xf32>
    %283 = vector.extract_strided_slice %220 {offsets = [0, 56], sizes = [5, 8], strides = [1, 1]} : vector<5x96xf32> to vector<5x8xf32>
    %284 = vector.extract_strided_slice %220 {offsets = [0, 88], sizes = [5, 8], strides = [1, 1]} : vector<5x96xf32> to vector<5x8xf32>
    %cst_155 = arith.constant dense<0.000000e+00> : vector<5x5xf32>
    %285 = tpu.matmul %282, %283, %cst_155 {dimension_numbers = #tpu.dot_dimension_numbers<[1], [1], [0], [0], [0, 0, 1, 0], [], []>} : vector<5x8xf32>, vector<5x8xf32>, vector<5x5xf32> -> vector<5x5xf32>
    %cst_156 = arith.constant 0.353553385 : f32
    %286 = vector.broadcast %cst_156 : f32 to vector<5x5xf32>
    %287 = arith.mulf %285, %286 : vector<5x5xf32>
    %cst_157 = arith.constant dense<0xFF800000> : vector<5xf32>
    %288 = vector.multi_reduction <maximumf>, %287, %cst_157 [1] : vector<5x5xf32> to vector<5xf32>
    %289 = vector.shape_cast %288 : vector<5xf32> to vector<5x1xf32>
    %290 = vector.broadcast %289 : vector<5x1xf32> to vector<5x5xf32>
    %291 = arith.subf %287, %290 : vector<5x5xf32>
    %292 = math.exp %291 : vector<5x5xf32>
    %cst_158 = arith.constant dense<0.000000e+00> : vector<5xf32>
    %293 = vector.multi_reduction <add>, %292, %cst_158 [1] : vector<5x5xf32> to vector<5xf32>
    %294 = vector.shape_cast %293 : vector<5xf32> to vector<5x1xf32>
    %295 = tpu.reciprocal %294 {approx = true} : vector<5x1xf32> -> vector<5x1xf32>
    %296 = vector.broadcast %295 : vector<5x1xf32> to vector<5x5xf32>
    %297 = arith.mulf %292, %296 : vector<5x5xf32>
    %cst_159 = arith.constant dense<0.000000e+00> : vector<5x8xf32>
    %298 = tpu.matmul %297, %284, %cst_159 {dimension_numbers = #tpu.dot_dimension_numbers<[1], [0], [0], [1], [0, 0, 1, 1], [], []>} : vector<5x5xf32>, vector<5x8xf32>, vector<5x8xf32> -> vector<5x8xf32>
    %299 = vector.extract_strided_slice %20 {offsets = [24, 0], sizes = [8, 32], strides = [1, 1]} : vector<32x32xf32> to vector<8x32xf32>
    %cst_160 = arith.constant dense<0.000000e+00> : vector<5x32xf32>
    %300 = tpu.matmul %298, %299, %cst_160 {dimension_numbers = #tpu.dot_dimension_numbers<[1], [0], [0], [1], [0, 0, 1, 1], [], []>} : vector<5x8xf32>, vector<8x32xf32>, vector<5x32xf32> -> vector<5x32xf32>
    %301 = arith.addf %281, %300 : vector<5x32xf32>
    %302 = arith.addf %49, %301 : vector<5x32xf32>
    %303 = vector.broadcast %10 : vector<1x32xf32> to vector<5x32xf32>
    %304 = arith.addf %302, %303 : vector<5x32xf32>
    %cst_161 = arith.constant dense<0.000000e+00> : vector<5xf32>
    %305 = vector.multi_reduction <add>, %304, %cst_161 [1] : vector<5x32xf32> to vector<5xf32>
    %306 = vector.shape_cast %305 : vector<5xf32> to vector<5x1xf32>
    %cst_162 = arith.constant 3.200000e+01 : f32
    %307 = vector.broadcast %cst_162 : f32 to vector<5x1xf32>
    %308 = arith.divf %306, %307 : vector<5x1xf32>
    %309 = vector.broadcast %308 : vector<5x1xf32> to vector<5x32xf32>
    %310 = arith.subf %304, %309 : vector<5x32xf32>
    %311 = arith.mulf %310, %310 : vector<5x32xf32>
    %cst_163 = arith.constant dense<0.000000e+00> : vector<5xf32>
    %312 = vector.multi_reduction <add>, %311, %cst_163 [1] : vector<5x32xf32> to vector<5xf32>
    %313 = vector.shape_cast %312 : vector<5xf32> to vector<5x1xf32>
    %cst_164 = arith.constant 3.200000e+01 : f32
    %314 = vector.broadcast %cst_164 : f32 to vector<5x1xf32>
    %315 = arith.divf %313, %314 : vector<5x1xf32>
    %316 = vector.broadcast %308 : vector<5x1xf32> to vector<5x32xf32>
    %317 = arith.subf %304, %316 : vector<5x32xf32>
    %cst_165 = arith.constant 9.99999997E-7 : f32
    %318 = vector.broadcast %cst_165 : f32 to vector<5x1xf32>
    %319 = arith.addf %315, %318 : vector<5x1xf32>
    %320 = math.rsqrt %319 : vector<5x1xf32>
    %321 = vector.broadcast %320 : vector<5x1xf32> to vector<5x32xf32>
    %322 = arith.mulf %317, %321 : vector<5x32xf32>
    %323 = vector.broadcast %15 : vector<1x32xf32> to vector<5x32xf32>
    %324 = arith.mulf %322, %323 : vector<5x32xf32>
    %325 = vector.broadcast %14 : vector<1x32xf32> to vector<5x32xf32>
    %326 = arith.addf %324, %325 : vector<5x32xf32>
    %cst_166 = arith.constant dense<0.000000e+00> : vector<5x128xf32>
    %327 = tpu.matmul %326, %17, %cst_166 {dimension_numbers = #tpu.dot_dimension_numbers<[1], [0], [0], [1], [0, 0, 1, 1], [], []>} : vector<5x32xf32>, vector<32x128xf32>, vector<5x128xf32> -> vector<5x128xf32>
    %328 = vector.broadcast %16 : vector<1x128xf32> to vector<5x128xf32>
    %329 = arith.addf %327, %328 : vector<5x128xf32>
    %cst_167 = arith.constant 5.000000e-01 : f32
    %330 = vector.broadcast %cst_167 : f32 to vector<5x128xf32>
    %331 = arith.mulf %330, %329 : vector<5x128xf32>
    %cst_168 = arith.constant 0.707106769 : f32
    %332 = vector.broadcast %cst_168 : f32 to vector<5x128xf32>
    %333 = arith.mulf %329, %332 : vector<5x128xf32>
    %334 = math.erf %333 : vector<5x128xf32>
    %cst_169 = arith.constant 1.000000e+00 : f32
    %335 = vector.broadcast %cst_169 : f32 to vector<5x128xf32>
    %336 = arith.addf %335, %334 : vector<5x128xf32>
    %337 = arith.mulf %331, %336 : vector<5x128xf32>
    %cst_170 = arith.constant dense<0.000000e+00> : vector<5x32xf32>
    %338 = tpu.matmul %337, %19, %cst_170 {dimension_numbers = #tpu.dot_dimension_numbers<[1], [0], [0], [1], [0, 0, 1, 1], [], []>} : vector<5x128xf32>, vector<128x32xf32>, vector<5x32xf32> -> vector<5x32xf32>
    %339 = vector.broadcast %18 : vector<1x32xf32> to vector<5x32xf32>
    %340 = arith.addf %338, %339 : vector<5x32xf32>
    %341 = arith.addf %304, %340 : vector<5x32xf32>
    %cst_171 = arith.constant dense<0.000000e+00> : vector<5xf32>
    %342 = vector.multi_reduction <add>, %195, %cst_171 [1] : vector<5x32xf32> to vector<5xf32>
    %343 = vector.shape_cast %342 : vector<5xf32> to vector<5x1xf32>
    %cst_172 = arith.constant 3.200000e+01 : f32
    %344 = vector.broadcast %cst_172 : f32 to vector<5x1xf32>
    %345 = arith.divf %343, %344 : vector<5x1xf32>
    %346 = vector.broadcast %345 : vector<5x1xf32> to vector<5x32xf32>
    %347 = arith.subf %195, %346 : vector<5x32xf32>
    %348 = arith.mulf %347, %347 : vector<5x32xf32>
    %cst_173 = arith.constant dense<0.000000e+00> : vector<5xf32>
    %349 = vector.multi_reduction <add>, %348, %cst_173 [1] : vector<5x32xf32> to vector<5xf32>
    %350 = vector.shape_cast %349 : vector<5xf32> to vector<5x1xf32>
    %cst_174 = arith.constant 3.200000e+01 : f32
    %351 = vector.broadcast %cst_174 : f32 to vector<5x1xf32>
    %352 = arith.divf %350, %351 : vector<5x1xf32>
    %353 = vector.broadcast %345 : vector<5x1xf32> to vector<5x32xf32>
    %354 = arith.subf %195, %353 : vector<5x32xf32>
    %cst_175 = arith.constant 9.99999997E-7 : f32
    %355 = vector.broadcast %cst_175 : f32 to vector<5x1xf32>
    %356 = arith.addf %352, %355 : vector<5x1xf32>
    %357 = math.rsqrt %356 : vector<5x1xf32>
    %358 = vector.broadcast %357 : vector<5x1xf32> to vector<5x32xf32>
    %359 = arith.mulf %354, %358 : vector<5x32xf32>
    %360 = vector.broadcast %25 : vector<1x32xf32> to vector<5x32xf32>
    %361 = arith.mulf %359, %360 : vector<5x32xf32>
    %362 = vector.broadcast %24 : vector<1x32xf32> to vector<5x32xf32>
    %363 = arith.addf %361, %362 : vector<5x32xf32>
    %cst_176 = arith.constant dense<0.000000e+00> : vector<5x96xf32>
    %364 = tpu.matmul %363, %33, %cst_176 {dimension_numbers = #tpu.dot_dimension_numbers<[1], [0], [0], [1], [0, 0, 1, 1], [], []>} : vector<5x32xf32>, vector<32x96xf32>, vector<5x96xf32> -> vector<5x96xf32>
    %365 = vector.broadcast %23 : vector<1x96xf32> to vector<5x96xf32>
    %366 = arith.addf %364, %365 : vector<5x96xf32>
    %cst_177 = arith.constant 0.000000e+00 : f32
    %367 = vector.broadcast %cst_177 : f32 to vector<5x32xf32>
    %368 = vector.extract_strided_slice %366 {offsets = [0, 0], sizes = [5, 8], strides = [1, 1]} : vector<5x96xf32> to vector<5x8xf32>
    %369 = vector.extract_strided_slice %366 {offsets = [0, 32], sizes = [5, 8], strides = [1, 1]} : vector<5x96xf32> to vector<5x8xf32>
    %370 = vector.extract_strided_slice %366 {offsets = [0, 64], sizes = [5, 8], strides = [1, 1]} : vector<5x96xf32> to vector<5x8xf32>
    %cst_178 = arith.constant dense<0.000000e+00> : vector<5x5xf32>
    %371 = tpu.matmul %368, %369, %cst_178 {dimension_numbers = #tpu.dot_dimension_numbers<[1], [1], [0], [0], [0, 0, 1, 0], [], []>} : vector<5x8xf32>, vector<5x8xf32>, vector<5x5xf32> -> vector<5x5xf32>
    %cst_179 = arith.constant 0.353553385 : f32
    %372 = vector.broadcast %cst_179 : f32 to vector<5x5xf32>
    %373 = arith.mulf %371, %372 : vector<5x5xf32>
    %cst_180 = arith.constant dense<0xFF800000> : vector<5xf32>
    %374 = vector.multi_reduction <maximumf>, %373, %cst_180 [1] : vector<5x5xf32> to vector<5xf32>
    %375 = vector.shape_cast %374 : vector<5xf32> to vector<5x1xf32>
    %376 = vector.broadcast %375 : vector<5x1xf32> to vector<5x5xf32>
    %377 = arith.subf %373, %376 : vector<5x5xf32>
    %378 = math.exp %377 : vector<5x5xf32>
    %cst_181 = arith.constant dense<0.000000e+00> : vector<5xf32>
    %379 = vector.multi_reduction <add>, %378, %cst_181 [1] : vector<5x5xf32> to vector<5xf32>
    %380 = vector.shape_cast %379 : vector<5xf32> to vector<5x1xf32>
    %381 = tpu.reciprocal %380 {approx = true} : vector<5x1xf32> -> vector<5x1xf32>
    %382 = vector.broadcast %381 : vector<5x1xf32> to vector<5x5xf32>
    %383 = arith.mulf %378, %382 : vector<5x5xf32>
    %cst_182 = arith.constant dense<0.000000e+00> : vector<5x8xf32>
    %384 = tpu.matmul %383, %370, %cst_182 {dimension_numbers = #tpu.dot_dimension_numbers<[1], [0], [0], [1], [0, 0, 1, 1], [], []>} : vector<5x5xf32>, vector<5x8xf32>, vector<5x8xf32> -> vector<5x8xf32>
    %385 = vector.extract_strided_slice %32 {offsets = [0, 0], sizes = [8, 32], strides = [1, 1]} : vector<32x32xf32> to vector<8x32xf32>
    %cst_183 = arith.constant dense<0.000000e+00> : vector<5x32xf32>
    %386 = tpu.matmul %384, %385, %cst_183 {dimension_numbers = #tpu.dot_dimension_numbers<[1], [0], [0], [1], [0, 0, 1, 1], [], []>} : vector<5x8xf32>, vector<8x32xf32>, vector<5x32xf32> -> vector<5x32xf32>
    %387 = arith.addf %367, %386 : vector<5x32xf32>
    %388 = vector.extract_strided_slice %366 {offsets = [0, 8], sizes = [5, 8], strides = [1, 1]} : vector<5x96xf32> to vector<5x8xf32>
    %389 = vector.extract_strided_slice %366 {offsets = [0, 40], sizes = [5, 8], strides = [1, 1]} : vector<5x96xf32> to vector<5x8xf32>
    %390 = vector.extract_strided_slice %366 {offsets = [0, 72], sizes = [5, 8], strides = [1, 1]} : vector<5x96xf32> to vector<5x8xf32>
    %cst_184 = arith.constant dense<0.000000e+00> : vector<5x5xf32>
    %391 = tpu.matmul %388, %389, %cst_184 {dimension_numbers = #tpu.dot_dimension_numbers<[1], [1], [0], [0], [0, 0, 1, 0], [], []>} : vector<5x8xf32>, vector<5x8xf32>, vector<5x5xf32> -> vector<5x5xf32>
    %cst_185 = arith.constant 0.353553385 : f32
    %392 = vector.broadcast %cst_185 : f32 to vector<5x5xf32>
    %393 = arith.mulf %391, %392 : vector<5x5xf32>
    %cst_186 = arith.constant dense<0xFF800000> : vector<5xf32>
    %394 = vector.multi_reduction <maximumf>, %393, %cst_186 [1] : vector<5x5xf32> to vector<5xf32>
    %395 = vector.shape_cast %394 : vector<5xf32> to vector<5x1xf32>
    %396 = vector.broadcast %395 : vector<5x1xf32> to vector<5x5xf32>
    %397 = arith.subf %393, %396 : vector<5x5xf32>
    %398 = math.exp %397 : vector<5x5xf32>
    %cst_187 = arith.constant dense<0.000000e+00> : vector<5xf32>
    %399 = vector.multi_reduction <add>, %398, %cst_187 [1] : vector<5x5xf32> to vector<5xf32>
    %400 = vector.shape_cast %399 : vector<5xf32> to vector<5x1xf32>
    %401 = tpu.reciprocal %400 {approx = true} : vector<5x1xf32> -> vector<5x1xf32>
    %402 = vector.broadcast %401 : vector<5x1xf32> to vector<5x5xf32>
    %403 = arith.mulf %398, %402 : vector<5x5xf32>
    %cst_188 = arith.constant dense<0.000000e+00> : vector<5x8xf32>
    %404 = tpu.matmul %403, %390, %cst_188 {dimension_numbers = #tpu.dot_dimension_numbers<[1], [0], [0], [1], [0, 0, 1, 1], [], []>} : vector<5x5xf32>, vector<5x8xf32>, vector<5x8xf32> -> vector<5x8xf32>
    %405 = vector.extract_strided_slice %32 {offsets = [8, 0], sizes = [8, 32], strides = [1, 1]} : vector<32x32xf32> to vector<8x32xf32>
    %cst_189 = arith.constant dense<0.000000e+00> : vector<5x32xf32>
    %406 = tpu.matmul %404, %405, %cst_189 {dimension_numbers = #tpu.dot_dimension_numbers<[1], [0], [0], [1], [0, 0, 1, 1], [], []>} : vector<5x8xf32>, vector<8x32xf32>, vector<5x32xf32> -> vector<5x32xf32>
    %407 = arith.addf %387, %406 : vector<5x32xf32>
    %408 = vector.extract_strided_slice %366 {offsets = [0, 16], sizes = [5, 8], strides = [1, 1]} : vector<5x96xf32> to vector<5x8xf32>
    %409 = vector.extract_strided_slice %366 {offsets = [0, 48], sizes = [5, 8], strides = [1, 1]} : vector<5x96xf32> to vector<5x8xf32>
    %410 = vector.extract_strided_slice %366 {offsets = [0, 80], sizes = [5, 8], strides = [1, 1]} : vector<5x96xf32> to vector<5x8xf32>
    %cst_190 = arith.constant dense<0.000000e+00> : vector<5x5xf32>
    %411 = tpu.matmul %408, %409, %cst_190 {dimension_numbers = #tpu.dot_dimension_numbers<[1], [1], [0], [0], [0, 0, 1, 0], [], []>} : vector<5x8xf32>, vector<5x8xf32>, vector<5x5xf32> -> vector<5x5xf32>
    %cst_191 = arith.constant 0.353553385 : f32
    %412 = vector.broadcast %cst_191 : f32 to vector<5x5xf32>
    %413 = arith.mulf %411, %412 : vector<5x5xf32>
    %cst_192 = arith.constant dense<0xFF800000> : vector<5xf32>
    %414 = vector.multi_reduction <maximumf>, %413, %cst_192 [1] : vector<5x5xf32> to vector<5xf32>
    %415 = vector.shape_cast %414 : vector<5xf32> to vector<5x1xf32>
    %416 = vector.broadcast %415 : vector<5x1xf32> to vector<5x5xf32>
    %417 = arith.subf %413, %416 : vector<5x5xf32>
    %418 = math.exp %417 : vector<5x5xf32>
    %cst_193 = arith.constant dense<0.000000e+00> : vector<5xf32>
    %419 = vector.multi_reduction <add>, %418, %cst_193 [1] : vector<5x5xf32> to vector<5xf32>
    %420 = vector.shape_cast %419 : vector<5xf32> to vector<5x1xf32>
    %421 = tpu.reciprocal %420 {approx = true} : vector<5x1xf32> -> vector<5x1xf32>
    %422 = vector.broadcast %421 : vector<5x1xf32> to vector<5x5xf32>
    %423 = arith.mulf %418, %422 : vector<5x5xf32>
    %cst_194 = arith.constant dense<0.000000e+00> : vector<5x8xf32>
    %424 = tpu.matmul %423, %410, %cst_194 {dimension_numbers = #tpu.dot_dimension_numbers<[1], [0], [0], [1], [0, 0, 1, 1], [], []>} : vector<5x5xf32>, vector<5x8xf32>, vector<5x8xf32> -> vector<5x8xf32>
    %425 = vector.extract_strided_slice %32 {offsets = [16, 0], sizes = [8, 32], strides = [1, 1]} : vector<32x32xf32> to vector<8x32xf32>
    %cst_195 = arith.constant dense<0.000000e+00> : vector<5x32xf32>
    %426 = tpu.matmul %424, %425, %cst_195 {dimension_numbers = #tpu.dot_dimension_numbers<[1], [0], [0], [1], [0, 0, 1, 1], [], []>} : vector<5x8xf32>, vector<8x32xf32>, vector<5x32xf32> -> vector<5x32xf32>
    %427 = arith.addf %407, %426 : vector<5x32xf32>
    %428 = vector.extract_strided_slice %366 {offsets = [0, 24], sizes = [5, 8], strides = [1, 1]} : vector<5x96xf32> to vector<5x8xf32>
    %429 = vector.extract_strided_slice %366 {offsets = [0, 56], sizes = [5, 8], strides = [1, 1]} : vector<5x96xf32> to vector<5x8xf32>
    %430 = vector.extract_strided_slice %366 {offsets = [0, 88], sizes = [5, 8], strides = [1, 1]} : vector<5x96xf32> to vector<5x8xf32>
    %cst_196 = arith.constant dense<0.000000e+00> : vector<5x5xf32>
    %431 = tpu.matmul %428, %429, %cst_196 {dimension_numbers = #tpu.dot_dimension_numbers<[1], [1], [0], [0], [0, 0, 1, 0], [], []>} : vector<5x8xf32>, vector<5x8xf32>, vector<5x5xf32> -> vector<5x5xf32>
    %cst_197 = arith.constant 0.353553385 : f32
    %432 = vector.broadcast %cst_197 : f32 to vector<5x5xf32>
    %433 = arith.mulf %431, %432 : vector<5x5xf32>
    %cst_198 = arith.constant dense<0xFF800000> : vector<5xf32>
    %434 = vector.multi_reduction <maximumf>, %433, %cst_198 [1] : vector<5x5xf32> to vector<5xf32>
    %435 = vector.shape_cast %434 : vector<5xf32> to vector<5x1xf32>
    %436 = vector.broadcast %435 : vector<5x1xf32> to vector<5x5xf32>
    %437 = arith.subf %433, %436 : vector<5x5xf32>
    %438 = math.exp %437 : vector<5x5xf32>
    %cst_199 = arith.constant dense<0.000000e+00> : vector<5xf32>
    %439 = vector.multi_reduction <add>, %438, %cst_199 [1] : vector<5x5xf32> to vector<5xf32>
    %440 = vector.shape_cast %439 : vector<5xf32> to vector<5x1xf32>
    %441 = tpu.reciprocal %440 {approx = true} : vector<5x1xf32> -> vector<5x1xf32>
    %442 = vector.broadcast %441 : vector<5x1xf32> to vector<5x5xf32>
    %443 = arith.mulf %438, %442 : vector<5x5xf32>
    %cst_200 = arith.constant dense<0.000000e+00> : vector<5x8xf32>
    %444 = tpu.matmul %443, %430, %cst_200 {dimension_numbers = #tpu.dot_dimension_numbers<[1], [0], [0], [1], [0, 0, 1, 1], [], []>} : vector<5x5xf32>, vector<5x8xf32>, vector<5x8xf32> -> vector<5x8xf32>
    %445 = vector.extract_strided_slice %32 {offsets = [24, 0], sizes = [8, 32], strides = [1, 1]} : vector<32x32xf32> to vector<8x32xf32>
    %cst_201 = arith.constant dense<0.000000e+00> : vector<5x32xf32>
    %446 = tpu.matmul %444, %445, %cst_201 {dimension_numbers = #tpu.dot_dimension_numbers<[1], [0], [0], [1], [0, 0, 1, 1], [], []>} : vector<5x8xf32>, vector<8x32xf32>, vector<5x32xf32> -> vector<5x32xf32>
    %447 = arith.addf %427, %446 : vector<5x32xf32>
    %448 = arith.addf %195, %447 : vector<5x32xf32>
    %449 = vector.broadcast %22 : vector<1x32xf32> to vector<5x32xf32>
    %450 = arith.addf %448, %449 : vector<5x32xf32>
    %cst_202 = arith.constant dense<0.000000e+00> : vector<5xf32>
    %451 = vector.multi_reduction <add>, %450, %cst_202 [1] : vector<5x32xf32> to vector<5xf32>
    %452 = vector.shape_cast %451 : vector<5xf32> to vector<5x1xf32>
    %cst_203 = arith.constant 3.200000e+01 : f32
    %453 = vector.broadcast %cst_203 : f32 to vector<5x1xf32>
    %454 = arith.divf %452, %453 : vector<5x1xf32>
    %455 = vector.broadcast %454 : vector<5x1xf32> to vector<5x32xf32>
    %456 = arith.subf %450, %455 : vector<5x32xf32>
    %457 = arith.mulf %456, %456 : vector<5x32xf32>
    %cst_204 = arith.constant dense<0.000000e+00> : vector<5xf32>
    %458 = vector.multi_reduction <add>, %457, %cst_204 [1] : vector<5x32xf32> to vector<5xf32>
    %459 = vector.shape_cast %458 : vector<5xf32> to vector<5x1xf32>
    %cst_205 = arith.constant 3.200000e+01 : f32
    %460 = vector.broadcast %cst_205 : f32 to vector<5x1xf32>
    %461 = arith.divf %459, %460 : vector<5x1xf32>
    %462 = vector.broadcast %454 : vector<5x1xf32> to vector<5x32xf32>
    %463 = arith.subf %450, %462 : vector<5x32xf32>
    %cst_206 = arith.constant 9.99999997E-7 : f32
    %464 = vector.broadcast %cst_206 : f32 to vector<5x1xf32>
    %465 = arith.addf %461, %464 : vector<5x1xf32>
    %466 = math.rsqrt %465 : vector<5x1xf32>
    %467 = vector.broadcast %466 : vector<5x1xf32> to vector<5x32xf32>
    %468 = arith.mulf %463, %467 : vector<5x32xf32>
    %469 = vector.broadcast %27 : vector<1x32xf32> to vector<5x32xf32>
    %470 = arith.mulf %468, %469 : vector<5x32xf32>
    %471 = vector.broadcast %26 : vector<1x32xf32> to vector<5x32xf32>
    %472 = arith.addf %470, %471 : vector<5x32xf32>
    %cst_207 = arith.constant dense<0.000000e+00> : vector<5x128xf32>
    %473 = tpu.matmul %472, %29, %cst_207 {dimension_numbers = #tpu.dot_dimension_numbers<[1], [0], [0], [1], [0, 0, 1, 1], [], []>} : vector<5x32xf32>, vector<32x128xf32>, vector<5x128xf32> -> vector<5x128xf32>
    %474 = vector.broadcast %28 : vector<1x128xf32> to vector<5x128xf32>
    %475 = arith.addf %473, %474 : vector<5x128xf32>
    %cst_208 = arith.constant 5.000000e-01 : f32
    %476 = vector.broadcast %cst_208 : f32 to vector<5x128xf32>
    %477 = arith.mulf %476, %475 : vector<5x128xf32>
    %cst_209 = arith.constant 0.707106769 : f32
    %478 = vector.broadcast %cst_209 : f32 to vector<5x128xf32>
    %479 = arith.mulf %475, %478 : vector<5x128xf32>
    %480 = math.erf %479 : vector<5x128xf32>
    %cst_210 = arith.constant 1.000000e+00 : f32
    %481 = vector.broadcast %cst_210 : f32 to vector<5x128xf32>
    %482 = arith.addf %481, %480 : vector<5x128xf32>
    %483 = arith.mulf %477, %482 : vector<5x128xf32>
    %cst_211 = arith.constant dense<0.000000e+00> : vector<5x32xf32>
    %484 = tpu.matmul %483, %31, %cst_211 {dimension_numbers = #tpu.dot_dimension_numbers<[1], [0], [0], [1], [0, 0, 1, 1], [], []>} : vector<5x128xf32>, vector<128x32xf32>, vector<5x32xf32> -> vector<5x32xf32>
    %485 = vector.broadcast %30 : vector<1x32xf32> to vector<5x32xf32>
    %486 = arith.addf %484, %485 : vector<5x32xf32>
    %487 = arith.addf %450, %486 : vector<5x32xf32>
    %cst_212 = arith.constant dense<0.000000e+00> : vector<5xf32>
    %488 = vector.multi_reduction <add>, %341, %cst_212 [1] : vector<5x32xf32> to vector<5xf32>
    %489 = vector.shape_cast %488 : vector<5xf32> to vector<5x1xf32>
    %cst_213 = arith.constant 3.200000e+01 : f32
    %490 = vector.broadcast %cst_213 : f32 to vector<5x1xf32>
    %491 = arith.divf %489, %490 : vector<5x1xf32>
    %492 = vector.broadcast %491 : vector<5x1xf32> to vector<5x32xf32>
    %493 = arith.subf %341, %492 : vector<5x32xf32>
    %494 = arith.mulf %493, %493 : vector<5x32xf32>
    %cst_214 = arith.constant dense<0.000000e+00> : vector<5xf32>
    %495 = vector.multi_reduction <add>, %494, %cst_214 [1] : vector<5x32xf32> to vector<5xf32>
    %496 = vector.shape_cast %495 : vector<5xf32> to vector<5x1xf32>
    %cst_215 = arith.constant 3.200000e+01 : f32
    %497 = vector.broadcast %cst_215 : f32 to vector<5x1xf32>
    %498 = arith.divf %496, %497 : vector<5x1xf32>
    %499 = vector.broadcast %491 : vector<5x1xf32> to vector<5x32xf32>
    %500 = arith.subf %341, %499 : vector<5x32xf32>
    %cst_216 = arith.constant 9.99999997E-7 : f32
    %501 = vector.broadcast %cst_216 : f32 to vector<5x1xf32>
    %502 = arith.addf %498, %501 : vector<5x1xf32>
    %503 = math.rsqrt %502 : vector<5x1xf32>
    %504 = vector.broadcast %503 : vector<5x1xf32> to vector<5x32xf32>
    %505 = arith.mulf %500, %504 : vector<5x32xf32>
    %506 = vector.broadcast %25 : vector<1x32xf32> to vector<5x32xf32>
    %507 = arith.mulf %505, %506 : vector<5x32xf32>
    %508 = vector.broadcast %24 : vector<1x32xf32> to vector<5x32xf32>
    %509 = arith.addf %507, %508 : vector<5x32xf32>
    %cst_217 = arith.constant dense<0.000000e+00> : vector<5x96xf32>
    %510 = tpu.matmul %509, %33, %cst_217 {dimension_numbers = #tpu.dot_dimension_numbers<[1], [0], [0], [1], [0, 0, 1, 1], [], []>} : vector<5x32xf32>, vector<32x96xf32>, vector<5x96xf32> -> vector<5x96xf32>
    %511 = vector.broadcast %23 : vector<1x96xf32> to vector<5x96xf32>
    %512 = arith.addf %510, %511 : vector<5x96xf32>
    %cst_218 = arith.constant 0.000000e+00 : f32
    %513 = vector.broadcast %cst_218 : f32 to vector<5x32xf32>
    %514 = vector.extract_strided_slice %512 {offsets = [0, 0], sizes = [5, 8], strides = [1, 1]} : vector<5x96xf32> to vector<5x8xf32>
    %515 = vector.extract_strided_slice %512 {offsets = [0, 32], sizes = [5, 8], strides = [1, 1]} : vector<5x96xf32> to vector<5x8xf32>
    %516 = vector.extract_strided_slice %512 {offsets = [0, 64], sizes = [5, 8], strides = [1, 1]} : vector<5x96xf32> to vector<5x8xf32>
    %cst_219 = arith.constant dense<0.000000e+00> : vector<5x5xf32>
    %517 = tpu.matmul %514, %515, %cst_219 {dimension_numbers = #tpu.dot_dimension_numbers<[1], [1], [0], [0], [0, 0, 1, 0], [], []>} : vector<5x8xf32>, vector<5x8xf32>, vector<5x5xf32> -> vector<5x5xf32>
    %cst_220 = arith.constant 0.353553385 : f32
    %518 = vector.broadcast %cst_220 : f32 to vector<5x5xf32>
    %519 = arith.mulf %517, %518 : vector<5x5xf32>
    %cst_221 = arith.constant dense<0xFF800000> : vector<5xf32>
    %520 = vector.multi_reduction <maximumf>, %519, %cst_221 [1] : vector<5x5xf32> to vector<5xf32>
    %521 = vector.shape_cast %520 : vector<5xf32> to vector<5x1xf32>
    %522 = vector.broadcast %521 : vector<5x1xf32> to vector<5x5xf32>
    %523 = arith.subf %519, %522 : vector<5x5xf32>
    %524 = math.exp %523 : vector<5x5xf32>
    %cst_222 = arith.constant dense<0.000000e+00> : vector<5xf32>
    %525 = vector.multi_reduction <add>, %524, %cst_222 [1] : vector<5x5xf32> to vector<5xf32>
    %526 = vector.shape_cast %525 : vector<5xf32> to vector<5x1xf32>
    %527 = tpu.reciprocal %526 {approx = true} : vector<5x1xf32> -> vector<5x1xf32>
    %528 = vector.broadcast %527 : vector<5x1xf32> to vector<5x5xf32>
    %529 = arith.mulf %524, %528 : vector<5x5xf32>
    %cst_223 = arith.constant dense<0.000000e+00> : vector<5x8xf32>
    %530 = tpu.matmul %529, %516, %cst_223 {dimension_numbers = #tpu.dot_dimension_numbers<[1], [0], [0], [1], [0, 0, 1, 1], [], []>} : vector<5x5xf32>, vector<5x8xf32>, vector<5x8xf32> -> vector<5x8xf32>
    %531 = vector.extract_strided_slice %32 {offsets = [0, 0], sizes = [8, 32], strides = [1, 1]} : vector<32x32xf32> to vector<8x32xf32>
    %cst_224 = arith.constant dense<0.000000e+00> : vector<5x32xf32>
    %532 = tpu.matmul %530, %531, %cst_224 {dimension_numbers = #tpu.dot_dimension_numbers<[1], [0], [0], [1], [0, 0, 1, 1], [], []>} : vector<5x8xf32>, vector<8x32xf32>, vector<5x32xf32> -> vector<5x32xf32>
    %533 = arith.addf %513, %532 : vector<5x32xf32>
    %534 = vector.extract_strided_slice %512 {offsets = [0, 8], sizes = [5, 8], strides = [1, 1]} : vector<5x96xf32> to vector<5x8xf32>
    %535 = vector.extract_strided_slice %512 {offsets = [0, 40], sizes = [5, 8], strides = [1, 1]} : vector<5x96xf32> to vector<5x8xf32>
    %536 = vector.extract_strided_slice %512 {offsets = [0, 72], sizes = [5, 8], strides = [1, 1]} : vector<5x96xf32> to vector<5x8xf32>
    %cst_225 = arith.constant dense<0.000000e+00> : vector<5x5xf32>
    %537 = tpu.matmul %534, %535, %cst_225 {dimension_numbers = #tpu.dot_dimension_numbers<[1], [1], [0], [0], [0, 0, 1, 0], [], []>} : vector<5x8xf32>, vector<5x8xf32>, vector<5x5xf32> -> vector<5x5xf32>
    %cst_226 = arith.constant 0.353553385 : f32
    %538 = vector.broadcast %cst_226 : f32 to vector<5x5xf32>
    %539 = arith.mulf %537, %538 : vector<5x5xf32>
    %cst_227 = arith.constant dense<0xFF800000> : vector<5xf32>
    %540 = vector.multi_reduction <maximumf>, %539, %cst_227 [1] : vector<5x5xf32> to vector<5xf32>
    %541 = vector.shape_cast %540 : vector<5xf32> to vector<5x1xf32>
    %542 = vector.broadcast %541 : vector<5x1xf32> to vector<5x5xf32>
    %543 = arith.subf %539, %542 : vector<5x5xf32>
    %544 = math.exp %543 : vector<5x5xf32>
    %cst_228 = arith.constant dense<0.000000e+00> : vector<5xf32>
    %545 = vector.multi_reduction <add>, %544, %cst_228 [1] : vector<5x5xf32> to vector<5xf32>
    %546 = vector.shape_cast %545 : vector<5xf32> to vector<5x1xf32>
    %547 = tpu.reciprocal %546 {approx = true} : vector<5x1xf32> -> vector<5x1xf32>
    %548 = vector.broadcast %547 : vector<5x1xf32> to vector<5x5xf32>
    %549 = arith.mulf %544, %548 : vector<5x5xf32>
    %cst_229 = arith.constant dense<0.000000e+00> : vector<5x8xf32>
    %550 = tpu.matmul %549, %536, %cst_229 {dimension_numbers = #tpu.dot_dimension_numbers<[1], [0], [0], [1], [0, 0, 1, 1], [], []>} : vector<5x5xf32>, vector<5x8xf32>, vector<5x8xf32> -> vector<5x8xf32>
    %551 = vector.extract_strided_slice %32 {offsets = [8, 0], sizes = [8, 32], strides = [1, 1]} : vector<32x32xf32> to vector<8x32xf32>
    %cst_230 = arith.constant dense<0.000000e+00> : vector<5x32xf32>
    %552 = tpu.matmul %550, %551, %cst_230 {dimension_numbers = #tpu.dot_dimension_numbers<[1], [0], [0], [1], [0, 0, 1, 1], [], []>} : vector<5x8xf32>, vector<8x32xf32>, vector<5x32xf32> -> vector<5x32xf32>
    %553 = arith.addf %533, %552 : vector<5x32xf32>
    %554 = vector.extract_strided_slice %512 {offsets = [0, 16], sizes = [5, 8], strides = [1, 1]} : vector<5x96xf32> to vector<5x8xf32>
    %555 = vector.extract_strided_slice %512 {offsets = [0, 48], sizes = [5, 8], strides = [1, 1]} : vector<5x96xf32> to vector<5x8xf32>
    %556 = vector.extract_strided_slice %512 {offsets = [0, 80], sizes = [5, 8], strides = [1, 1]} : vector<5x96xf32> to vector<5x8xf32>
    %cst_231 = arith.constant dense<0.000000e+00> : vector<5x5xf32>
    %557 = tpu.matmul %554, %555, %cst_231 {dimension_numbers = #tpu.dot_dimension_numbers<[1], [1], [0], [0], [0, 0, 1, 0], [], []>} : vector<5x8xf32>, vector<5x8xf32>, vector<5x5xf32> -> vector<5x5xf32>
    %cst_232 = arith.constant 0.353553385 : f32
    %558 = vector.broadcast %cst_232 : f32 to vector<5x5xf32>
    %559 = arith.mulf %557, %558 : vector<5x5xf32>
    %cst_233 = arith.constant dense<0xFF800000> : vector<5xf32>
    %560 = vector.multi_reduction <maximumf>, %559, %cst_233 [1] : vector<5x5xf32> to vector<5xf32>
    %561 = vector.shape_cast %560 : vector<5xf32> to vector<5x1xf32>
    %562 = vector.broadcast %561 : vector<5x1xf32> to vector<5x5xf32>
    %563 = arith.subf %559, %562 : vector<5x5xf32>
    %564 = math.exp %563 : vector<5x5xf32>
    %cst_234 = arith.constant dense<0.000000e+00> : vector<5xf32>
    %565 = vector.multi_reduction <add>, %564, %cst_234 [1] : vector<5x5xf32> to vector<5xf32>
    %566 = vector.shape_cast %565 : vector<5xf32> to vector<5x1xf32>
    %567 = tpu.reciprocal %566 {approx = true} : vector<5x1xf32> -> vector<5x1xf32>
    %568 = vector.broadcast %567 : vector<5x1xf32> to vector<5x5xf32>
    %569 = arith.mulf %564, %568 : vector<5x5xf32>
    %cst_235 = arith.constant dense<0.000000e+00> : vector<5x8xf32>
    %570 = tpu.matmul %569, %556, %cst_235 {dimension_numbers = #tpu.dot_dimension_numbers<[1], [0], [0], [1], [0, 0, 1, 1], [], []>} : vector<5x5xf32>, vector<5x8xf32>, vector<5x8xf32> -> vector<5x8xf32>
    %571 = vector.extract_strided_slice %32 {offsets = [16, 0], sizes = [8, 32], strides = [1, 1]} : vector<32x32xf32> to vector<8x32xf32>
    %cst_236 = arith.constant dense<0.000000e+00> : vector<5x32xf32>
    %572 = tpu.matmul %570, %571, %cst_236 {dimension_numbers = #tpu.dot_dimension_numbers<[1], [0], [0], [1], [0, 0, 1, 1], [], []>} : vector<5x8xf32>, vector<8x32xf32>, vector<5x32xf32> -> vector<5x32xf32>
    %573 = arith.addf %553, %572 : vector<5x32xf32>
    %574 = vector.extract_strided_slice %512 {offsets = [0, 24], sizes = [5, 8], strides = [1, 1]} : vector<5x96xf32> to vector<5x8xf32>
    %575 = vector.extract_strided_slice %512 {offsets = [0, 56], sizes = [5, 8], strides = [1, 1]} : vector<5x96xf32> to vector<5x8xf32>
    %576 = vector.extract_strided_slice %512 {offsets = [0, 88], sizes = [5, 8], strides = [1, 1]} : vector<5x96xf32> to vector<5x8xf32>
    %cst_237 = arith.constant dense<0.000000e+00> : vector<5x5xf32>
    %577 = tpu.matmul %574, %575, %cst_237 {dimension_numbers = #tpu.dot_dimension_numbers<[1], [1], [0], [0], [0, 0, 1, 0], [], []>} : vector<5x8xf32>, vector<5x8xf32>, vector<5x5xf32> -> vector<5x5xf32>
    %cst_238 = arith.constant 0.353553385 : f32
    %578 = vector.broadcast %cst_238 : f32 to vector<5x5xf32>
    %579 = arith.mulf %577, %578 : vector<5x5xf32>
    %cst_239 = arith.constant dense<0xFF800000> : vector<5xf32>
    %580 = vector.multi_reduction <maximumf>, %579, %cst_239 [1] : vector<5x5xf32> to vector<5xf32>
    %581 = vector.shape_cast %580 : vector<5xf32> to vector<5x1xf32>
    %582 = vector.broadcast %581 : vector<5x1xf32> to vector<5x5xf32>
    %583 = arith.subf %579, %582 : vector<5x5xf32>
    %584 = math.exp %583 : vector<5x5xf32>
    %cst_240 = arith.constant dense<0.000000e+00> : vector<5xf32>
    %585 = vector.multi_reduction <add>, %584, %cst_240 [1] : vector<5x5xf32> to vector<5xf32>
    %586 = vector.shape_cast %585 : vector<5xf32> to vector<5x1xf32>
    %587 = tpu.reciprocal %586 {approx = true} : vector<5x1xf32> -> vector<5x1xf32>
    %588 = vector.broadcast %587 : vector<5x1xf32> to vector<5x5xf32>
    %589 = arith.mulf %584, %588 : vector<5x5xf32>
    %cst_241 = arith.constant dense<0.000000e+00> : vector<5x8xf32>
    %590 = tpu.matmul %589, %576, %cst_241 {dimension_numbers = #tpu.dot_dimension_numbers<[1], [0], [0], [1], [0, 0, 1, 1], [], []>} : vector<5x5xf32>, vector<5x8xf32>, vector<5x8xf32> -> vector<5x8xf32>
    %591 = vector.extract_strided_slice %32 {offsets = [24, 0], sizes = [8, 32], strides = [1, 1]} : vector<32x32xf32> to vector<8x32xf32>
    %cst_242 = arith.constant dense<0.000000e+00> : vector<5x32xf32>
    %592 = tpu.matmul %590, %591, %cst_242 {dimension_numbers = #tpu.dot_dimension_numbers<[1], [0], [0], [1], [0, 0, 1, 1], [], []>} : vector<5x8xf32>, vector<8x32xf32>, vector<5x32xf32> -> vector<5x32xf32>
    %593 = arith.addf %573, %592 : vector<5x32xf32>
    %594 = arith.addf %341, %593 : vector<5x32xf32>
    %595 = vector.broadcast %22 : vector<1x32xf32> to vector<5x32xf32>
    %596 = arith.addf %594, %595 : vector<5x32xf32>
    %cst_243 = arith.constant dense<0.000000e+00> : vector<5xf32>
    %597 = vector.multi_reduction <add>, %596, %cst_243 [1] : vector<5x32xf32> to vector<5xf32>
    %598 = vector.shape_cast %597 : vector<5xf32> to vector<5x1xf32>
    %cst_244 = arith.constant 3.200000e+01 : f32
    %599 = vector.broadcast %cst_244 : f32 to vector<5x1xf32>
    %600 = arith.divf %598, %599 : vector<5x1xf32>
    %601 = vector.broadcast %600 : vector<5x1xf32> to vector<5x32xf32>
    %602 = arith.subf %596, %601 : vector<5x32xf32>
    %603 = arith.mulf %602, %602 : vector<5x32xf32>
    %cst_245 = arith.constant dense<0.000000e+00> : vector<5xf32>
    %604 = vector.multi_reduction <add>, %603, %cst_245 [1] : vector<5x32xf32> to vector<5xf32>
    %605 = vector.shape_cast %604 : vector<5xf32> to vector<5x1xf32>
    %cst_246 = arith.constant 3.200000e+01 : f32
    %606 = vector.broadcast %cst_246 : f32 to vector<5x1xf32>
    %607 = arith.divf %605, %606 : vector<5x1xf32>
    %608 = vector.broadcast %600 : vector<5x1xf32> to vector<5x32xf32>
    %609 = arith.subf %596, %608 : vector<5x32xf32>
    %cst_247 = arith.constant 9.99999997E-7 : f32
    %610 = vector.broadcast %cst_247 : f32 to vector<5x1xf32>
    %611 = arith.addf %607, %610 : vector<5x1xf32>
    %612 = math.rsqrt %611 : vector<5x1xf32>
    %613 = vector.broadcast %612 : vector<5x1xf32> to vector<5x32xf32>
    %614 = arith.mulf %609, %613 : vector<5x32xf32>
    %615 = vector.broadcast %27 : vector<1x32xf32> to vector<5x32xf32>
    %616 = arith.mulf %614, %615 : vector<5x32xf32>
    %617 = vector.broadcast %26 : vector<1x32xf32> to vector<5x32xf32>
    %618 = arith.addf %616, %617 : vector<5x32xf32>
    %cst_248 = arith.constant dense<0.000000e+00> : vector<5x128xf32>
    %619 = tpu.matmul %618, %29, %cst_248 {dimension_numbers = #tpu.dot_dimension_numbers<[1], [0], [0], [1], [0, 0, 1, 1], [], []>} : vector<5x32xf32>, vector<32x128xf32>, vector<5x128xf32> -> vector<5x128xf32>
    %620 = vector.broadcast %28 : vector<1x128xf32> to vector<5x128xf32>
    %621 = arith.addf %619, %620 : vector<5x128xf32>
    %cst_249 = arith.constant 5.000000e-01 : f32
    %622 = vector.broadcast %cst_249 : f32 to vector<5x128xf32>
    %623 = arith.mulf %622, %621 : vector<5x128xf32>
    %cst_250 = arith.constant 0.707106769 : f32
    %624 = vector.broadcast %cst_250 : f32 to vector<5x128xf32>
    %625 = arith.mulf %621, %624 : vector<5x128xf32>
    %626 = math.erf %625 : vector<5x128xf32>
    %cst_251 = arith.constant 1.000000e+00 : f32
    %627 = vector.broadcast %cst_251 : f32 to vector<5x128xf32>
    %628 = arith.addf %627, %626 : vector<5x128xf32>
    %629 = arith.mulf %623, %628 : vector<5x128xf32>
    %cst_252 = arith.constant dense<0.000000e+00> : vector<5x32xf32>
    %630 = tpu.matmul %629, %31, %cst_252 {dimension_numbers = #tpu.dot_dimension_numbers<[1], [0], [0], [1], [0, 0, 1, 1], [], []>} : vector<5x128xf32>, vector<128x32xf32>, vector<5x32xf32> -> vector<5x32xf32>
    %631 = vector.broadcast %30 : vector<1x32xf32> to vector<5x32xf32>
    %632 = arith.addf %630, %631 : vector<5x32xf32>
    %633 = arith.addf %596, %632 : vector<5x32xf32>
    %cst_253 = arith.constant dense<0.000000e+00> : vector<5xf32>
    %634 = vector.multi_reduction <add>, %487, %cst_253 [1] : vector<5x32xf32> to vector<5xf32>
    %635 = vector.shape_cast %634 : vector<5xf32> to vector<5x1xf32>
    %cst_254 = arith.constant 3.200000e+01 : f32
    %636 = vector.broadcast %cst_254 : f32 to vector<5x1xf32>
    %637 = arith.divf %635, %636 : vector<5x1xf32>
    %638 = vector.broadcast %637 : vector<5x1xf32> to vector<5x32xf32>
    %639 = arith.subf %487, %638 : vector<5x32xf32>
    %640 = arith.mulf %639, %639 : vector<5x32xf32>
    %cst_255 = arith.constant dense<0.000000e+00> : vector<5xf32>
    %641 = vector.multi_reduction <add>, %640, %cst_255 [1] : vector<5x32xf32> to vector<5xf32>
    %642 = vector.shape_cast %641 : vector<5xf32> to vector<5x1xf32>
    %cst_256 = arith.constant 3.200000e+01 : f32
    %643 = vector.broadcast %cst_256 : f32 to vector<5x1xf32>
    %644 = arith.divf %642, %643 : vector<5x1xf32>
    %645 = vector.broadcast %637 : vector<5x1xf32> to vector<5x32xf32>
    %646 = arith.subf %487, %645 : vector<5x32xf32>
    %cst_257 = arith.constant 9.99999997E-7 : f32
    %647 = vector.broadcast %cst_257 : f32 to vector<5x1xf32>
    %648 = arith.addf %644, %647 : vector<5x1xf32>
    %649 = math.rsqrt %648 : vector<5x1xf32>
    %650 = vector.broadcast %649 : vector<5x1xf32> to vector<5x32xf32>
    %651 = arith.mulf %646, %650 : vector<5x32xf32>
    %652 = vector.broadcast %35 : vector<1x32xf32> to vector<5x32xf32>
    %653 = arith.mulf %651, %652 : vector<5x32xf32>
    %654 = vector.broadcast %34 : vector<1x32xf32> to vector<5x32xf32>
    %655 = arith.addf %653, %654 : vector<5x32xf32>
    %656 = vector.extract_strided_slice %655 {offsets = [0, 0], sizes = [1, 32], strides = [1, 1]} : vector<5x32xf32> to vector<1x32xf32>
    %c0_258 = arith.constant 0 : index
    %c0_259 = arith.constant 0 : index
    %c0_260 = arith.constant 0 : index
    %657 = vector.load %arg2[%c0_258, %c0_259, %c0_260] : memref<2x1x4xf32, #tpu.memory_space<vmem>>, vector<1x1x4xf32>
    %658 = vector.shape_cast %657 : vector<1x1x4xf32> to vector<1x4xf32>
    %cst_261 = arith.constant dense<0.000000e+00> : vector<1x64xf32>
    %659 = tpu.matmul %658, %37, %cst_261 {dimension_numbers = #tpu.dot_dimension_numbers<[1], [0], [0], [1], [0, 0, 1, 1], [], []>} : vector<1x4xf32>, vector<4x64xf32>, vector<1x64xf32> -> vector<1x64xf32>
    %660 = arith.addf %659, %36 : vector<1x64xf32>
    %cst_262 = arith.constant 0.000000e+00 : f32
    %661 = vector.broadcast %cst_262 : f32 to vector<1x64xf32>
    %662 = arith.maximumf %660, %661 : vector<1x64xf32>
    %cst_263 = arith.constant dense<0.000000e+00> : vector<1x128xf32>
    %663 = tpu.matmul %662, %39, %cst_263 {dimension_numbers = #tpu.dot_dimension_numbers<[1], [0], [0], [1], [0, 0, 1, 1], [], []>} : vector<1x64xf32>, vector<64x128xf32>, vector<1x128xf32> -> vector<1x128xf32>
    %664 = arith.addf %663, %38 : vector<1x128xf32>
    %cst_264 = arith.constant 0.000000e+00 : f32
    %665 = vector.broadcast %cst_264 : f32 to vector<1x128xf32>
    %666 = arith.maximumf %664, %665 : vector<1x128xf32>
    %667 = vector.extract_strided_slice %9 {offsets = [0, 0], sizes = [32, 160], strides = [1, 1]} : vector<160x160xf32> to vector<32x160xf32>
    %cst_265 = arith.constant dense<0.000000e+00> : vector<1x160xf32>
    %668 = tpu.matmul %656, %667, %cst_265 {dimension_numbers = #tpu.dot_dimension_numbers<[1], [0], [0], [1], [0, 0, 1, 1], [], []>} : vector<1x32xf32>, vector<32x160xf32>, vector<1x160xf32> -> vector<1x160xf32>
    %669 = vector.extract_strided_slice %9 {offsets = [32, 0], sizes = [128, 160], strides = [1, 1]} : vector<160x160xf32> to vector<128x160xf32>
    %cst_266 = arith.constant dense<0.000000e+00> : vector<1x160xf32>
    %670 = tpu.matmul %666, %669, %cst_266 {dimension_numbers = #tpu.dot_dimension_numbers<[1], [0], [0], [1], [0, 0, 1, 1], [], []>} : vector<1x128xf32>, vector<128x160xf32>, vector<1x160xf32> -> vector<1x160xf32>
    %671 = arith.addf %668, %670 : vector<1x160xf32>
    %672 = arith.addf %671, %7 : vector<1x160xf32>
    %cst_267 = arith.constant dense<0.000000e+00> : vector<1x160xf32>
    %673 = tpu.matmul %672, %8, %cst_267 {dimension_numbers = #tpu.dot_dimension_numbers<[1], [0], [0], [1], [0, 0, 1, 1], [], []>} : vector<1x160xf32>, vector<160x160xf32>, vector<1x160xf32> -> vector<1x160xf32>
    %674 = arith.addf %673, %6 : vector<1x160xf32>
    %cst_268 = arith.constant dense<0.000000e+00> : vector<1x512xf32>
    %675 = tpu.matmul %674, %1, %cst_268 {dimension_numbers = #tpu.dot_dimension_numbers<[1], [0], [0], [1], [0, 0, 1, 1], [], []>} : vector<1x160xf32>, vector<160x512xf32>, vector<1x512xf32> -> vector<1x512xf32>
    %676 = arith.addf %675, %0 : vector<1x512xf32>
    %cst_269 = arith.constant 0.000000e+00 : f32
    %677 = vector.broadcast %cst_269 : f32 to vector<1x512xf32>
    %678 = arith.maximumf %676, %677 : vector<1x512xf32>
    %cst_270 = arith.constant dense<0.000000e+00> : vector<1x256xf32>
    %679 = tpu.matmul %678, %3, %cst_270 {dimension_numbers = #tpu.dot_dimension_numbers<[1], [0], [0], [1], [0, 0, 1, 1], [], []>} : vector<1x512xf32>, vector<512x256xf32>, vector<1x256xf32> -> vector<1x256xf32>
    %680 = arith.addf %679, %2 : vector<1x256xf32>
    %cst_271 = arith.constant 0.000000e+00 : f32
    %681 = vector.broadcast %cst_271 : f32 to vector<1x256xf32>
    %682 = arith.maximumf %680, %681 : vector<1x256xf32>
    %cst_272 = arith.constant dense<0.000000e+00> : vector<1x128xf32>
    %683 = tpu.matmul %682, %5, %cst_272 {dimension_numbers = #tpu.dot_dimension_numbers<[1], [0], [0], [1], [0, 0, 1, 1], [], []>} : vector<1x256xf32>, vector<256x128xf32>, vector<1x128xf32> -> vector<1x128xf32>
    %684 = arith.addf %683, %4 : vector<1x128xf32>
    %c0_273 = arith.constant 0 : index
    %c0_274 = arith.constant 0 : index
    %c0_275 = arith.constant 0 : index
    %685 = vector.load %arg47[%c0_273, %c0_274, %c0_275] : memref<2x1x128xf32, #tpu.memory_space<vmem>>, vector<1x1x128xf32>
    %686 = vector.shape_cast %685 : vector<1x1x128xf32> to vector<1x128xf32>
    %687 = vector.shape_cast %684 : vector<1x128xf32> to vector<1x1x128xf32>
    tpu.vector_store %arg47[%c0_273, %c0_274, %c0_275], %687 {strides = array<i32>} : memref<2x1x128xf32, #tpu.memory_space<vmem>>, vector<1x1x128xf32>,
    %cst_276 = arith.constant dense<0.000000e+00> : vector<5xf32>
    %688 = vector.multi_reduction <add>, %633, %cst_276 [1] : vector<5x32xf32> to vector<5xf32>
    %689 = vector.shape_cast %688 : vector<5xf32> to vector<5x1xf32>
    %cst_277 = arith.constant 3.200000e+01 : f32
    %690 = vector.broadcast %cst_277 : f32 to vector<5x1xf32>
    %691 = arith.divf %689, %690 : vector<5x1xf32>
    %692 = vector.broadcast %691 : vector<5x1xf32> to vector<5x32xf32>
    %693 = arith.subf %633, %692 : vector<5x32xf32>
    %694 = arith.mulf %693, %693 : vector<5x32xf32>
    %cst_278 = arith.constant dense<0.000000e+00> : vector<5xf32>
    %695 = vector.multi_reduction <add>, %694, %cst_278 [1] : vector<5x32xf32> to vector<5xf32>
    %696 = vector.shape_cast %695 : vector<5xf32> to vector<5x1xf32>
    %cst_279 = arith.constant 3.200000e+01 : f32
    %697 = vector.broadcast %cst_279 : f32 to vector<5x1xf32>
    %698 = arith.divf %696, %697 : vector<5x1xf32>
    %699 = vector.broadcast %691 : vector<5x1xf32> to vector<5x32xf32>
    %700 = arith.subf %633, %699 : vector<5x32xf32>
    %cst_280 = arith.constant 9.99999997E-7 : f32
    %701 = vector.broadcast %cst_280 : f32 to vector<5x1xf32>
    %702 = arith.addf %698, %701 : vector<5x1xf32>
    %703 = math.rsqrt %702 : vector<5x1xf32>
    %704 = vector.broadcast %703 : vector<5x1xf32> to vector<5x32xf32>
    %705 = arith.mulf %700, %704 : vector<5x32xf32>
    %706 = vector.broadcast %35 : vector<1x32xf32> to vector<5x32xf32>
    %707 = arith.mulf %705, %706 : vector<5x32xf32>
    %708 = vector.broadcast %34 : vector<1x32xf32> to vector<5x32xf32>
    %709 = arith.addf %707, %708 : vector<5x32xf32>
    %710 = vector.extract_strided_slice %709 {offsets = [0, 0], sizes = [1, 32], strides = [1, 1]} : vector<5x32xf32> to vector<1x32xf32>
    %c1_281 = arith.constant 1 : index
    %c0_282 = arith.constant 0 : index
    %c0_283 = arith.constant 0 : index
    %711 = vector.load %arg2[%c1_281, %c0_282, %c0_283] : memref<2x1x4xf32, #tpu.memory_space<vmem>>, vector<1x1x4xf32>
    %712 = vector.shape_cast %711 : vector<1x1x4xf32> to vector<1x4xf32>
    %cst_284 = arith.constant dense<0.000000e+00> : vector<1x64xf32>
    %713 = tpu.matmul %712, %37, %cst_284 {dimension_numbers = #tpu.dot_dimension_numbers<[1], [0], [0], [1], [0, 0, 1, 1], [], []>} : vector<1x4xf32>, vector<4x64xf32>, vector<1x64xf32> -> vector<1x64xf32>
    %714 = arith.addf %713, %36 : vector<1x64xf32>
    %cst_285 = arith.constant 0.000000e+00 : f32
    %715 = vector.broadcast %cst_285 : f32 to vector<1x64xf32>
    %716 = arith.maximumf %714, %715 : vector<1x64xf32>
    %cst_286 = arith.constant dense<0.000000e+00> : vector<1x128xf32>
    %717 = tpu.matmul %716, %39, %cst_286 {dimension_numbers = #tpu.dot_dimension_numbers<[1], [0], [0], [1], [0, 0, 1, 1], [], []>} : vector<1x64xf32>, vector<64x128xf32>, vector<1x128xf32> -> vector<1x128xf32>
    %718 = arith.addf %717, %38 : vector<1x128xf32>
    %cst_287 = arith.constant 0.000000e+00 : f32
    %719 = vector.broadcast %cst_287 : f32 to vector<1x128xf32>
    %720 = arith.maximumf %718, %719 : vector<1x128xf32>
    %721 = vector.extract_strided_slice %9 {offsets = [0, 0], sizes = [32, 160], strides = [1, 1]} : vector<160x160xf32> to vector<32x160xf32>
    %cst_288 = arith.constant dense<0.000000e+00> : vector<1x160xf32>
    %722 = tpu.matmul %710, %721, %cst_288 {dimension_numbers = #tpu.dot_dimension_numbers<[1], [0], [0], [1], [0, 0, 1, 1], [], []>} : vector<1x32xf32>, vector<32x160xf32>, vector<1x160xf32> -> vector<1x160xf32>
    %723 = vector.extract_strided_slice %9 {offsets = [32, 0], sizes = [128, 160], strides = [1, 1]} : vector<160x160xf32> to vector<128x160xf32>
    %cst_289 = arith.constant dense<0.000000e+00> : vector<1x160xf32>
    %724 = tpu.matmul %720, %723, %cst_289 {dimension_numbers = #tpu.dot_dimension_numbers<[1], [0], [0], [1], [0, 0, 1, 1], [], []>} : vector<1x128xf32>, vector<128x160xf32>, vector<1x160xf32> -> vector<1x160xf32>
    %725 = arith.addf %722, %724 : vector<1x160xf32>
    %726 = arith.addf %725, %7 : vector<1x160xf32>
    %cst_290 = arith.constant dense<0.000000e+00> : vector<1x160xf32>
    %727 = tpu.matmul %726, %8, %cst_290 {dimension_numbers = #tpu.dot_dimension_numbers<[1], [0], [0], [1], [0, 0, 1, 1], [], []>} : vector<1x160xf32>, vector<160x160xf32>, vector<1x160xf32> -> vector<1x160xf32>
    %728 = arith.addf %727, %6 : vector<1x160xf32>
    %cst_291 = arith.constant dense<0.000000e+00> : vector<1x512xf32>
    %729 = tpu.matmul %728, %1, %cst_291 {dimension_numbers = #tpu.dot_dimension_numbers<[1], [0], [0], [1], [0, 0, 1, 1], [], []>} : vector<1x160xf32>, vector<160x512xf32>, vector<1x512xf32> -> vector<1x512xf32>
    %730 = arith.addf %729, %0 : vector<1x512xf32>
    %cst_292 = arith.constant 0.000000e+00 : f32
    %731 = vector.broadcast %cst_292 : f32 to vector<1x512xf32>
    %732 = arith.maximumf %730, %731 : vector<1x512xf32>
    %cst_293 = arith.constant dense<0.000000e+00> : vector<1x256xf32>
    %733 = tpu.matmul %732, %3, %cst_293 {dimension_numbers = #tpu.dot_dimension_numbers<[1], [0], [0], [1], [0, 0, 1, 1], [], []>} : vector<1x512xf32>, vector<512x256xf32>, vector<1x256xf32> -> vector<1x256xf32>
    %734 = arith.addf %733, %2 : vector<1x256xf32>
    %cst_294 = arith.constant 0.000000e+00 : f32
    %735 = vector.broadcast %cst_294 : f32 to vector<1x256xf32>
    %736 = arith.maximumf %734, %735 : vector<1x256xf32>
    %cst_295 = arith.constant dense<0.000000e+00> : vector<1x128xf32>
    %737 = tpu.matmul %736, %5, %cst_295 {dimension_numbers = #tpu.dot_dimension_numbers<[1], [0], [0], [1], [0, 0, 1, 1], [], []>} : vector<1x256xf32>, vector<256x128xf32>, vector<1x128xf32> -> vector<1x128xf32>
    %738 = arith.addf %737, %4 : vector<1x128xf32>
    %c1_296 = arith.constant 1 : index
    %c0_297 = arith.constant 0 : index
    %c0_298 = arith.constant 0 : index
    %739 = vector.load %arg47[%c1_296, %c0_297, %c0_298] : memref<2x1x128xf32, #tpu.memory_space<vmem>>, vector<1x1x128xf32>
    %740 = vector.shape_cast %739 : vector<1x1x128xf32> to vector<1x128xf32>
    %741 = vector.shape_cast %738 : vector<1x128xf32> to vector<1x1x128xf32>
    tpu.vector_store %arg47[%c1_296, %c0_297, %c0_298], %741 {strides = array<i32>} : memref<2x1x128xf32, #tpu.memory_space<vmem>>, vector<1x1x128xf32>,
    return
  }
}

</mosaic_0001>

<llo_original>
// kernel: forward.1
$region0: #{forward.1}
  #allocation0 [shape = 'u32[]', space=smem, size = 0x4, offset = 0x4, fixed_abs, tag = 'smem constant byte address 0x4 - core index']
  #allocation1 [shape = 'u32[144,128]{1,0:T(1,128)}', space=vmem, size = 0x12000, scoped, tag = 'internal scratch']
  %s0 = inlined_call_operand.smem [shape: u32[48], index: -1, kind: input, shape index: {}]
  %s1 = sld [smem:[%s0]]
  %s2 = scalar_lea.smem %s0, 1
  %s3 = sld [smem:[%s2]]
  %s4 = scalar_lea.smem %s0, 2
  %s5 = sld [smem:[%s4]]
  %s6 = scalar_lea.smem %s0, 3
  %s7 = sld [smem:[%s6]]
  %s8 = scalar_lea.smem %s0, 4
  %s9 = sld [smem:[%s8]]
  %s10 = scalar_lea.smem %s0, 5
  %s11 = sld [smem:[%s10]]
  %s12 = scalar_lea.smem %s0, 6
  %s13 = sld [smem:[%s12]]
  %s14 = scalar_lea.smem %s0, 7
  %s15 = sld [smem:[%s14]]
  %s16 = scalar_lea.smem %s0, 8
  %s17 = sld [smem:[%s16]]
  %s18 = scalar_lea.smem %s0, 9
  %s19 = sld [smem:[%s18]]
  %s20 = scalar_lea.smem %s0, 10
  %s21 = sld [smem:[%s20]]
  %s22 = scalar_lea.smem %s0, 11
  %s23 = sld [smem:[%s22]]
  %s24 = scalar_lea.smem %s0, 12
  %s25 = sld [smem:[%s24]]
  %s26 = scalar_lea.smem %s0, 13
  %s27 = sld [smem:[%s26]]
  %s28 = scalar_lea.smem %s0, 14
  %s29 = sld [smem:[%s28]]
  %s30 = scalar_lea.smem %s0, 15
  %s31 = sld [smem:[%s30]]
  %s32 = scalar_lea.smem %s0, 16
  %s33 = sld [smem:[%s32]]
  %s34 = scalar_lea.smem %s0, 17
  %s35 = sld [smem:[%s34]]
  %s36 = scalar_lea.smem %s0, 18
  %s37 = sld [smem:[%s36]]
  %s38 = scalar_lea.smem %s0, 19
  %s39 = sld [smem:[%s38]]
  %s40 = scalar_lea.smem %s0, 20
  %s41 = sld [smem:[%s40]]
  %s42 = scalar_lea.smem %s0, 21
  %s43 = sld [smem:[%s42]]
  %s44 = scalar_lea.smem %s0, 22
  %s45 = sld [smem:[%s44]]
  %s46 = scalar_lea.smem %s0, 23
  %s47 = sld [smem:[%s46]]
  %s48 = scalar_lea.smem %s0, 24
  %s49 = sld [smem:[%s48]]
  %s50 = scalar_lea.smem %s0, 25
  %s51 = sld [smem:[%s50]]
  %s52 = scalar_lea.smem %s0, 26
  %s53 = sld [smem:[%s52]]
  %s54 = scalar_lea.smem %s0, 27
  %s55 = sld [smem:[%s54]]
  %s56 = scalar_lea.smem %s0, 28
  %s57 = sld [smem:[%s56]]
  %s58 = scalar_lea.smem %s0, 29
  %s59 = sld [smem:[%s58]]
  %s60 = scalar_lea.smem %s0, 30
  %s61 = sld [smem:[%s60]]
  %s62 = scalar_lea.smem %s0, 31
  %s63 = sld [smem:[%s62]]
  %s64 = scalar_lea.smem %s0, 32
  %s65 = sld [smem:[%s64]]
  %s66 = scalar_lea.smem %s0, 33
  %s67 = sld [smem:[%s66]]
  %s68 = scalar_lea.smem %s0, 34
  %s69 = sld [smem:[%s68]]
  %s70 = scalar_lea.smem %s0, 35
  %s71 = sld [smem:[%s70]]
  %s72 = scalar_lea.smem %s0, 36
  %s73 = sld [smem:[%s72]]
  %s74 = scalar_lea.smem %s0, 37
  %s75 = sld [smem:[%s74]]
  %s76 = scalar_lea.smem %s0, 38
  %s77 = sld [smem:[%s76]]
  %s78 = scalar_lea.smem %s0, 39
  %s79 = sld [smem:[%s78]]
  %s80 = scalar_lea.smem %s0, 40
  %s81 = sld [smem:[%s80]]
  %s82 = scalar_lea.smem %s0, 41
  %s83 = sld [smem:[%s82]]
  %s84 = scalar_lea.smem %s0, 42
  %s85 = sld [smem:[%s84]]
  %s86 = scalar_lea.smem %s0, 43
  %s87 = sld [smem:[%s86]]
  %s88 = scalar_lea.smem %s0, 44
  %s89 = sld [smem:[%s88]]
  %s90 = scalar_lea.smem %s0, 45
  %s91 = sld [smem:[%s90]]
  %s92 = scalar_lea.smem %s0, 46
  %s93 = sld [smem:[%s92]]
  %s94 = scalar_lea.smem %s0, 47
  %s95 = sld [smem:[%s94]]
  %s96 = sld [smem:[#allocation0]]
  $region338: #{forward.1} parent=0
    _
  %s98 = ssub.s32 1, %s96
  %s99 = scalar_select 0, %s98, %s96
  $region1: #{forward.1} parent=0
    #allocation2 [shape = 'u8[1024]{0}', space=vmem, size = 0x400, scoped, tag = 'input window, operand 6, single buffered']
    #allocation3 [shape = 's32[1]{0}', space=sflag, size = 0x4, scoped, tag = 'scoped memory for forward.1']
    #allocation4 [shape = 's32[1]{0}', space=sflag, size = 0x4, scoped, tag = 'scoped memory for forward.1']
    #allocation5 [shape = 'u8[512]{0}', space=vmem, size = 0x400, scoped, tag = 'input window, operand 8, single buffered']
    #allocation6 [shape = 's32[1]{0}', space=sflag, size = 0x4, scoped, tag = 'scoped memory for forward.1']
    #allocation7 [shape = 'u8[131072]{0}', space=vmem, size = 0x20000, scoped, tag = 'input window, operand 9, single buffered']
    #allocation8 [shape = 'u8[1024]{0}', space=vmem, size = 0x400, scoped, tag = 'input window, operand 10, single buffered']
    #allocation9 [shape = 's32[1]{0}', space=sflag, size = 0x4, scoped, tag = 'scoped memory for forward.1']
    #allocation10 [shape = 'u8[1024]{0}', space=vmem, size = 0x400, scoped, tag = 'input window, operand 11, single buffered']
    #allocation11 [shape = 'u8[163840]{0}', space=vmem, size = 0x28000, scoped, tag = 'input window, operand 12, single buffered']
    #allocation12 [shape = 's32[1]{0}', space=sflag, size = 0x4, scoped, tag = 'scoped memory for forward.1']
    #allocation13 [shape = 'u8[163840]{0}', space=vmem, size = 0x28000, scoped, tag = 'input window, operand 13, single buffered']
    #allocation14 [shape = 'u8[512]{0}', space=vmem, size = 0x400, scoped, tag = 'input window, operand 14, single buffered']
    #allocation15 [shape = 's32[1]{0}', space=sflag, size = 0x4, scoped, tag = 'scoped memory for forward.1']
    #allocation16 [shape = 'u8[512]{0}', space=vmem, size = 0x400, scoped, tag = 'input window, operand 15, single buffered']
    #allocation17 [shape = 'u8[512]{0}', space=vmem, size = 0x400, scoped, tag = 'input window, operand 16, single buffered']
    #allocation18 [shape = 's32[1]{0}', space=sflag, size = 0x4, scoped, tag = 'scoped memory for forward.1']
    #allocation19 [shape = 'u8[512]{0}', space=vmem, size = 0x400, scoped, tag = 'input window, operand 17, single buffered']
    #allocation20 [shape = 'u8[512]{0}', space=vmem, size = 0x400, scoped, tag = 'input window, operand 18, single buffered']
    #allocation21 [shape = 's32[1]{0}', space=sflag, size = 0x4, scoped, tag = 'scoped memory for forward.1']
    #allocation22 [shape = 'u8[512]{0}', space=vmem, size = 0x400, scoped, tag = 'input window, operand 19, single buffered']
    #allocation23 [shape = 'u8[512]{0}', space=vmem, size = 0x400, scoped, tag = 'input window, operand 20, single buffered']
    #allocation24 [shape = 's32[1]{0}', space=sflag, size = 0x4, scoped, tag = 'scoped memory for forward.1']
    #allocation25 [shape = 'u8[16384]{0}', space=vmem, size = 0x4000, scoped, tag = 'input window, operand 21, single buffered']
    #allocation26 [shape = 'u8[512]{0}', space=vmem, size = 0x400, scoped, tag = 'input window, operand 22, single buffered']
    #allocation27 [shape = 's32[1]{0}', space=sflag, size = 0x4, scoped, tag = 'scoped memory for forward.1']
    #allocation28 [shape = 'u8[16384]{0}', space=vmem, size = 0x4000, scoped, tag = 'input window, operand 24, single buffered']
    #allocation29 [shape = 'u8[16384]{0}', space=vmem, size = 0x4000, scoped, tag = 'input window, operand 25, single buffered']
    #allocation30 [shape = 's32[1]{0}', space=sflag, size = 0x4, scoped, tag = 'scoped memory for forward.1']
    #allocation31 [shape = 'u8[512]{0}', space=vmem, size = 0x400, scoped, tag = 'input window, operand 26, single buffered']
    #allocation32 [shape = 'u8[512]{0}', space=vmem, size = 0x400, scoped, tag = 'input window, operand 27, single buffered']
    #allocation33 [shape = 's32[1]{0}', space=sflag, size = 0x4, scoped, tag = 'scoped memory for forward.1']
    #allocation34 [shape = 'u8[512]{0}', space=vmem, size = 0x400, scoped, tag = 'input window, operand 28, single buffered']
    #allocation35 [shape = 'u8[512]{0}', space=vmem, size = 0x400, scoped, tag = 'input window, operand 29, single buffered']
    #allocation36 [shape = 's32[1]{0}', space=sflag, size = 0x4, scoped, tag = 'scoped memory for forward.1']
    #allocation37 [shape = 'u8[512]{0}', space=vmem, size = 0x400, scoped, tag = 'input window, operand 30, single buffered']
    #allocation38 [shape = 'u8[512]{0}', space=vmem, size = 0x400, scoped, tag = 'input window, operand 31, single buffered']
    #allocation39 [shape = 's32[1]{0}', space=sflag, size = 0x4, scoped, tag = 'scoped memory for forward.1']
    #allocation40 [shape = 'u8[512]{0}', space=vmem, size = 0x400, scoped, tag = 'input window, operand 32, single buffered']
    #allocation41 [shape = 'u8[16384]{0}', space=vmem, size = 0x4000, scoped, tag = 'input window, operand 33, single buffered']
    #allocation42 [shape = 's32[1]{0}', space=sflag, size = 0x4, scoped, tag = 'scoped memory for forward.1']
    #allocation43 [shape = 'u8[512]{0}', space=vmem, size = 0x400, scoped, tag = 'input window, operand 34, single buffered']
    #allocation44 [shape = 'u8[16384]{0}', space=vmem, size = 0x4000, scoped, tag = 'input window, operand 36, single buffered']
    #allocation45 [shape = 's32[1]{0}', space=sflag, size = 0x4, scoped, tag = 'scoped memory for forward.1']
    #allocation46 [shape = 'u8[16384]{0}', space=vmem, size = 0x4000, scoped, tag = 'input window, operand 37, single buffered']
    #allocation47 [shape = 'u8[512]{0}', space=vmem, size = 0x400, scoped, tag = 'input window, operand 38, single buffered']
    #allocation48 [shape = 's32[1]{0}', space=sflag, size = 0x4, scoped, tag = 'scoped memory for forward.1']
    #allocation49 [shape = 'u8[512]{0}', space=vmem, size = 0x400, scoped, tag = 'input window, operand 39, single buffered']
    #allocation50 [shape = 'u8[512]{0}', space=vmem, size = 0x400, scoped, tag = 'input window, operand 40, single buffered']
    #allocation51 [shape = 's32[1]{0}', space=sflag, size = 0x4, scoped, tag = 'scoped memory for forward.1']
    #allocation52 [shape = 'u8[2048]{0}', space=vmem, size = 0x800, scoped, tag = 'input window, operand 41, single buffered']
    #allocation53 [shape = 'u8[512]{0}', space=vmem, size = 0x400, scoped, tag = 'input window, operand 42, single buffered']
    #allocation54 [shape = 's32[1]{0}', space=sflag, size = 0x4, scoped, tag = 'scoped memory for forward.1']
    #allocation55 [shape = 'u8[32768]{0}', space=vmem, size = 0x8000, scoped, tag = 'input window, operand 43, single buffered']
    #allocation56 [shape = 'u8[1024]{0}', space=vmem, size = 0x400, scoped, tag = 'output window, operand 0, single buffered']
    %100 = vsyncpa [#allocation3], 0
    %101 = vsyncpa [#allocation6], 0
    %102 = vsyncpa [#allocation9], 0
    %103 = vsyncpa [#allocation12], 0
    %104 = vsyncpa [#allocation15], 0
    %105 = vsyncpa [#allocation18], 0
    %106 = vsyncpa [#allocation21], 0
    %107 = vsyncpa [#allocation24], 0
    %108 = vsyncpa [#allocation27], 0
    %109 = vsyncpa [#allocation30], 0
    %110 = vsyncpa [#allocation33], 0
    %111 = vsyncpa [#allocation36], 0
    %112 = vsyncpa [#allocation39], 0
    %113 = vsyncpa [#allocation42], 0
    %114 = vsyncpa [#allocation45], 0
    %115 = vsyncpa [#allocation48], 0
    %116 = vsyncpa [#allocation51], 0
    %117 = vsyncpa [#allocation54], 0
    %118 = vsyncpa [#allocation4], 0
    // Predicated region
    $region2: #{forward.1} parent=1 // pred_check
      _
    $region3: #{forward.1} parent=1 // pred_check_branch
      %120 = sbr.rel (0) target = $region5
    $region4: #{forward.1} parent=1 // pred_region
      _
    $region5: #{forward.1} parent=1 // pred_fallthru
      _
    // Predicated region
    $region6: #{forward.1} parent=1 // pred_check
      _
    $region7: #{forward.1} parent=1 // pred_check_branch
      %122 = sbr.rel (0) target = $region9
    $region8: #{forward.1} parent=1 // pred_region
      _
    $region9: #{forward.1} parent=1 // pred_fallthru
      _
    // Predicated region
    $region10: #{forward.1} parent=1 // pred_check
      _
    $region11: #{forward.1} parent=1 // pred_check_branch
      %124 = sbr.rel (0) target = $region13
    $region12: #{forward.1} parent=1 // pred_region
      _
    $region13: #{forward.1} parent=1 // pred_fallthru
      _
    // Predicated region
    $region14: #{forward.1} parent=1 // pred_check
      _
    $region15: #{forward.1} parent=1 // pred_check_branch
      %126 = sbr.rel (0) target = $region17
    $region16: #{forward.1} parent=1 // pred_region
      _
    $region17: #{forward.1} parent=1 // pred_fallthru
      _
    // Predicated region
    $region18: #{forward.1} parent=1 // pred_check
      _
    $region19: #{forward.1} parent=1 // pred_check_branch
      %128 = sbr.rel (0) target = $region21
    $region20: #{forward.1} parent=1 // pred_region
      _
    $region21: #{forward.1} parent=1 // pred_fallthru
      _
    // Predicated region
    $region22: #{forward.1} parent=1 // pred_check
      _
    $region23: #{forward.1} parent=1 // pred_check_branch
      %130 = sbr.rel (0) target = $region25
    $region24: #{forward.1} parent=1 // pred_region
      _
    $region25: #{forward.1} parent=1 // pred_fallthru
      _
    // Predicated region
    $region26: #{forward.1} parent=1 // pred_check
      _
    $region27: #{forward.1} parent=1 // pred_check_branch
      %132 = sbr.rel (0) target = $region29
    $region28: #{forward.1} parent=1 // pred_region
      %s134 = ssub.s32 32, 32
      %135 = vsyncadd [#allocation3], %s134
      %s137 = sshll.u32 [#allocation2], 4
      %s138 = int_to_ptr.vmem [resolvable:$true] %s137
      %140 = dma.hbm_to_vmem [thread:$0]  %s13, 32, %s138, [#allocation3]
    $region29: #{forward.1} parent=1 // pred_fallthru
      _
    // Predicated region
    $region30: #{forward.1} parent=1 // pred_check
      _
    $region31: #{forward.1} parent=1 // pred_check_branch
      %142 = sbr.rel (0) target = $region33
    $region32: #{forward.1} parent=1 // pred_region
      _
    $region33: #{forward.1} parent=1 // pred_fallthru
      _
    // Predicated region
    $region34: #{forward.1} parent=1 // pred_check
      _
    $region35: #{forward.1} parent=1 // pred_check_branch
      %144 = sbr.rel (0) target = $region37
    $region36: #{forward.1} parent=1 // pred_region
      %s146 = ssub.s32 16, 16
      %147 = vsyncadd [#allocation6], %s146
      %s149 = sshll.u32 [#allocation5], 4
      %s150 = int_to_ptr.vmem [resolvable:$true] %s149
      %152 = dma.hbm_to_vmem [thread:$0]  %s17, 16, %s150, [#allocation6]
    $region37: #{forward.1} parent=1 // pred_fallthru
      _
    // Predicated region
    $region38: #{forward.1} parent=1 // pred_check
      _
    $region39: #{forward.1} parent=1 // pred_check_branch
      %154 = sbr.rel (0) target = $region41
    $region40: #{forward.1} parent=1 // pred_region
      %s156 = ssub.s32 4096, 4096
      %157 = vsyncadd [#allocation6], %s156
      %s158 = sshll.u32 [#allocation7], 4
      %s159 = int_to_ptr.vmem [resolvable:$true] %s158
      %164 = dma.hbm_to_vmem [thread:$0]  %s19, 4096, %s159, [#allocation6], 128, 128, 8
    $region41: #{forward.1} parent=1 // pred_fallthru
      _
    // Predicated region
    $region42: #{forward.1} parent=1 // pred_check
      _
    $region43: #{forward.1} parent=1 // pred_check_branch
      %166 = sbr.rel (0) target = $region45
    $region44: #{forward.1} parent=1 // pred_region
      %s168 = ssub.s32 32, 32
      %169 = vsyncadd [#allocation9], %s168
      %s171 = sshll.u32 [#allocation8], 4
      %s172 = int_to_ptr.vmem [resolvable:$true] %s171
      %174 = dma.hbm_to_vmem [thread:$0]  %s21, 32, %s172, [#allocation9]
    $region45: #{forward.1} parent=1 // pred_fallthru
      _
    // Predicated region
    $region46: #{forward.1} parent=1 // pred_check
      _
    $region47: #{forward.1} parent=1 // pred_check_branch
      %176 = sbr.rel (0) target = $region49
    $region48: #{forward.1} parent=1 // pred_region
      %s178 = ssub.s32 32, 32
      %179 = vsyncadd [#allocation9], %s178
      %s181 = sshll.u32 [#allocation10], 4
      %s182 = int_to_ptr.vmem [resolvable:$true] %s181
      %184 = dma.hbm_to_vmem [thread:$0]  %s23, 32, %s182, [#allocation9]
    $region49: #{forward.1} parent=1 // pred_fallthru
      _
    // Predicated region
    $region50: #{forward.1} parent=1 // pred_check
      _
    $region51: #{forward.1} parent=1 // pred_check_branch
      %186 = sbr.rel (0) target = $region53
    $region52: #{forward.1} parent=1 // pred_region
      %s188 = ssub.s32 5120, 5120
      %189 = vsyncadd [#allocation12], %s188
      %s190 = sshll.u32 [#allocation11], 4
      %s191 = int_to_ptr.vmem [resolvable:$true] %s190
      %196 = dma.hbm_to_vmem [thread:$0]  %s25, 5120, %s191, [#allocation12], 256, 256, 16
    $region53: #{forward.1} parent=1 // pred_fallthru
      _
    // Predicated region
    $region54: #{forward.1} parent=1 // pred_check
      _
    $region55: #{forward.1} parent=1 // pred_check_branch
      %198 = sbr.rel (0) target = $region57
    $region56: #{forward.1} parent=1 // pred_region
      %s200 = ssub.s32 5120, 5120
      %201 = vsyncadd [#allocation12], %s200
      %s202 = sshll.u32 [#allocation13], 4
      %s203 = int_to_ptr.vmem [resolvable:$true] %s202
      %208 = dma.hbm_to_vmem [thread:$0]  %s27, 5120, %s203, [#allocation12], 256, 256, 16
    $region57: #{forward.1} parent=1 // pred_fallthru
      _
    // Predicated region
    $region58: #{forward.1} parent=1 // pred_check
      _
    $region59: #{forward.1} parent=1 // pred_check_branch
      %210 = sbr.rel (0) target = $region61
    $region60: #{forward.1} parent=1 // pred_region
      %s212 = ssub.s32 16, 16
      %213 = vsyncadd [#allocation15], %s212
      %s215 = sshll.u32 [#allocation14], 4
      %s216 = int_to_ptr.vmem [resolvable:$true] %s215
      %218 = dma.hbm_to_vmem [thread:$0]  %s29, 16, %s216, [#allocation15]
    $region61: #{forward.1} parent=1 // pred_fallthru
      _
    // Predicated region
    $region62: #{forward.1} parent=1 // pred_check
      _
    $region63: #{forward.1} parent=1 // pred_check_branch
      %220 = sbr.rel (0) target = $region65
    $region64: #{forward.1} parent=1 // pred_region
      %s222 = ssub.s32 16, 16
      %223 = vsyncadd [#allocation15], %s222
      %s225 = sshll.u32 [#allocation16], 4
      %s226 = int_to_ptr.vmem [resolvable:$true] %s225
      %228 = dma.hbm_to_vmem [thread:$0]  %s31, 16, %s226, [#allocation15]
    $region65: #{forward.1} parent=1 // pred_fallthru
      _
    // Predicated region
    $region66: #{forward.1} parent=1 // pred_check
      _
    $region67: #{forward.1} parent=1 // pred_check_branch
      %230 = sbr.rel (0) target = $region69
    $region68: #{forward.1} parent=1 // pred_region
      %s232 = ssub.s32 16, 16
      %233 = vsyncadd [#allocation18], %s232
      %s235 = sshll.u32 [#allocation17], 4
      %s236 = int_to_ptr.vmem [resolvable:$true] %s235
      %238 = dma.hbm_to_vmem [thread:$0]  %s33, 16, %s236, [#allocation18]
    $region69: #{forward.1} parent=1 // pred_fallthru
      _
    // Predicated region
    $region70: #{forward.1} parent=1 // pred_check
      _
    $region71: #{forward.1} parent=1 // pred_check_branch
      %240 = sbr.rel (0) target = $region73
    $region72: #{forward.1} parent=1 // pred_region
      %s242 = ssub.s32 16, 16
      %243 = vsyncadd [#allocation18], %s242
      %s245 = sshll.u32 [#allocation19], 4
      %s246 = int_to_ptr.vmem [resolvable:$true] %s245
      %248 = dma.hbm_to_vmem [thread:$0]  %s35, 16, %s246, [#allocation18]
    $region73: #{forward.1} parent=1 // pred_fallthru
      _
    // Predicated region
    $region74: #{forward.1} parent=1 // pred_check
      _
    $region75: #{forward.1} parent=1 // pred_check_branch
      %250 = sbr.rel (0) target = $region77
    $region76: #{forward.1} parent=1 // pred_region
      %s252 = ssub.s32 16, 16
      %253 = vsyncadd [#allocation21], %s252
      %s255 = sshll.u32 [#allocation20], 4
      %s256 = int_to_ptr.vmem [resolvable:$true] %s255
      %258 = dma.hbm_to_vmem [thread:$0]  %s37, 16, %s256, [#allocation21]
    $region77: #{forward.1} parent=1 // pred_fallthru
      _
    // Predicated region
    $region78: #{forward.1} parent=1 // pred_check
      _
    $region79: #{forward.1} parent=1 // pred_check_branch
      %260 = sbr.rel (0) target = $region81
    $region80: #{forward.1} parent=1 // pred_region
      %s262 = ssub.s32 16, 16
      %263 = vsyncadd [#allocation21], %s262
      %s265 = sshll.u32 [#allocation22], 4
      %s266 = int_to_ptr.vmem [resolvable:$true] %s265
      %268 = dma.hbm_to_vmem [thread:$0]  %s39, 16, %s266, [#allocation21]
    $region81: #{forward.1} parent=1 // pred_fallthru
      _
    // Predicated region
    $region82: #{forward.1} parent=1 // pred_check
      _
    $region83: #{forward.1} parent=1 // pred_check_branch
      %270 = sbr.rel (0) target = $region85
    $region84: #{forward.1} parent=1 // pred_region
      %s272 = ssub.s32 16, 16
      %273 = vsyncadd [#allocation24], %s272
      %s275 = sshll.u32 [#allocation23], 4
      %s276 = int_to_ptr.vmem [resolvable:$true] %s275
      %278 = dma.hbm_to_vmem [thread:$0]  %s41, 16, %s276, [#allocation24]
    $region85: #{forward.1} parent=1 // pred_fallthru
      _
    // Predicated region
    $region86: #{forward.1} parent=1 // pred_check
      _
    $region87: #{forward.1} parent=1 // pred_check_branch
      %280 = sbr.rel (0) target = $region89
    $region88: #{forward.1} parent=1 // pred_region
      %s282 = ssub.s32 512, 512
      %283 = vsyncadd [#allocation24], %s282
      %s284 = sshll.u32 [#allocation25], 4
      %s285 = int_to_ptr.vmem [resolvable:$true] %s284
      %290 = dma.hbm_to_vmem [thread:$0]  %s43, 512, %s285, [#allocation24], 128, 128, 8
    $region89: #{forward.1} parent=1 // pred_fallthru
      _
    // Predicated region
    $region90: #{forward.1} parent=1 // pred_check
      _
    $region91: #{forward.1} parent=1 // pred_check_branch
      %292 = sbr.rel (0) target = $region93
    $region92: #{forward.1} parent=1 // pred_region
      %s294 = ssub.s32 16, 16
      %295 = vsyncadd [#allocation27], %s294
      %s297 = sshll.u32 [#allocation26], 4
      %s298 = int_to_ptr.vmem [resolvable:$true] %s297
      %300 = dma.hbm_to_vmem [thread:$0]  %s45, 16, %s298, [#allocation27]
    $region93: #{forward.1} parent=1 // pred_fallthru
      _
    // Predicated region
    $region94: #{forward.1} parent=1 // pred_check
      _
    $region95: #{forward.1} parent=1 // pred_check_branch
      %302 = sbr.rel (0) target = $region97
    $region96: #{forward.1} parent=1 // pred_region
      _
    $region97: #{forward.1} parent=1 // pred_fallthru
      _
    // Predicated region
    $region98: #{forward.1} parent=1 // pred_check
      _
    $region99: #{forward.1} parent=1 // pred_check_branch
      %304 = sbr.rel (0) target = $region101
    $region100: #{forward.1} parent=1 // pred_region
      %s306 = ssub.s32 512, 512
      %307 = vsyncadd [#allocation27], %s306
      %s308 = sshll.u32 [#allocation28], 4
      %s309 = int_to_ptr.vmem [resolvable:$true] %s308
      %314 = dma.hbm_to_vmem [thread:$0]  %s49, 512, %s309, [#allocation27], 128, 128, 8
    $region101: #{forward.1} parent=1 // pred_fallthru
      _
    // Predicated region
    $region102: #{forward.1} parent=1 // pred_check
      _
    $region103: #{forward.1} parent=1 // pred_check_branch
      %316 = sbr.rel (0) target = $region105
    $region104: #{forward.1} parent=1 // pred_region
      %s318 = ssub.s32 512, 512
      %319 = vsyncadd [#allocation30], %s318
      %s320 = sshll.u32 [#allocation29], 4
      %s321 = int_to_ptr.vmem [resolvable:$true] %s320
      %326 = dma.hbm_to_vmem [thread:$0]  %s51, 512, %s321, [#allocation30], 128, 128, 8
    $region105: #{forward.1} parent=1 // pred_fallthru
      _
    // Predicated region
    $region106: #{forward.1} parent=1 // pred_check
      _
    $region107: #{forward.1} parent=1 // pred_check_branch
      %328 = sbr.rel (0) target = $region109
    $region108: #{forward.1} parent=1 // pred_region
      %s330 = ssub.s32 16, 16
      %331 = vsyncadd [#allocation30], %s330
      %s333 = sshll.u32 [#allocation31], 4
      %s334 = int_to_ptr.vmem [resolvable:$true] %s333
      %336 = dma.hbm_to_vmem [thread:$0]  %s53, 16, %s334, [#allocation30]
    $region109: #{forward.1} parent=1 // pred_fallthru
      _
    // Predicated region
    $region110: #{forward.1} parent=1 // pred_check
      _
    $region111: #{forward.1} parent=1 // pred_check_branch
      %338 = sbr.rel (0) target = $region113
    $region112: #{forward.1} parent=1 // pred_region
      %s340 = ssub.s32 16, 16
      %341 = vsyncadd [#allocation33], %s340
      %s343 = sshll.u32 [#allocation32], 4
      %s344 = int_to_ptr.vmem [resolvable:$true] %s343
      %346 = dma.hbm_to_vmem [thread:$0]  %s55, 16, %s344, [#allocation33]
    $region113: #{forward.1} parent=1 // pred_fallthru
      _
    // Predicated region
    $region114: #{forward.1} parent=1 // pred_check
      _
    $region115: #{forward.1} parent=1 // pred_check_branch
      %348 = sbr.rel (0) target = $region117
    $region116: #{forward.1} parent=1 // pred_region
      %s350 = ssub.s32 16, 16
      %351 = vsyncadd [#allocation33], %s350
      %s353 = sshll.u32 [#allocation34], 4
      %s354 = int_to_ptr.vmem [resolvable:$true] %s353
      %356 = dma.hbm_to_vmem [thread:$0]  %s57, 16, %s354, [#allocation33]
    $region117: #{forward.1} parent=1 // pred_fallthru
      _
    // Predicated region
    $region118: #{forward.1} parent=1 // pred_check
      _
    $region119: #{forward.1} parent=1 // pred_check_branch
      %358 = sbr.rel (0) target = $region121
    $region120: #{forward.1} parent=1 // pred_region
      %s360 = ssub.s32 16, 16
      %361 = vsyncadd [#allocation36], %s360
      %s363 = sshll.u32 [#allocation35], 4
      %s364 = int_to_ptr.vmem [resolvable:$true] %s363
      %366 = dma.hbm_to_vmem [thread:$0]  %s59, 16, %s364, [#allocation36]
    $region121: #{forward.1} parent=1 // pred_fallthru
      _
    // Predicated region
    $region122: #{forward.1} parent=1 // pred_check
      _
    $region123: #{forward.1} parent=1 // pred_check_branch
      %368 = sbr.rel (0) target = $region125
    $region124: #{forward.1} parent=1 // pred_region
      %s370 = ssub.s32 16, 16
      %371 = vsyncadd [#allocation36], %s370
      %s373 = sshll.u32 [#allocation37], 4
      %s374 = int_to_ptr.vmem [resolvable:$true] %s373
      %376 = dma.hbm_to_vmem [thread:$0]  %s61, 16, %s374, [#allocation36]
    $region125: #{forward.1} parent=1 // pred_fallthru
      _
    // Predicated region
    $region126: #{forward.1} parent=1 // pred_check
      _
    $region127: #{forward.1} parent=1 // pred_check_branch
      %378 = sbr.rel (0) target = $region129
    $region128: #{forward.1} parent=1 // pred_region
      %s380 = ssub.s32 16, 16
      %381 = vsyncadd [#allocation39], %s380
      %s383 = sshll.u32 [#allocation38], 4
      %s384 = int_to_ptr.vmem [resolvable:$true] %s383
      %386 = dma.hbm_to_vmem [thread:$0]  %s63, 16, %s384, [#allocation39]
    $region129: #{forward.1} parent=1 // pred_fallthru
      _
    // Predicated region
    $region130: #{forward.1} parent=1 // pred_check
      _
    $region131: #{forward.1} parent=1 // pred_check_branch
      %388 = sbr.rel (0) target = $region133
    $region132: #{forward.1} parent=1 // pred_region
      %s390 = ssub.s32 16, 16
      %391 = vsyncadd [#allocation39], %s390
      %s393 = sshll.u32 [#allocation40], 4
      %s394 = int_to_ptr.vmem [resolvable:$true] %s393
      %396 = dma.hbm_to_vmem [thread:$0]  %s65, 16, %s394, [#allocation39]
    $region133: #{forward.1} parent=1 // pred_fallthru
      _
    // Predicated region
    $region134: #{forward.1} parent=1 // pred_check
      _
    $region135: #{forward.1} parent=1 // pred_check_branch
      %398 = sbr.rel (0) target = $region137
    $region136: #{forward.1} parent=1 // pred_region
      %s400 = ssub.s32 512, 512
      %401 = vsyncadd [#allocation42], %s400
      %s402 = sshll.u32 [#allocation41], 4
      %s403 = int_to_ptr.vmem [resolvable:$true] %s402
      %408 = dma.hbm_to_vmem [thread:$0]  %s67, 512, %s403, [#allocation42], 128, 128, 8
    $region137: #{forward.1} parent=1 // pred_fallthru
      _
    // Predicated region
    $region138: #{forward.1} parent=1 // pred_check
      _
    $region139: #{forward.1} parent=1 // pred_check_branch
      %410 = sbr.rel (0) target = $region141
    $region140: #{forward.1} parent=1 // pred_region
      %s412 = ssub.s32 16, 16
      %413 = vsyncadd [#allocation42], %s412
      %s415 = sshll.u32 [#allocation43], 4
      %s416 = int_to_ptr.vmem [resolvable:$true] %s415
      %418 = dma.hbm_to_vmem [thread:$0]  %s69, 16, %s416, [#allocation42]
    $region141: #{forward.1} parent=1 // pred_fallthru
      _
    // Predicated region
    $region142: #{forward.1} parent=1 // pred_check
      _
    $region143: #{forward.1} parent=1 // pred_check_branch
      %420 = sbr.rel (0) target = $region145
    $region144: #{forward.1} parent=1 // pred_region
      _
    $region145: #{forward.1} parent=1 // pred_fallthru
      _
    // Predicated region
    $region146: #{forward.1} parent=1 // pred_check
      _
    $region147: #{forward.1} parent=1 // pred_check_branch
      %422 = sbr.rel (0) target = $region149
    $region148: #{forward.1} parent=1 // pred_region
      %s424 = ssub.s32 512, 512
      %425 = vsyncadd [#allocation45], %s424
      %s426 = sshll.u32 [#allocation44], 4
      %s427 = int_to_ptr.vmem [resolvable:$true] %s426
      %432 = dma.hbm_to_vmem [thread:$0]  %s73, 512, %s427, [#allocation45], 128, 128, 8
    $region149: #{forward.1} parent=1 // pred_fallthru
      _
    // Predicated region
    $region150: #{forward.1} parent=1 // pred_check
      _
    $region151: #{forward.1} parent=1 // pred_check_branch
      %434 = sbr.rel (0) target = $region153
    $region152: #{forward.1} parent=1 // pred_region
      %s436 = ssub.s32 512, 512
      %437 = vsyncadd [#allocation45], %s436
      %s438 = sshll.u32 [#allocation46], 4
      %s439 = int_to_ptr.vmem [resolvable:$true] %s438
      %444 = dma.hbm_to_vmem [thread:$0]  %s75, 512, %s439, [#allocation45], 128, 128, 8
    $region153: #{forward.1} parent=1 // pred_fallthru
      _
    // Predicated region
    $region154: #{forward.1} parent=1 // pred_check
      _
    $region155: #{forward.1} parent=1 // pred_check_branch
      %446 = sbr.rel (0) target = $region157
    $region156: #{forward.1} parent=1 // pred_region
      %s448 = ssub.s32 16, 16
      %449 = vsyncadd [#allocation48], %s448
      %s451 = sshll.u32 [#allocation47], 4
      %s452 = int_to_ptr.vmem [resolvable:$true] %s451
      %454 = dma.hbm_to_vmem [thread:$0]  %s77, 16, %s452, [#allocation48]
    $region157: #{forward.1} parent=1 // pred_fallthru
      _
    // Predicated region
    $region158: #{forward.1} parent=1 // pred_check
      _
    $region159: #{forward.1} parent=1 // pred_check_branch
      %456 = sbr.rel (0) target = $region161
    $region160: #{forward.1} parent=1 // pred_region
      %s458 = ssub.s32 16, 16
      %459 = vsyncadd [#allocation48], %s458
      %s461 = sshll.u32 [#allocation49], 4
      %s462 = int_to_ptr.vmem [resolvable:$true] %s461
      %464 = dma.hbm_to_vmem [thread:$0]  %s79, 16, %s462, [#allocation48]
    $region161: #{forward.1} parent=1 // pred_fallthru
      _
    // Predicated region
    $region162: #{forward.1} parent=1 // pred_check
      _
    $region163: #{forward.1} parent=1 // pred_check_branch
      %466 = sbr.rel (0) target = $region165
    $region164: #{forward.1} parent=1 // pred_region
      %s468 = ssub.s32 16, 16
      %469 = vsyncadd [#allocation51], %s468
      %s471 = sshll.u32 [#allocation50], 4
      %s472 = int_to_ptr.vmem [resolvable:$true] %s471
      %474 = dma.hbm_to_vmem [thread:$0]  %s81, 16, %s472, [#allocation51]
    $region165: #{forward.1} parent=1 // pred_fallthru
      _
    // Predicated region
    $region166: #{forward.1} parent=1 // pred_check
      _
    $region167: #{forward.1} parent=1 // pred_check_branch
      %476 = sbr.rel (0) target = $region169
    $region168: #{forward.1} parent=1 // pred_region
      %s478 = ssub.s32 64, 64
      %479 = vsyncadd [#allocation51], %s478
      %s481 = sshll.u32 [#allocation52], 4
      %s482 = int_to_ptr.vmem [resolvable:$true] %s481
      %484 = dma.hbm_to_vmem [thread:$0]  %s83, 64, %s482, [#allocation51]
    $region169: #{forward.1} parent=1 // pred_fallthru
      _
    // Predicated region
    $region170: #{forward.1} parent=1 // pred_check
      _
    $region171: #{forward.1} parent=1 // pred_check_branch
      %486 = sbr.rel (0) target = $region173
    $region172: #{forward.1} parent=1 // pred_region
      %s488 = ssub.s32 16, 16
      %489 = vsyncadd [#allocation54], %s488
      %s491 = sshll.u32 [#allocation53], 4
      %s492 = int_to_ptr.vmem [resolvable:$true] %s491
      %494 = dma.hbm_to_vmem [thread:$0]  %s85, 16, %s492, [#allocation54]
    $region173: #{forward.1} parent=1 // pred_fallthru
      _
    // Predicated region
    $region174: #{forward.1} parent=1 // pred_check
      _
    $region175: #{forward.1} parent=1 // pred_check_branch
      %496 = sbr.rel (0) target = $region177
    $region176: #{forward.1} parent=1 // pred_region
      %s498 = ssub.s32 1024, 1024
      %499 = vsyncadd [#allocation54], %s498
      %s500 = sshll.u32 [#allocation55], 4
      %s501 = int_to_ptr.vmem [resolvable:$true] %s500
      %506 = dma.hbm_to_vmem [thread:$0]  %s87, 1024, %s501, [#allocation54], 128, 128, 8
    $region177: #{forward.1} parent=1 // pred_fallthru
      _
    // Predicated region
    $region178: #{forward.1} parent=1 // pred_check
      _
    $region179: #{forward.1} parent=1 // pred_check_branch
      %508 = sbr.rel (0) target = $region181
    $region180: #{forward.1} parent=1 // pred_region
      _
    $region181: #{forward.1} parent=1 // pred_fallthru
      _
    // Predicated region
    $region182: #{forward.1} parent=1 // pred_check
      _
    $region183: #{forward.1} parent=1 // pred_check_branch
      %510 = sbr.rel (0) target = $region185
    $region184: #{forward.1} parent=1 // pred_region
      _
    $region185: #{forward.1} parent=1 // pred_fallthru
      _
    // Predicated region
    $region186: #{forward.1} parent=1 // pred_check
      _
    $region187: #{forward.1} parent=1 // pred_check_branch
      %512 = sbr.rel (0) target = $region189
    $region188: #{forward.1} parent=1 // pred_region
      _
    $region189: #{forward.1} parent=1 // pred_fallthru
      _
    // Predicated region
    $region190: #{forward.1} parent=1 // pred_check
      _
    $region191: #{forward.1} parent=1 // pred_check_branch
      %514 = sbr.rel (0) target = $region193
    $region192: #{forward.1} parent=1 // pred_region
      %515 = dma.done [#allocation3], 32
    $region193: #{forward.1} parent=1 // pred_fallthru
      _
    // Predicated region
    $region194: #{forward.1} parent=1 // pred_check
      _
    $region195: #{forward.1} parent=1 // pred_check_branch
      %517 = sbr.rel (0) target = $region197
    $region196: #{forward.1} parent=1 // pred_region
      %518 = dma.done [#allocation6], 16
    $region197: #{forward.1} parent=1 // pred_fallthru
      _
    // Predicated region
    $region198: #{forward.1} parent=1 // pred_check
      _
    $region199: #{forward.1} parent=1 // pred_check_branch
      %520 = sbr.rel (0) target = $region201
    $region200: #{forward.1} parent=1 // pred_region
      %521 = dma.done [#allocation6], 4096
    $region201: #{forward.1} parent=1 // pred_fallthru
      _
    // Predicated region
    $region202: #{forward.1} parent=1 // pred_check
      _
    $region203: #{forward.1} parent=1 // pred_check_branch
      %523 = sbr.rel (0) target = $region205
    $region204: #{forward.1} parent=1 // pred_region
      %524 = dma.done [#allocation9], 32
    $region205: #{forward.1} parent=1 // pred_fallthru
      _
    // Predicated region
    $region206: #{forward.1} parent=1 // pred_check
      _
    $region207: #{forward.1} parent=1 // pred_check_branch
      %526 = sbr.rel (0) target = $region209
    $region208: #{forward.1} parent=1 // pred_region
      %527 = dma.done [#allocation9], 32
    $region209: #{forward.1} parent=1 // pred_fallthru
      _
    // Predicated region
    $region210: #{forward.1} parent=1 // pred_check
      _
    $region211: #{forward.1} parent=1 // pred_check_branch
      %529 = sbr.rel (0) target = $region213
    $region212: #{forward.1} parent=1 // pred_region
      %530 = dma.done [#allocation12], 5120
    $region213: #{forward.1} parent=1 // pred_fallthru
      _
    // Predicated region
    $region214: #{forward.1} parent=1 // pred_check
      _
    $region215: #{forward.1} parent=1 // pred_check_branch
      %532 = sbr.rel (0) target = $region217
    $region216: #{forward.1} parent=1 // pred_region
      %533 = dma.done [#allocation12], 5120
    $region217: #{forward.1} parent=1 // pred_fallthru
      _
    // Predicated region
    $region218: #{forward.1} parent=1 // pred_check
      _
    $region219: #{forward.1} parent=1 // pred_check_branch
      %535 = sbr.rel (0) target = $region221
    $region220: #{forward.1} parent=1 // pred_region
      %536 = dma.done [#allocation15], 16
    $region221: #{forward.1} parent=1 // pred_fallthru
      _
    // Predicated region
    $region222: #{forward.1} parent=1 // pred_check
      _
    $region223: #{forward.1} parent=1 // pred_check_branch
      %538 = sbr.rel (0) target = $region225
    $region224: #{forward.1} parent=1 // pred_region
      %539 = dma.done [#allocation15], 16
    $region225: #{forward.1} parent=1 // pred_fallthru
      _
    // Predicated region
    $region226: #{forward.1} parent=1 // pred_check
      _
    $region227: #{forward.1} parent=1 // pred_check_branch
      %541 = sbr.rel (0) target = $region229
    $region228: #{forward.1} parent=1 // pred_region
      %542 = dma.done [#allocation18], 16
    $region229: #{forward.1} parent=1 // pred_fallthru
      _
    // Predicated region
    $region230: #{forward.1} parent=1 // pred_check
      _
    $region231: #{forward.1} parent=1 // pred_check_branch
      %544 = sbr.rel (0) target = $region233
    $region232: #{forward.1} parent=1 // pred_region
      %545 = dma.done [#allocation18], 16
    $region233: #{forward.1} parent=1 // pred_fallthru
      _
    // Predicated region
    $region234: #{forward.1} parent=1 // pred_check
      _
    $region235: #{forward.1} parent=1 // pred_check_branch
      %547 = sbr.rel (0) target = $region237
    $region236: #{forward.1} parent=1 // pred_region
      %548 = dma.done [#allocation21], 16
    $region237: #{forward.1} parent=1 // pred_fallthru
      _
    // Predicated region
    $region238: #{forward.1} parent=1 // pred_check
      _
    $region239: #{forward.1} parent=1 // pred_check_branch
      %550 = sbr.rel (0) target = $region241
    $region240: #{forward.1} parent=1 // pred_region
      %551 = dma.done [#allocation21], 16
    $region241: #{forward.1} parent=1 // pred_fallthru
      _
    // Predicated region
    $region242: #{forward.1} parent=1 // pred_check
      _
    $region243: #{forward.1} parent=1 // pred_check_branch
      %553 = sbr.rel (0) target = $region245
    $region244: #{forward.1} parent=1 // pred_region
      %554 = dma.done [#allocation24], 16
    $region245: #{forward.1} parent=1 // pred_fallthru
      _
    // Predicated region
    $region246: #{forward.1} parent=1 // pred_check
      _
    $region247: #{forward.1} parent=1 // pred_check_branch
      %556 = sbr.rel (0) target = $region249
    $region248: #{forward.1} parent=1 // pred_region
      %557 = dma.done [#allocation24], 512
    $region249: #{forward.1} parent=1 // pred_fallthru
      _
    // Predicated region
    $region250: #{forward.1} parent=1 // pred_check
      _
    $region251: #{forward.1} parent=1 // pred_check_branch
      %559 = sbr.rel (0) target = $region253
    $region252: #{forward.1} parent=1 // pred_region
      %560 = dma.done [#allocation27], 16
    $region253: #{forward.1} parent=1 // pred_fallthru
      _
    // Predicated region
    $region254: #{forward.1} parent=1 // pred_check
      _
    $region255: #{forward.1} parent=1 // pred_check_branch
      %562 = sbr.rel (0) target = $region257
    $region256: #{forward.1} parent=1 // pred_region
      %563 = dma.done [#allocation27], 512
    $region257: #{forward.1} parent=1 // pred_fallthru
      _
    // Predicated region
    $region258: #{forward.1} parent=1 // pred_check
      _
    $region259: #{forward.1} parent=1 // pred_check_branch
      %565 = sbr.rel (0) target = $region261
    $region260: #{forward.1} parent=1 // pred_region
      %566 = dma.done [#allocation30], 512
    $region261: #{forward.1} parent=1 // pred_fallthru
      _
    // Predicated region
    $region262: #{forward.1} parent=1 // pred_check
      _
    $region263: #{forward.1} parent=1 // pred_check_branch
      %568 = sbr.rel (0) target = $region265
    $region264: #{forward.1} parent=1 // pred_region
      %569 = dma.done [#allocation30], 16
    $region265: #{forward.1} parent=1 // pred_fallthru
      _
    // Predicated region
    $region266: #{forward.1} parent=1 // pred_check
      _
    $region267: #{forward.1} parent=1 // pred_check_branch
      %571 = sbr.rel (0) target = $region269
    $region268: #{forward.1} parent=1 // pred_region
      %572 = dma.done [#allocation33], 16
    $region269: #{forward.1} parent=1 // pred_fallthru
      _
    // Predicated region
    $region270: #{forward.1} parent=1 // pred_check
      _
    $region271: #{forward.1} parent=1 // pred_check_branch
      %574 = sbr.rel (0) target = $region273
    $region272: #{forward.1} parent=1 // pred_region
      %575 = dma.done [#allocation33], 16
    $region273: #{forward.1} parent=1 // pred_fallthru
      _
    // Predicated region
    $region274: #{forward.1} parent=1 // pred_check
      _
    $region275: #{forward.1} parent=1 // pred_check_branch
      %577 = sbr.rel (0) target = $region277
    $region276: #{forward.1} parent=1 // pred_region
      %578 = dma.done [#allocation36], 16
    $region277: #{forward.1} parent=1 // pred_fallthru
      _
    // Predicated region
    $region278: #{forward.1} parent=1 // pred_check
      _
    $region279: #{forward.1} parent=1 // pred_check_branch
      %580 = sbr.rel (0) target = $region281
    $region280: #{forward.1} parent=1 // pred_region
      %581 = dma.done [#allocation36], 16
    $region281: #{forward.1} parent=1 // pred_fallthru
      _
    // Predicated region
    $region282: #{forward.1} parent=1 // pred_check
      _
    $region283: #{forward.1} parent=1 // pred_check_branch
      %583 = sbr.rel (0) target = $region285
    $region284: #{forward.1} parent=1 // pred_region
      %584 = dma.done [#allocation39], 16
    $region285: #{forward.1} parent=1 // pred_fallthru
      _
    // Predicated region
    $region286: #{forward.1} parent=1 // pred_check
      _
    $region287: #{forward.1} parent=1 // pred_check_branch
      %586 = sbr.rel (0) target = $region289
    $region288: #{forward.1} parent=1 // pred_region
      %587 = dma.done [#allocation39], 16
    $region289: #{forward.1} parent=1 // pred_fallthru
      _
    // Predicated region
    $region290: #{forward.1} parent=1 // pred_check
      _
    $region291: #{forward.1} parent=1 // pred_check_branch
      %589 = sbr.rel (0) target = $region293
    $region292: #{forward.1} parent=1 // pred_region
      %590 = dma.done [#allocation42], 512
    $region293: #{forward.1} parent=1 // pred_fallthru
      _
    // Predicated region
    $region294: #{forward.1} parent=1 // pred_check
      _
    $region295: #{forward.1} parent=1 // pred_check_branch
      %592 = sbr.rel (0) target = $region297
    $region296: #{forward.1} parent=1 // pred_region
      %593 = dma.done [#allocation42], 16
    $region297: #{forward.1} parent=1 // pred_fallthru
      _
    // Predicated region
    $region298: #{forward.1} parent=1 // pred_check
      _
    $region299: #{forward.1} parent=1 // pred_check_branch
      %595 = sbr.rel (0) target = $region301
    $region300: #{forward.1} parent=1 // pred_region
      %596 = dma.done [#allocation45], 512
    $region301: #{forward.1} parent=1 // pred_fallthru
      _
    // Predicated region
    $region302: #{forward.1} parent=1 // pred_check
      _
    $region303: #{forward.1} parent=1 // pred_check_branch
      %598 = sbr.rel (0) target = $region305
    $region304: #{forward.1} parent=1 // pred_region
      %599 = dma.done [#allocation45], 512
    $region305: #{forward.1} parent=1 // pred_fallthru
      _
    // Predicated region
    $region306: #{forward.1} parent=1 // pred_check
      _
    $region307: #{forward.1} parent=1 // pred_check_branch
      %601 = sbr.rel (0) target = $region309
    $region308: #{forward.1} parent=1 // pred_region
      %602 = dma.done [#allocation48], 16
    $region309: #{forward.1} parent=1 // pred_fallthru
      _
    // Predicated region
    $region310: #{forward.1} parent=1 // pred_check
      _
    $region311: #{forward.1} parent=1 // pred_check_branch
      %604 = sbr.rel (0) target = $region313
    $region312: #{forward.1} parent=1 // pred_region
      %605 = dma.done [#allocation48], 16
    $region313: #{forward.1} parent=1 // pred_fallthru
      _
    // Predicated region
    $region314: #{forward.1} parent=1 // pred_check
      _
    $region315: #{forward.1} parent=1 // pred_check_branch
      %607 = sbr.rel (0) target = $region317
    $region316: #{forward.1} parent=1 // pred_region
      %608 = dma.done [#allocation51], 16
    $region317: #{forward.1} parent=1 // pred_fallthru
      _
    // Predicated region
    $region318: #{forward.1} parent=1 // pred_check
      _
    $region319: #{forward.1} parent=1 // pred_check_branch
      %610 = sbr.rel (0) target = $region321
    $region320: #{forward.1} parent=1 // pred_region
      %611 = dma.done [#allocation51], 64
    $region321: #{forward.1} parent=1 // pred_fallthru
      _
    // Predicated region
    $region322: #{forward.1} parent=1 // pred_check
      _
    $region323: #{forward.1} parent=1 // pred_check_branch
      %613 = sbr.rel (0) target = $region325
    $region324: #{forward.1} parent=1 // pred_region
      %614 = dma.done [#allocation54], 16
    $region325: #{forward.1} parent=1 // pred_fallthru
      _
    // Predicated region
    $region326: #{forward.1} parent=1 // pred_check
      _
    $region327: #{forward.1} parent=1 // pred_check_branch
      %616 = sbr.rel (0) target = $region329
    $region328: #{forward.1} parent=1 // pred_region
      %617 = dma.done [#allocation54], 1024
    $region329: #{forward.1} parent=1 // pred_fallthru
      _
    %v618 = vld [vmem:[%s9] sm:$0xf]
    %v619 = vld [vmem:[%s11] sm:$0xff]
    %v620 = vld [vmem:[%s11 + $0x8] sm:$0xff]
    %v621 = vld [vmem:[%s11 + $0x10] sm:$0xff]
    %v622 = vld [vmem:[%s11 + $0x18] sm:$0xff]
    %v623 = vld [vmem:[%s11 + $0x20] sm:$0xff]
    %v624 = vld [vmem:[%s11 + $0x28] sm:$0xff]
    %v625 = vld [vmem:[%s11 + $0x30] sm:$0xff]
    %v626 = vld [vmem:[%s11 + $0x38] sm:$0xff]
    %v627 = vld [vmem:[%s11 + $0x40] sm:$0xff]
    %v628 = vld [vmem:[%s11 + $0x48] sm:$0xff]
    %v629 = vld [vmem:[%s11 + $0x50] sm:$0xff]
    %v630 = vld [vmem:[%s11 + $0x58] sm:$0xff]
    %v631 = vld [vmem:[%s11 + $0x60] sm:$0xff]
    %v632 = vld [vmem:[%s11 + $0x68] sm:$0xff]
    %v633 = vld [vmem:[%s11 + $0x70] sm:$0xff]
    %v634 = vld [vmem:[%s11 + $0x78] sm:$0xff]
    %v635 = vld [vmem:[%s11 + $0x80] sm:$0xff]
    %v636 = vld [vmem:[%s11 + $0x88] sm:$0xff]
    %v637 = vld [vmem:[%s11 + $0x90] sm:$0xff]
    %v638 = vld [vmem:[%s11 + $0x98] sm:$0xff]
    %v639 = vld [vmem:[%s11 + $0xa0] sm:$0xff]
    %v640 = vld [vmem:[%s11 + $0xa8] sm:$0xff]
    %v641 = vld [vmem:[%s11 + $0xb0] sm:$0xff]
    %v642 = vld [vmem:[%s11 + $0xb8] sm:$0xff]
    %v643 = vld [vmem:[%s11 + $0xc0] sm:$0xff]
    %v644 = vld [vmem:[%s11 + $0xc8] sm:$0xff]
    %v645 = vld [vmem:[%s11 + $0xd0] sm:$0xff]
    %v646 = vld [vmem:[%s11 + $0xd8] sm:$0xff]
    %v647 = vld [vmem:[%s11 + $0xe0] sm:$0xff]
    %v648 = vld [vmem:[%s11 + $0xe8] sm:$0xff]
    %v649 = vld [vmem:[%s11 + $0xf0] sm:$0xff]
    %v650 = vld [vmem:[%s11 + $0xf8] sm:$0xff]
    %v651 = vld [vmem:[%s11 + $0x100] sm:$0xff]
    %v652 = vld [vmem:[%s11 + $0x108] sm:$0xff]
    %v653 = vld [vmem:[%s11 + $0x110] sm:$0xff]
    %v654 = vld [vmem:[%s11 + $0x118] sm:$0xff]
    %v655 = vld [vmem:[%s11 + $0x120] sm:$0xff]
    %v656 = vld [vmem:[%s11 + $0x128] sm:$0xff]
    %v657 = vld [vmem:[%s11 + $0x130] sm:$0xff]
    %v658 = vld [vmem:[%s11 + $0x138] sm:$0xff]
    %v659 = vld [vmem:[%s11 + $0x140] sm:$0xff]
    %v660 = vld [vmem:[%s11 + $0x148] sm:$0xff]
    %v661 = vld [vmem:[%s11 + $0x150] sm:$0xff]
    %v662 = vld [vmem:[%s11 + $0x158] sm:$0xff]
    %v663 = vld [vmem:[%s11 + $0x160] sm:$0xff]
    %v664 = vld [vmem:[%s11 + $0x168] sm:$0xff]
    %v665 = vld [vmem:[%s11 + $0x170] sm:$0xff]
    %v666 = vld [vmem:[%s11 + $0x178] sm:$0xff]
    %v667 = vld [vmem:[%s11 + $0x180] sm:$0xff]
    %v668 = vld [vmem:[%s11 + $0x188] sm:$0xff]
    %v669 = vld [vmem:[%s11 + $0x190] sm:$0xff]
    %v670 = vld [vmem:[%s11 + $0x198] sm:$0xff]
    %v671 = vld [vmem:[%s11 + $0x1a0] sm:$0xff]
    %v672 = vld [vmem:[%s11 + $0x1a8] sm:$0xff]
    %v673 = vld [vmem:[%s11 + $0x1b0] sm:$0xff]
    %v674 = vld [vmem:[%s11 + $0x1b8] sm:$0xff]
    %v675 = vld [vmem:[%s11 + $0x1c0] sm:$0xff]
    %v676 = vld [vmem:[%s11 + $0x1c8] sm:$0xff]
    %v677 = vld [vmem:[%s11 + $0x1d0] sm:$0xff]
    %v678 = vld [vmem:[%s11 + $0x1d8] sm:$0xff]
    %v679 = vld [vmem:[%s11 + $0x1e0] sm:$0xff]
    %v680 = vld [vmem:[%s11 + $0x1e8] sm:$0xff]
    %v681 = vld [vmem:[%s11 + $0x1f0] sm:$0xff]
    %v682 = vld [vmem:[%s11 + $0x1f8] sm:$0xff]
    %v683 = vld [vmem:[%s11 + $0x200] sm:$0xff]
    %v684 = vld [vmem:[%s11 + $0x208] sm:$0xff]
    %v685 = vld [vmem:[%s11 + $0x210] sm:$0xff]
    %v686 = vld [vmem:[%s11 + $0x218] sm:$0xff]
    %v687 = vld [vmem:[%s11 + $0x220] sm:$0xff]
    %v688 = vld [vmem:[%s11 + $0x228] sm:$0xff]
    %v689 = vld [vmem:[%s11 + $0x230] sm:$0xff]
    %v690 = vld [vmem:[%s11 + $0x238] sm:$0xff]
    %v691 = vld [vmem:[%s11 + $0x240] sm:$0xff]
    %v692 = vld [vmem:[%s11 + $0x248] sm:$0xff]
    %v693 = vld [vmem:[%s11 + $0x250] sm:$0xff]
    %v694 = vld [vmem:[%s11 + $0x258] sm:$0xff]
    %v695 = vld [vmem:[%s11 + $0x260] sm:$0xff]
    %v696 = vld [vmem:[%s11 + $0x268] sm:$0xff]
    %v697 = vld [vmem:[%s11 + $0x270] sm:$0xff]
    %v698 = vld [vmem:[%s11 + $0x278] sm:$0xff]
    %v699 = vld [vmem:[#allocation2] sm:$0x3]
    %v700 = vld [vmem:[%s15] sm:$0xff]
    %v701 = vld [vmem:[%s15 + $0x8] sm:$0xff]
    %v702 = vld [vmem:[%s15 + $0x10] sm:$0xff]
    %v703 = vld [vmem:[%s15 + $0x18] sm:$0xff]
    %v704 = vld [vmem:[%s15 + $0x20] sm:$0xff]
    %v705 = vld [vmem:[%s15 + $0x28] sm:$0xff]
    %v706 = vld [vmem:[%s15 + $0x30] sm:$0xff]
    %v707 = vld [vmem:[%s15 + $0x38] sm:$0xff]
    %v708 = vld [vmem:[%s15 + $0x40] sm:$0xff]
    %v709 = vld [vmem:[%s15 + $0x48] sm:$0xff]
    %v710 = vld [vmem:[%s15 + $0x50] sm:$0xff]
    %v711 = vld [vmem:[%s15 + $0x58] sm:$0xff]
    %v712 = vld [vmem:[%s15 + $0x60] sm:$0xff]
    %v713 = vld [vmem:[%s15 + $0x68] sm:$0xff]
    %v714 = vld [vmem:[%s15 + $0x70] sm:$0xff]
    %v715 = vld [vmem:[%s15 + $0x78] sm:$0xff]
    %v716 = vld [vmem:[%s15 + $0x80] sm:$0xff]
    %v717 = vld [vmem:[%s15 + $0x88] sm:$0xff]
    %v718 = vld [vmem:[%s15 + $0x90] sm:$0xff]
    %v719 = vld [vmem:[%s15 + $0x98] sm:$0xff]
    %v720 = vld [vmem:[%s15 + $0xa0] sm:$0xff]
    %v721 = vld [vmem:[%s15 + $0xa8] sm:$0xff]
    %v722 = vld [vmem:[%s15 + $0xb0] sm:$0xff]
    %v723 = vld [vmem:[%s15 + $0xb8] sm:$0xff]
    %v724 = vld [vmem:[%s15 + $0xc0] sm:$0xff]
    %v725 = vld [vmem:[%s15 + $0xc8] sm:$0xff]
    %v726 = vld [vmem:[%s15 + $0xd0] sm:$0xff]
    %v727 = vld [vmem:[%s15 + $0xd8] sm:$0xff]
    %v728 = vld [vmem:[%s15 + $0xe0] sm:$0xff]
    %v729 = vld [vmem:[%s15 + $0xe8] sm:$0xff]
    %v730 = vld [vmem:[%s15 + $0xf0] sm:$0xff]
    %v731 = vld [vmem:[%s15 + $0xf8] sm:$0xff]
    %v732 = vld [vmem:[%s15 + $0x100] sm:$0xff]
    %v733 = vld [vmem:[%s15 + $0x108] sm:$0xff]
    %v734 = vld [vmem:[%s15 + $0x110] sm:$0xff]
    %v735 = vld [vmem:[%s15 + $0x118] sm:$0xff]
    %v736 = vld [vmem:[%s15 + $0x120] sm:$0xff]
    %v737 = vld [vmem:[%s15 + $0x128] sm:$0xff]
    %v738 = vld [vmem:[%s15 + $0x130] sm:$0xff]
    %v739 = vld [vmem:[%s15 + $0x138] sm:$0xff]
    %v740 = vld [vmem:[%s15 + $0x140] sm:$0xff]
    %v741 = vld [vmem:[%s15 + $0x148] sm:$0xff]
    %v742 = vld [vmem:[%s15 + $0x150] sm:$0xff]
    %v743 = vld [vmem:[%s15 + $0x158] sm:$0xff]
    %v744 = vld [vmem:[%s15 + $0x160] sm:$0xff]
    %v745 = vld [vmem:[%s15 + $0x168] sm:$0xff]
    %v746 = vld [vmem:[%s15 + $0x170] sm:$0xff]
    %v747 = vld [vmem:[%s15 + $0x178] sm:$0xff]
    %v748 = vld [vmem:[%s15 + $0x180] sm:$0xff]
    %v749 = vld [vmem:[%s15 + $0x188] sm:$0xff]
    %v750 = vld [vmem:[%s15 + $0x190] sm:$0xff]
    %v751 = vld [vmem:[%s15 + $0x198] sm:$0xff]
    %v752 = vld [vmem:[%s15 + $0x1a0] sm:$0xff]
    %v753 = vld [vmem:[%s15 + $0x1a8] sm:$0xff]
    %v754 = vld [vmem:[%s15 + $0x1b0] sm:$0xff]
    %v755 = vld [vmem:[%s15 + $0x1b8] sm:$0xff]
    %v756 = vld [vmem:[%s15 + $0x1c0] sm:$0xff]
    %v757 = vld [vmem:[%s15 + $0x1c8] sm:$0xff]
    %v758 = vld [vmem:[%s15 + $0x1d0] sm:$0xff]
    %v759 = vld [vmem:[%s15 + $0x1d8] sm:$0xff]
    %v760 = vld [vmem:[%s15 + $0x1e0] sm:$0xff]
    %v761 = vld [vmem:[%s15 + $0x1e8] sm:$0xff]
    %v762 = vld [vmem:[%s15 + $0x1f0] sm:$0xff]
    %v763 = vld [vmem:[%s15 + $0x1f8] sm:$0xff]
    %v764 = vld [vmem:[%s15 + $0x200] sm:$0xff]
    %v765 = vld [vmem:[%s15 + $0x208] sm:$0xff]
    %v766 = vld [vmem:[%s15 + $0x210] sm:$0xff]
    %v767 = vld [vmem:[%s15 + $0x218] sm:$0xff]
    %v768 = vld [vmem:[%s15 + $0x220] sm:$0xff]
    %v769 = vld [vmem:[%s15 + $0x228] sm:$0xff]
    %v770 = vld [vmem:[%s15 + $0x230] sm:$0xff]
    %v771 = vld [vmem:[%s15 + $0x238] sm:$0xff]
    %v772 = vld [vmem:[%s15 + $0x240] sm:$0xff]
    %v773 = vld [vmem:[%s15 + $0x248] sm:$0xff]
    %v774 = vld [vmem:[%s15 + $0x250] sm:$0xff]
    %v775 = vld [vmem:[%s15 + $0x258] sm:$0xff]
    %v776 = vld [vmem:[%s15 + $0x260] sm:$0xff]
    %v777 = vld [vmem:[%s15 + $0x268] sm:$0xff]
    %v778 = vld [vmem:[%s15 + $0x270] sm:$0xff]
    %v779 = vld [vmem:[%s15 + $0x278] sm:$0xff]
    %v780 = vld [vmem:[%s15 + $0x280] sm:$0xff]
    %v781 = vld [vmem:[%s15 + $0x288] sm:$0xff]
    %v782 = vld [vmem:[%s15 + $0x290] sm:$0xff]
    %v783 = vld [vmem:[%s15 + $0x298] sm:$0xff]
    %v784 = vld [vmem:[%s15 + $0x2a0] sm:$0xff]
    %v785 = vld [vmem:[%s15 + $0x2a8] sm:$0xff]
    %v786 = vld [vmem:[%s15 + $0x2b0] sm:$0xff]
    %v787 = vld [vmem:[%s15 + $0x2b8] sm:$0xff]
    %v788 = vld [vmem:[%s15 + $0x2c0] sm:$0xff]
    %v789 = vld [vmem:[%s15 + $0x2c8] sm:$0xff]
    %v790 = vld [vmem:[%s15 + $0x2d0] sm:$0xff]
    %v791 = vld [vmem:[%s15 + $0x2d8] sm:$0xff]
    %v792 = vld [vmem:[%s15 + $0x2e0] sm:$0xff]
    %v793 = vld [vmem:[%s15 + $0x2e8] sm:$0xff]
    %v794 = vld [vmem:[%s15 + $0x2f0] sm:$0xff]
    %v795 = vld [vmem:[%s15 + $0x2f8] sm:$0xff]
    %v796 = vld [vmem:[%s15 + $0x300] sm:$0xff]
    %v797 = vld [vmem:[%s15 + $0x308] sm:$0xff]
    %v798 = vld [vmem:[%s15 + $0x310] sm:$0xff]
    %v799 = vld [vmem:[%s15 + $0x318] sm:$0xff]
    %v800 = vld [vmem:[%s15 + $0x320] sm:$0xff]
    %v801 = vld [vmem:[%s15 + $0x328] sm:$0xff]
    %v802 = vld [vmem:[%s15 + $0x330] sm:$0xff]
    %v803 = vld [vmem:[%s15 + $0x338] sm:$0xff]
    %v804 = vld [vmem:[%s15 + $0x340] sm:$0xff]
    %v805 = vld [vmem:[%s15 + $0x348] sm:$0xff]
    %v806 = vld [vmem:[%s15 + $0x350] sm:$0xff]
    %v807 = vld [vmem:[%s15 + $0x358] sm:$0xff]
    %v808 = vld [vmem:[%s15 + $0x360] sm:$0xff]
    %v809 = vld [vmem:[%s15 + $0x368] sm:$0xff]
    %v810 = vld [vmem:[%s15 + $0x370] sm:$0xff]
    %v811 = vld [vmem:[%s15 + $0x378] sm:$0xff]
    %v812 = vld [vmem:[%s15 + $0x380] sm:$0xff]
    %v813 = vld [vmem:[%s15 + $0x388] sm:$0xff]
    %v814 = vld [vmem:[%s15 + $0x390] sm:$0xff]
    %v815 = vld [vmem:[%s15 + $0x398] sm:$0xff]
    %v816 = vld [vmem:[%s15 + $0x3a0] sm:$0xff]
    %v817 = vld [vmem:[%s15 + $0x3a8] sm:$0xff]
    %v818 = vld [vmem:[%s15 + $0x3b0] sm:$0xff]
    %v819 = vld [vmem:[%s15 + $0x3b8] sm:$0xff]
    %v820 = vld [vmem:[%s15 + $0x3c0] sm:$0xff]
    %v821 = vld [vmem:[%s15 + $0x3c8] sm:$0xff]
    %v822 = vld [vmem:[%s15 + $0x3d0] sm:$0xff]
    %v823 = vld [vmem:[%s15 + $0x3d8] sm:$0xff]
    %v824 = vld [vmem:[%s15 + $0x3e0] sm:$0xff]
    %v825 = vld [vmem:[%s15 + $0x3e8] sm:$0xff]
    %v826 = vld [vmem:[%s15 + $0x3f0] sm:$0xff]
    %v827 = vld [vmem:[%s15 + $0x3f8] sm:$0xff]
    %v828 = vld [vmem:[#allocation5] sm:$0x1]
    %v829 = vld [vmem:[#allocation7] sm:$0xff]
    %v830 = vld [vmem:[#allocation7 + $0x8] sm:$0xff]
    %v831 = vld [vmem:[#allocation7 + $0x10] sm:$0xff]
    %v832 = vld [vmem:[#allocation7 + $0x18] sm:$0xff]
    %v833 = vld [vmem:[#allocation7 + $0x20] sm:$0xff]
    %v834 = vld [vmem:[#allocation7 + $0x28] sm:$0xff]
    %v835 = vld [vmem:[#allocation7 + $0x30] sm:$0xff]
    %v836 = vld [vmem:[#allocation7 + $0x38] sm:$0xff]
    %v837 = vld [vmem:[#allocation7 + $0x40] sm:$0xff]
    %v838 = vld [vmem:[#allocation7 + $0x48] sm:$0xff]
    %v839 = vld [vmem:[#allocation7 + $0x50] sm:$0xff]
    %v840 = vld [vmem:[#allocation7 + $0x58] sm:$0xff]
    %v841 = vld [vmem:[#allocation7 + $0x60] sm:$0xff]
    %v842 = vld [vmem:[#allocation7 + $0x68] sm:$0xff]
    %v843 = vld [vmem:[#allocation7 + $0x70] sm:$0xff]
    %v844 = vld [vmem:[#allocation7 + $0x78] sm:$0xff]
    %v845 = vld [vmem:[#allocation7 + $0x80] sm:$0xff]
    %v846 = vld [vmem:[#allocation7 + $0x88] sm:$0xff]
    %v847 = vld [vmem:[#allocation7 + $0x90] sm:$0xff]
    %v848 = vld [vmem:[#allocation7 + $0x98] sm:$0xff]
    %v849 = vld [vmem:[#allocation7 + $0xa0] sm:$0xff]
    %v850 = vld [vmem:[#allocation7 + $0xa8] sm:$0xff]
    %v851 = vld [vmem:[#allocation7 + $0xb0] sm:$0xff]
    %v852 = vld [vmem:[#allocation7 + $0xb8] sm:$0xff]
    %v853 = vld [vmem:[#allocation7 + $0xc0] sm:$0xff]
    %v854 = vld [vmem:[#allocation7 + $0xc8] sm:$0xff]
    %v855 = vld [vmem:[#allocation7 + $0xd0] sm:$0xff]
    %v856 = vld [vmem:[#allocation7 + $0xd8] sm:$0xff]
    %v857 = vld [vmem:[#allocation7 + $0xe0] sm:$0xff]
    %v858 = vld [vmem:[#allocation7 + $0xe8] sm:$0xff]
    %v859 = vld [vmem:[#allocation7 + $0xf0] sm:$0xff]
    %v860 = vld [vmem:[#allocation7 + $0xf8] sm:$0xff]
    %v861 = vld [vmem:[#allocation8] sm:$0x3]
    %v862 = vld [vmem:[#allocation10] sm:$0x3]
    %v863 = vld [vmem:[#allocation11] sm:$0xff]
    %v864 = vld [vmem:[#allocation11 + $0x8] sm:$0xff]
    %v865 = vld [vmem:[#allocation11 + $0x10] sm:$0xff]
    %v866 = vld [vmem:[#allocation11 + $0x18] sm:$0xff]
    %v867 = vld [vmem:[#allocation11 + $0x20] sm:$0xff]
    %v868 = vld [vmem:[#allocation11 + $0x28] sm:$0xff]
    %v869 = vld [vmem:[#allocation11 + $0x30] sm:$0xff]
    %v870 = vld [vmem:[#allocation11 + $0x38] sm:$0xff]
    %v871 = vld [vmem:[#allocation11 + $0x40] sm:$0xff]
    %v872 = vld [vmem:[#allocation11 + $0x48] sm:$0xff]
    %v873 = vld [vmem:[#allocation11 + $0x50] sm:$0xff]
    %v874 = vld [vmem:[#allocation11 + $0x58] sm:$0xff]
    %v875 = vld [vmem:[#allocation11 + $0x60] sm:$0xff]
    %v876 = vld [vmem:[#allocation11 + $0x68] sm:$0xff]
    %v877 = vld [vmem:[#allocation11 + $0x70] sm:$0xff]
    %v878 = vld [vmem:[#allocation11 + $0x78] sm:$0xff]
    %v879 = vld [vmem:[#allocation11 + $0x80] sm:$0xff]
    %v880 = vld [vmem:[#allocation11 + $0x88] sm:$0xff]
    %v881 = vld [vmem:[#allocation11 + $0x90] sm:$0xff]
    %v882 = vld [vmem:[#allocation11 + $0x98] sm:$0xff]
    %v883 = vld [vmem:[#allocation11 + $0xa0] sm:$0xff]
    %v884 = vld [vmem:[#allocation11 + $0xa8] sm:$0xff]
    %v885 = vld [vmem:[#allocation11 + $0xb0] sm:$0xff]
    %v886 = vld [vmem:[#allocation11 + $0xb8] sm:$0xff]
    %v887 = vld [vmem:[#allocation11 + $0xc0] sm:$0xff]
    %v888 = vld [vmem:[#allocation11 + $0xc8] sm:$0xff]
    %v889 = vld [vmem:[#allocation11 + $0xd0] sm:$0xff]
    %v890 = vld [vmem:[#allocation11 + $0xd8] sm:$0xff]
    %v891 = vld [vmem:[#allocation11 + $0xe0] sm:$0xff]
    %v892 = vld [vmem:[#allocation11 + $0xe8] sm:$0xff]
    %v893 = vld [vmem:[#allocation11 + $0xf0] sm:$0xff]
    %v894 = vld [vmem:[#allocation11 + $0xf8] sm:$0xff]
    %v895 = vld [vmem:[#allocation11 + $0x100] sm:$0xff]
    %v896 = vld [vmem:[#allocation11 + $0x108] sm:$0xff]
    %v897 = vld [vmem:[#allocation11 + $0x110] sm:$0xff]
    %v898 = vld [vmem:[#allocation11 + $0x118] sm:$0xff]
    %v899 = vld [vmem:[#allocation11 + $0x120] sm:$0xff]
    %v900 = vld [vmem:[#allocation11 + $0x128] sm:$0xff]
    %v901 = vld [vmem:[#allocation11 + $0x130] sm:$0xff]
    %v902 = vld [vmem:[#allocation11 + $0x138] sm:$0xff]
    %v903 = vld [vmem:[#allocation13] sm:$0xff]
    %v904 = vld [vmem:[#allocation13 + $0x8] sm:$0xff]
    %v905 = vld [vmem:[#allocation13 + $0x10] sm:$0xff]
    %v906 = vld [vmem:[#allocation13 + $0x18] sm:$0xff]
    %v907 = vld [vmem:[#allocation13 + $0x20] sm:$0xff]
    %v908 = vld [vmem:[#allocation13 + $0x28] sm:$0xff]
    %v909 = vld [vmem:[#allocation13 + $0x30] sm:$0xff]
    %v910 = vld [vmem:[#allocation13 + $0x38] sm:$0xff]
    %v911 = vld [vmem:[#allocation13 + $0x40] sm:$0xff]
    %v912 = vld [vmem:[#allocation13 + $0x48] sm:$0xff]
    %v913 = vld [vmem:[#allocation13 + $0x50] sm:$0xff]
    %v914 = vld [vmem:[#allocation13 + $0x58] sm:$0xff]
    %v915 = vld [vmem:[#allocation13 + $0x60] sm:$0xff]
    %v916 = vld [vmem:[#allocation13 + $0x68] sm:$0xff]
    %v917 = vld [vmem:[#allocation13 + $0x70] sm:$0xff]
    %v918 = vld [vmem:[#allocation13 + $0x78] sm:$0xff]
    %v919 = vld [vmem:[#allocation13 + $0x80] sm:$0xff]
    %v920 = vld [vmem:[#allocation13 + $0x88] sm:$0xff]
    %v921 = vld [vmem:[#allocation13 + $0x90] sm:$0xff]
    %v922 = vld [vmem:[#allocation13 + $0x98] sm:$0xff]
    %v923 = vld [vmem:[#allocation13 + $0xa0] sm:$0xff]
    %v924 = vld [vmem:[#allocation13 + $0xa8] sm:$0xff]
    %v925 = vld [vmem:[#allocation13 + $0xb0] sm:$0xff]
    %v926 = vld [vmem:[#allocation13 + $0xb8] sm:$0xff]
    %v927 = vld [vmem:[#allocation13 + $0xc0] sm:$0xff]
    %v928 = vld [vmem:[#allocation13 + $0xc8] sm:$0xff]
    %v929 = vld [vmem:[#allocation13 + $0xd0] sm:$0xff]
    %v930 = vld [vmem:[#allocation13 + $0xd8] sm:$0xff]
    %v931 = vld [vmem:[#allocation13 + $0xe0] sm:$0xff]
    %v932 = vld [vmem:[#allocation13 + $0xe8] sm:$0xff]
    %v933 = vld [vmem:[#allocation13 + $0xf0] sm:$0xff]
    %v934 = vld [vmem:[#allocation13 + $0xf8] sm:$0xff]
    %v935 = vld [vmem:[#allocation13 + $0x100] sm:$0xff]
    %v936 = vld [vmem:[#allocation13 + $0x108] sm:$0xff]
    %v937 = vld [vmem:[#allocation13 + $0x110] sm:$0xff]
    %v938 = vld [vmem:[#allocation13 + $0x118] sm:$0xff]
    %v939 = vld [vmem:[#allocation13 + $0x120] sm:$0xff]
    %v940 = vld [vmem:[#allocation13 + $0x128] sm:$0xff]
    %v941 = vld [vmem:[#allocation13 + $0x130] sm:$0xff]
    %v942 = vld [vmem:[#allocation13 + $0x138] sm:$0xff]
    %v943 = vld [vmem:[#allocation14] sm:$0x1]
    %v944 = vld [vmem:[#allocation16] sm:$0x1]
    %v945 = vld [vmem:[#allocation17] sm:$0x1]
    %v946 = vld [vmem:[#allocation19] sm:$0x1]
    %v947 = vld [vmem:[#allocation20] sm:$0x1]
    %v948 = vld [vmem:[#allocation22] sm:$0x1]
    %v949 = vld [vmem:[#allocation23] sm:$0x1]
    %v950 = vld [vmem:[#allocation25] sm:$0xff]
    %v951 = vld [vmem:[#allocation25 + $0x8] sm:$0xff]
    %v952 = vld [vmem:[#allocation25 + $0x10] sm:$0xff]
    %v953 = vld [vmem:[#allocation25 + $0x18] sm:$0xff]
    %v954 = vld [vmem:[#allocation26] sm:$0x1]
    %v955 = vld [vmem:[%s47] sm:$0xff]
    %v956 = vld [vmem:[%s47 + $0x8] sm:$0xff]
    %v957 = vld [vmem:[%s47 + $0x10] sm:$0xff]
    %v958 = vld [vmem:[%s47 + $0x18] sm:$0xff]
    %v959 = vld [vmem:[%s47 + $0x20] sm:$0xff]
    %v960 = vld [vmem:[%s47 + $0x28] sm:$0xff]
    %v961 = vld [vmem:[%s47 + $0x30] sm:$0xff]
    %v962 = vld [vmem:[%s47 + $0x38] sm:$0xff]
    %v963 = vld [vmem:[%s47 + $0x40] sm:$0xff]
    %v964 = vld [vmem:[%s47 + $0x48] sm:$0xff]
    %v965 = vld [vmem:[%s47 + $0x50] sm:$0xff]
    %v966 = vld [vmem:[%s47 + $0x58] sm:$0xff]
    %v967 = vld [vmem:[%s47 + $0x60] sm:$0xff]
    %v968 = vld [vmem:[%s47 + $0x68] sm:$0xff]
    %v969 = vld [vmem:[%s47 + $0x70] sm:$0xff]
    %v970 = vld [vmem:[%s47 + $0x78] sm:$0xff]
    %v971 = vld [vmem:[#allocation28] sm:$0xff]
    %v972 = vld [vmem:[#allocation28 + $0x8] sm:$0xff]
    %v973 = vld [vmem:[#allocation28 + $0x10] sm:$0xff]
    %v974 = vld [vmem:[#allocation28 + $0x18] sm:$0xff]
    %v975 = vld [vmem:[#allocation29] sm:$0xff]
    %v976 = vld [vmem:[#allocation29 + $0x8] sm:$0xff]
    %v977 = vld [vmem:[#allocation29 + $0x10] sm:$0xff]
    %v978 = vld [vmem:[#allocation29 + $0x18] sm:$0xff]
    %v979 = vld [vmem:[#allocation31] sm:$0x1]
    %v980 = vld [vmem:[#allocation32] sm:$0x1]
    %v981 = vld [vmem:[#allocation34] sm:$0x1]
    %v982 = vld [vmem:[#allocation35] sm:$0x1]
    %v983 = vld [vmem:[#allocation37] sm:$0x1]
    %v984 = vld [vmem:[#allocation38] sm:$0x1]
    %v985 = vld [vmem:[#allocation40] sm:$0x1]
    %v986 = vld [vmem:[#allocation41] sm:$0xff]
    %v987 = vld [vmem:[#allocation41 + $0x8] sm:$0xff]
    %v988 = vld [vmem:[#allocation41 + $0x10] sm:$0xff]
    %v989 = vld [vmem:[#allocation41 + $0x18] sm:$0xff]
    %v990 = vld [vmem:[#allocation43] sm:$0x1]
    %v991 = vld [vmem:[%s71] sm:$0xff]
    %v992 = vld [vmem:[%s71 + $0x8] sm:$0xff]
    %v993 = vld [vmem:[%s71 + $0x10] sm:$0xff]
    %v994 = vld [vmem:[%s71 + $0x18] sm:$0xff]
    %v995 = vld [vmem:[%s71 + $0x20] sm:$0xff]
    %v996 = vld [vmem:[%s71 + $0x28] sm:$0xff]
    %v997 = vld [vmem:[%s71 + $0x30] sm:$0xff]
    %v998 = vld [vmem:[%s71 + $0x38] sm:$0xff]
    %v999 = vld [vmem:[%s71 + $0x40] sm:$0xff]
    %v1000 = vld [vmem:[%s71 + $0x48] sm:$0xff]
    %v1001 = vld [vmem:[%s71 + $0x50] sm:$0xff]
    %v1002 = vld [vmem:[%s71 + $0x58] sm:$0xff]
    %v1003 = vld [vmem:[%s71 + $0x60] sm:$0xff]
    %v1004 = vld [vmem:[%s71 + $0x68] sm:$0xff]
    %v1005 = vld [vmem:[%s71 + $0x70] sm:$0xff]
    %v1006 = vld [vmem:[%s71 + $0x78] sm:$0xff]
    %v1007 = vld [vmem:[#allocation44] sm:$0xff]
    %v1008 = vld [vmem:[#allocation44 + $0x8] sm:$0xff]
    %v1009 = vld [vmem:[#allocation44 + $0x10] sm:$0xff]
    %v1010 = vld [vmem:[#allocation44 + $0x18] sm:$0xff]
    %v1011 = vld [vmem:[#allocation46] sm:$0xff]
    %v1012 = vld [vmem:[#allocation46 + $0x8] sm:$0xff]
    %v1013 = vld [vmem:[#allocation46 + $0x10] sm:$0xff]
    %v1014 = vld [vmem:[#allocation46 + $0x18] sm:$0xff]
    %v1015 = vld [vmem:[#allocation47] sm:$0x1]
    %v1016 = vld [vmem:[#allocation49] sm:$0x1]
    %v1017 = vld [vmem:[#allocation50] sm:$0x1]
    %v1018 = vld [vmem:[#allocation52] sm:$0xf]
    %v1019 = vld [vmem:[#allocation53] sm:$0x1]
    %v1020 = vld [vmem:[#allocation55] sm:$0xff]
    %v1021 = vld [vmem:[#allocation55 + $0x8] sm:$0xff]
    %v1022 = vld [vmem:[#allocation55 + $0x10] sm:$0xff]
    %v1023 = vld [vmem:[#allocation55 + $0x18] sm:$0xff]
    %v1024 = vld [vmem:[#allocation55 + $0x20] sm:$0xff]
    %v1025 = vld [vmem:[#allocation55 + $0x28] sm:$0xff]
    %v1026 = vld [vmem:[#allocation55 + $0x30] sm:$0xff]
    %v1027 = vld [vmem:[#allocation55 + $0x38] sm:$0xff]
    %v1028 = vld [vmem:[%s91] sm:$0xff]
    %v1029 = vld [vmem:[%s91 + $0x8] sm:$0xff]
    %v1030 = vld [vmem:[%s91 + $0x10] sm:$0xff]
    %v1031 = vld [vmem:[%s91 + $0x18] sm:$0xff]
    %v1032 = vld [vmem:[%s91 + $0x20] sm:$0xff]
    %v1033 = vld [vmem:[%s91 + $0x28] sm:$0xff]
    %v1034 = vld [vmem:[%s91 + $0x30] sm:$0xff]
    %v1035 = vld [vmem:[%s91 + $0x38] sm:$0xff]
    %v1036 = vld [vmem:[%s91 + $0x40] sm:$0xff]
    %v1037 = vld [vmem:[%s91 + $0x48] sm:$0xff]
    %v1038 = vld [vmem:[%s91 + $0x50] sm:$0xff]
    %v1039 = vld [vmem:[%s91 + $0x58] sm:$0xff]
    %v1040 = vld [vmem:[%s91 + $0x60] sm:$0xff]
    %v1041 = vld [vmem:[%s91 + $0x68] sm:$0xff]
    %v1042 = vld [vmem:[%s91 + $0x70] sm:$0xff]
    %v1043 = vld [vmem:[%s91 + $0x78] sm:$0xff]
    %v1044 = vld [vmem:[%s91 + $0x80] sm:$0xff]
    %v1045 = vld [vmem:[%s91 + $0x88] sm:$0xff]
    %v1046 = vld [vmem:[%s91 + $0x90] sm:$0xff]
    %v1047 = vld [vmem:[%s91 + $0x98] sm:$0xff]
    %v1048 = vld [vmem:[%s91 + $0xa0] sm:$0xff]
    %v1049 = vld [vmem:[%s91 + $0xa8] sm:$0xff]
    %v1050 = vld [vmem:[%s91 + $0xb0] sm:$0xff]
    %v1051 = vld [vmem:[%s91 + $0xb8] sm:$0xff]
    %v1052 = vld [vmem:[%s3] sm:$0x1f]
    %v1053 = vld [vmem:[%s1] sm:$0x1f]
    %v1054 = vld [vmem:[%s1 + $0x8] sm:$0x1f]
    %vm1055 = vcmask 523264
    %v1057 = vsel %vm1055, %v1054, 0
    %1059 = vmatprep.subr.mxu0 0.0
    %1060 = vmatpush1.msra.mxu0 %v1028
    %1061 = vmatprep.subr.mxu0 0.0
    %1062 = vmatpush1.msra.mxu0 %v1029
    %1063 = vmatprep.subr.mxu0 0.0
    %1064 = vmatpush1.msra.mxu0 %v1030
    %1065 = vmatprep.subr.mxu0 0.0
    %1066 = vmatpush1.msra.mxu0 %v1031
    %1067 = vmatprep.subr.mxu0 0.0
    %1068 = vmatpush1.msra.mxu0 %v1032
    %1069 = vmatprep.subr.mxu0 0.0
    %1070 = vmatpush1.msra.mxu0 %v1033
    %1071 = vmatprep.subr.mxu0 0.0
    %1072 = vmatpush1.msra.mxu0 %v1034
    %1073 = vmatprep.subr.mxu0 0.0
    %1074 = vmatpush1.msra.mxu0 %v1035
    %1075 = vmatprep.subr.mxu0 0.0
    %1076 = vmatpush1.msra.mxu0 %v1036
    %1077 = vmatprep.subr.mxu0 0.0
    %1078 = vmatpush1.msra.mxu0 %v1037
    %1079 = vmatprep.subr.mxu0 0.0
    %1080 = vmatpush1.msra.mxu0 %v1038
    %1081 = vmatprep.subr.mxu0 0.0
    %1082 = vmatpush1.msra.mxu0 %v1039
    %1083 = vmatprep.subr.mxu0 0.0
    %1084 = vmatpush1.msra.mxu0 %v1040
    %1085 = vmatprep.subr.mxu0 0.0
    %1086 = vmatpush1.msra.mxu0 %v1041
    %1087 = vmatprep.subr.mxu0 0.0
    %1088 = vmatpush1.msra.mxu0 %v1042
    %1089 = vmatprep.subr.mxu0 0.0
    %1090 = vmatpush1.msra.mxu0 %v1043
    %1091 = vmatprep.subr.mxu0 0.0
    %1092 = vmatpush1.msra.mxu0 %v1044
    %1093 = vmatprep.subr.mxu0 0.0
    %1094 = vmatpush1.msra.mxu0 %v1045
    %1095 = vmatprep.subr.mxu0 0.0
    %1096 = vmatpush1.msra.mxu0 %v1046
    %1097 = vmatprep.subr.mxu0 0.0
    %1098 = vmatpush1.msra.mxu0 %v1047
    %1099 = vmatprep.subr.mxu0 0.0
    %1100 = vmatpush1.msra.mxu0 %v1048
    %1101 = vmatprep.subr.mxu0 0.0
    %1102 = vmatpush1.msra.mxu0 %v1049
    %1103 = vmatprep.subr.mxu0 0.0
    %1104 = vmatpush1.msra.mxu0 %v1050
    %1105 = vmatprep.subr.mxu0 0.0
    %1106 = vmatpush1.msra.mxu0 %v1051
    %1107 = vmatprep.subr.mxu0 0.0
    %1108 = vmatpush1.msra.mxu0 0.0
    %1109 = vmatprep.subr.mxu0 0.0
    %1110 = vmatpush1.msra.mxu0 0.0
    %1111 = vmatprep.subr.mxu0 0.0
    %1112 = vmatpush1.msra.mxu0 0.0
    %1113 = vmatprep.subr.mxu0 0.0
    %1114 = vmatpush1.msra.mxu0 0.0
    %1115 = vmatprep.subr.mxu0 0.0
    %1116 = vmatpush1.msra.mxu0 0.0
    %1117 = vmatprep.subr.mxu0 0.0
    %1118 = vmatpush1.msra.mxu0 0.0
    %1119 = vmatprep.subr.mxu0 0.0
    %1120 = vmatpush1.msra.mxu0 0.0
    %1121 = vmatprep.subr.mxu0 0.0
    %1122 = vmatpush1.msra.mxu0 0.0
    %1123 = vmatprep.mubr.f32.mxu0 %v1057
    %1124 = vmatmul.mubr.f32.gmra.mrb[0].mxu0 %v1053
    %v1125 = vpop.f32.mrb[0].mxu0
    %v1126 = vadd.f32 %v1052, %v1125
    %v1127 = vpop.f32.mrb[0].mxu0
    %1128 = vdwg.mxu0
    %s1129 = scalar_lea.vmem %s1, 16
    %v1130 = vld [vmem:[%s1129] sm:$0x1f]
    %v1131 = vld [vmem:[%s1129 + $0x8] sm:$0x1f]
    %v1133 = vsel %vm1055, %v1131, 0
    %1135 = vmatprep.subr.mxu0 0.0
    %1136 = vmatpush1.msra.mxu0 %v1028
    %1137 = vmatprep.subr.mxu0 0.0
    %1138 = vmatpush1.msra.mxu0 %v1029
    %1139 = vmatprep.subr.mxu0 0.0
    %1140 = vmatpush1.msra.mxu0 %v1030
    %1141 = vmatprep.subr.mxu0 0.0
    %1142 = vmatpush1.msra.mxu0 %v1031
    %1143 = vmatprep.subr.mxu0 0.0
    %1144 = vmatpush1.msra.mxu0 %v1032
    %1145 = vmatprep.subr.mxu0 0.0
    %1146 = vmatpush1.msra.mxu0 %v1033
    %1147 = vmatprep.subr.mxu0 0.0
    %1148 = vmatpush1.msra.mxu0 %v1034
    %1149 = vmatprep.subr.mxu0 0.0
    %1150 = vmatpush1.msra.mxu0 %v1035
    %1151 = vmatprep.subr.mxu0 0.0
    %1152 = vmatpush1.msra.mxu0 %v1036
    %1153 = vmatprep.subr.mxu0 0.0
    %1154 = vmatpush1.msra.mxu0 %v1037
    %1155 = vmatprep.subr.mxu0 0.0
    %1156 = vmatpush1.msra.mxu0 %v1038
    %1157 = vmatprep.subr.mxu0 0.0
    %1158 = vmatpush1.msra.mxu0 %v1039
    %1159 = vmatprep.subr.mxu0 0.0
    %1160 = vmatpush1.msra.mxu0 %v1040
    %1161 = vmatprep.subr.mxu0 0.0
    %1162 = vmatpush1.msra.mxu0 %v1041
    %1163 = vmatprep.subr.mxu0 0.0
    %1164 = vmatpush1.msra.mxu0 %v1042
    %1165 = vmatprep.subr.mxu0 0.0
    %1166 = vmatpush1.msra.mxu0 %v1043
    %1167 = vmatprep.subr.mxu0 0.0
    %1168 = vmatpush1.msra.mxu0 %v1044
    %1169 = vmatprep.subr.mxu0 0.0
    %1170 = vmatpush1.msra.mxu0 %v1045
    %1171 = vmatprep.subr.mxu0 0.0
    %1172 = vmatpush1.msra.mxu0 %v1046
    %1173 = vmatprep.subr.mxu0 0.0
    %1174 = vmatpush1.msra.mxu0 %v1047
    %1175 = vmatprep.subr.mxu0 0.0
    %1176 = vmatpush1.msra.mxu0 %v1048
    %1177 = vmatprep.subr.mxu0 0.0
    %1178 = vmatpush1.msra.mxu0 %v1049
    %1179 = vmatprep.subr.mxu0 0.0
    %1180 = vmatpush1.msra.mxu0 %v1050
    %1181 = vmatprep.subr.mxu0 0.0
    %1182 = vmatpush1.msra.mxu0 %v1051
    %1183 = vmatprep.subr.mxu0 0.0
    %1184 = vmatpush1.msra.mxu0 0.0
    %1185 = vmatprep.subr.mxu0 0.0
    %1186 = vmatpush1.msra.mxu0 0.0
    %1187 = vmatprep.subr.mxu0 0.0
    %1188 = vmatpush1.msra.mxu0 0.0
    %1189 = vmatprep.subr.mxu0 0.0
    %1190 = vmatpush1.msra.mxu0 0.0
    %1191 = vmatprep.subr.mxu0 0.0
    %1192 = vmatpush1.msra.mxu0 0.0
    %1193 = vmatprep.subr.mxu0 0.0
    %1194 = vmatpush1.msra.mxu0 0.0
    %1195 = vmatprep.subr.mxu0 0.0
    %1196 = vmatpush1.msra.mxu0 0.0
    %1197 = vmatprep.subr.mxu0 0.0
    %1198 = vmatpush1.msra.mxu0 0.0
    %1199 = vmatprep.mubr.f32.mxu0 %v1133
    %1200 = vmatmul.mubr.f32.gmra.mrb[0].mxu0 %v1130
    %v1201 = vpop.f32.mrb[0].mxu0
    %v1202 = vadd.f32 %v1052, %v1201
    %v1203 = vpop.f32.mrb[0].mxu0
    %1204 = vdwg.mxu0
    %vm1205 = vcmask 258048
    %v1206 = vsel %vm1205, %v1126, 0.0
    %1207 = vadd.xlane.f32.xlu0 %v1206
    %v1208 = vpop.xlane.xlu0 %1207
    %v1209 = vrcp.pop 32.0
    %v1210 = vmul.f32 %v1208, %v1209
    %v1211 = vsub.f32 %v1126, %v1210
    %v1212 = vmul.f32 %v1211, %v1211
    %v1213 = vsel %vm1205, %v1212, 0.0
    %1214 = vadd.xlane.f32.xlu0 %v1213
    %v1215 = vpop.xlane.xlu0 %1214
    %v1216 = vmul.f32 %v1215, %v1209
    %v1217 = vadd.f32 %v1216, 1e-06
    %v1218 = vrsqrt.pop %v1217
    %v1219 = vmul.f32 %v1211, %v1218
    %v1221 = vlaneseq
    %v1222 = vshrl.u32 %v1221, 7
    %v1223 = vsub.s32 0, %v1222
    %v1224 = vrot.slane %v946, %v1223
    %v1226 = vmul.f32 %v1219, %v1224
    %v1228 = vlaneseq
    %v1229 = vshrl.u32 %v1228, 7
    %v1230 = vsub.s32 0, %v1229
    %v1231 = vrot.slane %v945, %v1230
    %v1233 = vadd.f32 %v1226, %v1231
    %v1235 = vlaneseq
    %v1236 = vshrl.u32 %v1235, 7
    %v1237 = vsub.s32 0, %v1236
    %v1238 = vrot.slane %v944, %v1237
    %vm1240 = vcmask 261120
    %v1242 = vsel %vm1240, %v1233, 0
    %1244 = vmatprep.subr.mxu0 0.0
    %1245 = vmatpush1.msra.mxu0 %v975
    %1246 = vmatprep.subr.mxu0 0.0
    %1247 = vmatpush1.msra.mxu0 %v976
    %1248 = vmatprep.subr.mxu0 0.0
    %1249 = vmatpush1.msra.mxu0 %v977
    %1250 = vmatprep.subr.mxu0 0.0
    %1251 = vmatpush1.msra.mxu0 %v978
    %1252 = vmatprep.subr.mxu0 0.0
    %1253 = vmatpush1.msra.mxu0 0.0
    %1254 = vmatprep.subr.mxu0 0.0
    %1255 = vmatpush1.msra.mxu0 0.0
    %1256 = vmatprep.subr.mxu0 0.0
    %1257 = vmatpush1.msra.mxu0 0.0
    %1258 = vmatprep.subr.mxu0 0.0
    %1259 = vmatpush1.msra.mxu0 0.0
    %1260 = vmatprep.subr.mxu0 0.0
    %1261 = vmatpush1.msra.mxu0 0.0
    %1262 = vmatprep.subr.mxu0 0.0
    %1263 = vmatpush1.msra.mxu0 0.0
    %1264 = vmatprep.subr.mxu0 0.0
    %1265 = vmatpush1.msra.mxu0 0.0
    %1266 = vmatprep.subr.mxu0 0.0
    %1267 = vmatpush1.msra.mxu0 0.0
    %1268 = vmatprep.subr.mxu0 0.0
    %1269 = vmatpush1.msra.mxu0 0.0
    %1270 = vmatprep.subr.mxu0 0.0
    %1271 = vmatpush1.msra.mxu0 0.0
    %1272 = vmatprep.subr.mxu0 0.0
    %1273 = vmatpush1.msra.mxu0 0.0
    %1274 = vmatprep.subr.mxu0 0.0
    %1275 = vmatpush1.msra.mxu0 0.0
    %1276 = vmatprep.subr.mxu0 0.0
    %1277 = vmatpush1.msra.mxu0 0.0
    %1278 = vmatprep.subr.mxu0 0.0
    %1279 = vmatpush1.msra.mxu0 0.0
    %1280 = vmatprep.subr.mxu0 0.0
    %1281 = vmatpush1.msra.mxu0 0.0
    %1282 = vmatprep.subr.mxu0 0.0
    %1283 = vmatpush1.msra.mxu0 0.0
    %1284 = vmatprep.subr.mxu0 0.0
    %1285 = vmatpush1.msra.mxu0 0.0
    %1286 = vmatprep.subr.mxu0 0.0
    %1287 = vmatpush1.msra.mxu0 0.0
    %1288 = vmatprep.subr.mxu0 0.0
    %1289 = vmatpush1.msra.mxu0 0.0
    %1290 = vmatprep.subr.mxu0 0.0
    %1291 = vmatpush1.msra.mxu0 0.0
    %1292 = vmatprep.subr.mxu0 0.0
    %1293 = vmatpush1.msra.mxu0 0.0
    %1294 = vmatprep.subr.mxu0 0.0
    %1295 = vmatpush1.msra.mxu0 0.0
    %1296 = vmatprep.subr.mxu0 0.0
    %1297 = vmatpush1.msra.mxu0 0.0
    %1298 = vmatprep.subr.mxu0 0.0
    %1299 = vmatpush1.msra.mxu0 0.0
    %1300 = vmatprep.subr.mxu0 0.0
    %1301 = vmatpush1.msra.mxu0 0.0
    %1302 = vmatprep.subr.mxu0 0.0
    %1303 = vmatpush1.msra.mxu0 0.0
    %1304 = vmatprep.subr.mxu0 0.0
    %1305 = vmatpush1.msra.mxu0 0.0
    %1306 = vmatprep.subr.mxu0 0.0
    %1307 = vmatpush1.msra.mxu0 0.0
    %1308 = vmatprep.mubr.f32.mxu0 0.0
    %1309 = vmatmul.mubr.f32.gmra.mrb[0].mxu0 %v1242
    %v1310 = vpop.f32.mrb[0].mxu0
    %v1311 = vadd.f32 %v1238, %v1310
    %v1312 = vpop.f32.mrb[0].mxu0
    %1313 = vdwg.mxu0
    %1315 = vrot.lane.b32.xlu0 %v1311, 96
    %v1316 = vpop.permute.xlu0 %1315
    %vm1317 = vcmask 64512
    %v1318 = vsel %vm1317, %v1311, 0
    %v1320 = vsel %vm1317, %v1316, 0
    %1322 = vmatprep.subr.mxu0 0.0
    %1323 = vmatpush1.xpose.msra.mxu0 %v1320
    %1324 = vmatprep.subr.mxu0 0.0
    %1325 = vmatpush1.xpose.msra.mxu0 0.0
    %1326 = vmatprep.subr.mxu0 0.0
    %1327 = vmatpush1.xpose.msra.mxu0 0.0
    %1328 = vmatprep.subr.mxu0 0.0
    %1329 = vmatpush1.xpose.msra.mxu0 0.0
    %1330 = vmatprep.subr.mxu0 0.0
    %1331 = vmatpush1.xpose.msra.mxu0 0.0
    %1332 = vmatprep.subr.mxu0 0.0
    %1333 = vmatpush1.xpose.msra.mxu0 0.0
    %1334 = vmatprep.subr.mxu0 0.0
    %1335 = vmatpush1.xpose.msra.mxu0 0.0
    %1336 = vmatprep.subr.mxu0 0.0
    %1337 = vmatpush1.xpose.msra.mxu0 0.0
    %1338 = vmatprep.subr.mxu0 0.0
    %1339 = vmatpush1.xpose.msra.mxu0 0.0
    %1340 = vmatprep.subr.mxu0 0.0
    %1341 = vmatpush1.xpose.msra.mxu0 0.0
    %1342 = vmatprep.subr.mxu0 0.0
    %1343 = vmatpush1.xpose.msra.mxu0 0.0
    %1344 = vmatprep.subr.mxu0 0.0
    %1345 = vmatpush1.xpose.msra.mxu0 0.0
    %1346 = vmatprep.subr.mxu0 0.0
    %1347 = vmatpush1.xpose.msra.mxu0 0.0
    %1348 = vmatprep.subr.mxu0 0.0
    %1349 = vmatpush1.xpose.msra.mxu0 0.0
    %1350 = vmatprep.subr.mxu0 0.0
    %1351 = vmatpush1.xpose.msra.mxu0 0.0
    %1352 = vmatprep.subr.mxu0 0.0
    %1353 = vmatpush1.xpose.msra.mxu0 0.0
    %1354 = vmatprep.subr.mxu0 0.0
    %1355 = vmatpush1.xpose.msra.mxu0 0.0
    %1356 = vmatprep.subr.mxu0 0.0
    %1357 = vmatpush1.xpose.msra.mxu0 0.0
    %1358 = vmatprep.subr.mxu0 0.0
    %1359 = vmatpush1.xpose.msra.mxu0 0.0
    %1360 = vmatprep.subr.mxu0 0.0
    %1361 = vmatpush1.xpose.msra.mxu0 0.0
    %1362 = vmatprep.subr.mxu0 0.0
    %1363 = vmatpush1.xpose.msra.mxu0 0.0
    %1364 = vmatprep.subr.mxu0 0.0
    %1365 = vmatpush1.xpose.msra.mxu0 0.0
    %1366 = vmatprep.subr.mxu0 0.0
    %1367 = vmatpush1.xpose.msra.mxu0 0.0
    %1368 = vmatprep.subr.mxu0 0.0
    %1369 = vmatpush1.xpose.msra.mxu0 0.0
    %1370 = vmatprep.subr.mxu0 0.0
    %1371 = vmatpush1.xpose.msra.mxu0 0.0
    %1372 = vmatprep.subr.mxu0 0.0
    %1373 = vmatpush1.xpose.msra.mxu0 0.0
    %1374 = vmatprep.subr.mxu0 0.0
    %1375 = vmatpush1.xpose.msra.mxu0 0.0
    %1376 = vmatprep.subr.mxu0 0.0
    %1377 = vmatpush1.xpose.msra.mxu0 0.0
    %1378 = vmatprep.subr.mxu0 0.0
    %1379 = vmatpush1.xpose.msra.mxu0 0.0
    %1380 = vmatprep.subr.mxu0 0.0
    %1381 = vmatpush1.xpose.msra.mxu0 0.0
    %1382 = vmatprep.subr.mxu0 0.0
    %1383 = vmatpush1.xpose.msra.mxu0 0.0
    %1384 = vmatprep.subr.mxu0 0.0
    %1385 = vmatpush1.xpose.msra.mxu0 0.0
    %1386 = vmatprep.mubr.f32.mxu0 0.0
    %1387 = vmatmul.mubr.f32.gmra.mrb[0].mxu0 %v1318
    %v1388 = vpop.f32.mrb[0].mxu0
    %v1389 = vadd.f32 0.0, %v1388
    %v1390 = vpop.f32.mrb[0].mxu0
    %1391 = vdwg.mxu0
    %v1392 = vmul.f32 %v1389, 0.35355338
    %vm1393 = vcmask 36864
    %v1394 = vsel %vm1393, %v1392, -inf
    %1395 = vmax.xlane.f32.xlu0 %v1394
    %v1396 = vpop.xlane.xlu0 %1395
    %v1397 = vsub.f32 %v1392, %v1396
    %v1398 = vmul.f32 %v1397, 1.442695
    %v1399 = vpow.pop %v1398
    %v1400 = vsel %vm1393, %v1399, 0.0
    %1401 = vadd.xlane.f32.xlu0 %v1400
    %v1402 = vpop.xlane.xlu0 %1401
    %v1403 = vrcp.pop %v1402
    %v1404 = vmul.f32 %v1399, %v1403
    %1405 = vrot.lane.b32.xlu0 %v1311, 64
    %v1406 = vpop.permute.xlu0 %1405
    %vm1407 = vcmask 39936
    %v1409 = vsel %vm1407, %v1404, 0
    %vm1411 = vcmask 1044480
    %v1412 = vsel %vm1411, %v1406, 0
    %1414 = vmatprep.subr.mxu0 0.0
    %1415 = vmatpush1.msra.mxu0 %v1412
    %1416 = vmatprep.subr.mxu0 0.0
    %1417 = vmatpush1.msra.mxu0 0.0
    %1418 = vmatprep.subr.mxu0 0.0
    %1419 = vmatpush1.msra.mxu0 0.0
    %1420 = vmatprep.subr.mxu0 0.0
    %1421 = vmatpush1.msra.mxu0 0.0
    %1422 = vmatprep.subr.mxu0 0.0
    %1423 = vmatpush1.msra.mxu0 0.0
    %1424 = vmatprep.subr.mxu0 0.0
    %1425 = vmatpush1.msra.mxu0 0.0
    %1426 = vmatprep.subr.mxu0 0.0
    %1427 = vmatpush1.msra.mxu0 0.0
    %1428 = vmatprep.subr.mxu0 0.0
    %1429 = vmatpush1.msra.mxu0 0.0
    %1430 = vmatprep.subr.mxu0 0.0
    %1431 = vmatpush1.msra.mxu0 0.0
    %1432 = vmatprep.subr.mxu0 0.0
    %1433 = vmatpush1.msra.mxu0 0.0
    %1434 = vmatprep.subr.mxu0 0.0
    %1435 = vmatpush1.msra.mxu0 0.0
    %1436 = vmatprep.subr.mxu0 0.0
    %1437 = vmatpush1.msra.mxu0 0.0
    %1438 = vmatprep.subr.mxu0 0.0
    %1439 = vmatpush1.msra.mxu0 0.0
    %1440 = vmatprep.subr.mxu0 0.0
    %1441 = vmatpush1.msra.mxu0 0.0
    %1442 = vmatprep.subr.mxu0 0.0
    %1443 = vmatpush1.msra.mxu0 0.0
    %1444 = vmatprep.subr.mxu0 0.0
    %1445 = vmatpush1.msra.mxu0 0.0
    %1446 = vmatprep.subr.mxu0 0.0
    %1447 = vmatpush1.msra.mxu0 0.0
    %1448 = vmatprep.subr.mxu0 0.0
    %1449 = vmatpush1.msra.mxu0 0.0
    %1450 = vmatprep.subr.mxu0 0.0
    %1451 = vmatpush1.msra.mxu0 0.0
    %1452 = vmatprep.subr.mxu0 0.0
    %1453 = vmatpush1.msra.mxu0 0.0
    %1454 = vmatprep.subr.mxu0 0.0
    %1455 = vmatpush1.msra.mxu0 0.0
    %1456 = vmatprep.subr.mxu0 0.0
    %1457 = vmatpush1.msra.mxu0 0.0
    %1458 = vmatprep.subr.mxu0 0.0
    %1459 = vmatpush1.msra.mxu0 0.0
    %1460 = vmatprep.subr.mxu0 0.0
    %1461 = vmatpush1.msra.mxu0 0.0
    %1462 = vmatprep.subr.mxu0 0.0
    %1463 = vmatpush1.msra.mxu0 0.0
    %1464 = vmatprep.subr.mxu0 0.0
    %1465 = vmatpush1.msra.mxu0 0.0
    %1466 = vmatprep.subr.mxu0 0.0
    %1467 = vmatpush1.msra.mxu0 0.0
    %1468 = vmatprep.subr.mxu0 0.0
    %1469 = vmatpush1.msra.mxu0 0.0
    %1470 = vmatprep.subr.mxu0 0.0
    %1471 = vmatpush1.msra.mxu0 0.0
    %1472 = vmatprep.subr.mxu0 0.0
    %1473 = vmatpush1.msra.mxu0 0.0
    %1474 = vmatprep.subr.mxu0 0.0
    %1475 = vmatpush1.msra.mxu0 0.0
    %1476 = vmatprep.subr.mxu0 0.0
    %1477 = vmatpush1.msra.mxu0 0.0
    %1478 = vmatprep.mubr.f32.mxu0 0.0
    %1479 = vmatmul.mubr.f32.gmra.mrb[0].mxu0 %v1409
    %v1480 = vpop.f32.mrb[0].mxu0
    %v1481 = vadd.f32 0.0, %v1480
    %v1482 = vpop.f32.mrb[0].mxu0
    %1483 = vdwg.mxu0
    %1484 = vrot.lane.b32.xlu0 %v1311, 120
    %v1485 = vpop.permute.xlu0 %1484
    %1486 = vrot.lane.b32.xlu0 %v1311, 88
    %v1487 = vpop.permute.xlu0 %1486
    %v1488 = vsel %vm1317, %v1485, 0
    %v1490 = vsel %vm1317, %v1487, 0
    %1492 = vmatprep.subr.mxu0 0.0
    %1493 = vmatpush1.xpose.msra.mxu0 %v1490
    %1494 = vmatprep.subr.mxu0 0.0
    %1495 = vmatpush1.xpose.msra.mxu0 0.0
    %1496 = vmatprep.subr.mxu0 0.0
    %1497 = vmatpush1.xpose.msra.mxu0 0.0
    %1498 = vmatprep.subr.mxu0 0.0
    %1499 = vmatpush1.xpose.msra.mxu0 0.0
    %1500 = vmatprep.subr.mxu0 0.0
    %1501 = vmatpush1.xpose.msra.mxu0 0.0
    %1502 = vmatprep.subr.mxu0 0.0
    %1503 = vmatpush1.xpose.msra.mxu0 0.0
    %1504 = vmatprep.subr.mxu0 0.0
    %1505 = vmatpush1.xpose.msra.mxu0 0.0
    %1506 = vmatprep.subr.mxu0 0.0
    %1507 = vmatpush1.xpose.msra.mxu0 0.0
    %1508 = vmatprep.subr.mxu0 0.0
    %1509 = vmatpush1.xpose.msra.mxu0 0.0
    %1510 = vmatprep.subr.mxu0 0.0
    %1511 = vmatpush1.xpose.msra.mxu0 0.0
    %1512 = vmatprep.subr.mxu0 0.0
    %1513 = vmatpush1.xpose.msra.mxu0 0.0
    %1514 = vmatprep.subr.mxu0 0.0
    %1515 = vmatpush1.xpose.msra.mxu0 0.0
    %1516 = vmatprep.subr.mxu0 0.0
    %1517 = vmatpush1.xpose.msra.mxu0 0.0
    %1518 = vmatprep.subr.mxu0 0.0
    %1519 = vmatpush1.xpose.msra.mxu0 0.0
    %1520 = vmatprep.subr.mxu0 0.0
    %1521 = vmatpush1.xpose.msra.mxu0 0.0
    %1522 = vmatprep.subr.mxu0 0.0
    %1523 = vmatpush1.xpose.msra.mxu0 0.0
    %1524 = vmatprep.subr.mxu0 0.0
    %1525 = vmatpush1.xpose.msra.mxu0 0.0
    %1526 = vmatprep.subr.mxu0 0.0
    %1527 = vmatpush1.xpose.msra.mxu0 0.0
    %1528 = vmatprep.subr.mxu0 0.0
    %1529 = vmatpush1.xpose.msra.mxu0 0.0
    %1530 = vmatprep.subr.mxu0 0.0
    %1531 = vmatpush1.xpose.msra.mxu0 0.0
    %1532 = vmatprep.subr.mxu0 0.0
    %1533 = vmatpush1.xpose.msra.mxu0 0.0
    %1534 = vmatprep.subr.mxu0 0.0
    %1535 = vmatpush1.xpose.msra.mxu0 0.0
    %1536 = vmatprep.subr.mxu0 0.0
    %1537 = vmatpush1.xpose.msra.mxu0 0.0
    %1538 = vmatprep.subr.mxu0 0.0
    %1539 = vmatpush1.xpose.msra.mxu0 0.0
    %1540 = vmatprep.subr.mxu0 0.0
    %1541 = vmatpush1.xpose.msra.mxu0 0.0
    %1542 = vmatprep.subr.mxu0 0.0
    %1543 = vmatpush1.xpose.msra.mxu0 0.0
    %1544 = vmatprep.subr.mxu0 0.0
    %1545 = vmatpush1.xpose.msra.mxu0 0.0
    %1546 = vmatprep.subr.mxu0 0.0
    %1547 = vmatpush1.xpose.msra.mxu0 0.0
    %1548 = vmatprep.subr.mxu0 0.0
    %1549 = vmatpush1.xpose.msra.mxu0 0.0
    %1550 = vmatprep.subr.mxu0 0.0
    %1551 = vmatpush1.xpose.msra.mxu0 0.0
    %1552 = vmatprep.subr.mxu0 0.0
    %1553 = vmatpush1.xpose.msra.mxu0 0.0
    %1554 = vmatprep.subr.mxu0 0.0
    %1555 = vmatpush1.xpose.msra.mxu0 0.0
    %1556 = vmatprep.mubr.f32.mxu0 0.0
    %1557 = vmatmul.mubr.f32.gmra.mrb[0].mxu0 %v1488
    %v1558 = vpop.f32.mrb[0].mxu0
    %v1559 = vadd.f32 0.0, %v1558
    %v1560 = vpop.f32.mrb[0].mxu0
    %1561 = vdwg.mxu0
    %v1562 = vmul.f32 %v1559, 0.35355338
    %v1563 = vsel %vm1393, %v1562, -inf
    %1564 = vmax.xlane.f32.xlu0 %v1563
    %v1565 = vpop.xlane.xlu0 %1564
    %v1566 = vsub.f32 %v1562, %v1565
    %v1567 = vmul.f32 %v1566, 1.442695
    %v1568 = vpow.pop %v1567
    %v1569 = vsel %vm1393, %v1568, 0.0
    %1570 = vadd.xlane.f32.xlu0 %v1569
    %v1571 = vpop.xlane.xlu0 %1570
    %v1572 = vrcp.pop %v1571
    %v1573 = vmul.f32 %v1568, %v1572
    %1574 = vrot.lane.b32.xlu0 %v1311, 56
    %v1575 = vpop.permute.xlu0 %1574
    %v1577 = vsel %vm1407, %v1573, 0
    %v1579 = vsel %vm1411, %v1575, 0
    %1581 = vmatprep.subr.mxu0 0.0
    %1582 = vmatpush1.msra.mxu0 %v1579
    %1583 = vmatprep.subr.mxu0 0.0
    %1584 = vmatpush1.msra.mxu0 0.0
    %1585 = vmatprep.subr.mxu0 0.0
    %1586 = vmatpush1.msra.mxu0 0.0
    %1587 = vmatprep.subr.mxu0 0.0
    %1588 = vmatpush1.msra.mxu0 0.0
    %1589 = vmatprep.subr.mxu0 0.0
    %1590 = vmatpush1.msra.mxu0 0.0
    %1591 = vmatprep.subr.mxu0 0.0
    %1592 = vmatpush1.msra.mxu0 0.0
    %1593 = vmatprep.subr.mxu0 0.0
    %1594 = vmatpush1.msra.mxu0 0.0
    %1595 = vmatprep.subr.mxu0 0.0
    %1596 = vmatpush1.msra.mxu0 0.0
    %1597 = vmatprep.subr.mxu0 0.0
    %1598 = vmatpush1.msra.mxu0 0.0
    %1599 = vmatprep.subr.mxu0 0.0
    %1600 = vmatpush1.msra.mxu0 0.0
    %1601 = vmatprep.subr.mxu0 0.0
    %1602 = vmatpush1.msra.mxu0 0.0
    %1603 = vmatprep.subr.mxu0 0.0
    %1604 = vmatpush1.msra.mxu0 0.0
    %1605 = vmatprep.subr.mxu0 0.0
    %1606 = vmatpush1.msra.mxu0 0.0
    %1607 = vmatprep.subr.mxu0 0.0
    %1608 = vmatpush1.msra.mxu0 0.0
    %1609 = vmatprep.subr.mxu0 0.0
    %1610 = vmatpush1.msra.mxu0 0.0
    %1611 = vmatprep.subr.mxu0 0.0
    %1612 = vmatpush1.msra.mxu0 0.0
    %1613 = vmatprep.subr.mxu0 0.0
    %1614 = vmatpush1.msra.mxu0 0.0
    %1615 = vmatprep.subr.mxu0 0.0
    %1616 = vmatpush1.msra.mxu0 0.0
    %1617 = vmatprep.subr.mxu0 0.0
    %1618 = vmatpush1.msra.mxu0 0.0
    %1619 = vmatprep.subr.mxu0 0.0
    %1620 = vmatpush1.msra.mxu0 0.0
    %1621 = vmatprep.subr.mxu0 0.0
    %1622 = vmatpush1.msra.mxu0 0.0
    %1623 = vmatprep.subr.mxu0 0.0
    %1624 = vmatpush1.msra.mxu0 0.0
    %1625 = vmatprep.subr.mxu0 0.0
    %1626 = vmatpush1.msra.mxu0 0.0
    %1627 = vmatprep.subr.mxu0 0.0
    %1628 = vmatpush1.msra.mxu0 0.0
    %1629 = vmatprep.subr.mxu0 0.0
    %1630 = vmatpush1.msra.mxu0 0.0
    %1631 = vmatprep.subr.mxu0 0.0
    %1632 = vmatpush1.msra.mxu0 0.0
    %1633 = vmatprep.subr.mxu0 0.0
    %1634 = vmatpush1.msra.mxu0 0.0
    %1635 = vmatprep.subr.mxu0 0.0
    %1636 = vmatpush1.msra.mxu0 0.0
    %1637 = vmatprep.subr.mxu0 0.0
    %1638 = vmatpush1.msra.mxu0 0.0
    %1639 = vmatprep.subr.mxu0 0.0
    %1640 = vmatpush1.msra.mxu0 0.0
    %1641 = vmatprep.subr.mxu0 0.0
    %1642 = vmatpush1.msra.mxu0 0.0
    %1643 = vmatprep.subr.mxu0 0.0
    %1644 = vmatpush1.msra.mxu0 0.0
    %1645 = vmatprep.mubr.f32.mxu0 0.0
    %1646 = vmatmul.mubr.f32.gmra.mrb[0].mxu0 %v1577
    %v1647 = vpop.f32.mrb[0].mxu0
    %v1648 = vadd.f32 0.0, %v1647
    %v1649 = vpop.f32.mrb[0].mxu0
    %1650 = vdwg.mxu0
    %v1652 = vsel %vm1317, %v1648, 0
    %1654 = vmatprep.subr.mxu0 0.0
    %1655 = vmatpush1.msra.mxu0 %v972
    %1656 = vmatprep.subr.mxu0 0.0
    %1657 = vmatpush1.msra.mxu0 0.0
    %1658 = vmatprep.subr.mxu0 0.0
    %1659 = vmatpush1.msra.mxu0 0.0
    %1660 = vmatprep.subr.mxu0 0.0
    %1661 = vmatpush1.msra.mxu0 0.0
    %1662 = vmatprep.subr.mxu0 0.0
    %1663 = vmatpush1.msra.mxu0 0.0
    %1664 = vmatprep.subr.mxu0 0.0
    %1665 = vmatpush1.msra.mxu0 0.0
    %1666 = vmatprep.subr.mxu0 0.0
    %1667 = vmatpush1.msra.mxu0 0.0
    %1668 = vmatprep.subr.mxu0 0.0
    %1669 = vmatpush1.msra.mxu0 0.0
    %1670 = vmatprep.subr.mxu0 0.0
    %1671 = vmatpush1.msra.mxu0 0.0
    %1672 = vmatprep.subr.mxu0 0.0
    %1673 = vmatpush1.msra.mxu0 0.0
    %1674 = vmatprep.subr.mxu0 0.0
    %1675 = vmatpush1.msra.mxu0 0.0
    %1676 = vmatprep.subr.mxu0 0.0
    %1677 = vmatpush1.msra.mxu0 0.0
    %1678 = vmatprep.subr.mxu0 0.0
    %1679 = vmatpush1.msra.mxu0 0.0
    %1680 = vmatprep.subr.mxu0 0.0
    %1681 = vmatpush1.msra.mxu0 0.0
    %1682 = vmatprep.subr.mxu0 0.0
    %1683 = vmatpush1.msra.mxu0 0.0
    %1684 = vmatprep.subr.mxu0 0.0
    %1685 = vmatpush1.msra.mxu0 0.0
    %1686 = vmatprep.subr.mxu0 0.0
    %1687 = vmatpush1.msra.mxu0 0.0
    %1688 = vmatprep.subr.mxu0 0.0
    %1689 = vmatpush1.msra.mxu0 0.0
    %1690 = vmatprep.subr.mxu0 0.0
    %1691 = vmatpush1.msra.mxu0 0.0
    %1692 = vmatprep.subr.mxu0 0.0
    %1693 = vmatpush1.msra.mxu0 0.0
    %1694 = vmatprep.subr.mxu0 0.0
    %1695 = vmatpush1.msra.mxu0 0.0
    %1696 = vmatprep.subr.mxu0 0.0
    %1697 = vmatpush1.msra.mxu0 0.0
    %1698 = vmatprep.subr.mxu0 0.0
    %1699 = vmatpush1.msra.mxu0 0.0
    %1700 = vmatprep.subr.mxu0 0.0
    %1701 = vmatpush1.msra.mxu0 0.0
    %1702 = vmatprep.subr.mxu0 0.0
    %1703 = vmatpush1.msra.mxu0 0.0
    %1704 = vmatprep.subr.mxu0 0.0
    %1705 = vmatpush1.msra.mxu0 0.0
    %1706 = vmatprep.subr.mxu0 0.0
    %1707 = vmatpush1.msra.mxu0 0.0
    %1708 = vmatprep.subr.mxu0 0.0
    %1709 = vmatpush1.msra.mxu0 0.0
    %1710 = vmatprep.subr.mxu0 0.0
    %1711 = vmatpush1.msra.mxu0 0.0
    %1712 = vmatprep.subr.mxu0 0.0
    %1713 = vmatpush1.msra.mxu0 0.0
    %1714 = vmatprep.subr.mxu0 0.0
    %1715 = vmatpush1.msra.mxu0 0.0
    %1716 = vmatprep.subr.mxu0 0.0
    %1717 = vmatpush1.msra.mxu0 0.0
    %1718 = vmatprep.mubr.f32.mxu0 0.0
    %1719 = vmatmul.mubr.f32.gmra.mrb[0].mxu0 %v1652
    %v1720 = vpop.f32.mrb[0].mxu0
    %v1721 = vadd.f32 0.0, %v1720
    %v1722 = vpop.f32.mrb[0].mxu0
    %1723 = vdwg.mxu0
    %v1725 = vsel %vm1317, %v1481, 0
    %1727 = vmatprep.subr.mxu0 0.0
    %1728 = vmatpush1.msra.mxu0 %v971
    %1729 = vmatprep.subr.mxu0 0.0
    %1730 = vmatpush1.msra.mxu0 0.0
    %1731 = vmatprep.subr.mxu0 0.0
    %1732 = vmatpush1.msra.mxu0 0.0
    %1733 = vmatprep.subr.mxu0 0.0
    %1734 = vmatpush1.msra.mxu0 0.0
    %1735 = vmatprep.subr.mxu0 0.0
    %1736 = vmatpush1.msra.mxu0 0.0
    %1737 = vmatprep.subr.mxu0 0.0
    %1738 = vmatpush1.msra.mxu0 0.0
    %1739 = vmatprep.subr.mxu0 0.0
    %1740 = vmatpush1.msra.mxu0 0.0
    %1741 = vmatprep.subr.mxu0 0.0
    %1742 = vmatpush1.msra.mxu0 0.0
    %1743 = vmatprep.subr.mxu0 0.0
    %1744 = vmatpush1.msra.mxu0 0.0
    %1745 = vmatprep.subr.mxu0 0.0
    %1746 = vmatpush1.msra.mxu0 0.0
    %1747 = vmatprep.subr.mxu0 0.0
    %1748 = vmatpush1.msra.mxu0 0.0
    %1749 = vmatprep.subr.mxu0 0.0
    %1750 = vmatpush1.msra.mxu0 0.0
    %1751 = vmatprep.subr.mxu0 0.0
    %1752 = vmatpush1.msra.mxu0 0.0
    %1753 = vmatprep.subr.mxu0 0.0
    %1754 = vmatpush1.msra.mxu0 0.0
    %1755 = vmatprep.subr.mxu0 0.0
    %1756 = vmatpush1.msra.mxu0 0.0
    %1757 = vmatprep.subr.mxu0 0.0
    %1758 = vmatpush1.msra.mxu0 0.0
    %1759 = vmatprep.subr.mxu0 0.0
    %1760 = vmatpush1.msra.mxu0 0.0
    %1761 = vmatprep.subr.mxu0 0.0
    %1762 = vmatpush1.msra.mxu0 0.0
    %1763 = vmatprep.subr.mxu0 0.0
    %1764 = vmatpush1.msra.mxu0 0.0
    %1765 = vmatprep.subr.mxu0 0.0
    %1766 = vmatpush1.msra.mxu0 0.0
    %1767 = vmatprep.subr.mxu0 0.0
    %1768 = vmatpush1.msra.mxu0 0.0
    %1769 = vmatprep.subr.mxu0 0.0
    %1770 = vmatpush1.msra.mxu0 0.0
    %1771 = vmatprep.subr.mxu0 0.0
    %1772 = vmatpush1.msra.mxu0 0.0
    %1773 = vmatprep.subr.mxu0 0.0
    %1774 = vmatpush1.msra.mxu0 0.0
    %1775 = vmatprep.subr.mxu0 0.0
    %1776 = vmatpush1.msra.mxu0 0.0
    %1777 = vmatprep.subr.mxu0 0.0
    %1778 = vmatpush1.msra.mxu0 0.0
    %1779 = vmatprep.subr.mxu0 0.0
    %1780 = vmatpush1.msra.mxu0 0.0
    %1781 = vmatprep.subr.mxu0 0.0
    %1782 = vmatpush1.msra.mxu0 0.0
    %1783 = vmatprep.subr.mxu0 0.0
    %1784 = vmatpush1.msra.mxu0 0.0
    %1785 = vmatprep.subr.mxu0 0.0
    %1786 = vmatpush1.msra.mxu0 0.0
    %1787 = vmatprep.subr.mxu0 0.0
    %1788 = vmatpush1.msra.mxu0 0.0
    %1789 = vmatprep.subr.mxu0 0.0
    %1790 = vmatpush1.msra.mxu0 0.0
    %1791 = vmatprep.mubr.f32.mxu0 0.0
    %1792 = vmatmul.mubr.f32.gmra.mrb[0].mxu0 %v1725
    %v1793 = vpop.f32.mrb[0].mxu0
    %v1794 = vadd.f32 %v1721, %v1793
    %v1795 = vpop.f32.mrb[0].mxu0
    %1796 = vdwg.mxu0
    %1797 = vrot.lane.b32.xlu0 %v1311, 112
    %v1798 = vpop.permute.xlu0 %1797
    %1799 = vrot.lane.b32.xlu0 %v1311, 80
    %v1800 = vpop.permute.xlu0 %1799
    %v1801 = vsel %vm1317, %v1798, 0
    %v1803 = vsel %vm1317, %v1800, 0
    %1805 = vmatprep.subr.mxu0 0.0
    %1806 = vmatpush1.xpose.msra.mxu0 %v1803
    %1807 = vmatprep.subr.mxu0 0.0
    %1808 = vmatpush1.xpose.msra.mxu0 0.0
    %1809 = vmatprep.subr.mxu0 0.0
    %1810 = vmatpush1.xpose.msra.mxu0 0.0
    %1811 = vmatprep.subr.mxu0 0.0
    %1812 = vmatpush1.xpose.msra.mxu0 0.0
    %1813 = vmatprep.subr.mxu0 0.0
    %1814 = vmatpush1.xpose.msra.mxu0 0.0
    %1815 = vmatprep.subr.mxu0 0.0
    %1816 = vmatpush1.xpose.msra.mxu0 0.0
    %1817 = vmatprep.subr.mxu0 0.0
    %1818 = vmatpush1.xpose.msra.mxu0 0.0
    %1819 = vmatprep.subr.mxu0 0.0
    %1820 = vmatpush1.xpose.msra.mxu0 0.0
    %1821 = vmatprep.subr.mxu0 0.0
    %1822 = vmatpush1.xpose.msra.mxu0 0.0
    %1823 = vmatprep.subr.mxu0 0.0
    %1824 = vmatpush1.xpose.msra.mxu0 0.0
    %1825 = vmatprep.subr.mxu0 0.0
    %1826 = vmatpush1.xpose.msra.mxu0 0.0
    %1827 = vmatprep.subr.mxu0 0.0
    %1828 = vmatpush1.xpose.msra.mxu0 0.0
    %1829 = vmatprep.subr.mxu0 0.0
    %1830 = vmatpush1.xpose.msra.mxu0 0.0
    %1831 = vmatprep.subr.mxu0 0.0
    %1832 = vmatpush1.xpose.msra.mxu0 0.0
    %1833 = vmatprep.subr.mxu0 0.0
    %1834 = vmatpush1.xpose.msra.mxu0 0.0
    %1835 = vmatprep.subr.mxu0 0.0
    %1836 = vmatpush1.xpose.msra.mxu0 0.0
    %1837 = vmatprep.subr.mxu0 0.0
    %1838 = vmatpush1.xpose.msra.mxu0 0.0
    %1839 = vmatprep.subr.mxu0 0.0
    %1840 = vmatpush1.xpose.msra.mxu0 0.0
    %1841 = vmatprep.subr.mxu0 0.0
    %1842 = vmatpush1.xpose.msra.mxu0 0.0
    %1843 = vmatprep.subr.mxu0 0.0
    %1844 = vmatpush1.xpose.msra.mxu0 0.0
    %1845 = vmatprep.subr.mxu0 0.0
    %1846 = vmatpush1.xpose.msra.mxu0 0.0
    %1847 = vmatprep.subr.mxu0 0.0
    %1848 = vmatpush1.xpose.msra.mxu0 0.0
    %1849 = vmatprep.subr.mxu0 0.0
    %1850 = vmatpush1.xpose.msra.mxu0 0.0
    %1851 = vmatprep.subr.mxu0 0.0
    %1852 = vmatpush1.xpose.msra.mxu0 0.0
    %1853 = vmatprep.subr.mxu0 0.0
    %1854 = vmatpush1.xpose.msra.mxu0 0.0
    %1855 = vmatprep.subr.mxu0 0.0
    %1856 = vmatpush1.xpose.msra.mxu0 0.0
    %1857 = vmatprep.subr.mxu0 0.0
    %1858 = vmatpush1.xpose.msra.mxu0 0.0
    %1859 = vmatprep.subr.mxu0 0.0
    %1860 = vmatpush1.xpose.msra.mxu0 0.0
    %1861 = vmatprep.subr.mxu0 0.0
    %1862 = vmatpush1.xpose.msra.mxu0 0.0
    %1863 = vmatprep.subr.mxu0 0.0
    %1864 = vmatpush1.xpose.msra.mxu0 0.0
    %1865 = vmatprep.subr.mxu0 0.0
    %1866 = vmatpush1.xpose.msra.mxu0 0.0
    %1867 = vmatprep.subr.mxu0 0.0
    %1868 = vmatpush1.xpose.msra.mxu0 0.0
    %1869 = vmatprep.mubr.f32.mxu0 0.0
    %1870 = vmatmul.mubr.f32.gmra.mrb[0].mxu0 %v1801
    %v1871 = vpop.f32.mrb[0].mxu0
    %v1872 = vadd.f32 0.0, %v1871
    %v1873 = vpop.f32.mrb[0].mxu0
    %1874 = vdwg.mxu0
    %v1875 = vmul.f32 %v1872, 0.35355338
    %v1876 = vsel %vm1393, %v1875, -inf
    %1877 = vmax.xlane.f32.xlu0 %v1876
    %v1878 = vpop.xlane.xlu0 %1877
    %v1879 = vsub.f32 %v1875, %v1878
    %v1880 = vmul.f32 %v1879, 1.442695
    %v1881 = vpow.pop %v1880
    %v1882 = vsel %vm1393, %v1881, 0.0
    %1883 = vadd.xlane.f32.xlu0 %v1882
    %v1884 = vpop.xlane.xlu0 %1883
    %v1885 = vrcp.pop %v1884
    %v1886 = vmul.f32 %v1881, %v1885
    %1887 = vrot.lane.b32.xlu0 %v1311, 48
    %v1888 = vpop.permute.xlu0 %1887
    %v1890 = vsel %vm1407, %v1886, 0
    %v1892 = vsel %vm1411, %v1888, 0
    %1894 = vmatprep.subr.mxu0 0.0
    %1895 = vmatpush1.msra.mxu0 %v1892
    %1896 = vmatprep.subr.mxu0 0.0
    %1897 = vmatpush1.msra.mxu0 0.0
    %1898 = vmatprep.subr.mxu0 0.0
    %1899 = vmatpush1.msra.mxu0 0.0
    %1900 = vmatprep.subr.mxu0 0.0
    %1901 = vmatpush1.msra.mxu0 0.0
    %1902 = vmatprep.subr.mxu0 0.0
    %1903 = vmatpush1.msra.mxu0 0.0
    %1904 = vmatprep.subr.mxu0 0.0
    %1905 = vmatpush1.msra.mxu0 0.0
    %1906 = vmatprep.subr.mxu0 0.0
    %1907 = vmatpush1.msra.mxu0 0.0
    %1908 = vmatprep.subr.mxu0 0.0
    %1909 = vmatpush1.msra.mxu0 0.0
    %1910 = vmatprep.subr.mxu0 0.0
    %1911 = vmatpush1.msra.mxu0 0.0
    %1912 = vmatprep.subr.mxu0 0.0
    %1913 = vmatpush1.msra.mxu0 0.0
    %1914 = vmatprep.subr.mxu0 0.0
    %1915 = vmatpush1.msra.mxu0 0.0
    %1916 = vmatprep.subr.mxu0 0.0
    %1917 = vmatpush1.msra.mxu0 0.0
    %1918 = vmatprep.subr.mxu0 0.0
    %1919 = vmatpush1.msra.mxu0 0.0
    %1920 = vmatprep.subr.mxu0 0.0
    %1921 = vmatpush1.msra.mxu0 0.0
    %1922 = vmatprep.subr.mxu0 0.0
    %1923 = vmatpush1.msra.mxu0 0.0
    %1924 = vmatprep.subr.mxu0 0.0
    %1925 = vmatpush1.msra.mxu0 0.0
    %1926 = vmatprep.subr.mxu0 0.0
    %1927 = vmatpush1.msra.mxu0 0.0
    %1928 = vmatprep.subr.mxu0 0.0
    %1929 = vmatpush1.msra.mxu0 0.0
    %1930 = vmatprep.subr.mxu0 0.0
    %1931 = vmatpush1.msra.mxu0 0.0
    %1932 = vmatprep.subr.mxu0 0.0
    %1933 = vmatpush1.msra.mxu0 0.0
    %1934 = vmatprep.subr.mxu0 0.0
    %1935 = vmatpush1.msra.mxu0 0.0
    %1936 = vmatprep.subr.mxu0 0.0
    %1937 = vmatpush1.msra.mxu0 0.0
    %1938 = vmatprep.subr.mxu0 0.0
    %1939 = vmatpush1.msra.mxu0 0.0
    %1940 = vmatprep.subr.mxu0 0.0
    %1941 = vmatpush1.msra.mxu0 0.0
    %1942 = vmatprep.subr.mxu0 0.0
    %1943 = vmatpush1.msra.mxu0 0.0
    %1944 = vmatprep.subr.mxu0 0.0
    %1945 = vmatpush1.msra.mxu0 0.0
    %1946 = vmatprep.subr.mxu0 0.0
    %1947 = vmatpush1.msra.mxu0 0.0
    %1948 = vmatprep.subr.mxu0 0.0
    %1949 = vmatpush1.msra.mxu0 0.0
    %1950 = vmatprep.subr.mxu0 0.0
    %1951 = vmatpush1.msra.mxu0 0.0
    %1952 = vmatprep.subr.mxu0 0.0
    %1953 = vmatpush1.msra.mxu0 0.0
    %1954 = vmatprep.subr.mxu0 0.0
    %1955 = vmatpush1.msra.mxu0 0.0
    %1956 = vmatprep.subr.mxu0 0.0
    %1957 = vmatpush1.msra.mxu0 0.0
    %1958 = vmatprep.mubr.f32.mxu0 0.0
    %1959 = vmatmul.mubr.f32.gmra.mrb[0].mxu0 %v1890
    %v1960 = vpop.f32.mrb[0].mxu0
    %v1961 = vadd.f32 0.0, %v1960
    %v1962 = vpop.f32.mrb[0].mxu0
    %1963 = vdwg.mxu0
    %v1965 = vsel %vm1317, %v1961, 0
    %1967 = vmatprep.subr.mxu0 0.0
    %1968 = vmatpush1.msra.mxu0 %v973
    %1969 = vmatprep.subr.mxu0 0.0
    %1970 = vmatpush1.msra.mxu0 0.0
    %1971 = vmatprep.subr.mxu0 0.0
    %1972 = vmatpush1.msra.mxu0 0.0
    %1973 = vmatprep.subr.mxu0 0.0
    %1974 = vmatpush1.msra.mxu0 0.0
    %1975 = vmatprep.subr.mxu0 0.0
    %1976 = vmatpush1.msra.mxu0 0.0
    %1977 = vmatprep.subr.mxu0 0.0
    %1978 = vmatpush1.msra.mxu0 0.0
    %1979 = vmatprep.subr.mxu0 0.0
    %1980 = vmatpush1.msra.mxu0 0.0
    %1981 = vmatprep.subr.mxu0 0.0
    %1982 = vmatpush1.msra.mxu0 0.0
    %1983 = vmatprep.subr.mxu0 0.0
    %1984 = vmatpush1.msra.mxu0 0.0
    %1985 = vmatprep.subr.mxu0 0.0
    %1986 = vmatpush1.msra.mxu0 0.0
    %1987 = vmatprep.subr.mxu0 0.0
    %1988 = vmatpush1.msra.mxu0 0.0
    %1989 = vmatprep.subr.mxu0 0.0
    %1990 = vmatpush1.msra.mxu0 0.0
    %1991 = vmatprep.subr.mxu0 0.0
    %1992 = vmatpush1.msra.mxu0 0.0
    %1993 = vmatprep.subr.mxu0 0.0
    %1994 = vmatpush1.msra.mxu0 0.0
    %1995 = vmatprep.subr.mxu0 0.0
    %1996 = vmatpush1.msra.mxu0 0.0
    %1997 = vmatprep.subr.mxu0 0.0
    %1998 = vmatpush1.msra.mxu0 0.0
    %1999 = vmatprep.subr.mxu0 0.0
    %2000 = vmatpush1.msra.mxu0 0.0
    %2001 = vmatprep.subr.mxu0 0.0
    %2002 = vmatpush1.msra.mxu0 0.0
    %2003 = vmatprep.subr.mxu0 0.0
    %2004 = vmatpush1.msra.mxu0 0.0
    %2005 = vmatprep.subr.mxu0 0.0
    %2006 = vmatpush1.msra.mxu0 0.0
    %2007 = vmatprep.subr.mxu0 0.0
    %2008 = vmatpush1.msra.mxu0 0.0
    %2009 = vmatprep.subr.mxu0 0.0
    %2010 = vmatpush1.msra.mxu0 0.0
    %2011 = vmatprep.subr.mxu0 0.0
    %2012 = vmatpush1.msra.mxu0 0.0
    %2013 = vmatprep.subr.mxu0 0.0
    %2014 = vmatpush1.msra.mxu0 0.0
    %2015 = vmatprep.subr.mxu0 0.0
    %2016 = vmatpush1.msra.mxu0 0.0
    %2017 = vmatprep.subr.mxu0 0.0
    %2018 = vmatpush1.msra.mxu0 0.0
    %2019 = vmatprep.subr.mxu0 0.0
    %2020 = vmatpush1.msra.mxu0 0.0
    %2021 = vmatprep.subr.mxu0 0.0
    %2022 = vmatpush1.msra.mxu0 0.0
    %2023 = vmatprep.subr.mxu0 0.0
    %2024 = vmatpush1.msra.mxu0 0.0
    %2025 = vmatprep.subr.mxu0 0.0
    %2026 = vmatpush1.msra.mxu0 0.0
    %2027 = vmatprep.subr.mxu0 0.0
    %2028 = vmatpush1.msra.mxu0 0.0
    %2029 = vmatprep.subr.mxu0 0.0
    %2030 = vmatpush1.msra.mxu0 0.0
    %2031 = vmatprep.mubr.f32.mxu0 0.0
    %2032 = vmatmul.mubr.f32.gmra.mrb[0].mxu0 %v1965
    %v2033 = vpop.f32.mrb[0].mxu0
    %v2034 = vadd.f32 0.0, %v2033
    %v2035 = vpop.f32.mrb[0].mxu0
    %2036 = vdwg.mxu0
    %v2037 = vadd.f32 %v1794, %v2034
    %2038 = vrot.lane.b32.xlu0 %v1311, 104
    %v2039 = vpop.permute.xlu0 %2038
    %2040 = vrot.lane.b32.xlu0 %v1311, 72
    %v2041 = vpop.permute.xlu0 %2040
    %v2042 = vsel %vm1317, %v2039, 0
    %v2044 = vsel %vm1317, %v2041, 0
    %2046 = vmatprep.subr.mxu0 0.0
    %2047 = vmatpush1.xpose.msra.mxu0 %v2044
    %2048 = vmatprep.subr.mxu0 0.0
    %2049 = vmatpush1.xpose.msra.mxu0 0.0
    %2050 = vmatprep.subr.mxu0 0.0
    %2051 = vmatpush1.xpose.msra.mxu0 0.0
    %2052 = vmatprep.subr.mxu0 0.0
    %2053 = vmatpush1.xpose.msra.mxu0 0.0
    %2054 = vmatprep.subr.mxu0 0.0
    %2055 = vmatpush1.xpose.msra.mxu0 0.0
    %2056 = vmatprep.subr.mxu0 0.0
    %2057 = vmatpush1.xpose.msra.mxu0 0.0
    %2058 = vmatprep.subr.mxu0 0.0
    %2059 = vmatpush1.xpose.msra.mxu0 0.0
    %2060 = vmatprep.subr.mxu0 0.0
    %2061 = vmatpush1.xpose.msra.mxu0 0.0
    %2062 = vmatprep.subr.mxu0 0.0
    %2063 = vmatpush1.xpose.msra.mxu0 0.0
    %2064 = vmatprep.subr.mxu0 0.0
    %2065 = vmatpush1.xpose.msra.mxu0 0.0
    %2066 = vmatprep.subr.mxu0 0.0
    %2067 = vmatpush1.xpose.msra.mxu0 0.0
    %2068 = vmatprep.subr.mxu0 0.0
    %2069 = vmatpush1.xpose.msra.mxu0 0.0
    %2070 = vmatprep.subr.mxu0 0.0
    %2071 = vmatpush1.xpose.msra.mxu0 0.0
    %2072 = vmatprep.subr.mxu0 0.0
    %2073 = vmatpush1.xpose.msra.mxu0 0.0
    %2074 = vmatprep.subr.mxu0 0.0
    %2075 = vmatpush1.xpose.msra.mxu0 0.0
    %2076 = vmatprep.subr.mxu0 0.0
    %2077 = vmatpush1.xpose.msra.mxu0 0.0
    %2078 = vmatprep.subr.mxu0 0.0
    %2079 = vmatpush1.xpose.msra.mxu0 0.0
    %2080 = vmatprep.subr.mxu0 0.0
    %2081 = vmatpush1.xpose.msra.mxu0 0.0
    %2082 = vmatprep.subr.mxu0 0.0
    %2083 = vmatpush1.xpose.msra.mxu0 0.0
    %2084 = vmatprep.subr.mxu0 0.0
    %2085 = vmatpush1.xpose.msra.mxu0 0.0
    %2086 = vmatprep.subr.mxu0 0.0
    %2087 = vmatpush1.xpose.msra.mxu0 0.0
    %2088 = vmatprep.subr.mxu0 0.0
    %2089 = vmatpush1.xpose.msra.mxu0 0.0
    %2090 = vmatprep.subr.mxu0 0.0
    %2091 = vmatpush1.xpose.msra.mxu0 0.0
    %2092 = vmatprep.subr.mxu0 0.0
    %2093 = vmatpush1.xpose.msra.mxu0 0.0
    %2094 = vmatprep.subr.mxu0 0.0
    %2095 = vmatpush1.xpose.msra.mxu0 0.0
    %2096 = vmatprep.subr.mxu0 0.0
    %2097 = vmatpush1.xpose.msra.mxu0 0.0
    %2098 = vmatprep.subr.mxu0 0.0
    %2099 = vmatpush1.xpose.msra.mxu0 0.0
    %2100 = vmatprep.subr.mxu0 0.0
    %2101 = vmatpush1.xpose.msra.mxu0 0.0
    %2102 = vmatprep.subr.mxu0 0.0
    %2103 = vmatpush1.xpose.msra.mxu0 0.0
    %2104 = vmatprep.subr.mxu0 0.0
    %2105 = vmatpush1.xpose.msra.mxu0 0.0
    %2106 = vmatprep.subr.mxu0 0.0
    %2107 = vmatpush1.xpose.msra.mxu0 0.0
    %2108 = vmatprep.subr.mxu0 0.0
    %2109 = vmatpush1.xpose.msra.mxu0 0.0
    %2110 = vmatprep.mubr.f32.mxu0 0.0
    %2111 = vmatmul.mubr.f32.gmra.mrb[0].mxu0 %v2042
    %v2112 = vpop.f32.mrb[0].mxu0
    %v2113 = vadd.f32 0.0, %v2112
    %v2114 = vpop.f32.mrb[0].mxu0
    %2115 = vdwg.mxu0
    %v2116 = vmul.f32 %v2113, 0.35355338
    %v2117 = vsel %vm1393, %v2116, -inf
    %2118 = vmax.xlane.f32.xlu0 %v2117
    %v2119 = vpop.xlane.xlu0 %2118
    %v2120 = vsub.f32 %v2116, %v2119
    %v2121 = vmul.f32 %v2120, 1.442695
    %v2122 = vpow.pop %v2121
    %v2123 = vsel %vm1393, %v2122, 0.0
    %2124 = vadd.xlane.f32.xlu0 %v2123
    %v2125 = vpop.xlane.xlu0 %2124
    %v2126 = vrcp.pop %v2125
    %v2127 = vmul.f32 %v2122, %v2126
    %2128 = vrot.lane.b32.xlu0 %v1311, 40
    %v2129 = vpop.permute.xlu0 %2128
    %v2131 = vsel %vm1407, %v2127, 0
    %v2133 = vsel %vm1411, %v2129, 0
    %2135 = vmatprep.subr.mxu0 0.0
    %2136 = vmatpush1.msra.mxu0 %v2133
    %2137 = vmatprep.subr.mxu0 0.0
    %2138 = vmatpush1.msra.mxu0 0.0
    %2139 = vmatprep.subr.mxu0 0.0
    %2140 = vmatpush1.msra.mxu0 0.0
    %2141 = vmatprep.subr.mxu0 0.0
    %2142 = vmatpush1.msra.mxu0 0.0
    %2143 = vmatprep.subr.mxu0 0.0
    %2144 = vmatpush1.msra.mxu0 0.0
    %2145 = vmatprep.subr.mxu0 0.0
    %2146 = vmatpush1.msra.mxu0 0.0
    %2147 = vmatprep.subr.mxu0 0.0
    %2148 = vmatpush1.msra.mxu0 0.0
    %2149 = vmatprep.subr.mxu0 0.0
    %2150 = vmatpush1.msra.mxu0 0.0
    %2151 = vmatprep.subr.mxu0 0.0
    %2152 = vmatpush1.msra.mxu0 0.0
    %2153 = vmatprep.subr.mxu0 0.0
    %2154 = vmatpush1.msra.mxu0 0.0
    %2155 = vmatprep.subr.mxu0 0.0
    %2156 = vmatpush1.msra.mxu0 0.0
    %2157 = vmatprep.subr.mxu0 0.0
    %2158 = vmatpush1.msra.mxu0 0.0
    %2159 = vmatprep.subr.mxu0 0.0
    %2160 = vmatpush1.msra.mxu0 0.0
    %2161 = vmatprep.subr.mxu0 0.0
    %2162 = vmatpush1.msra.mxu0 0.0
    %2163 = vmatprep.subr.mxu0 0.0
    %2164 = vmatpush1.msra.mxu0 0.0
    %2165 = vmatprep.subr.mxu0 0.0
    %2166 = vmatpush1.msra.mxu0 0.0
    %2167 = vmatprep.subr.mxu0 0.0
    %2168 = vmatpush1.msra.mxu0 0.0
    %2169 = vmatprep.subr.mxu0 0.0
    %2170 = vmatpush1.msra.mxu0 0.0
    %2171 = vmatprep.subr.mxu0 0.0
    %2172 = vmatpush1.msra.mxu0 0.0
    %2173 = vmatprep.subr.mxu0 0.0
    %2174 = vmatpush1.msra.mxu0 0.0
    %2175 = vmatprep.subr.mxu0 0.0
    %2176 = vmatpush1.msra.mxu0 0.0
    %2177 = vmatprep.subr.mxu0 0.0
    %2178 = vmatpush1.msra.mxu0 0.0
    %2179 = vmatprep.subr.mxu0 0.0
    %2180 = vmatpush1.msra.mxu0 0.0
    %2181 = vmatprep.subr.mxu0 0.0
    %2182 = vmatpush1.msra.mxu0 0.0
    %2183 = vmatprep.subr.mxu0 0.0
    %2184 = vmatpush1.msra.mxu0 0.0
    %2185 = vmatprep.subr.mxu0 0.0
    %2186 = vmatpush1.msra.mxu0 0.0
    %2187 = vmatprep.subr.mxu0 0.0
    %2188 = vmatpush1.msra.mxu0 0.0
    %2189 = vmatprep.subr.mxu0 0.0
    %2190 = vmatpush1.msra.mxu0 0.0
    %2191 = vmatprep.subr.mxu0 0.0
    %2192 = vmatpush1.msra.mxu0 0.0
    %2193 = vmatprep.subr.mxu0 0.0
    %2194 = vmatpush1.msra.mxu0 0.0
    %2195 = vmatprep.subr.mxu0 0.0
    %2196 = vmatpush1.msra.mxu0 0.0
    %2197 = vmatprep.subr.mxu0 0.0
    %2198 = vmatpush1.msra.mxu0 0.0
    %2199 = vmatprep.mubr.f32.mxu0 0.0
    %2200 = vmatmul.mubr.f32.gmra.mrb[0].mxu0 %v2131
    %v2201 = vpop.f32.mrb[0].mxu0
    %v2202 = vadd.f32 0.0, %v2201
    %v2203 = vpop.f32.mrb[0].mxu0
    %2204 = vdwg.mxu0
    %v2206 = vsel %vm1317, %v2202, 0
    %2208 = vmatprep.subr.mxu0 0.0
    %2209 = vmatpush1.msra.mxu0 %v974
    %2210 = vmatprep.subr.mxu0 0.0
    %2211 = vmatpush1.msra.mxu0 0.0
    %2212 = vmatprep.subr.mxu0 0.0
    %2213 = vmatpush1.msra.mxu0 0.0
    %2214 = vmatprep.subr.mxu0 0.0
    %2215 = vmatpush1.msra.mxu0 0.0
    %2216 = vmatprep.subr.mxu0 0.0
    %2217 = vmatpush1.msra.mxu0 0.0
    %2218 = vmatprep.subr.mxu0 0.0
    %2219 = vmatpush1.msra.mxu0 0.0
    %2220 = vmatprep.subr.mxu0 0.0
    %2221 = vmatpush1.msra.mxu0 0.0
    %2222 = vmatprep.subr.mxu0 0.0
    %2223 = vmatpush1.msra.mxu0 0.0
    %2224 = vmatprep.subr.mxu0 0.0
    %2225 = vmatpush1.msra.mxu0 0.0
    %2226 = vmatprep.subr.mxu0 0.0
    %2227 = vmatpush1.msra.mxu0 0.0
    %2228 = vmatprep.subr.mxu0 0.0
    %2229 = vmatpush1.msra.mxu0 0.0
    %2230 = vmatprep.subr.mxu0 0.0
    %2231 = vmatpush1.msra.mxu0 0.0
    %2232 = vmatprep.subr.mxu0 0.0
    %2233 = vmatpush1.msra.mxu0 0.0
    %2234 = vmatprep.subr.mxu0 0.0
    %2235 = vmatpush1.msra.mxu0 0.0
    %2236 = vmatprep.subr.mxu0 0.0
    %2237 = vmatpush1.msra.mxu0 0.0
    %2238 = vmatprep.subr.mxu0 0.0
    %2239 = vmatpush1.msra.mxu0 0.0
    %2240 = vmatprep.subr.mxu0 0.0
    %2241 = vmatpush1.msra.mxu0 0.0
    %2242 = vmatprep.subr.mxu0 0.0
    %2243 = vmatpush1.msra.mxu0 0.0
    %2244 = vmatprep.subr.mxu0 0.0
    %2245 = vmatpush1.msra.mxu0 0.0
    %2246 = vmatprep.subr.mxu0 0.0
    %2247 = vmatpush1.msra.mxu0 0.0
    %2248 = vmatprep.subr.mxu0 0.0
    %2249 = vmatpush1.msra.mxu0 0.0
    %2250 = vmatprep.subr.mxu0 0.0
    %2251 = vmatpush1.msra.mxu0 0.0
    %2252 = vmatprep.subr.mxu0 0.0
    %2253 = vmatpush1.msra.mxu0 0.0
    %2254 = vmatprep.subr.mxu0 0.0
    %2255 = vmatpush1.msra.mxu0 0.0
    %2256 = vmatprep.subr.mxu0 0.0
    %2257 = vmatpush1.msra.mxu0 0.0
    %2258 = vmatprep.subr.mxu0 0.0
    %2259 = vmatpush1.msra.mxu0 0.0
    %2260 = vmatprep.subr.mxu0 0.0
    %2261 = vmatpush1.msra.mxu0 0.0
    %2262 = vmatprep.subr.mxu0 0.0
    %2263 = vmatpush1.msra.mxu0 0.0
    %2264 = vmatprep.subr.mxu0 0.0
    %2265 = vmatpush1.msra.mxu0 0.0
    %2266 = vmatprep.subr.mxu0 0.0
    %2267 = vmatpush1.msra.mxu0 0.0
    %2268 = vmatprep.subr.mxu0 0.0
    %2269 = vmatpush1.msra.mxu0 0.0
    %2270 = vmatprep.subr.mxu0 0.0
    %2271 = vmatpush1.msra.mxu0 0.0
    %2272 = vmatprep.mubr.f32.mxu0 0.0
    %2273 = vmatmul.mubr.f32.gmra.mrb[0].mxu0 %v2206
    %v2274 = vpop.f32.mrb[0].mxu0
    %v2275 = vadd.f32 0.0, %v2274
    %v2276 = vpop.f32.mrb[0].mxu0
    %2277 = vdwg.mxu0
    %v2278 = vadd.f32 %v2037, %v2275
    %v2279 = vadd.f32 %v1126, %v2278
    %v2281 = vlaneseq
    %v2282 = vshrl.u32 %v2281, 7
    %v2283 = vsub.s32 0, %v2282
    %v2284 = vrot.slane %v943, %v2283
    %v2286 = vadd.f32 %v2279, %v2284
    %v2287 = vsel %vm1205, %v2286, 0.0
    %2288 = vadd.xlane.f32.xlu0 %v2287
    %v2289 = vpop.xlane.xlu0 %2288
    %v2290 = vmul.f32 %v2289, %v1209
    %v2291 = vsub.f32 %v2286, %v2290
    %v2292 = vmul.f32 %v2291, %v2291
    %v2293 = vsel %vm1205, %v2292, 0.0
    %2294 = vadd.xlane.f32.xlu0 %v2293
    %v2295 = vpop.xlane.xlu0 %2294
    %v2296 = vmul.f32 %v2295, %v1209
    %v2297 = vadd.f32 %v2296, 1e-06
    %v2298 = vrsqrt.pop %v2297
    %v2299 = vmul.f32 %v2291, %v2298
    %v2301 = vlaneseq
    %v2302 = vshrl.u32 %v2301, 7
    %v2303 = vsub.s32 0, %v2302
    %v2304 = vrot.slane %v948, %v2303
    %v2306 = vmul.f32 %v2299, %v2304
    %v2308 = vlaneseq
    %v2309 = vshrl.u32 %v2308, 7
    %v2310 = vsub.s32 0, %v2309
    %v2311 = vrot.slane %v947, %v2310
    %v2313 = vadd.f32 %v2306, %v2311
    %v2315 = vlaneseq
    %v2316 = vshrl.u32 %v2315, 7
    %v2317 = vsub.s32 0, %v2316
    %v2318 = vrot.slane %v949, %v2317
    %v2321 = vsel %vm1240, %v2313, 0
    %2323 = vmatprep.subr.mxu0 0.0
    %2324 = vmatpush1.msra.mxu0 %v950
    %2325 = vmatprep.subr.mxu0 0.0
    %2326 = vmatpush1.msra.mxu0 %v951
    %2327 = vmatprep.subr.mxu0 0.0
    %2328 = vmatpush1.msra.mxu0 %v952
    %2329 = vmatprep.subr.mxu0 0.0
    %2330 = vmatpush1.msra.mxu0 %v953
    %2331 = vmatprep.subr.mxu0 0.0
    %2332 = vmatpush1.msra.mxu0 0.0
    %2333 = vmatprep.subr.mxu0 0.0
    %2334 = vmatpush1.msra.mxu0 0.0
    %2335 = vmatprep.subr.mxu0 0.0
    %2336 = vmatpush1.msra.mxu0 0.0
    %2337 = vmatprep.subr.mxu0 0.0
    %2338 = vmatpush1.msra.mxu0 0.0
    %2339 = vmatprep.subr.mxu0 0.0
    %2340 = vmatpush1.msra.mxu0 0.0
    %2341 = vmatprep.subr.mxu0 0.0
    %2342 = vmatpush1.msra.mxu0 0.0
    %2343 = vmatprep.subr.mxu0 0.0
    %2344 = vmatpush1.msra.mxu0 0.0
    %2345 = vmatprep.subr.mxu0 0.0
    %2346 = vmatpush1.msra.mxu0 0.0
    %2347 = vmatprep.subr.mxu0 0.0
    %2348 = vmatpush1.msra.mxu0 0.0
    %2349 = vmatprep.subr.mxu0 0.0
    %2350 = vmatpush1.msra.mxu0 0.0
    %2351 = vmatprep.subr.mxu0 0.0
    %2352 = vmatpush1.msra.mxu0 0.0
    %2353 = vmatprep.subr.mxu0 0.0
    %2354 = vmatpush1.msra.mxu0 0.0
    %2355 = vmatprep.subr.mxu0 0.0
    %2356 = vmatpush1.msra.mxu0 0.0
    %2357 = vmatprep.subr.mxu0 0.0
    %2358 = vmatpush1.msra.mxu0 0.0
    %2359 = vmatprep.subr.mxu0 0.0
    %2360 = vmatpush1.msra.mxu0 0.0
    %2361 = vmatprep.subr.mxu0 0.0
    %2362 = vmatpush1.msra.mxu0 0.0
    %2363 = vmatprep.subr.mxu0 0.0
    %2364 = vmatpush1.msra.mxu0 0.0
    %2365 = vmatprep.subr.mxu0 0.0
    %2366 = vmatpush1.msra.mxu0 0.0
    %2367 = vmatprep.subr.mxu0 0.0
    %2368 = vmatpush1.msra.mxu0 0.0
    %2369 = vmatprep.subr.mxu0 0.0
    %2370 = vmatpush1.msra.mxu0 0.0
    %2371 = vmatprep.subr.mxu0 0.0
    %2372 = vmatpush1.msra.mxu0 0.0
    %2373 = vmatprep.subr.mxu0 0.0
    %2374 = vmatpush1.msra.mxu0 0.0
    %2375 = vmatprep.subr.mxu0 0.0
    %2376 = vmatpush1.msra.mxu0 0.0
    %2377 = vmatprep.subr.mxu0 0.0
    %2378 = vmatpush1.msra.mxu0 0.0
    %2379 = vmatprep.subr.mxu0 0.0
    %2380 = vmatpush1.msra.mxu0 0.0
    %2381 = vmatprep.subr.mxu0 0.0
    %2382 = vmatpush1.msra.mxu0 0.0
    %2383 = vmatprep.subr.mxu0 0.0
    %2384 = vmatpush1.msra.mxu0 0.0
    %2385 = vmatprep.subr.mxu0 0.0
    %2386 = vmatpush1.msra.mxu0 0.0
    %2387 = vmatprep.mubr.f32.mxu0 0.0
    %2388 = vmatmul.mubr.f32.gmra.mrb[0].mxu0 %v2321
    %v2389 = vpop.f32.mrb[0].mxu0
    %v2390 = vadd.f32 %v2318, %v2389
    %v2391 = vpop.f32.mrb[0].mxu0
    %2392 = vdwg.mxu0
    %v2393 = vmul.f32 %v2390, 0.5
    %v2394 = vmul.f32 %v2390, 0.70710677
    %v2395 = verf.f32.pop %v2394
    %v2396 = vadd.f32 %v2395, 1.0
    %v2397 = vmul.f32 %v2393, %v2396
    %v2399 = vlaneseq
    %v2400 = vshrl.u32 %v2399, 7
    %v2401 = vsub.s32 0, %v2400
    %v2402 = vrot.slane %v954, %v2401
    %2404 = vmatprep.subr.mxu0 0.0
    %2405 = vmatpush1.msra.mxu0 %v955
    %2406 = vmatprep.subr.mxu0 0.0
    %2407 = vmatpush1.msra.mxu0 %v956
    %2408 = vmatprep.subr.mxu0 0.0
    %2409 = vmatpush1.msra.mxu0 %v957
    %2410 = vmatprep.subr.mxu0 0.0
    %2411 = vmatpush1.msra.mxu0 %v958
    %2412 = vmatprep.subr.mxu0 0.0
    %2413 = vmatpush1.msra.mxu0 %v959
    %2414 = vmatprep.subr.mxu0 0.0
    %2415 = vmatpush1.msra.mxu0 %v960
    %2416 = vmatprep.subr.mxu0 0.0
    %2417 = vmatpush1.msra.mxu0 %v961
    %2418 = vmatprep.subr.mxu0 0.0
    %2419 = vmatpush1.msra.mxu0 %v962
    %2420 = vmatprep.subr.mxu0 0.0
    %2421 = vmatpush1.msra.mxu0 %v963
    %2422 = vmatprep.subr.mxu0 0.0
    %2423 = vmatpush1.msra.mxu0 %v964
    %2424 = vmatprep.subr.mxu0 0.0
    %2425 = vmatpush1.msra.mxu0 %v965
    %2426 = vmatprep.subr.mxu0 0.0
    %2427 = vmatpush1.msra.mxu0 %v966
    %2428 = vmatprep.subr.mxu0 0.0
    %2429 = vmatpush1.msra.mxu0 %v967
    %2430 = vmatprep.subr.mxu0 0.0
    %2431 = vmatpush1.msra.mxu0 %v968
    %2432 = vmatprep.subr.mxu0 0.0
    %2433 = vmatpush1.msra.mxu0 %v969
    %2434 = vmatprep.subr.mxu0 0.0
    %2435 = vmatpush1.msra.mxu0 %v970
    %2436 = vmatprep.subr.mxu0 0.0
    %2437 = vmatpush1.msra.mxu0 0.0
    %2438 = vmatprep.subr.mxu0 0.0
    %2439 = vmatpush1.msra.mxu0 0.0
    %2440 = vmatprep.subr.mxu0 0.0
    %2441 = vmatpush1.msra.mxu0 0.0
    %2442 = vmatprep.subr.mxu0 0.0
    %2443 = vmatpush1.msra.mxu0 0.0
    %2444 = vmatprep.subr.mxu0 0.0
    %2445 = vmatpush1.msra.mxu0 0.0
    %2446 = vmatprep.subr.mxu0 0.0
    %2447 = vmatpush1.msra.mxu0 0.0
    %2448 = vmatprep.subr.mxu0 0.0
    %2449 = vmatpush1.msra.mxu0 0.0
    %2450 = vmatprep.subr.mxu0 0.0
    %2451 = vmatpush1.msra.mxu0 0.0
    %2452 = vmatprep.subr.mxu0 0.0
    %2453 = vmatpush1.msra.mxu0 0.0
    %2454 = vmatprep.subr.mxu0 0.0
    %2455 = vmatpush1.msra.mxu0 0.0
    %2456 = vmatprep.subr.mxu0 0.0
    %2457 = vmatpush1.msra.mxu0 0.0
    %2458 = vmatprep.subr.mxu0 0.0
    %2459 = vmatpush1.msra.mxu0 0.0
    %2460 = vmatprep.subr.mxu0 0.0
    %2461 = vmatpush1.msra.mxu0 0.0
    %2462 = vmatprep.subr.mxu0 0.0
    %2463 = vmatpush1.msra.mxu0 0.0
    %2464 = vmatprep.subr.mxu0 0.0
    %2465 = vmatpush1.msra.mxu0 0.0
    %2466 = vmatprep.subr.mxu0 0.0
    %2467 = vmatpush1.msra.mxu0 0.0
    %2468 = vmatprep.mubr.f32.mxu0 0.0
    %2469 = vmatmul.mubr.f32.gmra.mrb[0].mxu0 %v2397
    %v2470 = vpop.f32.mrb[0].mxu0
    %v2471 = vadd.f32 %v2402, %v2470
    %v2472 = vpop.f32.mrb[0].mxu0
    %2473 = vdwg.mxu0
    %v2474 = vadd.f32 %v2286, %v2471
    %v2475 = vsel %vm1205, %v1202, 0.0
    %2476 = vadd.xlane.f32.xlu0 %v2475
    %v2477 = vpop.xlane.xlu0 %2476
    %v2478 = vmul.f32 %v2477, %v1209
    %v2479 = vsub.f32 %v1202, %v2478
    %v2480 = vmul.f32 %v2479, %v2479
    %v2481 = vsel %vm1205, %v2480, 0.0
    %2482 = vadd.xlane.f32.xlu0 %v2481
    %v2483 = vpop.xlane.xlu0 %2482
    %v2484 = vmul.f32 %v2483, %v1209
    %v2485 = vadd.f32 %v2484, 1e-06
    %v2486 = vrsqrt.pop %v2485
    %v2487 = vmul.f32 %v2479, %v2486
    %v2488 = vmul.f32 %v2487, %v1224
    %v2489 = vadd.f32 %v2488, %v1231
    %v2491 = vsel %vm1240, %v2489, 0
    %2493 = vmatprep.subr.mxu0 0.0
    %2494 = vmatpush1.msra.mxu0 %v975
    %2495 = vmatprep.subr.mxu0 0.0
    %2496 = vmatpush1.msra.mxu0 %v976
    %2497 = vmatprep.subr.mxu0 0.0
    %2498 = vmatpush1.msra.mxu0 %v977
    %2499 = vmatprep.subr.mxu0 0.0
    %2500 = vmatpush1.msra.mxu0 %v978
    %2501 = vmatprep.subr.mxu0 0.0
    %2502 = vmatpush1.msra.mxu0 0.0
    %2503 = vmatprep.subr.mxu0 0.0
    %2504 = vmatpush1.msra.mxu0 0.0
    %2505 = vmatprep.subr.mxu0 0.0
    %2506 = vmatpush1.msra.mxu0 0.0
    %2507 = vmatprep.subr.mxu0 0.0
    %2508 = vmatpush1.msra.mxu0 0.0
    %2509 = vmatprep.subr.mxu0 0.0
    %2510 = vmatpush1.msra.mxu0 0.0
    %2511 = vmatprep.subr.mxu0 0.0
    %2512 = vmatpush1.msra.mxu0 0.0
    %2513 = vmatprep.subr.mxu0 0.0
    %2514 = vmatpush1.msra.mxu0 0.0
    %2515 = vmatprep.subr.mxu0 0.0
    %2516 = vmatpush1.msra.mxu0 0.0
    %2517 = vmatprep.subr.mxu0 0.0
    %2518 = vmatpush1.msra.mxu0 0.0
    %2519 = vmatprep.subr.mxu0 0.0
    %2520 = vmatpush1.msra.mxu0 0.0
    %2521 = vmatprep.subr.mxu0 0.0
    %2522 = vmatpush1.msra.mxu0 0.0
    %2523 = vmatprep.subr.mxu0 0.0
    %2524 = vmatpush1.msra.mxu0 0.0
    %2525 = vmatprep.subr.mxu0 0.0
    %2526 = vmatpush1.msra.mxu0 0.0
    %2527 = vmatprep.subr.mxu0 0.0
    %2528 = vmatpush1.msra.mxu0 0.0
    %2529 = vmatprep.subr.mxu0 0.0
    %2530 = vmatpush1.msra.mxu0 0.0
    %2531 = vmatprep.subr.mxu0 0.0
    %2532 = vmatpush1.msra.mxu0 0.0
    %2533 = vmatprep.subr.mxu0 0.0
    %2534 = vmatpush1.msra.mxu0 0.0
    %2535 = vmatprep.subr.mxu0 0.0
    %2536 = vmatpush1.msra.mxu0 0.0
    %2537 = vmatprep.subr.mxu0 0.0
    %2538 = vmatpush1.msra.mxu0 0.0
    %2539 = vmatprep.subr.mxu0 0.0
    %2540 = vmatpush1.msra.mxu0 0.0
    %2541 = vmatprep.subr.mxu0 0.0
    %2542 = vmatpush1.msra.mxu0 0.0
    %2543 = vmatprep.subr.mxu0 0.0
    %2544 = vmatpush1.msra.mxu0 0.0
    %2545 = vmatprep.subr.mxu0 0.0
    %2546 = vmatpush1.msra.mxu0 0.0
    %2547 = vmatprep.subr.mxu0 0.0
    %2548 = vmatpush1.msra.mxu0 0.0
    %2549 = vmatprep.subr.mxu0 0.0
    %2550 = vmatpush1.msra.mxu0 0.0
    %2551 = vmatprep.subr.mxu0 0.0
    %2552 = vmatpush1.msra.mxu0 0.0
    %2553 = vmatprep.subr.mxu0 0.0
    %2554 = vmatpush1.msra.mxu0 0.0
    %2555 = vmatprep.subr.mxu0 0.0
    %2556 = vmatpush1.msra.mxu0 0.0
    %2557 = vmatprep.mubr.f32.mxu0 0.0
    %2558 = vmatmul.mubr.f32.gmra.mrb[0].mxu0 %v2491
    %v2559 = vpop.f32.mrb[0].mxu0
    %v2560 = vadd.f32 %v1238, %v2559
    %v2561 = vpop.f32.mrb[0].mxu0
    %2562 = vdwg.mxu0
    %2564 = vrot.lane.b32.xlu0 %v2560, 96
    %v2565 = vpop.permute.xlu0 %2564
    %v2566 = vsel %vm1317, %v2560, 0
    %v2568 = vsel %vm1317, %v2565, 0
    %2570 = vmatprep.subr.mxu0 0.0
    %2571 = vmatpush1.xpose.msra.mxu0 %v2568
    %2572 = vmatprep.subr.mxu0 0.0
    %2573 = vmatpush1.xpose.msra.mxu0 0.0
    %2574 = vmatprep.subr.mxu0 0.0
    %2575 = vmatpush1.xpose.msra.mxu0 0.0
    %2576 = vmatprep.subr.mxu0 0.0
    %2577 = vmatpush1.xpose.msra.mxu0 0.0
    %2578 = vmatprep.subr.mxu0 0.0
    %2579 = vmatpush1.xpose.msra.mxu0 0.0
    %2580 = vmatprep.subr.mxu0 0.0
    %2581 = vmatpush1.xpose.msra.mxu0 0.0
    %2582 = vmatprep.subr.mxu0 0.0
    %2583 = vmatpush1.xpose.msra.mxu0 0.0
    %2584 = vmatprep.subr.mxu0 0.0
    %2585 = vmatpush1.xpose.msra.mxu0 0.0
    %2586 = vmatprep.subr.mxu0 0.0
    %2587 = vmatpush1.xpose.msra.mxu0 0.0
    %2588 = vmatprep.subr.mxu0 0.0
    %2589 = vmatpush1.xpose.msra.mxu0 0.0
    %2590 = vmatprep.subr.mxu0 0.0
    %2591 = vmatpush1.xpose.msra.mxu0 0.0
    %2592 = vmatprep.subr.mxu0 0.0
    %2593 = vmatpush1.xpose.msra.mxu0 0.0
    %2594 = vmatprep.subr.mxu0 0.0
    %2595 = vmatpush1.xpose.msra.mxu0 0.0
    %2596 = vmatprep.subr.mxu0 0.0
    %2597 = vmatpush1.xpose.msra.mxu0 0.0
    %2598 = vmatprep.subr.mxu0 0.0
    %2599 = vmatpush1.xpose.msra.mxu0 0.0
    %2600 = vmatprep.subr.mxu0 0.0
    %2601 = vmatpush1.xpose.msra.mxu0 0.0
    %2602 = vmatprep.subr.mxu0 0.0
    %2603 = vmatpush1.xpose.msra.mxu0 0.0
    %2604 = vmatprep.subr.mxu0 0.0
    %2605 = vmatpush1.xpose.msra.mxu0 0.0
    %2606 = vmatprep.subr.mxu0 0.0
    %2607 = vmatpush1.xpose.msra.mxu0 0.0
    %2608 = vmatprep.subr.mxu0 0.0
    %2609 = vmatpush1.xpose.msra.mxu0 0.0
    %2610 = vmatprep.subr.mxu0 0.0
    %2611 = vmatpush1.xpose.msra.mxu0 0.0
    %2612 = vmatprep.subr.mxu0 0.0
    %2613 = vmatpush1.xpose.msra.mxu0 0.0
    %2614 = vmatprep.subr.mxu0 0.0
    %2615 = vmatpush1.xpose.msra.mxu0 0.0
    %2616 = vmatprep.subr.mxu0 0.0
    %2617 = vmatpush1.xpose.msra.mxu0 0.0
    %2618 = vmatprep.subr.mxu0 0.0
    %2619 = vmatpush1.xpose.msra.mxu0 0.0
    %2620 = vmatprep.subr.mxu0 0.0
    %2621 = vmatpush1.xpose.msra.mxu0 0.0
    %2622 = vmatprep.subr.mxu0 0.0
    %2623 = vmatpush1.xpose.msra.mxu0 0.0
    %2624 = vmatprep.subr.mxu0 0.0
    %2625 = vmatpush1.xpose.msra.mxu0 0.0
    %2626 = vmatprep.subr.mxu0 0.0
    %2627 = vmatpush1.xpose.msra.mxu0 0.0
    %2628 = vmatprep.subr.mxu0 0.0
    %2629 = vmatpush1.xpose.msra.mxu0 0.0
    %2630 = vmatprep.subr.mxu0 0.0
    %2631 = vmatpush1.xpose.msra.mxu0 0.0
    %2632 = vmatprep.subr.mxu0 0.0
    %2633 = vmatpush1.xpose.msra.mxu0 0.0
    %2634 = vmatprep.mubr.f32.mxu0 0.0
    %2635 = vmatmul.mubr.f32.gmra.mrb[0].mxu0 %v2566
    %v2636 = vpop.f32.mrb[0].mxu0
    %v2637 = vadd.f32 0.0, %v2636
    %v2638 = vpop.f32.mrb[0].mxu0
    %2639 = vdwg.mxu0
    %v2640 = vmul.f32 %v2637, 0.35355338
    %v2641 = vsel %vm1393, %v2640, -inf
    %2642 = vmax.xlane.f32.xlu0 %v2641
    %v2643 = vpop.xlane.xlu0 %2642
    %v2644 = vsub.f32 %v2640, %v2643
    %v2645 = vmul.f32 %v2644, 1.442695
    %v2646 = vpow.pop %v2645
    %v2647 = vsel %vm1393, %v2646, 0.0
    %2648 = vadd.xlane.f32.xlu0 %v2647
    %v2649 = vpop.xlane.xlu0 %2648
    %v2650 = vrcp.pop %v2649
    %v2651 = vmul.f32 %v2646, %v2650
    %2652 = vrot.lane.b32.xlu0 %v2560, 64
    %v2653 = vpop.permute.xlu0 %2652
    %v2655 = vsel %vm1407, %v2651, 0
    %v2657 = vsel %vm1411, %v2653, 0
    %2659 = vmatprep.subr.mxu0 0.0
    %2660 = vmatpush1.msra.mxu0 %v2657
    %2661 = vmatprep.subr.mxu0 0.0
    %2662 = vmatpush1.msra.mxu0 0.0
    %2663 = vmatprep.subr.mxu0 0.0
    %2664 = vmatpush1.msra.mxu0 0.0
    %2665 = vmatprep.subr.mxu0 0.0
    %2666 = vmatpush1.msra.mxu0 0.0
    %2667 = vmatprep.subr.mxu0 0.0
    %2668 = vmatpush1.msra.mxu0 0.0
    %2669 = vmatprep.subr.mxu0 0.0
    %2670 = vmatpush1.msra.mxu0 0.0
    %2671 = vmatprep.subr.mxu0 0.0
    %2672 = vmatpush1.msra.mxu0 0.0
    %2673 = vmatprep.subr.mxu0 0.0
    %2674 = vmatpush1.msra.mxu0 0.0
    %2675 = vmatprep.subr.mxu0 0.0
    %2676 = vmatpush1.msra.mxu0 0.0
    %2677 = vmatprep.subr.mxu0 0.0
    %2678 = vmatpush1.msra.mxu0 0.0
    %2679 = vmatprep.subr.mxu0 0.0
    %2680 = vmatpush1.msra.mxu0 0.0
    %2681 = vmatprep.subr.mxu0 0.0
    %2682 = vmatpush1.msra.mxu0 0.0
    %2683 = vmatprep.subr.mxu0 0.0
    %2684 = vmatpush1.msra.mxu0 0.0
    %2685 = vmatprep.subr.mxu0 0.0
    %2686 = vmatpush1.msra.mxu0 0.0
    %2687 = vmatprep.subr.mxu0 0.0
    %2688 = vmatpush1.msra.mxu0 0.0
    %2689 = vmatprep.subr.mxu0 0.0
    %2690 = vmatpush1.msra.mxu0 0.0
    %2691 = vmatprep.subr.mxu0 0.0
    %2692 = vmatpush1.msra.mxu0 0.0
    %2693 = vmatprep.subr.mxu0 0.0
    %2694 = vmatpush1.msra.mxu0 0.0
    %2695 = vmatprep.subr.mxu0 0.0
    %2696 = vmatpush1.msra.mxu0 0.0
    %2697 = vmatprep.subr.mxu0 0.0
    %2698 = vmatpush1.msra.mxu0 0.0
    %2699 = vmatprep.subr.mxu0 0.0
    %2700 = vmatpush1.msra.mxu0 0.0
    %2701 = vmatprep.subr.mxu0 0.0
    %2702 = vmatpush1.msra.mxu0 0.0
    %2703 = vmatprep.subr.mxu0 0.0
    %2704 = vmatpush1.msra.mxu0 0.0
    %2705 = vmatprep.subr.mxu0 0.0
    %2706 = vmatpush1.msra.mxu0 0.0
    %2707 = vmatprep.subr.mxu0 0.0
    %2708 = vmatpush1.msra.mxu0 0.0
    %2709 = vmatprep.subr.mxu0 0.0
    %2710 = vmatpush1.msra.mxu0 0.0
    %2711 = vmatprep.subr.mxu0 0.0
    %2712 = vmatpush1.msra.mxu0 0.0
    %2713 = vmatprep.subr.mxu0 0.0
    %2714 = vmatpush1.msra.mxu0 0.0
    %2715 = vmatprep.subr.mxu0 0.0
    %2716 = vmatpush1.msra.mxu0 0.0
    %2717 = vmatprep.subr.mxu0 0.0
    %2718 = vmatpush1.msra.mxu0 0.0
    %2719 = vmatprep.subr.mxu0 0.0
    %2720 = vmatpush1.msra.mxu0 0.0
    %2721 = vmatprep.subr.mxu0 0.0
    %2722 = vmatpush1.msra.mxu0 0.0
    %2723 = vmatprep.mubr.f32.mxu0 0.0
    %2724 = vmatmul.mubr.f32.gmra.mrb[0].mxu0 %v2655
    %v2725 = vpop.f32.mrb[0].mxu0
    %v2726 = vadd.f32 0.0, %v2725
    %v2727 = vpop.f32.mrb[0].mxu0
    %2728 = vdwg.mxu0
    %2729 = vrot.lane.b32.xlu0 %v2560, 120
    %v2730 = vpop.permute.xlu0 %2729
    %2731 = vrot.lane.b32.xlu0 %v2560, 88
    %v2732 = vpop.permute.xlu0 %2731
    %v2733 = vsel %vm1317, %v2730, 0
    %v2735 = vsel %vm1317, %v2732, 0
    %2737 = vmatprep.subr.mxu0 0.0
    %2738 = vmatpush1.xpose.msra.mxu0 %v2735
    %2739 = vmatprep.subr.mxu0 0.0
    %2740 = vmatpush1.xpose.msra.mxu0 0.0
    %2741 = vmatprep.subr.mxu0 0.0
    %2742 = vmatpush1.xpose.msra.mxu0 0.0
    %2743 = vmatprep.subr.mxu0 0.0
    %2744 = vmatpush1.xpose.msra.mxu0 0.0
    %2745 = vmatprep.subr.mxu0 0.0
    %2746 = vmatpush1.xpose.msra.mxu0 0.0
    %2747 = vmatprep.subr.mxu0 0.0
    %2748 = vmatpush1.xpose.msra.mxu0 0.0
    %2749 = vmatprep.subr.mxu0 0.0
    %2750 = vmatpush1.xpose.msra.mxu0 0.0
    %2751 = vmatprep.subr.mxu0 0.0
    %2752 = vmatpush1.xpose.msra.mxu0 0.0
    %2753 = vmatprep.subr.mxu0 0.0
    %2754 = vmatpush1.xpose.msra.mxu0 0.0
    %2755 = vmatprep.subr.mxu0 0.0
    %2756 = vmatpush1.xpose.msra.mxu0 0.0
    %2757 = vmatprep.subr.mxu0 0.0
    %2758 = vmatpush1.xpose.msra.mxu0 0.0
    %2759 = vmatprep.subr.mxu0 0.0
    %2760 = vmatpush1.xpose.msra.mxu0 0.0
    %2761 = vmatprep.subr.mxu0 0.0
    %2762 = vmatpush1.xpose.msra.mxu0 0.0
    %2763 = vmatprep.subr.mxu0 0.0
    %2764 = vmatpush1.xpose.msra.mxu0 0.0
    %2765 = vmatprep.subr.mxu0 0.0
    %2766 = vmatpush1.xpose.msra.mxu0 0.0
    %2767 = vmatprep.subr.mxu0 0.0
    %2768 = vmatpush1.xpose.msra.mxu0 0.0
    %2769 = vmatprep.subr.mxu0 0.0
    %2770 = vmatpush1.xpose.msra.mxu0 0.0
    %2771 = vmatprep.subr.mxu0 0.0
    %2772 = vmatpush1.xpose.msra.mxu0 0.0
    %2773 = vmatprep.subr.mxu0 0.0
    %2774 = vmatpush1.xpose.msra.mxu0 0.0
    %2775 = vmatprep.subr.mxu0 0.0
    %2776 = vmatpush1.xpose.msra.mxu0 0.0
    %2777 = vmatprep.subr.mxu0 0.0
    %2778 = vmatpush1.xpose.msra.mxu0 0.0
    %2779 = vmatprep.subr.mxu0 0.0
    %2780 = vmatpush1.xpose.msra.mxu0 0.0
    %2781 = vmatprep.subr.mxu0 0.0
    %2782 = vmatpush1.xpose.msra.mxu0 0.0
    %2783 = vmatprep.subr.mxu0 0.0
    %2784 = vmatpush1.xpose.msra.mxu0 0.0
    %2785 = vmatprep.subr.mxu0 0.0
    %2786 = vmatpush1.xpose.msra.mxu0 0.0
    %2787 = vmatprep.subr.mxu0 0.0
    %2788 = vmatpush1.xpose.msra.mxu0 0.0
    %2789 = vmatprep.subr.mxu0 0.0
    %2790 = vmatpush1.xpose.msra.mxu0 0.0
    %2791 = vmatprep.subr.mxu0 0.0
    %2792 = vmatpush1.xpose.msra.mxu0 0.0
    %2793 = vmatprep.subr.mxu0 0.0
    %2794 = vmatpush1.xpose.msra.mxu0 0.0
    %2795 = vmatprep.subr.mxu0 0.0
    %2796 = vmatpush1.xpose.msra.mxu0 0.0
    %2797 = vmatprep.subr.mxu0 0.0
    %2798 = vmatpush1.xpose.msra.mxu0 0.0
    %2799 = vmatprep.subr.mxu0 0.0
    %2800 = vmatpush1.xpose.msra.mxu0 0.0
    %2801 = vmatprep.mubr.f32.mxu0 0.0
    %2802 = vmatmul.mubr.f32.gmra.mrb[0].mxu0 %v2733
    %v2803 = vpop.f32.mrb[0].mxu0
    %v2804 = vadd.f32 0.0, %v2803
    %v2805 = vpop.f32.mrb[0].mxu0
    %2806 = vdwg.mxu0
    %v2807 = vmul.f32 %v2804, 0.35355338
    %v2808 = vsel %vm1393, %v2807, -inf
    %2809 = vmax.xlane.f32.xlu0 %v2808
    %v2810 = vpop.xlane.xlu0 %2809
    %v2811 = vsub.f32 %v2807, %v2810
    %v2812 = vmul.f32 %v2811, 1.442695
    %v2813 = vpow.pop %v2812
    %v2814 = vsel %vm1393, %v2813, 0.0
    %2815 = vadd.xlane.f32.xlu0 %v2814
    %v2816 = vpop.xlane.xlu0 %2815
    %v2817 = vrcp.pop %v2816
    %v2818 = vmul.f32 %v2813, %v2817
    %2819 = vrot.lane.b32.xlu0 %v2560, 56
    %v2820 = vpop.permute.xlu0 %2819
    %v2822 = vsel %vm1407, %v2818, 0
    %v2824 = vsel %vm1411, %v2820, 0
    %2826 = vmatprep.subr.mxu0 0.0
    %2827 = vmatpush1.msra.mxu0 %v2824
    %2828 = vmatprep.subr.mxu0 0.0
    %2829 = vmatpush1.msra.mxu0 0.0
    %2830 = vmatprep.subr.mxu0 0.0
    %2831 = vmatpush1.msra.mxu0 0.0
    %2832 = vmatprep.subr.mxu0 0.0
    %2833 = vmatpush1.msra.mxu0 0.0
    %2834 = vmatprep.subr.mxu0 0.0
    %2835 = vmatpush1.msra.mxu0 0.0
    %2836 = vmatprep.subr.mxu0 0.0
    %2837 = vmatpush1.msra.mxu0 0.0
    %2838 = vmatprep.subr.mxu0 0.0
    %2839 = vmatpush1.msra.mxu0 0.0
    %2840 = vmatprep.subr.mxu0 0.0
    %2841 = vmatpush1.msra.mxu0 0.0
    %2842 = vmatprep.subr.mxu0 0.0
    %2843 = vmatpush1.msra.mxu0 0.0
    %2844 = vmatprep.subr.mxu0 0.0
    %2845 = vmatpush1.msra.mxu0 0.0
    %2846 = vmatprep.subr.mxu0 0.0
    %2847 = vmatpush1.msra.mxu0 0.0
    %2848 = vmatprep.subr.mxu0 0.0
    %2849 = vmatpush1.msra.mxu0 0.0
    %2850 = vmatprep.subr.mxu0 0.0
    %2851 = vmatpush1.msra.mxu0 0.0
    %2852 = vmatprep.subr.mxu0 0.0
    %2853 = vmatpush1.msra.mxu0 0.0
    %2854 = vmatprep.subr.mxu0 0.0
    %2855 = vmatpush1.msra.mxu0 0.0
    %2856 = vmatprep.subr.mxu0 0.0
    %2857 = vmatpush1.msra.mxu0 0.0
    %2858 = vmatprep.subr.mxu0 0.0
    %2859 = vmatpush1.msra.mxu0 0.0
    %2860 = vmatprep.subr.mxu0 0.0
    %2861 = vmatpush1.msra.mxu0 0.0
    %2862 = vmatprep.subr.mxu0 0.0
    %2863 = vmatpush1.msra.mxu0 0.0
    %2864 = vmatprep.subr.mxu0 0.0
    %2865 = vmatpush1.msra.mxu0 0.0
    %2866 = vmatprep.subr.mxu0 0.0
    %2867 = vmatpush1.msra.mxu0 0.0
    %2868 = vmatprep.subr.mxu0 0.0
    %2869 = vmatpush1.msra.mxu0 0.0
    %2870 = vmatprep.subr.mxu0 0.0
    %2871 = vmatpush1.msra.mxu0 0.0
    %2872 = vmatprep.subr.mxu0 0.0
    %2873 = vmatpush1.msra.mxu0 0.0
    %2874 = vmatprep.subr.mxu0 0.0
    %2875 = vmatpush1.msra.mxu0 0.0
    %2876 = vmatprep.subr.mxu0 0.0
    %2877 = vmatpush1.msra.mxu0 0.0
    %2878 = vmatprep.subr.mxu0 0.0
    %2879 = vmatpush1.msra.mxu0 0.0
    %2880 = vmatprep.subr.mxu0 0.0
    %2881 = vmatpush1.msra.mxu0 0.0
    %2882 = vmatprep.subr.mxu0 0.0
    %2883 = vmatpush1.msra.mxu0 0.0
    %2884 = vmatprep.subr.mxu0 0.0
    %2885 = vmatpush1.msra.mxu0 0.0
    %2886 = vmatprep.subr.mxu0 0.0
    %2887 = vmatpush1.msra.mxu0 0.0
    %2888 = vmatprep.subr.mxu0 0.0
    %2889 = vmatpush1.msra.mxu0 0.0
    %2890 = vmatprep.mubr.f32.mxu0 0.0
    %2891 = vmatmul.mubr.f32.gmra.mrb[0].mxu0 %v2822
    %v2892 = vpop.f32.mrb[0].mxu0
    %v2893 = vadd.f32 0.0, %v2892
    %v2894 = vpop.f32.mrb[0].mxu0
    %2895 = vdwg.mxu0
    %v2897 = vsel %vm1317, %v2893, 0
    %2899 = vmatprep.subr.mxu0 0.0
    %2900 = vmatpush1.msra.mxu0 %v972
    %2901 = vmatprep.subr.mxu0 0.0
    %2902 = vmatpush1.msra.mxu0 0.0
    %2903 = vmatprep.subr.mxu0 0.0
    %2904 = vmatpush1.msra.mxu0 0.0
    %2905 = vmatprep.subr.mxu0 0.0
    %2906 = vmatpush1.msra.mxu0 0.0
    %2907 = vmatprep.subr.mxu0 0.0
    %2908 = vmatpush1.msra.mxu0 0.0
    %2909 = vmatprep.subr.mxu0 0.0
    %2910 = vmatpush1.msra.mxu0 0.0
    %2911 = vmatprep.subr.mxu0 0.0
    %2912 = vmatpush1.msra.mxu0 0.0
    %2913 = vmatprep.subr.mxu0 0.0
    %2914 = vmatpush1.msra.mxu0 0.0
    %2915 = vmatprep.subr.mxu0 0.0
    %2916 = vmatpush1.msra.mxu0 0.0
    %2917 = vmatprep.subr.mxu0 0.0
    %2918 = vmatpush1.msra.mxu0 0.0
    %2919 = vmatprep.subr.mxu0 0.0
    %2920 = vmatpush1.msra.mxu0 0.0
    %2921 = vmatprep.subr.mxu0 0.0
    %2922 = vmatpush1.msra.mxu0 0.0
    %2923 = vmatprep.subr.mxu0 0.0
    %2924 = vmatpush1.msra.mxu0 0.0
    %2925 = vmatprep.subr.mxu0 0.0
    %2926 = vmatpush1.msra.mxu0 0.0
    %2927 = vmatprep.subr.mxu0 0.0
    %2928 = vmatpush1.msra.mxu0 0.0
    %2929 = vmatprep.subr.mxu0 0.0
    %2930 = vmatpush1.msra.mxu0 0.0
    %2931 = vmatprep.subr.mxu0 0.0
    %2932 = vmatpush1.msra.mxu0 0.0
    %2933 = vmatprep.subr.mxu0 0.0
    %2934 = vmatpush1.msra.mxu0 0.0
    %2935 = vmatprep.subr.mxu0 0.0
    %2936 = vmatpush1.msra.mxu0 0.0
    %2937 = vmatprep.subr.mxu0 0.0
    %2938 = vmatpush1.msra.mxu0 0.0
    %2939 = vmatprep.subr.mxu0 0.0
    %2940 = vmatpush1.msra.mxu0 0.0
    %2941 = vmatprep.subr.mxu0 0.0
    %2942 = vmatpush1.msra.mxu0 0.0
    %2943 = vmatprep.subr.mxu0 0.0
    %2944 = vmatpush1.msra.mxu0 0.0
    %2945 = vmatprep.subr.mxu0 0.0
    %2946 = vmatpush1.msra.mxu0 0.0
    %2947 = vmatprep.subr.mxu0 0.0
    %2948 = vmatpush1.msra.mxu0 0.0
    %2949 = vmatprep.subr.mxu0 0.0
    %2950 = vmatpush1.msra.mxu0 0.0
    %2951 = vmatprep.subr.mxu0 0.0
    %2952 = vmatpush1.msra.mxu0 0.0
    %2953 = vmatprep.subr.mxu0 0.0
    %2954 = vmatpush1.msra.mxu0 0.0
    %2955 = vmatprep.subr.mxu0 0.0
    %2956 = vmatpush1.msra.mxu0 0.0
    %2957 = vmatprep.subr.mxu0 0.0
    %2958 = vmatpush1.msra.mxu0 0.0
    %2959 = vmatprep.subr.mxu0 0.0
    %2960 = vmatpush1.msra.mxu0 0.0
    %2961 = vmatprep.subr.mxu0 0.0
    %2962 = vmatpush1.msra.mxu0 0.0
    %2963 = vmatprep.mubr.f32.mxu0 0.0
    %2964 = vmatmul.mubr.f32.gmra.mrb[0].mxu0 %v2897
    %v2965 = vpop.f32.mrb[0].mxu0
    %v2966 = vadd.f32 0.0, %v2965
    %v2967 = vpop.f32.mrb[0].mxu0
    %2968 = vdwg.mxu0
    %v2970 = vsel %vm1317, %v2726, 0
    %2972 = vmatprep.subr.mxu0 0.0
    %2973 = vmatpush1.msra.mxu0 %v971
    %2974 = vmatprep.subr.mxu0 0.0
    %2975 = vmatpush1.msra.mxu0 0.0
    %2976 = vmatprep.subr.mxu0 0.0
    %2977 = vmatpush1.msra.mxu0 0.0
    %2978 = vmatprep.subr.mxu0 0.0
    %2979 = vmatpush1.msra.mxu0 0.0
    %2980 = vmatprep.subr.mxu0 0.0
    %2981 = vmatpush1.msra.mxu0 0.0
    %2982 = vmatprep.subr.mxu0 0.0
    %2983 = vmatpush1.msra.mxu0 0.0
    %2984 = vmatprep.subr.mxu0 0.0
    %2985 = vmatpush1.msra.mxu0 0.0
    %2986 = vmatprep.subr.mxu0 0.0
    %2987 = vmatpush1.msra.mxu0 0.0
    %2988 = vmatprep.subr.mxu0 0.0
    %2989 = vmatpush1.msra.mxu0 0.0
    %2990 = vmatprep.subr.mxu0 0.0
    %2991 = vmatpush1.msra.mxu0 0.0
    %2992 = vmatprep.subr.mxu0 0.0
    %2993 = vmatpush1.msra.mxu0 0.0
    %2994 = vmatprep.subr.mxu0 0.0
    %2995 = vmatpush1.msra.mxu0 0.0
    %2996 = vmatprep.subr.mxu0 0.0
    %2997 = vmatpush1.msra.mxu0 0.0
    %2998 = vmatprep.subr.mxu0 0.0
    %2999 = vmatpush1.msra.mxu0 0.0
    %3000 = vmatprep.subr.mxu0 0.0
    %3001 = vmatpush1.msra.mxu0 0.0
    %3002 = vmatprep.subr.mxu0 0.0
    %3003 = vmatpush1.msra.mxu0 0.0
    %3004 = vmatprep.subr.mxu0 0.0
    %3005 = vmatpush1.msra.mxu0 0.0
    %3006 = vmatprep.subr.mxu0 0.0
    %3007 = vmatpush1.msra.mxu0 0.0
    %3008 = vmatprep.subr.mxu0 0.0
    %3009 = vmatpush1.msra.mxu0 0.0
    %3010 = vmatprep.subr.mxu0 0.0
    %3011 = vmatpush1.msra.mxu0 0.0
    %3012 = vmatprep.subr.mxu0 0.0
    %3013 = vmatpush1.msra.mxu0 0.0
    %3014 = vmatprep.subr.mxu0 0.0
    %3015 = vmatpush1.msra.mxu0 0.0
    %3016 = vmatprep.subr.mxu0 0.0
    %3017 = vmatpush1.msra.mxu0 0.0
    %3018 = vmatprep.subr.mxu0 0.0
    %3019 = vmatpush1.msra.mxu0 0.0
    %3020 = vmatprep.subr.mxu0 0.0
    %3021 = vmatpush1.msra.mxu0 0.0
    %3022 = vmatprep.subr.mxu0 0.0
    %3023 = vmatpush1.msra.mxu0 0.0
    %3024 = vmatprep.subr.mxu0 0.0
    %3025 = vmatpush1.msra.mxu0 0.0
    %3026 = vmatprep.subr.mxu0 0.0
    %3027 = vmatpush1.msra.mxu0 0.0
    %3028 = vmatprep.subr.mxu0 0.0
    %3029 = vmatpush1.msra.mxu0 0.0
    %3030 = vmatprep.subr.mxu0 0.0
    %3031 = vmatpush1.msra.mxu0 0.0
    %3032 = vmatprep.subr.mxu0 0.0
    %3033 = vmatpush1.msra.mxu0 0.0
    %3034 = vmatprep.subr.mxu0 0.0
    %3035 = vmatpush1.msra.mxu0 0.0
    %3036 = vmatprep.mubr.f32.mxu0 0.0
    %3037 = vmatmul.mubr.f32.gmra.mrb[0].mxu0 %v2970
    %v3038 = vpop.f32.mrb[0].mxu0
    %v3039 = vadd.f32 %v2966, %v3038
    %v3040 = vpop.f32.mrb[0].mxu0
    %3041 = vdwg.mxu0
    %3042 = vrot.lane.b32.xlu0 %v2560, 112
    %v3043 = vpop.permute.xlu0 %3042
    %3044 = vrot.lane.b32.xlu0 %v2560, 80
    %v3045 = vpop.permute.xlu0 %3044
    %v3046 = vsel %vm1317, %v3043, 0
    %v3048 = vsel %vm1317, %v3045, 0
    %3050 = vmatprep.subr.mxu0 0.0
    %3051 = vmatpush1.xpose.msra.mxu0 %v3048
    %3052 = vmatprep.subr.mxu0 0.0
    %3053 = vmatpush1.xpose.msra.mxu0 0.0
    %3054 = vmatprep.subr.mxu0 0.0
    %3055 = vmatpush1.xpose.msra.mxu0 0.0
    %3056 = vmatprep.subr.mxu0 0.0
    %3057 = vmatpush1.xpose.msra.mxu0 0.0
    %3058 = vmatprep.subr.mxu0 0.0
    %3059 = vmatpush1.xpose.msra.mxu0 0.0
    %3060 = vmatprep.subr.mxu0 0.0
    %3061 = vmatpush1.xpose.msra.mxu0 0.0
    %3062 = vmatprep.subr.mxu0 0.0
    %3063 = vmatpush1.xpose.msra.mxu0 0.0
    %3064 = vmatprep.subr.mxu0 0.0
    %3065 = vmatpush1.xpose.msra.mxu0 0.0
    %3066 = vmatprep.subr.mxu0 0.0
    %3067 = vmatpush1.xpose.msra.mxu0 0.0
    %3068 = vmatprep.subr.mxu0 0.0
    %3069 = vmatpush1.xpose.msra.mxu0 0.0
    %3070 = vmatprep.subr.mxu0 0.0
    %3071 = vmatpush1.xpose.msra.mxu0 0.0
    %3072 = vmatprep.subr.mxu0 0.0
    %3073 = vmatpush1.xpose.msra.mxu0 0.0
    %3074 = vmatprep.subr.mxu0 0.0
    %3075 = vmatpush1.xpose.msra.mxu0 0.0
    %3076 = vmatprep.subr.mxu0 0.0
    %3077 = vmatpush1.xpose.msra.mxu0 0.0
    %3078 = vmatprep.subr.mxu0 0.0
    %3079 = vmatpush1.xpose.msra.mxu0 0.0
    %3080 = vmatprep.subr.mxu0 0.0
    %3081 = vmatpush1.xpose.msra.mxu0 0.0
    %3082 = vmatprep.subr.mxu0 0.0
    %3083 = vmatpush1.xpose.msra.mxu0 0.0
    %3084 = vmatprep.subr.mxu0 0.0
    %3085 = vmatpush1.xpose.msra.mxu0 0.0
    %3086 = vmatprep.subr.mxu0 0.0
    %3087 = vmatpush1.xpose.msra.mxu0 0.0
    %3088 = vmatprep.subr.mxu0 0.0
    %3089 = vmatpush1.xpose.msra.mxu0 0.0
    %3090 = vmatprep.subr.mxu0 0.0
    %3091 = vmatpush1.xpose.msra.mxu0 0.0
    %3092 = vmatprep.subr.mxu0 0.0
    %3093 = vmatpush1.xpose.msra.mxu0 0.0
    %3094 = vmatprep.subr.mxu0 0.0
    %3095 = vmatpush1.xpose.msra.mxu0 0.0
    %3096 = vmatprep.subr.mxu0 0.0
    %3097 = vmatpush1.xpose.msra.mxu0 0.0
    %3098 = vmatprep.subr.mxu0 0.0
    %3099 = vmatpush1.xpose.msra.mxu0 0.0
    %3100 = vmatprep.subr.mxu0 0.0
    %3101 = vmatpush1.xpose.msra.mxu0 0.0
    %3102 = vmatprep.subr.mxu0 0.0
    %3103 = vmatpush1.xpose.msra.mxu0 0.0
    %3104 = vmatprep.subr.mxu0 0.0
    %3105 = vmatpush1.xpose.msra.mxu0 0.0
    %3106 = vmatprep.subr.mxu0 0.0
    %3107 = vmatpush1.xpose.msra.mxu0 0.0
    %3108 = vmatprep.subr.mxu0 0.0
    %3109 = vmatpush1.xpose.msra.mxu0 0.0
    %3110 = vmatprep.subr.mxu0 0.0
    %3111 = vmatpush1.xpose.msra.mxu0 0.0
    %3112 = vmatprep.subr.mxu0 0.0
    %3113 = vmatpush1.xpose.msra.mxu0 0.0
    %3114 = vmatprep.mubr.f32.mxu0 0.0
    %3115 = vmatmul.mubr.f32.gmra.mrb[0].mxu0 %v3046
    %v3116 = vpop.f32.mrb[0].mxu0
    %v3117 = vadd.f32 0.0, %v3116
    %v3118 = vpop.f32.mrb[0].mxu0
    %3119 = vdwg.mxu0
    %v3120 = vmul.f32 %v3117, 0.35355338
    %v3121 = vsel %vm1393, %v3120, -inf
    %3122 = vmax.xlane.f32.xlu0 %v3121
    %v3123 = vpop.xlane.xlu0 %3122
    %v3124 = vsub.f32 %v3120, %v3123
    %v3125 = vmul.f32 %v3124, 1.442695
    %v3126 = vpow.pop %v3125
    %v3127 = vsel %vm1393, %v3126, 0.0
    %3128 = vadd.xlane.f32.xlu0 %v3127
    %v3129 = vpop.xlane.xlu0 %3128
    %v3130 = vrcp.pop %v3129
    %v3131 = vmul.f32 %v3126, %v3130
    %3132 = vrot.lane.b32.xlu0 %v2560, 48
    %v3133 = vpop.permute.xlu0 %3132
    %v3135 = vsel %vm1407, %v3131, 0
    %v3137 = vsel %vm1411, %v3133, 0
    %3139 = vmatprep.subr.mxu0 0.0
    %3140 = vmatpush1.msra.mxu0 %v3137
    %3141 = vmatprep.subr.mxu0 0.0
    %3142 = vmatpush1.msra.mxu0 0.0
    %3143 = vmatprep.subr.mxu0 0.0
    %3144 = vmatpush1.msra.mxu0 0.0
    %3145 = vmatprep.subr.mxu0 0.0
    %3146 = vmatpush1.msra.mxu0 0.0
    %3147 = vmatprep.subr.mxu0 0.0
    %3148 = vmatpush1.msra.mxu0 0.0
    %3149 = vmatprep.subr.mxu0 0.0
    %3150 = vmatpush1.msra.mxu0 0.0
    %3151 = vmatprep.subr.mxu0 0.0
    %3152 = vmatpush1.msra.mxu0 0.0
    %3153 = vmatprep.subr.mxu0 0.0
    %3154 = vmatpush1.msra.mxu0 0.0
    %3155 = vmatprep.subr.mxu0 0.0
    %3156 = vmatpush1.msra.mxu0 0.0
    %3157 = vmatprep.subr.mxu0 0.0
    %3158 = vmatpush1.msra.mxu0 0.0
    %3159 = vmatprep.subr.mxu0 0.0
    %3160 = vmatpush1.msra.mxu0 0.0
    %3161 = vmatprep.subr.mxu0 0.0
    %3162 = vmatpush1.msra.mxu0 0.0
    %3163 = vmatprep.subr.mxu0 0.0
    %3164 = vmatpush1.msra.mxu0 0.0
    %3165 = vmatprep.subr.mxu0 0.0
    %3166 = vmatpush1.msra.mxu0 0.0
    %3167 = vmatprep.subr.mxu0 0.0
    %3168 = vmatpush1.msra.mxu0 0.0
    %3169 = vmatprep.subr.mxu0 0.0
    %3170 = vmatpush1.msra.mxu0 0.0
    %3171 = vmatprep.subr.mxu0 0.0
    %3172 = vmatpush1.msra.mxu0 0.0
    %3173 = vmatprep.subr.mxu0 0.0
    %3174 = vmatpush1.msra.mxu0 0.0
    %3175 = vmatprep.subr.mxu0 0.0
    %3176 = vmatpush1.msra.mxu0 0.0
    %3177 = vmatprep.subr.mxu0 0.0
    %3178 = vmatpush1.msra.mxu0 0.0
    %3179 = vmatprep.subr.mxu0 0.0
    %3180 = vmatpush1.msra.mxu0 0.0
    %3181 = vmatprep.subr.mxu0 0.0
    %3182 = vmatpush1.msra.mxu0 0.0
    %3183 = vmatprep.subr.mxu0 0.0
    %3184 = vmatpush1.msra.mxu0 0.0
    %3185 = vmatprep.subr.mxu0 0.0
    %3186 = vmatpush1.msra.mxu0 0.0
    %3187 = vmatprep.subr.mxu0 0.0
    %3188 = vmatpush1.msra.mxu0 0.0
    %3189 = vmatprep.subr.mxu0 0.0
    %3190 = vmatpush1.msra.mxu0 0.0
    %3191 = vmatprep.subr.mxu0 0.0
    %3192 = vmatpush1.msra.mxu0 0.0
    %3193 = vmatprep.subr.mxu0 0.0
    %3194 = vmatpush1.msra.mxu0 0.0
    %3195 = vmatprep.subr.mxu0 0.0
    %3196 = vmatpush1.msra.mxu0 0.0
    %3197 = vmatprep.subr.mxu0 0.0
    %3198 = vmatpush1.msra.mxu0 0.0
    %3199 = vmatprep.subr.mxu0 0.0
    %3200 = vmatpush1.msra.mxu0 0.0
    %3201 = vmatprep.subr.mxu0 0.0
    %3202 = vmatpush1.msra.mxu0 0.0
    %3203 = vmatprep.mubr.f32.mxu0 0.0
    %3204 = vmatmul.mubr.f32.gmra.mrb[0].mxu0 %v3135
    %v3205 = vpop.f32.mrb[0].mxu0
    %v3206 = vadd.f32 0.0, %v3205
    %v3207 = vpop.f32.mrb[0].mxu0
    %3208 = vdwg.mxu0
    %v3210 = vsel %vm1317, %v3206, 0
    %3212 = vmatprep.subr.mxu0 0.0
    %3213 = vmatpush1.msra.mxu0 %v973
    %3214 = vmatprep.subr.mxu0 0.0
    %3215 = vmatpush1.msra.mxu0 0.0
    %3216 = vmatprep.subr.mxu0 0.0
    %3217 = vmatpush1.msra.mxu0 0.0
    %3218 = vmatprep.subr.mxu0 0.0
    %3219 = vmatpush1.msra.mxu0 0.0
    %3220 = vmatprep.subr.mxu0 0.0
    %3221 = vmatpush1.msra.mxu0 0.0
    %3222 = vmatprep.subr.mxu0 0.0
    %3223 = vmatpush1.msra.mxu0 0.0
    %3224 = vmatprep.subr.mxu0 0.0
    %3225 = vmatpush1.msra.mxu0 0.0
    %3226 = vmatprep.subr.mxu0 0.0
    %3227 = vmatpush1.msra.mxu0 0.0
    %3228 = vmatprep.subr.mxu0 0.0
    %3229 = vmatpush1.msra.mxu0 0.0
    %3230 = vmatprep.subr.mxu0 0.0
    %3231 = vmatpush1.msra.mxu0 0.0
    %3232 = vmatprep.subr.mxu0 0.0
    %3233 = vmatpush1.msra.mxu0 0.0
    %3234 = vmatprep.subr.mxu0 0.0
    %3235 = vmatpush1.msra.mxu0 0.0
    %3236 = vmatprep.subr.mxu0 0.0
    %3237 = vmatpush1.msra.mxu0 0.0
    %3238 = vmatprep.subr.mxu0 0.0
    %3239 = vmatpush1.msra.mxu0 0.0
    %3240 = vmatprep.subr.mxu0 0.0
    %3241 = vmatpush1.msra.mxu0 0.0
    %3242 = vmatprep.subr.mxu0 0.0
    %3243 = vmatpush1.msra.mxu0 0.0
    %3244 = vmatprep.subr.mxu0 0.0
    %3245 = vmatpush1.msra.mxu0 0.0
    %3246 = vmatprep.subr.mxu0 0.0
    %3247 = vmatpush1.msra.mxu0 0.0
    %3248 = vmatprep.subr.mxu0 0.0
    %3249 = vmatpush1.msra.mxu0 0.0
    %3250 = vmatprep.subr.mxu0 0.0
    %3251 = vmatpush1.msra.mxu0 0.0
    %3252 = vmatprep.subr.mxu0 0.0
    %3253 = vmatpush1.msra.mxu0 0.0
    %3254 = vmatprep.subr.mxu0 0.0
    %3255 = vmatpush1.msra.mxu0 0.0
    %3256 = vmatprep.subr.mxu0 0.0
    %3257 = vmatpush1.msra.mxu0 0.0
    %3258 = vmatprep.subr.mxu0 0.0
    %3259 = vmatpush1.msra.mxu0 0.0
    %3260 = vmatprep.subr.mxu0 0.0
    %3261 = vmatpush1.msra.mxu0 0.0
    %3262 = vmatprep.subr.mxu0 0.0
    %3263 = vmatpush1.msra.mxu0 0.0
    %3264 = vmatprep.subr.mxu0 0.0
    %3265 = vmatpush1.msra.mxu0 0.0
    %3266 = vmatprep.subr.mxu0 0.0
    %3267 = vmatpush1.msra.mxu0 0.0
    %3268 = vmatprep.subr.mxu0 0.0
    %3269 = vmatpush1.msra.mxu0 0.0
    %3270 = vmatprep.subr.mxu0 0.0
    %3271 = vmatpush1.msra.mxu0 0.0
    %3272 = vmatprep.subr.mxu0 0.0
    %3273 = vmatpush1.msra.mxu0 0.0
    %3274 = vmatprep.subr.mxu0 0.0
    %3275 = vmatpush1.msra.mxu0 0.0
    %3276 = vmatprep.mubr.f32.mxu0 0.0
    %3277 = vmatmul.mubr.f32.gmra.mrb[0].mxu0 %v3210
    %v3278 = vpop.f32.mrb[0].mxu0
    %v3279 = vadd.f32 0.0, %v3278
    %v3280 = vpop.f32.mrb[0].mxu0
    %3281 = vdwg.mxu0
    %v3282 = vadd.f32 %v3039, %v3279
    %3283 = vrot.lane.b32.xlu0 %v2560, 104
    %v3284 = vpop.permute.xlu0 %3283
    %3285 = vrot.lane.b32.xlu0 %v2560, 72
    %v3286 = vpop.permute.xlu0 %3285
    %v3287 = vsel %vm1317, %v3284, 0
    %v3289 = vsel %vm1317, %v3286, 0
    %3291 = vmatprep.subr.mxu0 0.0
    %3292 = vmatpush1.xpose.msra.mxu0 %v3289
    %3293 = vmatprep.subr.mxu0 0.0
    %3294 = vmatpush1.xpose.msra.mxu0 0.0
    %3295 = vmatprep.subr.mxu0 0.0
    %3296 = vmatpush1.xpose.msra.mxu0 0.0
    %3297 = vmatprep.subr.mxu0 0.0
    %3298 = vmatpush1.xpose.msra.mxu0 0.0
    %3299 = vmatprep.subr.mxu0 0.0
    %3300 = vmatpush1.xpose.msra.mxu0 0.0
    %3301 = vmatprep.subr.mxu0 0.0
    %3302 = vmatpush1.xpose.msra.mxu0 0.0
    %3303 = vmatprep.subr.mxu0 0.0
    %3304 = vmatpush1.xpose.msra.mxu0 0.0
    %3305 = vmatprep.subr.mxu0 0.0
    %3306 = vmatpush1.xpose.msra.mxu0 0.0
    %3307 = vmatprep.subr.mxu0 0.0
    %3308 = vmatpush1.xpose.msra.mxu0 0.0
    %3309 = vmatprep.subr.mxu0 0.0
    %3310 = vmatpush1.xpose.msra.mxu0 0.0
    %3311 = vmatprep.subr.mxu0 0.0
    %3312 = vmatpush1.xpose.msra.mxu0 0.0
    %3313 = vmatprep.subr.mxu0 0.0
    %3314 = vmatpush1.xpose.msra.mxu0 0.0
    %3315 = vmatprep.subr.mxu0 0.0
    %3316 = vmatpush1.xpose.msra.mxu0 0.0
    %3317 = vmatprep.subr.mxu0 0.0
    %3318 = vmatpush1.xpose.msra.mxu0 0.0
    %3319 = vmatprep.subr.mxu0 0.0
    %3320 = vmatpush1.xpose.msra.mxu0 0.0
    %3321 = vmatprep.subr.mxu0 0.0
    %3322 = vmatpush1.xpose.msra.mxu0 0.0
    %3323 = vmatprep.subr.mxu0 0.0
    %3324 = vmatpush1.xpose.msra.mxu0 0.0
    %3325 = vmatprep.subr.mxu0 0.0
    %3326 = vmatpush1.xpose.msra.mxu0 0.0
    %3327 = vmatprep.subr.mxu0 0.0
    %3328 = vmatpush1.xpose.msra.mxu0 0.0
    %3329 = vmatprep.subr.mxu0 0.0
    %3330 = vmatpush1.xpose.msra.mxu0 0.0
    %3331 = vmatprep.subr.mxu0 0.0
    %3332 = vmatpush1.xpose.msra.mxu0 0.0
    %3333 = vmatprep.subr.mxu0 0.0
    %3334 = vmatpush1.xpose.msra.mxu0 0.0
    %3335 = vmatprep.subr.mxu0 0.0
    %3336 = vmatpush1.xpose.msra.mxu0 0.0
    %3337 = vmatprep.subr.mxu0 0.0
    %3338 = vmatpush1.xpose.msra.mxu0 0.0
    %3339 = vmatprep.subr.mxu0 0.0
    %3340 = vmatpush1.xpose.msra.mxu0 0.0
    %3341 = vmatprep.subr.mxu0 0.0
    %3342 = vmatpush1.xpose.msra.mxu0 0.0
    %3343 = vmatprep.subr.mxu0 0.0
    %3344 = vmatpush1.xpose.msra.mxu0 0.0
    %3345 = vmatprep.subr.mxu0 0.0
    %3346 = vmatpush1.xpose.msra.mxu0 0.0
    %3347 = vmatprep.subr.mxu0 0.0
    %3348 = vmatpush1.xpose.msra.mxu0 0.0
    %3349 = vmatprep.subr.mxu0 0.0
    %3350 = vmatpush1.xpose.msra.mxu0 0.0
    %3351 = vmatprep.subr.mxu0 0.0
    %3352 = vmatpush1.xpose.msra.mxu0 0.0
    %3353 = vmatprep.subr.mxu0 0.0
    %3354 = vmatpush1.xpose.msra.mxu0 0.0
    %3355 = vmatprep.mubr.f32.mxu0 0.0
    %3356 = vmatmul.mubr.f32.gmra.mrb[0].mxu0 %v3287
    %v3357 = vpop.f32.mrb[0].mxu0
    %v3358 = vadd.f32 0.0, %v3357
    %v3359 = vpop.f32.mrb[0].mxu0
    %3360 = vdwg.mxu0
    %v3361 = vmul.f32 %v3358, 0.35355338
    %v3362 = vsel %vm1393, %v3361, -inf
    %3363 = vmax.xlane.f32.xlu0 %v3362
    %v3364 = vpop.xlane.xlu0 %3363
    %v3365 = vsub.f32 %v3361, %v3364
    %v3366 = vmul.f32 %v3365, 1.442695
    %v3367 = vpow.pop %v3366
    %v3368 = vsel %vm1393, %v3367, 0.0
    %3369 = vadd.xlane.f32.xlu0 %v3368
    %v3370 = vpop.xlane.xlu0 %3369
    %v3371 = vrcp.pop %v3370
    %v3372 = vmul.f32 %v3367, %v3371
    %3373 = vrot.lane.b32.xlu0 %v2560, 40
    %v3374 = vpop.permute.xlu0 %3373
    %v3376 = vsel %vm1407, %v3372, 0
    %v3378 = vsel %vm1411, %v3374, 0
    %3380 = vmatprep.subr.mxu0 0.0
    %3381 = vmatpush1.msra.mxu0 %v3378
    %3382 = vmatprep.subr.mxu0 0.0
    %3383 = vmatpush1.msra.mxu0 0.0
    %3384 = vmatprep.subr.mxu0 0.0
    %3385 = vmatpush1.msra.mxu0 0.0
    %3386 = vmatprep.subr.mxu0 0.0
    %3387 = vmatpush1.msra.mxu0 0.0
    %3388 = vmatprep.subr.mxu0 0.0
    %3389 = vmatpush1.msra.mxu0 0.0
    %3390 = vmatprep.subr.mxu0 0.0
    %3391 = vmatpush1.msra.mxu0 0.0
    %3392 = vmatprep.subr.mxu0 0.0
    %3393 = vmatpush1.msra.mxu0 0.0
    %3394 = vmatprep.subr.mxu0 0.0
    %3395 = vmatpush1.msra.mxu0 0.0
    %3396 = vmatprep.subr.mxu0 0.0
    %3397 = vmatpush1.msra.mxu0 0.0
    %3398 = vmatprep.subr.mxu0 0.0
    %3399 = vmatpush1.msra.mxu0 0.0
    %3400 = vmatprep.subr.mxu0 0.0
    %3401 = vmatpush1.msra.mxu0 0.0
    %3402 = vmatprep.subr.mxu0 0.0
    %3403 = vmatpush1.msra.mxu0 0.0
    %3404 = vmatprep.subr.mxu0 0.0
    %3405 = vmatpush1.msra.mxu0 0.0
    %3406 = vmatprep.subr.mxu0 0.0
    %3407 = vmatpush1.msra.mxu0 0.0
    %3408 = vmatprep.subr.mxu0 0.0
    %3409 = vmatpush1.msra.mxu0 0.0
    %3410 = vmatprep.subr.mxu0 0.0
    %3411 = vmatpush1.msra.mxu0 0.0
    %3412 = vmatprep.subr.mxu0 0.0
    %3413 = vmatpush1.msra.mxu0 0.0
    %3414 = vmatprep.subr.mxu0 0.0
    %3415 = vmatpush1.msra.mxu0 0.0
    %3416 = vmatprep.subr.mxu0 0.0
    %3417 = vmatpush1.msra.mxu0 0.0
    %3418 = vmatprep.subr.mxu0 0.0
    %3419 = vmatpush1.msra.mxu0 0.0
    %3420 = vmatprep.subr.mxu0 0.0
    %3421 = vmatpush1.msra.mxu0 0.0
    %3422 = vmatprep.subr.mxu0 0.0
    %3423 = vmatpush1.msra.mxu0 0.0
    %3424 = vmatprep.subr.mxu0 0.0
    %3425 = vmatpush1.msra.mxu0 0.0
    %3426 = vmatprep.subr.mxu0 0.0
    %3427 = vmatpush1.msra.mxu0 0.0
    %3428 = vmatprep.subr.mxu0 0.0
    %3429 = vmatpush1.msra.mxu0 0.0
    %3430 = vmatprep.subr.mxu0 0.0
    %3431 = vmatpush1.msra.mxu0 0.0
    %3432 = vmatprep.subr.mxu0 0.0
    %3433 = vmatpush1.msra.mxu0 0.0
    %3434 = vmatprep.subr.mxu0 0.0
    %3435 = vmatpush1.msra.mxu0 0.0
    %3436 = vmatprep.subr.mxu0 0.0
    %3437 = vmatpush1.msra.mxu0 0.0
    %3438 = vmatprep.subr.mxu0 0.0
    %3439 = vmatpush1.msra.mxu0 0.0
    %3440 = vmatprep.subr.mxu0 0.0
    %3441 = vmatpush1.msra.mxu0 0.0
    %3442 = vmatprep.subr.mxu0 0.0
    %3443 = vmatpush1.msra.mxu0 0.0
    %3444 = vmatprep.mubr.f32.mxu0 0.0
    %3445 = vmatmul.mubr.f32.gmra.mrb[0].mxu0 %v3376
    %v3446 = vpop.f32.mrb[0].mxu0
    %v3447 = vadd.f32 0.0, %v3446
    %v3448 = vpop.f32.mrb[0].mxu0
    %3449 = vdwg.mxu0
    %v3451 = vsel %vm1317, %v3447, 0
    %3453 = vmatprep.subr.mxu0 0.0
    %3454 = vmatpush1.msra.mxu0 %v974
    %3455 = vmatprep.subr.mxu0 0.0
    %3456 = vmatpush1.msra.mxu0 0.0
    %3457 = vmatprep.subr.mxu0 0.0
    %3458 = vmatpush1.msra.mxu0 0.0
    %3459 = vmatprep.subr.mxu0 0.0
    %3460 = vmatpush1.msra.mxu0 0.0
    %3461 = vmatprep.subr.mxu0 0.0
    %3462 = vmatpush1.msra.mxu0 0.0
    %3463 = vmatprep.subr.mxu0 0.0
    %3464 = vmatpush1.msra.mxu0 0.0
    %3465 = vmatprep.subr.mxu0 0.0
    %3466 = vmatpush1.msra.mxu0 0.0
    %3467 = vmatprep.subr.mxu0 0.0
    %3468 = vmatpush1.msra.mxu0 0.0
    %3469 = vmatprep.subr.mxu0 0.0
    %3470 = vmatpush1.msra.mxu0 0.0
    %3471 = vmatprep.subr.mxu0 0.0
    %3472 = vmatpush1.msra.mxu0 0.0
    %3473 = vmatprep.subr.mxu0 0.0
    %3474 = vmatpush1.msra.mxu0 0.0
    %3475 = vmatprep.subr.mxu0 0.0
    %3476 = vmatpush1.msra.mxu0 0.0
    %3477 = vmatprep.subr.mxu0 0.0
    %3478 = vmatpush1.msra.mxu0 0.0
    %3479 = vmatprep.subr.mxu0 0.0
    %3480 = vmatpush1.msra.mxu0 0.0
    %3481 = vmatprep.subr.mxu0 0.0
    %3482 = vmatpush1.msra.mxu0 0.0
    %3483 = vmatprep.subr.mxu0 0.0
    %3484 = vmatpush1.msra.mxu0 0.0
    %3485 = vmatprep.subr.mxu0 0.0
    %3486 = vmatpush1.msra.mxu0 0.0
    %3487 = vmatprep.subr.mxu0 0.0
    %3488 = vmatpush1.msra.mxu0 0.0
    %3489 = vmatprep.subr.mxu0 0.0
    %3490 = vmatpush1.msra.mxu0 0.0
    %3491 = vmatprep.subr.mxu0 0.0
    %3492 = vmatpush1.msra.mxu0 0.0
    %3493 = vmatprep.subr.mxu0 0.0
    %3494 = vmatpush1.msra.mxu0 0.0
    %3495 = vmatprep.subr.mxu0 0.0
    %3496 = vmatpush1.msra.mxu0 0.0
    %3497 = vmatprep.subr.mxu0 0.0
    %3498 = vmatpush1.msra.mxu0 0.0
    %3499 = vmatprep.subr.mxu0 0.0
    %3500 = vmatpush1.msra.mxu0 0.0
    %3501 = vmatprep.subr.mxu0 0.0
    %3502 = vmatpush1.msra.mxu0 0.0
    %3503 = vmatprep.subr.mxu0 0.0
    %3504 = vmatpush1.msra.mxu0 0.0
    %3505 = vmatprep.subr.mxu0 0.0
    %3506 = vmatpush1.msra.mxu0 0.0
    %3507 = vmatprep.subr.mxu0 0.0
    %3508 = vmatpush1.msra.mxu0 0.0
    %3509 = vmatprep.subr.mxu0 0.0
    %3510 = vmatpush1.msra.mxu0 0.0
    %3511 = vmatprep.subr.mxu0 0.0
    %3512 = vmatpush1.msra.mxu0 0.0
    %3513 = vmatprep.subr.mxu0 0.0
    %3514 = vmatpush1.msra.mxu0 0.0
    %3515 = vmatprep.subr.mxu0 0.0
    %3516 = vmatpush1.msra.mxu0 0.0
    %3517 = vmatprep.mubr.f32.mxu0 0.0
    %3518 = vmatmul.mubr.f32.gmra.mrb[0].mxu0 %v3451
    %v3519 = vpop.f32.mrb[0].mxu0
    %v3520 = vadd.f32 0.0, %v3519
    %v3521 = vpop.f32.mrb[0].mxu0
    %3522 = vdwg.mxu0
    %v3523 = vadd.f32 %v3282, %v3520
    %v3524 = vadd.f32 %v1202, %v3523
    %v3525 = vadd.f32 %v3524, %v2284
    %v3526 = vsel %vm1205, %v3525, 0.0
    %3527 = vadd.xlane.f32.xlu0 %v3526
    %v3528 = vpop.xlane.xlu0 %3527
    %v3529 = vmul.f32 %v3528, %v1209
    %v3530 = vsub.f32 %v3525, %v3529
    %v3531 = vmul.f32 %v3530, %v3530
    %v3532 = vsel %vm1205, %v3531, 0.0
    %3533 = vadd.xlane.f32.xlu0 %v3532
    %v3534 = vpop.xlane.xlu0 %3533
    %v3535 = vmul.f32 %v3534, %v1209
    %v3536 = vadd.f32 %v3535, 1e-06
    %v3537 = vrsqrt.pop %v3536
    %v3538 = vmul.f32 %v3530, %v3537
    %v3539 = vmul.f32 %v3538, %v2304
    %v3540 = vadd.f32 %v3539, %v2311
    %v3542 = vsel %vm1240, %v3540, 0
    %3544 = vmatprep.subr.mxu0 0.0
    %3545 = vmatpush1.msra.mxu0 %v950
    %3546 = vmatprep.subr.mxu0 0.0
    %3547 = vmatpush1.msra.mxu0 %v951
    %3548 = vmatprep.subr.mxu0 0.0
    %3549 = vmatpush1.msra.mxu0 %v952
    %3550 = vmatprep.subr.mxu0 0.0
    %3551 = vmatpush1.msra.mxu0 %v953
    %3552 = vmatprep.subr.mxu0 0.0
    %3553 = vmatpush1.msra.mxu0 0.0
    %3554 = vmatprep.subr.mxu0 0.0
    %3555 = vmatpush1.msra.mxu0 0.0
    %3556 = vmatprep.subr.mxu0 0.0
    %3557 = vmatpush1.msra.mxu0 0.0
    %3558 = vmatprep.subr.mxu0 0.0
    %3559 = vmatpush1.msra.mxu0 0.0
    %3560 = vmatprep.subr.mxu0 0.0
    %3561 = vmatpush1.msra.mxu0 0.0
    %3562 = vmatprep.subr.mxu0 0.0
    %3563 = vmatpush1.msra.mxu0 0.0
    %3564 = vmatprep.subr.mxu0 0.0
    %3565 = vmatpush1.msra.mxu0 0.0
    %3566 = vmatprep.subr.mxu0 0.0
    %3567 = vmatpush1.msra.mxu0 0.0
    %3568 = vmatprep.subr.mxu0 0.0
    %3569 = vmatpush1.msra.mxu0 0.0
    %3570 = vmatprep.subr.mxu0 0.0
    %3571 = vmatpush1.msra.mxu0 0.0
    %3572 = vmatprep.subr.mxu0 0.0
    %3573 = vmatpush1.msra.mxu0 0.0
    %3574 = vmatprep.subr.mxu0 0.0
    %3575 = vmatpush1.msra.mxu0 0.0
    %3576 = vmatprep.subr.mxu0 0.0
    %3577 = vmatpush1.msra.mxu0 0.0
    %3578 = vmatprep.subr.mxu0 0.0
    %3579 = vmatpush1.msra.mxu0 0.0
    %3580 = vmatprep.subr.mxu0 0.0
    %3581 = vmatpush1.msra.mxu0 0.0
    %3582 = vmatprep.subr.mxu0 0.0
    %3583 = vmatpush1.msra.mxu0 0.0
    %3584 = vmatprep.subr.mxu0 0.0
    %3585 = vmatpush1.msra.mxu0 0.0
    %3586 = vmatprep.subr.mxu0 0.0
    %3587 = vmatpush1.msra.mxu0 0.0
    %3588 = vmatprep.subr.mxu0 0.0
    %3589 = vmatpush1.msra.mxu0 0.0
    %3590 = vmatprep.subr.mxu0 0.0
    %3591 = vmatpush1.msra.mxu0 0.0
    %3592 = vmatprep.subr.mxu0 0.0
    %3593 = vmatpush1.msra.mxu0 0.0
    %3594 = vmatprep.subr.mxu0 0.0
    %3595 = vmatpush1.msra.mxu0 0.0
    %3596 = vmatprep.subr.mxu0 0.0
    %3597 = vmatpush1.msra.mxu0 0.0
    %3598 = vmatprep.subr.mxu0 0.0
    %3599 = vmatpush1.msra.mxu0 0.0
    %3600 = vmatprep.subr.mxu0 0.0
    %3601 = vmatpush1.msra.mxu0 0.0
    %3602 = vmatprep.subr.mxu0 0.0
    %3603 = vmatpush1.msra.mxu0 0.0
    %3604 = vmatprep.subr.mxu0 0.0
    %3605 = vmatpush1.msra.mxu0 0.0
    %3606 = vmatprep.subr.mxu0 0.0
    %3607 = vmatpush1.msra.mxu0 0.0
    %3608 = vmatprep.mubr.f32.mxu0 0.0
    %3609 = vmatmul.mubr.f32.gmra.mrb[0].mxu0 %v3542
    %v3610 = vpop.f32.mrb[0].mxu0
    %v3611 = vadd.f32 %v2318, %v3610
    %v3612 = vpop.f32.mrb[0].mxu0
    %3613 = vdwg.mxu0
    %v3614 = vmul.f32 %v3611, 0.5
    %v3615 = vmul.f32 %v3611, 0.70710677
    %v3616 = verf.f32.pop %v3615
    %v3617 = vadd.f32 %v3616, 1.0
    %v3618 = vmul.f32 %v3614, %v3617
    %3619 = vmatprep.subr.mxu0 0.0
    %3620 = vmatpush1.msra.mxu0 %v955
    %3621 = vmatprep.subr.mxu0 0.0
    %3622 = vmatpush1.msra.mxu0 %v956
    %3623 = vmatprep.subr.mxu0 0.0
    %3624 = vmatpush1.msra.mxu0 %v957
    %3625 = vmatprep.subr.mxu0 0.0
    %3626 = vmatpush1.msra.mxu0 %v958
    %3627 = vmatprep.subr.mxu0 0.0
    %3628 = vmatpush1.msra.mxu0 %v959
    %3629 = vmatprep.subr.mxu0 0.0
    %3630 = vmatpush1.msra.mxu0 %v960
    %3631 = vmatprep.subr.mxu0 0.0
    %3632 = vmatpush1.msra.mxu0 %v961
    %3633 = vmatprep.subr.mxu0 0.0
    %3634 = vmatpush1.msra.mxu0 %v962
    %3635 = vmatprep.subr.mxu0 0.0
    %3636 = vmatpush1.msra.mxu0 %v963
    %3637 = vmatprep.subr.mxu0 0.0
    %3638 = vmatpush1.msra.mxu0 %v964
    %3639 = vmatprep.subr.mxu0 0.0
    %3640 = vmatpush1.msra.mxu0 %v965
    %3641 = vmatprep.subr.mxu0 0.0
    %3642 = vmatpush1.msra.mxu0 %v966
    %3643 = vmatprep.subr.mxu0 0.0
    %3644 = vmatpush1.msra.mxu0 %v967
    %3645 = vmatprep.subr.mxu0 0.0
    %3646 = vmatpush1.msra.mxu0 %v968
    %3647 = vmatprep.subr.mxu0 0.0
    %3648 = vmatpush1.msra.mxu0 %v969
    %3649 = vmatprep.subr.mxu0 0.0
    %3650 = vmatpush1.msra.mxu0 %v970
    %3651 = vmatprep.subr.mxu0 0.0
    %3652 = vmatpush1.msra.mxu0 0.0
    %3653 = vmatprep.subr.mxu0 0.0
    %3654 = vmatpush1.msra.mxu0 0.0
    %3655 = vmatprep.subr.mxu0 0.0
    %3656 = vmatpush1.msra.mxu0 0.0
    %3657 = vmatprep.subr.mxu0 0.0
    %3658 = vmatpush1.msra.mxu0 0.0
    %3659 = vmatprep.subr.mxu0 0.0
    %3660 = vmatpush1.msra.mxu0 0.0
    %3661 = vmatprep.subr.mxu0 0.0
    %3662 = vmatpush1.msra.mxu0 0.0
    %3663 = vmatprep.subr.mxu0 0.0
    %3664 = vmatpush1.msra.mxu0 0.0
    %3665 = vmatprep.subr.mxu0 0.0
    %3666 = vmatpush1.msra.mxu0 0.0
    %3667 = vmatprep.subr.mxu0 0.0
    %3668 = vmatpush1.msra.mxu0 0.0
    %3669 = vmatprep.subr.mxu0 0.0
    %3670 = vmatpush1.msra.mxu0 0.0
    %3671 = vmatprep.subr.mxu0 0.0
    %3672 = vmatpush1.msra.mxu0 0.0
    %3673 = vmatprep.subr.mxu0 0.0
    %3674 = vmatpush1.msra.mxu0 0.0
    %3675 = vmatprep.subr.mxu0 0.0
    %3676 = vmatpush1.msra.mxu0 0.0
    %3677 = vmatprep.subr.mxu0 0.0
    %3678 = vmatpush1.msra.mxu0 0.0
    %3679 = vmatprep.subr.mxu0 0.0
    %3680 = vmatpush1.msra.mxu0 0.0
    %3681 = vmatprep.subr.mxu0 0.0
    %3682 = vmatpush1.msra.mxu0 0.0
    %3683 = vmatprep.mubr.f32.mxu0 0.0
    %3684 = vmatmul.mubr.f32.gmra.mrb[0].mxu0 %v3618
    %v3685 = vpop.f32.mrb[0].mxu0
    %v3686 = vadd.f32 %v2402, %v3685
    %v3687 = vpop.f32.mrb[0].mxu0
    %3688 = vdwg.mxu0
    %v3689 = vadd.f32 %v3525, %v3686
    %v3690 = vsel %vm1205, %v2474, 0.0
    %3691 = vadd.xlane.f32.xlu0 %v3690
    %v3692 = vpop.xlane.xlu0 %3691
    %v3693 = vmul.f32 %v3692, %v1209
    %v3694 = vsub.f32 %v2474, %v3693
    %v3695 = vmul.f32 %v3694, %v3694
    %v3696 = vsel %vm1205, %v3695, 0.0
    %3697 = vadd.xlane.f32.xlu0 %v3696
    %v3698 = vpop.xlane.xlu0 %3697
    %v3699 = vmul.f32 %v3698, %v1209
    %v3700 = vadd.f32 %v3699, 1e-06
    %v3701 = vrsqrt.pop %v3700
    %v3702 = vmul.f32 %v3694, %v3701
    %v3704 = vlaneseq
    %v3705 = vshrl.u32 %v3704, 7
    %v3706 = vsub.s32 0, %v3705
    %v3707 = vrot.slane %v982, %v3706
    %v3709 = vmul.f32 %v3702, %v3707
    %v3711 = vlaneseq
    %v3712 = vshrl.u32 %v3711, 7
    %v3713 = vsub.s32 0, %v3712
    %v3714 = vrot.slane %v981, %v3713
    %v3716 = vadd.f32 %v3709, %v3714
    %v3718 = vlaneseq
    %v3719 = vshrl.u32 %v3718, 7
    %v3720 = vsub.s32 0, %v3719
    %v3721 = vrot.slane %v980, %v3720
    %v3724 = vsel %vm1240, %v3716, 0
    %3726 = vmatprep.subr.mxu0 0.0
    %3727 = vmatpush1.msra.mxu0 %v1011
    %3728 = vmatprep.subr.mxu0 0.0
    %3729 = vmatpush1.msra.mxu0 %v1012
    %3730 = vmatprep.subr.mxu0 0.0
    %3731 = vmatpush1.msra.mxu0 %v1013
    %3732 = vmatprep.subr.mxu0 0.0
    %3733 = vmatpush1.msra.mxu0 %v1014
    %3734 = vmatprep.subr.mxu0 0.0
    %3735 = vmatpush1.msra.mxu0 0.0
    %3736 = vmatprep.subr.mxu0 0.0
    %3737 = vmatpush1.msra.mxu0 0.0
    %3738 = vmatprep.subr.mxu0 0.0
    %3739 = vmatpush1.msra.mxu0 0.0
    %3740 = vmatprep.subr.mxu0 0.0
    %3741 = vmatpush1.msra.mxu0 0.0
    %3742 = vmatprep.subr.mxu0 0.0
    %3743 = vmatpush1.msra.mxu0 0.0
    %3744 = vmatprep.subr.mxu0 0.0
    %3745 = vmatpush1.msra.mxu0 0.0
    %3746 = vmatprep.subr.mxu0 0.0
    %3747 = vmatpush1.msra.mxu0 0.0
    %3748 = vmatprep.subr.mxu0 0.0
    %3749 = vmatpush1.msra.mxu0 0.0
    %3750 = vmatprep.subr.mxu0 0.0
    %3751 = vmatpush1.msra.mxu0 0.0
    %3752 = vmatprep.subr.mxu0 0.0
    %3753 = vmatpush1.msra.mxu0 0.0
    %3754 = vmatprep.subr.mxu0 0.0
    %3755 = vmatpush1.msra.mxu0 0.0
    %3756 = vmatprep.subr.mxu0 0.0
    %3757 = vmatpush1.msra.mxu0 0.0
    %3758 = vmatprep.subr.mxu0 0.0
    %3759 = vmatpush1.msra.mxu0 0.0
    %3760 = vmatprep.subr.mxu0 0.0
    %3761 = vmatpush1.msra.mxu0 0.0
    %3762 = vmatprep.subr.mxu0 0.0
    %3763 = vmatpush1.msra.mxu0 0.0
    %3764 = vmatprep.subr.mxu0 0.0
    %3765 = vmatpush1.msra.mxu0 0.0
    %3766 = vmatprep.subr.mxu0 0.0
    %3767 = vmatpush1.msra.mxu0 0.0
    %3768 = vmatprep.subr.mxu0 0.0
    %3769 = vmatpush1.msra.mxu0 0.0
    %3770 = vmatprep.subr.mxu0 0.0
    %3771 = vmatpush1.msra.mxu0 0.0
    %3772 = vmatprep.subr.mxu0 0.0
    %3773 = vmatpush1.msra.mxu0 0.0
    %3774 = vmatprep.subr.mxu0 0.0
    %3775 = vmatpush1.msra.mxu0 0.0
    %3776 = vmatprep.subr.mxu0 0.0
    %3777 = vmatpush1.msra.mxu0 0.0
    %3778 = vmatprep.subr.mxu0 0.0
    %3779 = vmatpush1.msra.mxu0 0.0
    %3780 = vmatprep.subr.mxu0 0.0
    %3781 = vmatpush1.msra.mxu0 0.0
    %3782 = vmatprep.subr.mxu0 0.0
    %3783 = vmatpush1.msra.mxu0 0.0
    %3784 = vmatprep.subr.mxu0 0.0
    %3785 = vmatpush1.msra.mxu0 0.0
    %3786 = vmatprep.subr.mxu0 0.0
    %3787 = vmatpush1.msra.mxu0 0.0
    %3788 = vmatprep.subr.mxu0 0.0
    %3789 = vmatpush1.msra.mxu0 0.0
    %3790 = vmatprep.mubr.f32.mxu0 0.0
    %3791 = vmatmul.mubr.f32.gmra.mrb[0].mxu0 %v3724
    %v3792 = vpop.f32.mrb[0].mxu0
    %v3793 = vadd.f32 %v3721, %v3792
    %v3794 = vpop.f32.mrb[0].mxu0
    %3795 = vdwg.mxu0
    %3797 = vrot.lane.b32.xlu0 %v3793, 96
    %v3798 = vpop.permute.xlu0 %3797
    %v3799 = vsel %vm1317, %v3793, 0
    %v3801 = vsel %vm1317, %v3798, 0
    %3803 = vmatprep.subr.mxu0 0.0
    %3804 = vmatpush1.xpose.msra.mxu0 %v3801
    %3805 = vmatprep.subr.mxu0 0.0
    %3806 = vmatpush1.xpose.msra.mxu0 0.0
    %3807 = vmatprep.subr.mxu0 0.0
    %3808 = vmatpush1.xpose.msra.mxu0 0.0
    %3809 = vmatprep.subr.mxu0 0.0
    %3810 = vmatpush1.xpose.msra.mxu0 0.0
    %3811 = vmatprep.subr.mxu0 0.0
    %3812 = vmatpush1.xpose.msra.mxu0 0.0
    %3813 = vmatprep.subr.mxu0 0.0
    %3814 = vmatpush1.xpose.msra.mxu0 0.0
    %3815 = vmatprep.subr.mxu0 0.0
    %3816 = vmatpush1.xpose.msra.mxu0 0.0
    %3817 = vmatprep.subr.mxu0 0.0
    %3818 = vmatpush1.xpose.msra.mxu0 0.0
    %3819 = vmatprep.subr.mxu0 0.0
    %3820 = vmatpush1.xpose.msra.mxu0 0.0
    %3821 = vmatprep.subr.mxu0 0.0
    %3822 = vmatpush1.xpose.msra.mxu0 0.0
    %3823 = vmatprep.subr.mxu0 0.0
    %3824 = vmatpush1.xpose.msra.mxu0 0.0
    %3825 = vmatprep.subr.mxu0 0.0
    %3826 = vmatpush1.xpose.msra.mxu0 0.0
    %3827 = vmatprep.subr.mxu0 0.0
    %3828 = vmatpush1.xpose.msra.mxu0 0.0
    %3829 = vmatprep.subr.mxu0 0.0
    %3830 = vmatpush1.xpose.msra.mxu0 0.0
    %3831 = vmatprep.subr.mxu0 0.0
    %3832 = vmatpush1.xpose.msra.mxu0 0.0
    %3833 = vmatprep.subr.mxu0 0.0
    %3834 = vmatpush1.xpose.msra.mxu0 0.0
    %3835 = vmatprep.subr.mxu0 0.0
    %3836 = vmatpush1.xpose.msra.mxu0 0.0
    %3837 = vmatprep.subr.mxu0 0.0
    %3838 = vmatpush1.xpose.msra.mxu0 0.0
    %3839 = vmatprep.subr.mxu0 0.0
    %3840 = vmatpush1.xpose.msra.mxu0 0.0
    %3841 = vmatprep.subr.mxu0 0.0
    %3842 = vmatpush1.xpose.msra.mxu0 0.0
    %3843 = vmatprep.subr.mxu0 0.0
    %3844 = vmatpush1.xpose.msra.mxu0 0.0
    %3845 = vmatprep.subr.mxu0 0.0
    %3846 = vmatpush1.xpose.msra.mxu0 0.0
    %3847 = vmatprep.subr.mxu0 0.0
    %3848 = vmatpush1.xpose.msra.mxu0 0.0
    %3849 = vmatprep.subr.mxu0 0.0
    %3850 = vmatpush1.xpose.msra.mxu0 0.0
    %3851 = vmatprep.subr.mxu0 0.0
    %3852 = vmatpush1.xpose.msra.mxu0 0.0
    %3853 = vmatprep.subr.mxu0 0.0
    %3854 = vmatpush1.xpose.msra.mxu0 0.0
    %3855 = vmatprep.subr.mxu0 0.0
    %3856 = vmatpush1.xpose.msra.mxu0 0.0
    %3857 = vmatprep.subr.mxu0 0.0
    %3858 = vmatpush1.xpose.msra.mxu0 0.0
    %3859 = vmatprep.subr.mxu0 0.0
    %3860 = vmatpush1.xpose.msra.mxu0 0.0
    %3861 = vmatprep.subr.mxu0 0.0
    %3862 = vmatpush1.xpose.msra.mxu0 0.0
    %3863 = vmatprep.subr.mxu0 0.0
    %3864 = vmatpush1.xpose.msra.mxu0 0.0
    %3865 = vmatprep.subr.mxu0 0.0
    %3866 = vmatpush1.xpose.msra.mxu0 0.0
    %3867 = vmatprep.mubr.f32.mxu0 0.0
    %3868 = vmatmul.mubr.f32.gmra.mrb[0].mxu0 %v3799
    %v3869 = vpop.f32.mrb[0].mxu0
    %v3870 = vadd.f32 0.0, %v3869
    %v3871 = vpop.f32.mrb[0].mxu0
    %3872 = vdwg.mxu0
    %v3873 = vmul.f32 %v3870, 0.35355338
    %v3874 = vsel %vm1393, %v3873, -inf
    %3875 = vmax.xlane.f32.xlu0 %v3874
    %v3876 = vpop.xlane.xlu0 %3875
    %v3877 = vsub.f32 %v3873, %v3876
    %v3878 = vmul.f32 %v3877, 1.442695
    %v3879 = vpow.pop %v3878
    %v3880 = vsel %vm1393, %v3879, 0.0
    %3881 = vadd.xlane.f32.xlu0 %v3880
    %v3882 = vpop.xlane.xlu0 %3881
    %v3883 = vrcp.pop %v3882
    %v3884 = vmul.f32 %v3879, %v3883
    %3885 = vrot.lane.b32.xlu0 %v3793, 64
    %v3886 = vpop.permute.xlu0 %3885
    %v3888 = vsel %vm1407, %v3884, 0
    %v3890 = vsel %vm1411, %v3886, 0
    %3892 = vmatprep.subr.mxu0 0.0
    %3893 = vmatpush1.msra.mxu0 %v3890
    %3894 = vmatprep.subr.mxu0 0.0
    %3895 = vmatpush1.msra.mxu0 0.0
    %3896 = vmatprep.subr.mxu0 0.0
    %3897 = vmatpush1.msra.mxu0 0.0
    %3898 = vmatprep.subr.mxu0 0.0
    %3899 = vmatpush1.msra.mxu0 0.0
    %3900 = vmatprep.subr.mxu0 0.0
    %3901 = vmatpush1.msra.mxu0 0.0
    %3902 = vmatprep.subr.mxu0 0.0
    %3903 = vmatpush1.msra.mxu0 0.0
    %3904 = vmatprep.subr.mxu0 0.0
    %3905 = vmatpush1.msra.mxu0 0.0
    %3906 = vmatprep.subr.mxu0 0.0
    %3907 = vmatpush1.msra.mxu0 0.0
    %3908 = vmatprep.subr.mxu0 0.0
    %3909 = vmatpush1.msra.mxu0 0.0
    %3910 = vmatprep.subr.mxu0 0.0
    %3911 = vmatpush1.msra.mxu0 0.0
    %3912 = vmatprep.subr.mxu0 0.0
    %3913 = vmatpush1.msra.mxu0 0.0
    %3914 = vmatprep.subr.mxu0 0.0
    %3915 = vmatpush1.msra.mxu0 0.0
    %3916 = vmatprep.subr.mxu0 0.0
    %3917 = vmatpush1.msra.mxu0 0.0
    %3918 = vmatprep.subr.mxu0 0.0
    %3919 = vmatpush1.msra.mxu0 0.0
    %3920 = vmatprep.subr.mxu0 0.0
    %3921 = vmatpush1.msra.mxu0 0.0
    %3922 = vmatprep.subr.mxu0 0.0
    %3923 = vmatpush1.msra.mxu0 0.0
    %3924 = vmatprep.subr.mxu0 0.0
    %3925 = vmatpush1.msra.mxu0 0.0
    %3926 = vmatprep.subr.mxu0 0.0
    %3927 = vmatpush1.msra.mxu0 0.0
    %3928 = vmatprep.subr.mxu0 0.0
    %3929 = vmatpush1.msra.mxu0 0.0
    %3930 = vmatprep.subr.mxu0 0.0
    %3931 = vmatpush1.msra.mxu0 0.0
    %3932 = vmatprep.subr.mxu0 0.0
    %3933 = vmatpush1.msra.mxu0 0.0
    %3934 = vmatprep.subr.mxu0 0.0
    %3935 = vmatpush1.msra.mxu0 0.0
    %3936 = vmatprep.subr.mxu0 0.0
    %3937 = vmatpush1.msra.mxu0 0.0
    %3938 = vmatprep.subr.mxu0 0.0
    %3939 = vmatpush1.msra.mxu0 0.0
    %3940 = vmatprep.subr.mxu0 0.0
    %3941 = vmatpush1.msra.mxu0 0.0
    %3942 = vmatprep.subr.mxu0 0.0
    %3943 = vmatpush1.msra.mxu0 0.0
    %3944 = vmatprep.subr.mxu0 0.0
    %3945 = vmatpush1.msra.mxu0 0.0
    %3946 = vmatprep.subr.mxu0 0.0
    %3947 = vmatpush1.msra.mxu0 0.0
    %3948 = vmatprep.subr.mxu0 0.0
    %3949 = vmatpush1.msra.mxu0 0.0
    %3950 = vmatprep.subr.mxu0 0.0
    %3951 = vmatpush1.msra.mxu0 0.0
    %3952 = vmatprep.subr.mxu0 0.0
    %3953 = vmatpush1.msra.mxu0 0.0
    %3954 = vmatprep.subr.mxu0 0.0
    %3955 = vmatpush1.msra.mxu0 0.0
    %3956 = vmatprep.mubr.f32.mxu0 0.0
    %3957 = vmatmul.mubr.f32.gmra.mrb[0].mxu0 %v3888
    %v3958 = vpop.f32.mrb[0].mxu0
    %v3959 = vadd.f32 0.0, %v3958
    %v3960 = vpop.f32.mrb[0].mxu0
    %3961 = vdwg.mxu0
    %3962 = vrot.lane.b32.xlu0 %v3793, 120
    %v3963 = vpop.permute.xlu0 %3962
    %3964 = vrot.lane.b32.xlu0 %v3793, 88
    %v3965 = vpop.permute.xlu0 %3964
    %v3966 = vsel %vm1317, %v3963, 0
    %v3968 = vsel %vm1317, %v3965, 0
    %3970 = vmatprep.subr.mxu0 0.0
    %3971 = vmatpush1.xpose.msra.mxu0 %v3968
    %3972 = vmatprep.subr.mxu0 0.0
    %3973 = vmatpush1.xpose.msra.mxu0 0.0
    %3974 = vmatprep.subr.mxu0 0.0
    %3975 = vmatpush1.xpose.msra.mxu0 0.0
    %3976 = vmatprep.subr.mxu0 0.0
    %3977 = vmatpush1.xpose.msra.mxu0 0.0
    %3978 = vmatprep.subr.mxu0 0.0
    %3979 = vmatpush1.xpose.msra.mxu0 0.0
    %3980 = vmatprep.subr.mxu0 0.0
    %3981 = vmatpush1.xpose.msra.mxu0 0.0
    %3982 = vmatprep.subr.mxu0 0.0
    %3983 = vmatpush1.xpose.msra.mxu0 0.0
    %3984 = vmatprep.subr.mxu0 0.0
    %3985 = vmatpush1.xpose.msra.mxu0 0.0
    %3986 = vmatprep.subr.mxu0 0.0
    %3987 = vmatpush1.xpose.msra.mxu0 0.0
    %3988 = vmatprep.subr.mxu0 0.0
    %3989 = vmatpush1.xpose.msra.mxu0 0.0
    %3990 = vmatprep.subr.mxu0 0.0
    %3991 = vmatpush1.xpose.msra.mxu0 0.0
    %3992 = vmatprep.subr.mxu0 0.0
    %3993 = vmatpush1.xpose.msra.mxu0 0.0
    %3994 = vmatprep.subr.mxu0 0.0
    %3995 = vmatpush1.xpose.msra.mxu0 0.0
    %3996 = vmatprep.subr.mxu0 0.0
    %3997 = vmatpush1.xpose.msra.mxu0 0.0
    %3998 = vmatprep.subr.mxu0 0.0
    %3999 = vmatpush1.xpose.msra.mxu0 0.0
    %4000 = vmatprep.subr.mxu0 0.0
    %4001 = vmatpush1.xpose.msra.mxu0 0.0
    %4002 = vmatprep.subr.mxu0 0.0
    %4003 = vmatpush1.xpose.msra.mxu0 0.0
    %4004 = vmatprep.subr.mxu0 0.0
    %4005 = vmatpush1.xpose.msra.mxu0 0.0
    %4006 = vmatprep.subr.mxu0 0.0
    %4007 = vmatpush1.xpose.msra.mxu0 0.0
    %4008 = vmatprep.subr.mxu0 0.0
    %4009 = vmatpush1.xpose.msra.mxu0 0.0
    %4010 = vmatprep.subr.mxu0 0.0
    %4011 = vmatpush1.xpose.msra.mxu0 0.0
    %4012 = vmatprep.subr.mxu0 0.0
    %4013 = vmatpush1.xpose.msra.mxu0 0.0
    %4014 = vmatprep.subr.mxu0 0.0
    %4015 = vmatpush1.xpose.msra.mxu0 0.0
    %4016 = vmatprep.subr.mxu0 0.0
    %4017 = vmatpush1.xpose.msra.mxu0 0.0
    %4018 = vmatprep.subr.mxu0 0.0
    %4019 = vmatpush1.xpose.msra.mxu0 0.0
    %4020 = vmatprep.subr.mxu0 0.0
    %4021 = vmatpush1.xpose.msra.mxu0 0.0
    %4022 = vmatprep.subr.mxu0 0.0
    %4023 = vmatpush1.xpose.msra.mxu0 0.0
    %4024 = vmatprep.subr.mxu0 0.0
    %4025 = vmatpush1.xpose.msra.mxu0 0.0
    %4026 = vmatprep.subr.mxu0 0.0
    %4027 = vmatpush1.xpose.msra.mxu0 0.0
    %4028 = vmatprep.subr.mxu0 0.0
    %4029 = vmatpush1.xpose.msra.mxu0 0.0
    %4030 = vmatprep.subr.mxu0 0.0
    %4031 = vmatpush1.xpose.msra.mxu0 0.0
    %4032 = vmatprep.subr.mxu0 0.0
    %4033 = vmatpush1.xpose.msra.mxu0 0.0
    %4034 = vmatprep.mubr.f32.mxu0 0.0
    %4035 = vmatmul.mubr.f32.gmra.mrb[0].mxu0 %v3966
    %v4036 = vpop.f32.mrb[0].mxu0
    %v4037 = vadd.f32 0.0, %v4036
    %v4038 = vpop.f32.mrb[0].mxu0
    %4039 = vdwg.mxu0
    %v4040 = vmul.f32 %v4037, 0.35355338
    %v4041 = vsel %vm1393, %v4040, -inf
    %4042 = vmax.xlane.f32.xlu0 %v4041
    %v4043 = vpop.xlane.xlu0 %4042
    %v4044 = vsub.f32 %v4040, %v4043
    %v4045 = vmul.f32 %v4044, 1.442695
    %v4046 = vpow.pop %v4045
    %v4047 = vsel %vm1393, %v4046, 0.0
    %4048 = vadd.xlane.f32.xlu0 %v4047
    %v4049 = vpop.xlane.xlu0 %4048
    %v4050 = vrcp.pop %v4049
    %v4051 = vmul.f32 %v4046, %v4050
    %4052 = vrot.lane.b32.xlu0 %v3793, 56
    %v4053 = vpop.permute.xlu0 %4052
    %v4055 = vsel %vm1407, %v4051, 0
    %v4057 = vsel %vm1411, %v4053, 0
    %4059 = vmatprep.subr.mxu0 0.0
    %4060 = vmatpush1.msra.mxu0 %v4057
    %4061 = vmatprep.subr.mxu0 0.0
    %4062 = vmatpush1.msra.mxu0 0.0
    %4063 = vmatprep.subr.mxu0 0.0
    %4064 = vmatpush1.msra.mxu0 0.0
    %4065 = vmatprep.subr.mxu0 0.0
    %4066 = vmatpush1.msra.mxu0 0.0
    %4067 = vmatprep.subr.mxu0 0.0
    %4068 = vmatpush1.msra.mxu0 0.0
    %4069 = vmatprep.subr.mxu0 0.0
    %4070 = vmatpush1.msra.mxu0 0.0
    %4071 = vmatprep.subr.mxu0 0.0
    %4072 = vmatpush1.msra.mxu0 0.0
    %4073 = vmatprep.subr.mxu0 0.0
    %4074 = vmatpush1.msra.mxu0 0.0
    %4075 = vmatprep.subr.mxu0 0.0
    %4076 = vmatpush1.msra.mxu0 0.0
    %4077 = vmatprep.subr.mxu0 0.0
    %4078 = vmatpush1.msra.mxu0 0.0
    %4079 = vmatprep.subr.mxu0 0.0
    %4080 = vmatpush1.msra.mxu0 0.0
    %4081 = vmatprep.subr.mxu0 0.0
    %4082 = vmatpush1.msra.mxu0 0.0
    %4083 = vmatprep.subr.mxu0 0.0
    %4084 = vmatpush1.msra.mxu0 0.0
    %4085 = vmatprep.subr.mxu0 0.0
    %4086 = vmatpush1.msra.mxu0 0.0
    %4087 = vmatprep.subr.mxu0 0.0
    %4088 = vmatpush1.msra.mxu0 0.0
    %4089 = vmatprep.subr.mxu0 0.0
    %4090 = vmatpush1.msra.mxu0 0.0
    %4091 = vmatprep.subr.mxu0 0.0
    %4092 = vmatpush1.msra.mxu0 0.0
    %4093 = vmatprep.subr.mxu0 0.0
    %4094 = vmatpush1.msra.mxu0 0.0
    %4095 = vmatprep.subr.mxu0 0.0
    %4096 = vmatpush1.msra.mxu0 0.0
    %4097 = vmatprep.subr.mxu0 0.0
    %4098 = vmatpush1.msra.mxu0 0.0
    %4099 = vmatprep.subr.mxu0 0.0
    %4100 = vmatpush1.msra.mxu0 0.0
    %4101 = vmatprep.subr.mxu0 0.0
    %4102 = vmatpush1.msra.mxu0 0.0
    %4103 = vmatprep.subr.mxu0 0.0
    %4104 = vmatpush1.msra.mxu0 0.0
    %4105 = vmatprep.subr.mxu0 0.0
    %4106 = vmatpush1.msra.mxu0 0.0
    %4107 = vmatprep.subr.mxu0 0.0
    %4108 = vmatpush1.msra.mxu0 0.0
    %4109 = vmatprep.subr.mxu0 0.0
    %4110 = vmatpush1.msra.mxu0 0.0
    %4111 = vmatprep.subr.mxu0 0.0
    %4112 = vmatpush1.msra.mxu0 0.0
    %4113 = vmatprep.subr.mxu0 0.0
    %4114 = vmatpush1.msra.mxu0 0.0
    %4115 = vmatprep.subr.mxu0 0.0
    %4116 = vmatpush1.msra.mxu0 0.0
    %4117 = vmatprep.subr.mxu0 0.0
    %4118 = vmatpush1.msra.mxu0 0.0
    %4119 = vmatprep.subr.mxu0 0.0
    %4120 = vmatpush1.msra.mxu0 0.0
    %4121 = vmatprep.subr.mxu0 0.0
    %4122 = vmatpush1.msra.mxu0 0.0
    %4123 = vmatprep.mubr.f32.mxu0 0.0
    %4124 = vmatmul.mubr.f32.gmra.mrb[0].mxu0 %v4055
    %v4125 = vpop.f32.mrb[0].mxu0
    %v4126 = vadd.f32 0.0, %v4125
    %v4127 = vpop.f32.mrb[0].mxu0
    %4128 = vdwg.mxu0
    %v4130 = vsel %vm1317, %v4126, 0
    %4132 = vmatprep.subr.mxu0 0.0
    %4133 = vmatpush1.msra.mxu0 %v1008
    %4134 = vmatprep.subr.mxu0 0.0
    %4135 = vmatpush1.msra.mxu0 0.0
    %4136 = vmatprep.subr.mxu0 0.0
    %4137 = vmatpush1.msra.mxu0 0.0
    %4138 = vmatprep.subr.mxu0 0.0
    %4139 = vmatpush1.msra.mxu0 0.0
    %4140 = vmatprep.subr.mxu0 0.0
    %4141 = vmatpush1.msra.mxu0 0.0
    %4142 = vmatprep.subr.mxu0 0.0
    %4143 = vmatpush1.msra.mxu0 0.0
    %4144 = vmatprep.subr.mxu0 0.0
    %4145 = vmatpush1.msra.mxu0 0.0
    %4146 = vmatprep.subr.mxu0 0.0
    %4147 = vmatpush1.msra.mxu0 0.0
    %4148 = vmatprep.subr.mxu0 0.0
    %4149 = vmatpush1.msra.mxu0 0.0
    %4150 = vmatprep.subr.mxu0 0.0
    %4151 = vmatpush1.msra.mxu0 0.0
    %4152 = vmatprep.subr.mxu0 0.0
    %4153 = vmatpush1.msra.mxu0 0.0
    %4154 = vmatprep.subr.mxu0 0.0
    %4155 = vmatpush1.msra.mxu0 0.0
    %4156 = vmatprep.subr.mxu0 0.0
    %4157 = vmatpush1.msra.mxu0 0.0
    %4158 = vmatprep.subr.mxu0 0.0
    %4159 = vmatpush1.msra.mxu0 0.0
    %4160 = vmatprep.subr.mxu0 0.0
    %4161 = vmatpush1.msra.mxu0 0.0
    %4162 = vmatprep.subr.mxu0 0.0
    %4163 = vmatpush1.msra.mxu0 0.0
    %4164 = vmatprep.subr.mxu0 0.0
    %4165 = vmatpush1.msra.mxu0 0.0
    %4166 = vmatprep.subr.mxu0 0.0
    %4167 = vmatpush1.msra.mxu0 0.0
    %4168 = vmatprep.subr.mxu0 0.0
    %4169 = vmatpush1.msra.mxu0 0.0
    %4170 = vmatprep.subr.mxu0 0.0
    %4171 = vmatpush1.msra.mxu0 0.0
    %4172 = vmatprep.subr.mxu0 0.0
    %4173 = vmatpush1.msra.mxu0 0.0
    %4174 = vmatprep.subr.mxu0 0.0
    %4175 = vmatpush1.msra.mxu0 0.0
    %4176 = vmatprep.subr.mxu0 0.0
    %4177 = vmatpush1.msra.mxu0 0.0
    %4178 = vmatprep.subr.mxu0 0.0
    %4179 = vmatpush1.msra.mxu0 0.0
    %4180 = vmatprep.subr.mxu0 0.0
    %4181 = vmatpush1.msra.mxu0 0.0
    %4182 = vmatprep.subr.mxu0 0.0
    %4183 = vmatpush1.msra.mxu0 0.0
    %4184 = vmatprep.subr.mxu0 0.0
    %4185 = vmatpush1.msra.mxu0 0.0
    %4186 = vmatprep.subr.mxu0 0.0
    %4187 = vmatpush1.msra.mxu0 0.0
    %4188 = vmatprep.subr.mxu0 0.0
    %4189 = vmatpush1.msra.mxu0 0.0
    %4190 = vmatprep.subr.mxu0 0.0
    %4191 = vmatpush1.msra.mxu0 0.0
    %4192 = vmatprep.subr.mxu0 0.0
    %4193 = vmatpush1.msra.mxu0 0.0
    %4194 = vmatprep.subr.mxu0 0.0
    %4195 = vmatpush1.msra.mxu0 0.0
    %4196 = vmatprep.mubr.f32.mxu0 0.0
    %4197 = vmatmul.mubr.f32.gmra.mrb[0].mxu0 %v4130
    %v4198 = vpop.f32.mrb[0].mxu0
    %v4199 = vadd.f32 0.0, %v4198
    %v4200 = vpop.f32.mrb[0].mxu0
    %4201 = vdwg.mxu0
    %v4203 = vsel %vm1317, %v3959, 0
    %4205 = vmatprep.subr.mxu0 0.0
    %4206 = vmatpush1.msra.mxu0 %v1007
    %4207 = vmatprep.subr.mxu0 0.0
    %4208 = vmatpush1.msra.mxu0 0.0
    %4209 = vmatprep.subr.mxu0 0.0
    %4210 = vmatpush1.msra.mxu0 0.0
    %4211 = vmatprep.subr.mxu0 0.0
    %4212 = vmatpush1.msra.mxu0 0.0
    %4213 = vmatprep.subr.mxu0 0.0
    %4214 = vmatpush1.msra.mxu0 0.0
    %4215 = vmatprep.subr.mxu0 0.0
    %4216 = vmatpush1.msra.mxu0 0.0
    %4217 = vmatprep.subr.mxu0 0.0
    %4218 = vmatpush1.msra.mxu0 0.0
    %4219 = vmatprep.subr.mxu0 0.0
    %4220 = vmatpush1.msra.mxu0 0.0
    %4221 = vmatprep.subr.mxu0 0.0
    %4222 = vmatpush1.msra.mxu0 0.0
    %4223 = vmatprep.subr.mxu0 0.0
    %4224 = vmatpush1.msra.mxu0 0.0
    %4225 = vmatprep.subr.mxu0 0.0
    %4226 = vmatpush1.msra.mxu0 0.0
    %4227 = vmatprep.subr.mxu0 0.0
    %4228 = vmatpush1.msra.mxu0 0.0
    %4229 = vmatprep.subr.mxu0 0.0
    %4230 = vmatpush1.msra.mxu0 0.0
    %4231 = vmatprep.subr.mxu0 0.0
    %4232 = vmatpush1.msra.mxu0 0.0
    %4233 = vmatprep.subr.mxu0 0.0
    %4234 = vmatpush1.msra.mxu0 0.0
    %4235 = vmatprep.subr.mxu0 0.0
    %4236 = vmatpush1.msra.mxu0 0.0
    %4237 = vmatprep.subr.mxu0 0.0
    %4238 = vmatpush1.msra.mxu0 0.0
    %4239 = vmatprep.subr.mxu0 0.0
    %4240 = vmatpush1.msra.mxu0 0.0
    %4241 = vmatprep.subr.mxu0 0.0
    %4242 = vmatpush1.msra.mxu0 0.0
    %4243 = vmatprep.subr.mxu0 0.0
    %4244 = vmatpush1.msra.mxu0 0.0
    %4245 = vmatprep.subr.mxu0 0.0
    %4246 = vmatpush1.msra.mxu0 0.0
    %4247 = vmatprep.subr.mxu0 0.0
    %4248 = vmatpush1.msra.mxu0 0.0
    %4249 = vmatprep.subr.mxu0 0.0
    %4250 = vmatpush1.msra.mxu0 0.0
    %4251 = vmatprep.subr.mxu0 0.0
    %4252 = vmatpush1.msra.mxu0 0.0
    %4253 = vmatprep.subr.mxu0 0.0
    %4254 = vmatpush1.msra.mxu0 0.0
    %4255 = vmatprep.subr.mxu0 0.0
    %4256 = vmatpush1.msra.mxu0 0.0
    %4257 = vmatprep.subr.mxu0 0.0
    %4258 = vmatpush1.msra.mxu0 0.0
    %4259 = vmatprep.subr.mxu0 0.0
    %4260 = vmatpush1.msra.mxu0 0.0
    %4261 = vmatprep.subr.mxu0 0.0
    %4262 = vmatpush1.msra.mxu0 0.0
    %4263 = vmatprep.subr.mxu0 0.0
    %4264 = vmatpush1.msra.mxu0 0.0
    %4265 = vmatprep.subr.mxu0 0.0
    %4266 = vmatpush1.msra.mxu0 0.0
    %4267 = vmatprep.subr.mxu0 0.0
    %4268 = vmatpush1.msra.mxu0 0.0
    %4269 = vmatprep.mubr.f32.mxu0 0.0
    %4270 = vmatmul.mubr.f32.gmra.mrb[0].mxu0 %v4203
    %v4271 = vpop.f32.mrb[0].mxu0
    %v4272 = vadd.f32 %v4199, %v4271
    %v4273 = vpop.f32.mrb[0].mxu0
    %4274 = vdwg.mxu0
    %4275 = vrot.lane.b32.xlu0 %v3793, 112
    %v4276 = vpop.permute.xlu0 %4275
    %4277 = vrot.lane.b32.xlu0 %v3793, 80
    %v4278 = vpop.permute.xlu0 %4277
    %v4279 = vsel %vm1317, %v4276, 0
    %v4281 = vsel %vm1317, %v4278, 0
    %4283 = vmatprep.subr.mxu0 0.0
    %4284 = vmatpush1.xpose.msra.mxu0 %v4281
    %4285 = vmatprep.subr.mxu0 0.0
    %4286 = vmatpush1.xpose.msra.mxu0 0.0
    %4287 = vmatprep.subr.mxu0 0.0
    %4288 = vmatpush1.xpose.msra.mxu0 0.0
    %4289 = vmatprep.subr.mxu0 0.0
    %4290 = vmatpush1.xpose.msra.mxu0 0.0
    %4291 = vmatprep.subr.mxu0 0.0
    %4292 = vmatpush1.xpose.msra.mxu0 0.0
    %4293 = vmatprep.subr.mxu0 0.0
    %4294 = vmatpush1.xpose.msra.mxu0 0.0
    %4295 = vmatprep.subr.mxu0 0.0
    %4296 = vmatpush1.xpose.msra.mxu0 0.0
    %4297 = vmatprep.subr.mxu0 0.0
    %4298 = vmatpush1.xpose.msra.mxu0 0.0
    %4299 = vmatprep.subr.mxu0 0.0
    %4300 = vmatpush1.xpose.msra.mxu0 0.0
    %4301 = vmatprep.subr.mxu0 0.0
    %4302 = vmatpush1.xpose.msra.mxu0 0.0
    %4303 = vmatprep.subr.mxu0 0.0
    %4304 = vmatpush1.xpose.msra.mxu0 0.0
    %4305 = vmatprep.subr.mxu0 0.0
    %4306 = vmatpush1.xpose.msra.mxu0 0.0
    %4307 = vmatprep.subr.mxu0 0.0
    %4308 = vmatpush1.xpose.msra.mxu0 0.0
    %4309 = vmatprep.subr.mxu0 0.0
    %4310 = vmatpush1.xpose.msra.mxu0 0.0
    %4311 = vmatprep.subr.mxu0 0.0
    %4312 = vmatpush1.xpose.msra.mxu0 0.0
    %4313 = vmatprep.subr.mxu0 0.0
    %4314 = vmatpush1.xpose.msra.mxu0 0.0
    %4315 = vmatprep.subr.mxu0 0.0
    %4316 = vmatpush1.xpose.msra.mxu0 0.0
    %4317 = vmatprep.subr.mxu0 0.0
    %4318 = vmatpush1.xpose.msra.mxu0 0.0
    %4319 = vmatprep.subr.mxu0 0.0
    %4320 = vmatpush1.xpose.msra.mxu0 0.0
    %4321 = vmatprep.subr.mxu0 0.0
    %4322 = vmatpush1.xpose.msra.mxu0 0.0
    %4323 = vmatprep.subr.mxu0 0.0
    %4324 = vmatpush1.xpose.msra.mxu0 0.0
    %4325 = vmatprep.subr.mxu0 0.0
    %4326 = vmatpush1.xpose.msra.mxu0 0.0
    %4327 = vmatprep.subr.mxu0 0.0
    %4328 = vmatpush1.xpose.msra.mxu0 0.0
    %4329 = vmatprep.subr.mxu0 0.0
    %4330 = vmatpush1.xpose.msra.mxu0 0.0
    %4331 = vmatprep.subr.mxu0 0.0
    %4332 = vmatpush1.xpose.msra.mxu0 0.0
    %4333 = vmatprep.subr.mxu0 0.0
    %4334 = vmatpush1.xpose.msra.mxu0 0.0
    %4335 = vmatprep.subr.mxu0 0.0
    %4336 = vmatpush1.xpose.msra.mxu0 0.0
    %4337 = vmatprep.subr.mxu0 0.0
    %4338 = vmatpush1.xpose.msra.mxu0 0.0
    %4339 = vmatprep.subr.mxu0 0.0
    %4340 = vmatpush1.xpose.msra.mxu0 0.0
    %4341 = vmatprep.subr.mxu0 0.0
    %4342 = vmatpush1.xpose.msra.mxu0 0.0
    %4343 = vmatprep.subr.mxu0 0.0
    %4344 = vmatpush1.xpose.msra.mxu0 0.0
    %4345 = vmatprep.subr.mxu0 0.0
    %4346 = vmatpush1.xpose.msra.mxu0 0.0
    %4347 = vmatprep.mubr.f32.mxu0 0.0
    %4348 = vmatmul.mubr.f32.gmra.mrb[0].mxu0 %v4279
    %v4349 = vpop.f32.mrb[0].mxu0
    %v4350 = vadd.f32 0.0, %v4349
    %v4351 = vpop.f32.mrb[0].mxu0
    %4352 = vdwg.mxu0
    %v4353 = vmul.f32 %v4350, 0.35355338
    %v4354 = vsel %vm1393, %v4353, -inf
    %4355 = vmax.xlane.f32.xlu0 %v4354
    %v4356 = vpop.xlane.xlu0 %4355
    %v4357 = vsub.f32 %v4353, %v4356
    %v4358 = vmul.f32 %v4357, 1.442695
    %v4359 = vpow.pop %v4358
    %v4360 = vsel %vm1393, %v4359, 0.0
    %4361 = vadd.xlane.f32.xlu0 %v4360
    %v4362 = vpop.xlane.xlu0 %4361
    %v4363 = vrcp.pop %v4362
    %v4364 = vmul.f32 %v4359, %v4363
    %4365 = vrot.lane.b32.xlu0 %v3793, 48
    %v4366 = vpop.permute.xlu0 %4365
    %v4368 = vsel %vm1407, %v4364, 0
    %v4370 = vsel %vm1411, %v4366, 0
    %4372 = vmatprep.subr.mxu0 0.0
    %4373 = vmatpush1.msra.mxu0 %v4370
    %4374 = vmatprep.subr.mxu0 0.0
    %4375 = vmatpush1.msra.mxu0 0.0
    %4376 = vmatprep.subr.mxu0 0.0
    %4377 = vmatpush1.msra.mxu0 0.0
    %4378 = vmatprep.subr.mxu0 0.0
    %4379 = vmatpush1.msra.mxu0 0.0
    %4380 = vmatprep.subr.mxu0 0.0
    %4381 = vmatpush1.msra.mxu0 0.0
    %4382 = vmatprep.subr.mxu0 0.0
    %4383 = vmatpush1.msra.mxu0 0.0
    %4384 = vmatprep.subr.mxu0 0.0
    %4385 = vmatpush1.msra.mxu0 0.0
    %4386 = vmatprep.subr.mxu0 0.0
    %4387 = vmatpush1.msra.mxu0 0.0
    %4388 = vmatprep.subr.mxu0 0.0
    %4389 = vmatpush1.msra.mxu0 0.0
    %4390 = vmatprep.subr.mxu0 0.0
    %4391 = vmatpush1.msra.mxu0 0.0
    %4392 = vmatprep.subr.mxu0 0.0
    %4393 = vmatpush1.msra.mxu0 0.0
    %4394 = vmatprep.subr.mxu0 0.0
    %4395 = vmatpush1.msra.mxu0 0.0
    %4396 = vmatprep.subr.mxu0 0.0
    %4397 = vmatpush1.msra.mxu0 0.0
    %4398 = vmatprep.subr.mxu0 0.0
    %4399 = vmatpush1.msra.mxu0 0.0
    %4400 = vmatprep.subr.mxu0 0.0
    %4401 = vmatpush1.msra.mxu0 0.0
    %4402 = vmatprep.subr.mxu0 0.0
    %4403 = vmatpush1.msra.mxu0 0.0
    %4404 = vmatprep.subr.mxu0 0.0
    %4405 = vmatpush1.msra.mxu0 0.0
    %4406 = vmatprep.subr.mxu0 0.0
    %4407 = vmatpush1.msra.mxu0 0.0
    %4408 = vmatprep.subr.mxu0 0.0
    %4409 = vmatpush1.msra.mxu0 0.0
    %4410 = vmatprep.subr.mxu0 0.0
    %4411 = vmatpush1.msra.mxu0 0.0
    %4412 = vmatprep.subr.mxu0 0.0
    %4413 = vmatpush1.msra.mxu0 0.0
    %4414 = vmatprep.subr.mxu0 0.0
    %4415 = vmatpush1.msra.mxu0 0.0
    %4416 = vmatprep.subr.mxu0 0.0
    %4417 = vmatpush1.msra.mxu0 0.0
    %4418 = vmatprep.subr.mxu0 0.0
    %4419 = vmatpush1.msra.mxu0 0.0
    %4420 = vmatprep.subr.mxu0 0.0
    %4421 = vmatpush1.msra.mxu0 0.0
    %4422 = vmatprep.subr.mxu0 0.0
    %4423 = vmatpush1.msra.mxu0 0.0
    %4424 = vmatprep.subr.mxu0 0.0
    %4425 = vmatpush1.msra.mxu0 0.0
    %4426 = vmatprep.subr.mxu0 0.0
    %4427 = vmatpush1.msra.mxu0 0.0
    %4428 = vmatprep.subr.mxu0 0.0
    %4429 = vmatpush1.msra.mxu0 0.0
    %4430 = vmatprep.subr.mxu0 0.0
    %4431 = vmatpush1.msra.mxu0 0.0
    %4432 = vmatprep.subr.mxu0 0.0
    %4433 = vmatpush1.msra.mxu0 0.0
    %4434 = vmatprep.subr.mxu0 0.0
    %4435 = vmatpush1.msra.mxu0 0.0
    %4436 = vmatprep.mubr.f32.mxu0 0.0
    %4437 = vmatmul.mubr.f32.gmra.mrb[0].mxu0 %v4368
    %v4438 = vpop.f32.mrb[0].mxu0
    %v4439 = vadd.f32 0.0, %v4438
    %v4440 = vpop.f32.mrb[0].mxu0
    %4441 = vdwg.mxu0
    %v4443 = vsel %vm1317, %v4439, 0
    %4445 = vmatprep.subr.mxu0 0.0
    %4446 = vmatpush1.msra.mxu0 %v1009
    %4447 = vmatprep.subr.mxu0 0.0
    %4448 = vmatpush1.msra.mxu0 0.0
    %4449 = vmatprep.subr.mxu0 0.0
    %4450 = vmatpush1.msra.mxu0 0.0
    %4451 = vmatprep.subr.mxu0 0.0
    %4452 = vmatpush1.msra.mxu0 0.0
    %4453 = vmatprep.subr.mxu0 0.0
    %4454 = vmatpush1.msra.mxu0 0.0
    %4455 = vmatprep.subr.mxu0 0.0
    %4456 = vmatpush1.msra.mxu0 0.0
    %4457 = vmatprep.subr.mxu0 0.0
    %4458 = vmatpush1.msra.mxu0 0.0
    %4459 = vmatprep.subr.mxu0 0.0
    %4460 = vmatpush1.msra.mxu0 0.0
    %4461 = vmatprep.subr.mxu0 0.0
    %4462 = vmatpush1.msra.mxu0 0.0
    %4463 = vmatprep.subr.mxu0 0.0
    %4464 = vmatpush1.msra.mxu0 0.0
    %4465 = vmatprep.subr.mxu0 0.0
    %4466 = vmatpush1.msra.mxu0 0.0
    %4467 = vmatprep.subr.mxu0 0.0
    %4468 = vmatpush1.msra.mxu0 0.0
    %4469 = vmatprep.subr.mxu0 0.0
    %4470 = vmatpush1.msra.mxu0 0.0
    %4471 = vmatprep.subr.mxu0 0.0
    %4472 = vmatpush1.msra.mxu0 0.0
    %4473 = vmatprep.subr.mxu0 0.0
    %4474 = vmatpush1.msra.mxu0 0.0
    %4475 = vmatprep.subr.mxu0 0.0
    %4476 = vmatpush1.msra.mxu0 0.0
    %4477 = vmatprep.subr.mxu0 0.0
    %4478 = vmatpush1.msra.mxu0 0.0
    %4479 = vmatprep.subr.mxu0 0.0
    %4480 = vmatpush1.msra.mxu0 0.0
    %4481 = vmatprep.subr.mxu0 0.0
    %4482 = vmatpush1.msra.mxu0 0.0
    %4483 = vmatprep.subr.mxu0 0.0
    %4484 = vmatpush1.msra.mxu0 0.0
    %4485 = vmatprep.subr.mxu0 0.0
    %4486 = vmatpush1.msra.mxu0 0.0
    %4487 = vmatprep.subr.mxu0 0.0
    %4488 = vmatpush1.msra.mxu0 0.0
    %4489 = vmatprep.subr.mxu0 0.0
    %4490 = vmatpush1.msra.mxu0 0.0
    %4491 = vmatprep.subr.mxu0 0.0
    %4492 = vmatpush1.msra.mxu0 0.0
    %4493 = vmatprep.subr.mxu0 0.0
    %4494 = vmatpush1.msra.mxu0 0.0
    %4495 = vmatprep.subr.mxu0 0.0
    %4496 = vmatpush1.msra.mxu0 0.0
    %4497 = vmatprep.subr.mxu0 0.0
    %4498 = vmatpush1.msra.mxu0 0.0
    %4499 = vmatprep.subr.mxu0 0.0
    %4500 = vmatpush1.msra.mxu0 0.0
    %4501 = vmatprep.subr.mxu0 0.0
    %4502 = vmatpush1.msra.mxu0 0.0
    %4503 = vmatprep.subr.mxu0 0.0
    %4504 = vmatpush1.msra.mxu0 0.0
    %4505 = vmatprep.subr.mxu0 0.0
    %4506 = vmatpush1.msra.mxu0 0.0
    %4507 = vmatprep.subr.mxu0 0.0
    %4508 = vmatpush1.msra.mxu0 0.0
    %4509 = vmatprep.mubr.f32.mxu0 0.0
    %4510 = vmatmul.mubr.f32.gmra.mrb[0].mxu0 %v4443
    %v4511 = vpop.f32.mrb[0].mxu0
    %v4512 = vadd.f32 0.0, %v4511
    %v4513 = vpop.f32.mrb[0].mxu0
    %4514 = vdwg.mxu0
    %v4515 = vadd.f32 %v4272, %v4512
    %4516 = vrot.lane.b32.xlu0 %v3793, 104
    %v4517 = vpop.permute.xlu0 %4516
    %4518 = vrot.lane.b32.xlu0 %v3793, 72
    %v4519 = vpop.permute.xlu0 %4518
    %v4520 = vsel %vm1317, %v4517, 0
    %v4522 = vsel %vm1317, %v4519, 0
    %4524 = vmatprep.subr.mxu0 0.0
    %4525 = vmatpush1.xpose.msra.mxu0 %v4522
    %4526 = vmatprep.subr.mxu0 0.0
    %4527 = vmatpush1.xpose.msra.mxu0 0.0
    %4528 = vmatprep.subr.mxu0 0.0
    %4529 = vmatpush1.xpose.msra.mxu0 0.0
    %4530 = vmatprep.subr.mxu0 0.0
    %4531 = vmatpush1.xpose.msra.mxu0 0.0
    %4532 = vmatprep.subr.mxu0 0.0
    %4533 = vmatpush1.xpose.msra.mxu0 0.0
    %4534 = vmatprep.subr.mxu0 0.0
    %4535 = vmatpush1.xpose.msra.mxu0 0.0
    %4536 = vmatprep.subr.mxu0 0.0
    %4537 = vmatpush1.xpose.msra.mxu0 0.0
    %4538 = vmatprep.subr.mxu0 0.0
    %4539 = vmatpush1.xpose.msra.mxu0 0.0
    %4540 = vmatprep.subr.mxu0 0.0
    %4541 = vmatpush1.xpose.msra.mxu0 0.0
    %4542 = vmatprep.subr.mxu0 0.0
    %4543 = vmatpush1.xpose.msra.mxu0 0.0
    %4544 = vmatprep.subr.mxu0 0.0
    %4545 = vmatpush1.xpose.msra.mxu0 0.0
    %4546 = vmatprep.subr.mxu0 0.0
    %4547 = vmatpush1.xpose.msra.mxu0 0.0
    %4548 = vmatprep.subr.mxu0 0.0
    %4549 = vmatpush1.xpose.msra.mxu0 0.0
    %4550 = vmatprep.subr.mxu0 0.0
    %4551 = vmatpush1.xpose.msra.mxu0 0.0
    %4552 = vmatprep.subr.mxu0 0.0
    %4553 = vmatpush1.xpose.msra.mxu0 0.0
    %4554 = vmatprep.subr.mxu0 0.0
    %4555 = vmatpush1.xpose.msra.mxu0 0.0
    %4556 = vmatprep.subr.mxu0 0.0
    %4557 = vmatpush1.xpose.msra.mxu0 0.0
    %4558 = vmatprep.subr.mxu0 0.0
    %4559 = vmatpush1.xpose.msra.mxu0 0.0
    %4560 = vmatprep.subr.mxu0 0.0
    %4561 = vmatpush1.xpose.msra.mxu0 0.0
    %4562 = vmatprep.subr.mxu0 0.0
    %4563 = vmatpush1.xpose.msra.mxu0 0.0
    %4564 = vmatprep.subr.mxu0 0.0
    %4565 = vmatpush1.xpose.msra.mxu0 0.0
    %4566 = vmatprep.subr.mxu0 0.0
    %4567 = vmatpush1.xpose.msra.mxu0 0.0
    %4568 = vmatprep.subr.mxu0 0.0
    %4569 = vmatpush1.xpose.msra.mxu0 0.0
    %4570 = vmatprep.subr.mxu0 0.0
    %4571 = vmatpush1.xpose.msra.mxu0 0.0
    %4572 = vmatprep.subr.mxu0 0.0
    %4573 = vmatpush1.xpose.msra.mxu0 0.0
    %4574 = vmatprep.subr.mxu0 0.0
    %4575 = vmatpush1.xpose.msra.mxu0 0.0
    %4576 = vmatprep.subr.mxu0 0.0
    %4577 = vmatpush1.xpose.msra.mxu0 0.0
    %4578 = vmatprep.subr.mxu0 0.0
    %4579 = vmatpush1.xpose.msra.mxu0 0.0
    %4580 = vmatprep.subr.mxu0 0.0
    %4581 = vmatpush1.xpose.msra.mxu0 0.0
    %4582 = vmatprep.subr.mxu0 0.0
    %4583 = vmatpush1.xpose.msra.mxu0 0.0
    %4584 = vmatprep.subr.mxu0 0.0
    %4585 = vmatpush1.xpose.msra.mxu0 0.0
    %4586 = vmatprep.subr.mxu0 0.0
    %4587 = vmatpush1.xpose.msra.mxu0 0.0
    %4588 = vmatprep.mubr.f32.mxu0 0.0
    %4589 = vmatmul.mubr.f32.gmra.mrb[0].mxu0 %v4520
    %v4590 = vpop.f32.mrb[0].mxu0
    %v4591 = vadd.f32 0.0, %v4590
    %v4592 = vpop.f32.mrb[0].mxu0
    %4593 = vdwg.mxu0
    %v4594 = vmul.f32 %v4591, 0.35355338
    %v4595 = vsel %vm1393, %v4594, -inf
    %4596 = vmax.xlane.f32.xlu0 %v4595
    %v4597 = vpop.xlane.xlu0 %4596
    %v4598 = vsub.f32 %v4594, %v4597
    %v4599 = vmul.f32 %v4598, 1.442695
    %v4600 = vpow.pop %v4599
    %v4601 = vsel %vm1393, %v4600, 0.0
    %4602 = vadd.xlane.f32.xlu0 %v4601
    %v4603 = vpop.xlane.xlu0 %4602
    %v4604 = vrcp.pop %v4603
    %v4605 = vmul.f32 %v4600, %v4604
    %4606 = vrot.lane.b32.xlu0 %v3793, 40
    %v4607 = vpop.permute.xlu0 %4606
    %v4609 = vsel %vm1407, %v4605, 0
    %v4611 = vsel %vm1411, %v4607, 0
    %4613 = vmatprep.subr.mxu0 0.0
    %4614 = vmatpush1.msra.mxu0 %v4611
    %4615 = vmatprep.subr.mxu0 0.0
    %4616 = vmatpush1.msra.mxu0 0.0
    %4617 = vmatprep.subr.mxu0 0.0
    %4618 = vmatpush1.msra.mxu0 0.0
    %4619 = vmatprep.subr.mxu0 0.0
    %4620 = vmatpush1.msra.mxu0 0.0
    %4621 = vmatprep.subr.mxu0 0.0
    %4622 = vmatpush1.msra.mxu0 0.0
    %4623 = vmatprep.subr.mxu0 0.0
    %4624 = vmatpush1.msra.mxu0 0.0
    %4625 = vmatprep.subr.mxu0 0.0
    %4626 = vmatpush1.msra.mxu0 0.0
    %4627 = vmatprep.subr.mxu0 0.0
    %4628 = vmatpush1.msra.mxu0 0.0
    %4629 = vmatprep.subr.mxu0 0.0
    %4630 = vmatpush1.msra.mxu0 0.0
    %4631 = vmatprep.subr.mxu0 0.0
    %4632 = vmatpush1.msra.mxu0 0.0
    %4633 = vmatprep.subr.mxu0 0.0
    %4634 = vmatpush1.msra.mxu0 0.0
    %4635 = vmatprep.subr.mxu0 0.0
    %4636 = vmatpush1.msra.mxu0 0.0
    %4637 = vmatprep.subr.mxu0 0.0
    %4638 = vmatpush1.msra.mxu0 0.0
    %4639 = vmatprep.subr.mxu0 0.0
    %4640 = vmatpush1.msra.mxu0 0.0
    %4641 = vmatprep.subr.mxu0 0.0
    %4642 = vmatpush1.msra.mxu0 0.0
    %4643 = vmatprep.subr.mxu0 0.0
    %4644 = vmatpush1.msra.mxu0 0.0
    %4645 = vmatprep.subr.mxu0 0.0
    %4646 = vmatpush1.msra.mxu0 0.0
    %4647 = vmatprep.subr.mxu0 0.0
    %4648 = vmatpush1.msra.mxu0 0.0
    %4649 = vmatprep.subr.mxu0 0.0
    %4650 = vmatpush1.msra.mxu0 0.0
    %4651 = vmatprep.subr.mxu0 0.0
    %4652 = vmatpush1.msra.mxu0 0.0
    %4653 = vmatprep.subr.mxu0 0.0
    %4654 = vmatpush1.msra.mxu0 0.0
    %4655 = vmatprep.subr.mxu0 0.0
    %4656 = vmatpush1.msra.mxu0 0.0
    %4657 = vmatprep.subr.mxu0 0.0
    %4658 = vmatpush1.msra.mxu0 0.0
    %4659 = vmatprep.subr.mxu0 0.0
    %4660 = vmatpush1.msra.mxu0 0.0
    %4661 = vmatprep.subr.mxu0 0.0
    %4662 = vmatpush1.msra.mxu0 0.0
    %4663 = vmatprep.subr.mxu0 0.0
    %4664 = vmatpush1.msra.mxu0 0.0
    %4665 = vmatprep.subr.mxu0 0.0
    %4666 = vmatpush1.msra.mxu0 0.0
    %4667 = vmatprep.subr.mxu0 0.0
    %4668 = vmatpush1.msra.mxu0 0.0
    %4669 = vmatprep.subr.mxu0 0.0
    %4670 = vmatpush1.msra.mxu0 0.0
    %4671 = vmatprep.subr.mxu0 0.0
    %4672 = vmatpush1.msra.mxu0 0.0
    %4673 = vmatprep.subr.mxu0 0.0
    %4674 = vmatpush1.msra.mxu0 0.0
    %4675 = vmatprep.subr.mxu0 0.0
    %4676 = vmatpush1.msra.mxu0 0.0
    %4677 = vmatprep.mubr.f32.mxu0 0.0
    %4678 = vmatmul.mubr.f32.gmra.mrb[0].mxu0 %v4609
    %v4679 = vpop.f32.mrb[0].mxu0
    %v4680 = vadd.f32 0.0, %v4679
    %v4681 = vpop.f32.mrb[0].mxu0
    %4682 = vdwg.mxu0
    %v4684 = vsel %vm1317, %v4680, 0
    %4686 = vmatprep.subr.mxu0 0.0
    %4687 = vmatpush1.msra.mxu0 %v1010
    %4688 = vmatprep.subr.mxu0 0.0
    %4689 = vmatpush1.msra.mxu0 0.0
    %4690 = vmatprep.subr.mxu0 0.0
    %4691 = vmatpush1.msra.mxu0 0.0
    %4692 = vmatprep.subr.mxu0 0.0
    %4693 = vmatpush1.msra.mxu0 0.0
    %4694 = vmatprep.subr.mxu0 0.0
    %4695 = vmatpush1.msra.mxu0 0.0
    %4696 = vmatprep.subr.mxu0 0.0
    %4697 = vmatpush1.msra.mxu0 0.0
    %4698 = vmatprep.subr.mxu0 0.0
    %4699 = vmatpush1.msra.mxu0 0.0
    %4700 = vmatprep.subr.mxu0 0.0
    %4701 = vmatpush1.msra.mxu0 0.0
    %4702 = vmatprep.subr.mxu0 0.0
    %4703 = vmatpush1.msra.mxu0 0.0
    %4704 = vmatprep.subr.mxu0 0.0
    %4705 = vmatpush1.msra.mxu0 0.0
    %4706 = vmatprep.subr.mxu0 0.0
    %4707 = vmatpush1.msra.mxu0 0.0
    %4708 = vmatprep.subr.mxu0 0.0
    %4709 = vmatpush1.msra.mxu0 0.0
    %4710 = vmatprep.subr.mxu0 0.0
    %4711 = vmatpush1.msra.mxu0 0.0
    %4712 = vmatprep.subr.mxu0 0.0
    %4713 = vmatpush1.msra.mxu0 0.0
    %4714 = vmatprep.subr.mxu0 0.0
    %4715 = vmatpush1.msra.mxu0 0.0
    %4716 = vmatprep.subr.mxu0 0.0
    %4717 = vmatpush1.msra.mxu0 0.0
    %4718 = vmatprep.subr.mxu0 0.0
    %4719 = vmatpush1.msra.mxu0 0.0
    %4720 = vmatprep.subr.mxu0 0.0
    %4721 = vmatpush1.msra.mxu0 0.0
    %4722 = vmatprep.subr.mxu0 0.0
    %4723 = vmatpush1.msra.mxu0 0.0
    %4724 = vmatprep.subr.mxu0 0.0
    %4725 = vmatpush1.msra.mxu0 0.0
    %4726 = vmatprep.subr.mxu0 0.0
    %4727 = vmatpush1.msra.mxu0 0.0
    %4728 = vmatprep.subr.mxu0 0.0
    %4729 = vmatpush1.msra.mxu0 0.0
    %4730 = vmatprep.subr.mxu0 0.0
    %4731 = vmatpush1.msra.mxu0 0.0
    %4732 = vmatprep.subr.mxu0 0.0
    %4733 = vmatpush1.msra.mxu0 0.0
    %4734 = vmatprep.subr.mxu0 0.0
    %4735 = vmatpush1.msra.mxu0 0.0
    %4736 = vmatprep.subr.mxu0 0.0
    %4737 = vmatpush1.msra.mxu0 0.0
    %4738 = vmatprep.subr.mxu0 0.0
    %4739 = vmatpush1.msra.mxu0 0.0
    %4740 = vmatprep.subr.mxu0 0.0
    %4741 = vmatpush1.msra.mxu0 0.0
    %4742 = vmatprep.subr.mxu0 0.0
    %4743 = vmatpush1.msra.mxu0 0.0
    %4744 = vmatprep.subr.mxu0 0.0
    %4745 = vmatpush1.msra.mxu0 0.0
    %4746 = vmatprep.subr.mxu0 0.0
    %4747 = vmatpush1.msra.mxu0 0.0
    %4748 = vmatprep.subr.mxu0 0.0
    %4749 = vmatpush1.msra.mxu0 0.0
    %4750 = vmatprep.mubr.f32.mxu0 0.0
    %4751 = vmatmul.mubr.f32.gmra.mrb[0].mxu0 %v4684
    %v4752 = vpop.f32.mrb[0].mxu0
    %v4753 = vadd.f32 0.0, %v4752
    %v4754 = vpop.f32.mrb[0].mxu0
    %4755 = vdwg.mxu0
    %v4756 = vadd.f32 %v4515, %v4753
    %v4757 = vadd.f32 %v2474, %v4756
    %v4759 = vlaneseq
    %v4760 = vshrl.u32 %v4759, 7
    %v4761 = vsub.s32 0, %v4760
    %v4762 = vrot.slane %v979, %v4761
    %v4764 = vadd.f32 %v4757, %v4762
    %v4765 = vsel %vm1205, %v4764, 0.0
    %4766 = vadd.xlane.f32.xlu0 %v4765
    %v4767 = vpop.xlane.xlu0 %4766
    %v4768 = vmul.f32 %v4767, %v1209
    %v4769 = vsub.f32 %v4764, %v4768
    %v4770 = vmul.f32 %v4769, %v4769
    %v4771 = vsel %vm1205, %v4770, 0.0
    %4772 = vadd.xlane.f32.xlu0 %v4771
    %v4773 = vpop.xlane.xlu0 %4772
    %v4774 = vmul.f32 %v4773, %v1209
    %v4775 = vadd.f32 %v4774, 1e-06
    %v4776 = vrsqrt.pop %v4775
    %v4777 = vmul.f32 %v4769, %v4776
    %v4779 = vlaneseq
    %v4780 = vshrl.u32 %v4779, 7
    %v4781 = vsub.s32 0, %v4780
    %v4782 = vrot.slane %v984, %v4781
    %v4784 = vmul.f32 %v4777, %v4782
    %v4786 = vlaneseq
    %v4787 = vshrl.u32 %v4786, 7
    %v4788 = vsub.s32 0, %v4787
    %v4789 = vrot.slane %v983, %v4788
    %v4791 = vadd.f32 %v4784, %v4789
    %v4793 = vlaneseq
    %v4794 = vshrl.u32 %v4793, 7
    %v4795 = vsub.s32 0, %v4794
    %v4796 = vrot.slane %v985, %v4795
    %v4799 = vsel %vm1240, %v4791, 0
    %4801 = vmatprep.subr.mxu0 0.0
    %4802 = vmatpush1.msra.mxu0 %v986
    %4803 = vmatprep.subr.mxu0 0.0
    %4804 = vmatpush1.msra.mxu0 %v987
    %4805 = vmatprep.subr.mxu0 0.0
    %4806 = vmatpush1.msra.mxu0 %v988
    %4807 = vmatprep.subr.mxu0 0.0
    %4808 = vmatpush1.msra.mxu0 %v989
    %4809 = vmatprep.subr.mxu0 0.0
    %4810 = vmatpush1.msra.mxu0 0.0
    %4811 = vmatprep.subr.mxu0 0.0
    %4812 = vmatpush1.msra.mxu0 0.0
    %4813 = vmatprep.subr.mxu0 0.0
    %4814 = vmatpush1.msra.mxu0 0.0
    %4815 = vmatprep.subr.mxu0 0.0
    %4816 = vmatpush1.msra.mxu0 0.0
    %4817 = vmatprep.subr.mxu0 0.0
    %4818 = vmatpush1.msra.mxu0 0.0
    %4819 = vmatprep.subr.mxu0 0.0
    %4820 = vmatpush1.msra.mxu0 0.0
    %4821 = vmatprep.subr.mxu0 0.0
    %4822 = vmatpush1.msra.mxu0 0.0
    %4823 = vmatprep.subr.mxu0 0.0
    %4824 = vmatpush1.msra.mxu0 0.0
    %4825 = vmatprep.subr.mxu0 0.0
    %4826 = vmatpush1.msra.mxu0 0.0
    %4827 = vmatprep.subr.mxu0 0.0
    %4828 = vmatpush1.msra.mxu0 0.0
    %4829 = vmatprep.subr.mxu0 0.0
    %4830 = vmatpush1.msra.mxu0 0.0
    %4831 = vmatprep.subr.mxu0 0.0
    %4832 = vmatpush1.msra.mxu0 0.0
    %4833 = vmatprep.subr.mxu0 0.0
    %4834 = vmatpush1.msra.mxu0 0.0
    %4835 = vmatprep.subr.mxu0 0.0
    %4836 = vmatpush1.msra.mxu0 0.0
    %4837 = vmatprep.subr.mxu0 0.0
    %4838 = vmatpush1.msra.mxu0 0.0
    %4839 = vmatprep.subr.mxu0 0.0
    %4840 = vmatpush1.msra.mxu0 0.0
    %4841 = vmatprep.subr.mxu0 0.0
    %4842 = vmatpush1.msra.mxu0 0.0
    %4843 = vmatprep.subr.mxu0 0.0
    %4844 = vmatpush1.msra.mxu0 0.0
    %4845 = vmatprep.subr.mxu0 0.0
    %4846 = vmatpush1.msra.mxu0 0.0
    %4847 = vmatprep.subr.mxu0 0.0
    %4848 = vmatpush1.msra.mxu0 0.0
    %4849 = vmatprep.subr.mxu0 0.0
    %4850 = vmatpush1.msra.mxu0 0.0
    %4851 = vmatprep.subr.mxu0 0.0
    %4852 = vmatpush1.msra.mxu0 0.0
    %4853 = vmatprep.subr.mxu0 0.0
    %4854 = vmatpush1.msra.mxu0 0.0
    %4855 = vmatprep.subr.mxu0 0.0
    %4856 = vmatpush1.msra.mxu0 0.0
    %4857 = vmatprep.subr.mxu0 0.0
    %4858 = vmatpush1.msra.mxu0 0.0
    %4859 = vmatprep.subr.mxu0 0.0
    %4860 = vmatpush1.msra.mxu0 0.0
    %4861 = vmatprep.subr.mxu0 0.0
    %4862 = vmatpush1.msra.mxu0 0.0
    %4863 = vmatprep.subr.mxu0 0.0
    %4864 = vmatpush1.msra.mxu0 0.0
    %4865 = vmatprep.mubr.f32.mxu0 0.0
    %4866 = vmatmul.mubr.f32.gmra.mrb[0].mxu0 %v4799
    %v4867 = vpop.f32.mrb[0].mxu0
    %v4868 = vadd.f32 %v4796, %v4867
    %v4869 = vpop.f32.mrb[0].mxu0
    %4870 = vdwg.mxu0
    %v4871 = vmul.f32 %v4868, 0.5
    %v4872 = vmul.f32 %v4868, 0.70710677
    %v4873 = verf.f32.pop %v4872
    %v4874 = vadd.f32 %v4873, 1.0
    %v4875 = vmul.f32 %v4871, %v4874
    %v4877 = vlaneseq
    %v4878 = vshrl.u32 %v4877, 7
    %v4879 = vsub.s32 0, %v4878
    %v4880 = vrot.slane %v990, %v4879
    %4882 = vmatprep.subr.mxu0 0.0
    %4883 = vmatpush1.msra.mxu0 %v991
    %4884 = vmatprep.subr.mxu0 0.0
    %4885 = vmatpush1.msra.mxu0 %v992
    %4886 = vmatprep.subr.mxu0 0.0
    %4887 = vmatpush1.msra.mxu0 %v993
    %4888 = vmatprep.subr.mxu0 0.0
    %4889 = vmatpush1.msra.mxu0 %v994
    %4890 = vmatprep.subr.mxu0 0.0
    %4891 = vmatpush1.msra.mxu0 %v995
    %4892 = vmatprep.subr.mxu0 0.0
    %4893 = vmatpush1.msra.mxu0 %v996
    %4894 = vmatprep.subr.mxu0 0.0
    %4895 = vmatpush1.msra.mxu0 %v997
    %4896 = vmatprep.subr.mxu0 0.0
    %4897 = vmatpush1.msra.mxu0 %v998
    %4898 = vmatprep.subr.mxu0 0.0
    %4899 = vmatpush1.msra.mxu0 %v999
    %4900 = vmatprep.subr.mxu0 0.0
    %4901 = vmatpush1.msra.mxu0 %v1000
    %4902 = vmatprep.subr.mxu0 0.0
    %4903 = vmatpush1.msra.mxu0 %v1001
    %4904 = vmatprep.subr.mxu0 0.0
    %4905 = vmatpush1.msra.mxu0 %v1002
    %4906 = vmatprep.subr.mxu0 0.0
    %4907 = vmatpush1.msra.mxu0 %v1003
    %4908 = vmatprep.subr.mxu0 0.0
    %4909 = vmatpush1.msra.mxu0 %v1004
    %4910 = vmatprep.subr.mxu0 0.0
    %4911 = vmatpush1.msra.mxu0 %v1005
    %4912 = vmatprep.subr.mxu0 0.0
    %4913 = vmatpush1.msra.mxu0 %v1006
    %4914 = vmatprep.subr.mxu0 0.0
    %4915 = vmatpush1.msra.mxu0 0.0
    %4916 = vmatprep.subr.mxu0 0.0
    %4917 = vmatpush1.msra.mxu0 0.0
    %4918 = vmatprep.subr.mxu0 0.0
    %4919 = vmatpush1.msra.mxu0 0.0
    %4920 = vmatprep.subr.mxu0 0.0
    %4921 = vmatpush1.msra.mxu0 0.0
    %4922 = vmatprep.subr.mxu0 0.0
    %4923 = vmatpush1.msra.mxu0 0.0
    %4924 = vmatprep.subr.mxu0 0.0
    %4925 = vmatpush1.msra.mxu0 0.0
    %4926 = vmatprep.subr.mxu0 0.0
    %4927 = vmatpush1.msra.mxu0 0.0
    %4928 = vmatprep.subr.mxu0 0.0
    %4929 = vmatpush1.msra.mxu0 0.0
    %4930 = vmatprep.subr.mxu0 0.0
    %4931 = vmatpush1.msra.mxu0 0.0
    %4932 = vmatprep.subr.mxu0 0.0
    %4933 = vmatpush1.msra.mxu0 0.0
    %4934 = vmatprep.subr.mxu0 0.0
    %4935 = vmatpush1.msra.mxu0 0.0
    %4936 = vmatprep.subr.mxu0 0.0
    %4937 = vmatpush1.msra.mxu0 0.0
    %4938 = vmatprep.subr.mxu0 0.0
    %4939 = vmatpush1.msra.mxu0 0.0
    %4940 = vmatprep.subr.mxu0 0.0
    %4941 = vmatpush1.msra.mxu0 0.0
    %4942 = vmatprep.subr.mxu0 0.0
    %4943 = vmatpush1.msra.mxu0 0.0
    %4944 = vmatprep.subr.mxu0 0.0
    %4945 = vmatpush1.msra.mxu0 0.0
    %4946 = vmatprep.mubr.f32.mxu0 0.0
    %4947 = vmatmul.mubr.f32.gmra.mrb[0].mxu0 %v4875
    %v4948 = vpop.f32.mrb[0].mxu0
    %v4949 = vadd.f32 %v4880, %v4948
    %v4950 = vpop.f32.mrb[0].mxu0
    %4951 = vdwg.mxu0
    %v4952 = vadd.f32 %v4764, %v4949
    %v4953 = vsel %vm1205, %v3689, 0.0
    %4954 = vadd.xlane.f32.xlu0 %v4953
    %v4955 = vpop.xlane.xlu0 %4954
    %v4956 = vmul.f32 %v4955, %v1209
    %v4957 = vsub.f32 %v3689, %v4956
    %v4958 = vmul.f32 %v4957, %v4957
    %v4959 = vsel %vm1205, %v4958, 0.0
    %4960 = vadd.xlane.f32.xlu0 %v4959
    %v4961 = vpop.xlane.xlu0 %4960
    %v4962 = vmul.f32 %v4961, %v1209
    %v4963 = vadd.f32 %v4962, 1e-06
    %v4964 = vrsqrt.pop %v4963
    %v4965 = vmul.f32 %v4957, %v4964
    %v4966 = vmul.f32 %v4965, %v3707
    %v4967 = vadd.f32 %v4966, %v3714
    %v4969 = vsel %vm1240, %v4967, 0
    %4971 = vmatprep.subr.mxu0 0.0
    %4972 = vmatpush1.msra.mxu0 %v1011
    %4973 = vmatprep.subr.mxu0 0.0
    %4974 = vmatpush1.msra.mxu0 %v1012
    %4975 = vmatprep.subr.mxu0 0.0
    %4976 = vmatpush1.msra.mxu0 %v1013
    %4977 = vmatprep.subr.mxu0 0.0
    %4978 = vmatpush1.msra.mxu0 %v1014
    %4979 = vmatprep.subr.mxu0 0.0
    %4980 = vmatpush1.msra.mxu0 0.0
    %4981 = vmatprep.subr.mxu0 0.0
    %4982 = vmatpush1.msra.mxu0 0.0
    %4983 = vmatprep.subr.mxu0 0.0
    %4984 = vmatpush1.msra.mxu0 0.0
    %4985 = vmatprep.subr.mxu0 0.0
    %4986 = vmatpush1.msra.mxu0 0.0
    %4987 = vmatprep.subr.mxu0 0.0
    %4988 = vmatpush1.msra.mxu0 0.0
    %4989 = vmatprep.subr.mxu0 0.0
    %4990 = vmatpush1.msra.mxu0 0.0
    %4991 = vmatprep.subr.mxu0 0.0
    %4992 = vmatpush1.msra.mxu0 0.0
    %4993 = vmatprep.subr.mxu0 0.0
    %4994 = vmatpush1.msra.mxu0 0.0
    %4995 = vmatprep.subr.mxu0 0.0
    %4996 = vmatpush1.msra.mxu0 0.0
    %4997 = vmatprep.subr.mxu0 0.0
    %4998 = vmatpush1.msra.mxu0 0.0
    %4999 = vmatprep.subr.mxu0 0.0
    %5000 = vmatpush1.msra.mxu0 0.0
    %5001 = vmatprep.subr.mxu0 0.0
    %5002 = vmatpush1.msra.mxu0 0.0
    %5003 = vmatprep.subr.mxu0 0.0
    %5004 = vmatpush1.msra.mxu0 0.0
    %5005 = vmatprep.subr.mxu0 0.0
    %5006 = vmatpush1.msra.mxu0 0.0
    %5007 = vmatprep.subr.mxu0 0.0
    %5008 = vmatpush1.msra.mxu0 0.0
    %5009 = vmatprep.subr.mxu0 0.0
    %5010 = vmatpush1.msra.mxu0 0.0
    %5011 = vmatprep.subr.mxu0 0.0
    %5012 = vmatpush1.msra.mxu0 0.0
    %5013 = vmatprep.subr.mxu0 0.0
    %5014 = vmatpush1.msra.mxu0 0.0
    %5015 = vmatprep.subr.mxu0 0.0
    %5016 = vmatpush1.msra.mxu0 0.0
    %5017 = vmatprep.subr.mxu0 0.0
    %5018 = vmatpush1.msra.mxu0 0.0
    %5019 = vmatprep.subr.mxu0 0.0
    %5020 = vmatpush1.msra.mxu0 0.0
    %5021 = vmatprep.subr.mxu0 0.0
    %5022 = vmatpush1.msra.mxu0 0.0
    %5023 = vmatprep.subr.mxu0 0.0
    %5024 = vmatpush1.msra.mxu0 0.0
    %5025 = vmatprep.subr.mxu0 0.0
    %5026 = vmatpush1.msra.mxu0 0.0
    %5027 = vmatprep.subr.mxu0 0.0
    %5028 = vmatpush1.msra.mxu0 0.0
    %5029 = vmatprep.subr.mxu0 0.0
    %5030 = vmatpush1.msra.mxu0 0.0
    %5031 = vmatprep.subr.mxu0 0.0
    %5032 = vmatpush1.msra.mxu0 0.0
    %5033 = vmatprep.subr.mxu0 0.0
    %5034 = vmatpush1.msra.mxu0 0.0
    %5035 = vmatprep.mubr.f32.mxu0 0.0
    %5036 = vmatmul.mubr.f32.gmra.mrb[0].mxu0 %v4969
    %v5037 = vpop.f32.mrb[0].mxu0
    %v5038 = vadd.f32 %v3721, %v5037
    %v5039 = vpop.f32.mrb[0].mxu0
    %5040 = vdwg.mxu0
    %5042 = vrot.lane.b32.xlu0 %v5038, 96
    %v5043 = vpop.permute.xlu0 %5042
    %v5044 = vsel %vm1317, %v5038, 0
    %v5046 = vsel %vm1317, %v5043, 0
    %5048 = vmatprep.subr.mxu0 0.0
    %5049 = vmatpush1.xpose.msra.mxu0 %v5046
    %5050 = vmatprep.subr.mxu0 0.0
    %5051 = vmatpush1.xpose.msra.mxu0 0.0
    %5052 = vmatprep.subr.mxu0 0.0
    %5053 = vmatpush1.xpose.msra.mxu0 0.0
    %5054 = vmatprep.subr.mxu0 0.0
    %5055 = vmatpush1.xpose.msra.mxu0 0.0
    %5056 = vmatprep.subr.mxu0 0.0
    %5057 = vmatpush1.xpose.msra.mxu0 0.0
    %5058 = vmatprep.subr.mxu0 0.0
    %5059 = vmatpush1.xpose.msra.mxu0 0.0
    %5060 = vmatprep.subr.mxu0 0.0
    %5061 = vmatpush1.xpose.msra.mxu0 0.0
    %5062 = vmatprep.subr.mxu0 0.0
    %5063 = vmatpush1.xpose.msra.mxu0 0.0
    %5064 = vmatprep.subr.mxu0 0.0
    %5065 = vmatpush1.xpose.msra.mxu0 0.0
    %5066 = vmatprep.subr.mxu0 0.0
    %5067 = vmatpush1.xpose.msra.mxu0 0.0
    %5068 = vmatprep.subr.mxu0 0.0
    %5069 = vmatpush1.xpose.msra.mxu0 0.0
    %5070 = vmatprep.subr.mxu0 0.0
    %5071 = vmatpush1.xpose.msra.mxu0 0.0
    %5072 = vmatprep.subr.mxu0 0.0
    %5073 = vmatpush1.xpose.msra.mxu0 0.0
    %5074 = vmatprep.subr.mxu0 0.0
    %5075 = vmatpush1.xpose.msra.mxu0 0.0
    %5076 = vmatprep.subr.mxu0 0.0
    %5077 = vmatpush1.xpose.msra.mxu0 0.0
    %5078 = vmatprep.subr.mxu0 0.0
    %5079 = vmatpush1.xpose.msra.mxu0 0.0
    %5080 = vmatprep.subr.mxu0 0.0
    %5081 = vmatpush1.xpose.msra.mxu0 0.0
    %5082 = vmatprep.subr.mxu0 0.0
    %5083 = vmatpush1.xpose.msra.mxu0 0.0
    %5084 = vmatprep.subr.mxu0 0.0
    %5085 = vmatpush1.xpose.msra.mxu0 0.0
    %5086 = vmatprep.subr.mxu0 0.0
    %5087 = vmatpush1.xpose.msra.mxu0 0.0
    %5088 = vmatprep.subr.mxu0 0.0
    %5089 = vmatpush1.xpose.msra.mxu0 0.0
    %5090 = vmatprep.subr.mxu0 0.0
    %5091 = vmatpush1.xpose.msra.mxu0 0.0
    %5092 = vmatprep.subr.mxu0 0.0
    %5093 = vmatpush1.xpose.msra.mxu0 0.0
    %5094 = vmatprep.subr.mxu0 0.0
    %5095 = vmatpush1.xpose.msra.mxu0 0.0
    %5096 = vmatprep.subr.mxu0 0.0
    %5097 = vmatpush1.xpose.msra.mxu0 0.0
    %5098 = vmatprep.subr.mxu0 0.0
    %5099 = vmatpush1.xpose.msra.mxu0 0.0
    %5100 = vmatprep.subr.mxu0 0.0
    %5101 = vmatpush1.xpose.msra.mxu0 0.0
    %5102 = vmatprep.subr.mxu0 0.0
    %5103 = vmatpush1.xpose.msra.mxu0 0.0
    %5104 = vmatprep.subr.mxu0 0.0
    %5105 = vmatpush1.xpose.msra.mxu0 0.0
    %5106 = vmatprep.subr.mxu0 0.0
    %5107 = vmatpush1.xpose.msra.mxu0 0.0
    %5108 = vmatprep.subr.mxu0 0.0
    %5109 = vmatpush1.xpose.msra.mxu0 0.0
    %5110 = vmatprep.subr.mxu0 0.0
    %5111 = vmatpush1.xpose.msra.mxu0 0.0
    %5112 = vmatprep.mubr.f32.mxu0 0.0
    %5113 = vmatmul.mubr.f32.gmra.mrb[0].mxu0 %v5044
    %v5114 = vpop.f32.mrb[0].mxu0
    %v5115 = vadd.f32 0.0, %v5114
    %v5116 = vpop.f32.mrb[0].mxu0
    %5117 = vdwg.mxu0
    %v5118 = vmul.f32 %v5115, 0.35355338
    %v5119 = vsel %vm1393, %v5118, -inf
    %5120 = vmax.xlane.f32.xlu0 %v5119
    %v5121 = vpop.xlane.xlu0 %5120
    %v5122 = vsub.f32 %v5118, %v5121
    %v5123 = vmul.f32 %v5122, 1.442695
    %v5124 = vpow.pop %v5123
    %v5125 = vsel %vm1393, %v5124, 0.0
    %5126 = vadd.xlane.f32.xlu0 %v5125
    %v5127 = vpop.xlane.xlu0 %5126
    %v5128 = vrcp.pop %v5127
    %v5129 = vmul.f32 %v5124, %v5128
    %5130 = vrot.lane.b32.xlu0 %v5038, 64
    %v5131 = vpop.permute.xlu0 %5130
    %v5133 = vsel %vm1407, %v5129, 0
    %v5135 = vsel %vm1411, %v5131, 0
    %5137 = vmatprep.subr.mxu0 0.0
    %5138 = vmatpush1.msra.mxu0 %v5135
    %5139 = vmatprep.subr.mxu0 0.0
    %5140 = vmatpush1.msra.mxu0 0.0
    %5141 = vmatprep.subr.mxu0 0.0
    %5142 = vmatpush1.msra.mxu0 0.0
    %5143 = vmatprep.subr.mxu0 0.0
    %5144 = vmatpush1.msra.mxu0 0.0
    %5145 = vmatprep.subr.mxu0 0.0
    %5146 = vmatpush1.msra.mxu0 0.0
    %5147 = vmatprep.subr.mxu0 0.0
    %5148 = vmatpush1.msra.mxu0 0.0
    %5149 = vmatprep.subr.mxu0 0.0
    %5150 = vmatpush1.msra.mxu0 0.0
    %5151 = vmatprep.subr.mxu0 0.0
    %5152 = vmatpush1.msra.mxu0 0.0
    %5153 = vmatprep.subr.mxu0 0.0
    %5154 = vmatpush1.msra.mxu0 0.0
    %5155 = vmatprep.subr.mxu0 0.0
    %5156 = vmatpush1.msra.mxu0 0.0
    %5157 = vmatprep.subr.mxu0 0.0
    %5158 = vmatpush1.msra.mxu0 0.0
    %5159 = vmatprep.subr.mxu0 0.0
    %5160 = vmatpush1.msra.mxu0 0.0
    %5161 = vmatprep.subr.mxu0 0.0
    %5162 = vmatpush1.msra.mxu0 0.0
    %5163 = vmatprep.subr.mxu0 0.0
    %5164 = vmatpush1.msra.mxu0 0.0
    %5165 = vmatprep.subr.mxu0 0.0
    %5166 = vmatpush1.msra.mxu0 0.0
    %5167 = vmatprep.subr.mxu0 0.0
    %5168 = vmatpush1.msra.mxu0 0.0
    %5169 = vmatprep.subr.mxu0 0.0
    %5170 = vmatpush1.msra.mxu0 0.0
    %5171 = vmatprep.subr.mxu0 0.0
    %5172 = vmatpush1.msra.mxu0 0.0
    %5173 = vmatprep.subr.mxu0 0.0
    %5174 = vmatpush1.msra.mxu0 0.0
    %5175 = vmatprep.subr.mxu0 0.0
    %5176 = vmatpush1.msra.mxu0 0.0
    %5177 = vmatprep.subr.mxu0 0.0
    %5178 = vmatpush1.msra.mxu0 0.0
    %5179 = vmatprep.subr.mxu0 0.0
    %5180 = vmatpush1.msra.mxu0 0.0
    %5181 = vmatprep.subr.mxu0 0.0
    %5182 = vmatpush1.msra.mxu0 0.0
    %5183 = vmatprep.subr.mxu0 0.0
    %5184 = vmatpush1.msra.mxu0 0.0
    %5185 = vmatprep.subr.mxu0 0.0
    %5186 = vmatpush1.msra.mxu0 0.0
    %5187 = vmatprep.subr.mxu0 0.0
    %5188 = vmatpush1.msra.mxu0 0.0
    %5189 = vmatprep.subr.mxu0 0.0
    %5190 = vmatpush1.msra.mxu0 0.0
    %5191 = vmatprep.subr.mxu0 0.0
    %5192 = vmatpush1.msra.mxu0 0.0
    %5193 = vmatprep.subr.mxu0 0.0
    %5194 = vmatpush1.msra.mxu0 0.0
    %5195 = vmatprep.subr.mxu0 0.0
    %5196 = vmatpush1.msra.mxu0 0.0
    %5197 = vmatprep.subr.mxu0 0.0
    %5198 = vmatpush1.msra.mxu0 0.0
    %5199 = vmatprep.subr.mxu0 0.0
    %5200 = vmatpush1.msra.mxu0 0.0
    %5201 = vmatprep.mubr.f32.mxu0 0.0
    %5202 = vmatmul.mubr.f32.gmra.mrb[0].mxu0 %v5133
    %v5203 = vpop.f32.mrb[0].mxu0
    %v5204 = vadd.f32 0.0, %v5203
    %v5205 = vpop.f32.mrb[0].mxu0
    %5206 = vdwg.mxu0
    %5207 = vrot.lane.b32.xlu0 %v5038, 120
    %v5208 = vpop.permute.xlu0 %5207
    %5209 = vrot.lane.b32.xlu0 %v5038, 88
    %v5210 = vpop.permute.xlu0 %5209
    %v5211 = vsel %vm1317, %v5208, 0
    %v5213 = vsel %vm1317, %v5210, 0
    %5215 = vmatprep.subr.mxu0 0.0
    %5216 = vmatpush1.xpose.msra.mxu0 %v5213
    %5217 = vmatprep.subr.mxu0 0.0
    %5218 = vmatpush1.xpose.msra.mxu0 0.0
    %5219 = vmatprep.subr.mxu0 0.0
    %5220 = vmatpush1.xpose.msra.mxu0 0.0
    %5221 = vmatprep.subr.mxu0 0.0
    %5222 = vmatpush1.xpose.msra.mxu0 0.0
    %5223 = vmatprep.subr.mxu0 0.0
    %5224 = vmatpush1.xpose.msra.mxu0 0.0
    %5225 = vmatprep.subr.mxu0 0.0
    %5226 = vmatpush1.xpose.msra.mxu0 0.0
    %5227 = vmatprep.subr.mxu0 0.0
    %5228 = vmatpush1.xpose.msra.mxu0 0.0
    %5229 = vmatprep.subr.mxu0 0.0
    %5230 = vmatpush1.xpose.msra.mxu0 0.0
    %5231 = vmatprep.subr.mxu0 0.0
    %5232 = vmatpush1.xpose.msra.mxu0 0.0
    %5233 = vmatprep.subr.mxu0 0.0
    %5234 = vmatpush1.xpose.msra.mxu0 0.0
    %5235 = vmatprep.subr.mxu0 0.0
    %5236 = vmatpush1.xpose.msra.mxu0 0.0
    %5237 = vmatprep.subr.mxu0 0.0
    %5238 = vmatpush1.xpose.msra.mxu0 0.0
    %5239 = vmatprep.subr.mxu0 0.0
    %5240 = vmatpush1.xpose.msra.mxu0 0.0
    %5241 = vmatprep.subr.mxu0 0.0
    %5242 = vmatpush1.xpose.msra.mxu0 0.0
    %5243 = vmatprep.subr.mxu0 0.0
    %5244 = vmatpush1.xpose.msra.mxu0 0.0
    %5245 = vmatprep.subr.mxu0 0.0
    %5246 = vmatpush1.xpose.msra.mxu0 0.0
    %5247 = vmatprep.subr.mxu0 0.0
    %5248 = vmatpush1.xpose.msra.mxu0 0.0
    %5249 = vmatprep.subr.mxu0 0.0
    %5250 = vmatpush1.xpose.msra.mxu0 0.0
    %5251 = vmatprep.subr.mxu0 0.0
    %5252 = vmatpush1.xpose.msra.mxu0 0.0
    %5253 = vmatprep.subr.mxu0 0.0
    %5254 = vmatpush1.xpose.msra.mxu0 0.0
    %5255 = vmatprep.subr.mxu0 0.0
    %5256 = vmatpush1.xpose.msra.mxu0 0.0
    %5257 = vmatprep.subr.mxu0 0.0
    %5258 = vmatpush1.xpose.msra.mxu0 0.0
    %5259 = vmatprep.subr.mxu0 0.0
    %5260 = vmatpush1.xpose.msra.mxu0 0.0
    %5261 = vmatprep.subr.mxu0 0.0
    %5262 = vmatpush1.xpose.msra.mxu0 0.0
    %5263 = vmatprep.subr.mxu0 0.0
    %5264 = vmatpush1.xpose.msra.mxu0 0.0
    %5265 = vmatprep.subr.mxu0 0.0
    %5266 = vmatpush1.xpose.msra.mxu0 0.0
    %5267 = vmatprep.subr.mxu0 0.0
    %5268 = vmatpush1.xpose.msra.mxu0 0.0
    %5269 = vmatprep.subr.mxu0 0.0
    %5270 = vmatpush1.xpose.msra.mxu0 0.0
    %5271 = vmatprep.subr.mxu0 0.0
    %5272 = vmatpush1.xpose.msra.mxu0 0.0
    %5273 = vmatprep.subr.mxu0 0.0
    %5274 = vmatpush1.xpose.msra.mxu0 0.0
    %5275 = vmatprep.subr.mxu0 0.0
    %5276 = vmatpush1.xpose.msra.mxu0 0.0
    %5277 = vmatprep.subr.mxu0 0.0
    %5278 = vmatpush1.xpose.msra.mxu0 0.0
    %5279 = vmatprep.mubr.f32.mxu0 0.0
    %5280 = vmatmul.mubr.f32.gmra.mrb[0].mxu0 %v5211
    %v5281 = vpop.f32.mrb[0].mxu0
    %v5282 = vadd.f32 0.0, %v5281
    %v5283 = vpop.f32.mrb[0].mxu0
    %5284 = vdwg.mxu0
    %v5285 = vmul.f32 %v5282, 0.35355338
    %v5286 = vsel %vm1393, %v5285, -inf
    %5287 = vmax.xlane.f32.xlu0 %v5286
    %v5288 = vpop.xlane.xlu0 %5287
    %v5289 = vsub.f32 %v5285, %v5288
    %v5290 = vmul.f32 %v5289, 1.442695
    %v5291 = vpow.pop %v5290
    %v5292 = vsel %vm1393, %v5291, 0.0
    %5293 = vadd.xlane.f32.xlu0 %v5292
    %v5294 = vpop.xlane.xlu0 %5293
    %v5295 = vrcp.pop %v5294
    %v5296 = vmul.f32 %v5291, %v5295
    %5297 = vrot.lane.b32.xlu0 %v5038, 56
    %v5298 = vpop.permute.xlu0 %5297
    %v5300 = vsel %vm1407, %v5296, 0
    %v5302 = vsel %vm1411, %v5298, 0
    %5304 = vmatprep.subr.mxu0 0.0
    %5305 = vmatpush1.msra.mxu0 %v5302
    %5306 = vmatprep.subr.mxu0 0.0
    %5307 = vmatpush1.msra.mxu0 0.0
    %5308 = vmatprep.subr.mxu0 0.0
    %5309 = vmatpush1.msra.mxu0 0.0
    %5310 = vmatprep.subr.mxu0 0.0
    %5311 = vmatpush1.msra.mxu0 0.0
    %5312 = vmatprep.subr.mxu0 0.0
    %5313 = vmatpush1.msra.mxu0 0.0
    %5314 = vmatprep.subr.mxu0 0.0
    %5315 = vmatpush1.msra.mxu0 0.0
    %5316 = vmatprep.subr.mxu0 0.0
    %5317 = vmatpush1.msra.mxu0 0.0
    %5318 = vmatprep.subr.mxu0 0.0
    %5319 = vmatpush1.msra.mxu0 0.0
    %5320 = vmatprep.subr.mxu0 0.0
    %5321 = vmatpush1.msra.mxu0 0.0
    %5322 = vmatprep.subr.mxu0 0.0
    %5323 = vmatpush1.msra.mxu0 0.0
    %5324 = vmatprep.subr.mxu0 0.0
    %5325 = vmatpush1.msra.mxu0 0.0
    %5326 = vmatprep.subr.mxu0 0.0
    %5327 = vmatpush1.msra.mxu0 0.0
    %5328 = vmatprep.subr.mxu0 0.0
    %5329 = vmatpush1.msra.mxu0 0.0
    %5330 = vmatprep.subr.mxu0 0.0
    %5331 = vmatpush1.msra.mxu0 0.0
    %5332 = vmatprep.subr.mxu0 0.0
    %5333 = vmatpush1.msra.mxu0 0.0
    %5334 = vmatprep.subr.mxu0 0.0
    %5335 = vmatpush1.msra.mxu0 0.0
    %5336 = vmatprep.subr.mxu0 0.0
    %5337 = vmatpush1.msra.mxu0 0.0
    %5338 = vmatprep.subr.mxu0 0.0
    %5339 = vmatpush1.msra.mxu0 0.0
    %5340 = vmatprep.subr.mxu0 0.0
    %5341 = vmatpush1.msra.mxu0 0.0
    %5342 = vmatprep.subr.mxu0 0.0
    %5343 = vmatpush1.msra.mxu0 0.0
    %5344 = vmatprep.subr.mxu0 0.0
    %5345 = vmatpush1.msra.mxu0 0.0
    %5346 = vmatprep.subr.mxu0 0.0
    %5347 = vmatpush1.msra.mxu0 0.0
    %5348 = vmatprep.subr.mxu0 0.0
    %5349 = vmatpush1.msra.mxu0 0.0
    %5350 = vmatprep.subr.mxu0 0.0
    %5351 = vmatpush1.msra.mxu0 0.0
    %5352 = vmatprep.subr.mxu0 0.0
    %5353 = vmatpush1.msra.mxu0 0.0
    %5354 = vmatprep.subr.mxu0 0.0
    %5355 = vmatpush1.msra.mxu0 0.0
    %5356 = vmatprep.subr.mxu0 0.0
    %5357 = vmatpush1.msra.mxu0 0.0
    %5358 = vmatprep.subr.mxu0 0.0
    %5359 = vmatpush1.msra.mxu0 0.0
    %5360 = vmatprep.subr.mxu0 0.0
    %5361 = vmatpush1.msra.mxu0 0.0
    %5362 = vmatprep.subr.mxu0 0.0
    %5363 = vmatpush1.msra.mxu0 0.0
    %5364 = vmatprep.subr.mxu0 0.0
    %5365 = vmatpush1.msra.mxu0 0.0
    %5366 = vmatprep.subr.mxu0 0.0
    %5367 = vmatpush1.msra.mxu0 0.0
    %5368 = vmatprep.mubr.f32.mxu0 0.0
    %5369 = vmatmul.mubr.f32.gmra.mrb[0].mxu0 %v5300
    %v5370 = vpop.f32.mrb[0].mxu0
    %v5371 = vadd.f32 0.0, %v5370
    %v5372 = vpop.f32.mrb[0].mxu0
    %5373 = vdwg.mxu0
    %v5375 = vsel %vm1317, %v5371, 0
    %5377 = vmatprep.subr.mxu0 0.0
    %5378 = vmatpush1.msra.mxu0 %v1008
    %5379 = vmatprep.subr.mxu0 0.0
    %5380 = vmatpush1.msra.mxu0 0.0
    %5381 = vmatprep.subr.mxu0 0.0
    %5382 = vmatpush1.msra.mxu0 0.0
    %5383 = vmatprep.subr.mxu0 0.0
    %5384 = vmatpush1.msra.mxu0 0.0
    %5385 = vmatprep.subr.mxu0 0.0
    %5386 = vmatpush1.msra.mxu0 0.0
    %5387 = vmatprep.subr.mxu0 0.0
    %5388 = vmatpush1.msra.mxu0 0.0
    %5389 = vmatprep.subr.mxu0 0.0
    %5390 = vmatpush1.msra.mxu0 0.0
    %5391 = vmatprep.subr.mxu0 0.0
    %5392 = vmatpush1.msra.mxu0 0.0
    %5393 = vmatprep.subr.mxu0 0.0
    %5394 = vmatpush1.msra.mxu0 0.0
    %5395 = vmatprep.subr.mxu0 0.0
    %5396 = vmatpush1.msra.mxu0 0.0
    %5397 = vmatprep.subr.mxu0 0.0
    %5398 = vmatpush1.msra.mxu0 0.0
    %5399 = vmatprep.subr.mxu0 0.0
    %5400 = vmatpush1.msra.mxu0 0.0
    %5401 = vmatprep.subr.mxu0 0.0
    %5402 = vmatpush1.msra.mxu0 0.0
    %5403 = vmatprep.subr.mxu0 0.0
    %5404 = vmatpush1.msra.mxu0 0.0
    %5405 = vmatprep.subr.mxu0 0.0
    %5406 = vmatpush1.msra.mxu0 0.0
    %5407 = vmatprep.subr.mxu0 0.0
    %5408 = vmatpush1.msra.mxu0 0.0
    %5409 = vmatprep.subr.mxu0 0.0
    %5410 = vmatpush1.msra.mxu0 0.0
    %5411 = vmatprep.subr.mxu0 0.0
    %5412 = vmatpush1.msra.mxu0 0.0
    %5413 = vmatprep.subr.mxu0 0.0
    %5414 = vmatpush1.msra.mxu0 0.0
    %5415 = vmatprep.subr.mxu0 0.0
    %5416 = vmatpush1.msra.mxu0 0.0
    %5417 = vmatprep.subr.mxu0 0.0
    %5418 = vmatpush1.msra.mxu0 0.0
    %5419 = vmatprep.subr.mxu0 0.0
    %5420 = vmatpush1.msra.mxu0 0.0
    %5421 = vmatprep.subr.mxu0 0.0
    %5422 = vmatpush1.msra.mxu0 0.0
    %5423 = vmatprep.subr.mxu0 0.0
    %5424 = vmatpush1.msra.mxu0 0.0
    %5425 = vmatprep.subr.mxu0 0.0
    %5426 = vmatpush1.msra.mxu0 0.0
    %5427 = vmatprep.subr.mxu0 0.0
    %5428 = vmatpush1.msra.mxu0 0.0
    %5429 = vmatprep.subr.mxu0 0.0
    %5430 = vmatpush1.msra.mxu0 0.0
    %5431 = vmatprep.subr.mxu0 0.0
    %5432 = vmatpush1.msra.mxu0 0.0
    %5433 = vmatprep.subr.mxu0 0.0
    %5434 = vmatpush1.msra.mxu0 0.0
    %5435 = vmatprep.subr.mxu0 0.0
    %5436 = vmatpush1.msra.mxu0 0.0
    %5437 = vmatprep.subr.mxu0 0.0
    %5438 = vmatpush1.msra.mxu0 0.0
    %5439 = vmatprep.subr.mxu0 0.0
    %5440 = vmatpush1.msra.mxu0 0.0
    %5441 = vmatprep.mubr.f32.mxu0 0.0
    %5442 = vmatmul.mubr.f32.gmra.mrb[0].mxu0 %v5375
    %v5443 = vpop.f32.mrb[0].mxu0
    %v5444 = vadd.f32 0.0, %v5443
    %v5445 = vpop.f32.mrb[0].mxu0
    %5446 = vdwg.mxu0
    %v5448 = vsel %vm1317, %v5204, 0
    %5450 = vmatprep.subr.mxu0 0.0
    %5451 = vmatpush1.msra.mxu0 %v1007
    %5452 = vmatprep.subr.mxu0 0.0
    %5453 = vmatpush1.msra.mxu0 0.0
    %5454 = vmatprep.subr.mxu0 0.0
    %5455 = vmatpush1.msra.mxu0 0.0
    %5456 = vmatprep.subr.mxu0 0.0
    %5457 = vmatpush1.msra.mxu0 0.0
    %5458 = vmatprep.subr.mxu0 0.0
    %5459 = vmatpush1.msra.mxu0 0.0
    %5460 = vmatprep.subr.mxu0 0.0
    %5461 = vmatpush1.msra.mxu0 0.0
    %5462 = vmatprep.subr.mxu0 0.0
    %5463 = vmatpush1.msra.mxu0 0.0
    %5464 = vmatprep.subr.mxu0 0.0
    %5465 = vmatpush1.msra.mxu0 0.0
    %5466 = vmatprep.subr.mxu0 0.0
    %5467 = vmatpush1.msra.mxu0 0.0
    %5468 = vmatprep.subr.mxu0 0.0
    %5469 = vmatpush1.msra.mxu0 0.0
    %5470 = vmatprep.subr.mxu0 0.0
    %5471 = vmatpush1.msra.mxu0 0.0
    %5472 = vmatprep.subr.mxu0 0.0
    %5473 = vmatpush1.msra.mxu0 0.0
    %5474 = vmatprep.subr.mxu0 0.0
    %5475 = vmatpush1.msra.mxu0 0.0
    %5476 = vmatprep.subr.mxu0 0.0
    %5477 = vmatpush1.msra.mxu0 0.0
    %5478 = vmatprep.subr.mxu0 0.0
    %5479 = vmatpush1.msra.mxu0 0.0
    %5480 = vmatprep.subr.mxu0 0.0
    %5481 = vmatpush1.msra.mxu0 0.0
    %5482 = vmatprep.subr.mxu0 0.0
    %5483 = vmatpush1.msra.mxu0 0.0
    %5484 = vmatprep.subr.mxu0 0.0
    %5485 = vmatpush1.msra.mxu0 0.0
    %5486 = vmatprep.subr.mxu0 0.0
    %5487 = vmatpush1.msra.mxu0 0.0
    %5488 = vmatprep.subr.mxu0 0.0
    %5489 = vmatpush1.msra.mxu0 0.0
    %5490 = vmatprep.subr.mxu0 0.0
    %5491 = vmatpush1.msra.mxu0 0.0
    %5492 = vmatprep.subr.mxu0 0.0
    %5493 = vmatpush1.msra.mxu0 0.0
    %5494 = vmatprep.subr.mxu0 0.0
    %5495 = vmatpush1.msra.mxu0 0.0
    %5496 = vmatprep.subr.mxu0 0.0
    %5497 = vmatpush1.msra.mxu0 0.0
    %5498 = vmatprep.subr.mxu0 0.0
    %5499 = vmatpush1.msra.mxu0 0.0
    %5500 = vmatprep.subr.mxu0 0.0
    %5501 = vmatpush1.msra.mxu0 0.0
    %5502 = vmatprep.subr.mxu0 0.0
    %5503 = vmatpush1.msra.mxu0 0.0
    %5504 = vmatprep.subr.mxu0 0.0
    %5505 = vmatpush1.msra.mxu0 0.0
    %5506 = vmatprep.subr.mxu0 0.0
    %5507 = vmatpush1.msra.mxu0 0.0
    %5508 = vmatprep.subr.mxu0 0.0
    %5509 = vmatpush1.msra.mxu0 0.0
    %5510 = vmatprep.subr.mxu0 0.0
    %5511 = vmatpush1.msra.mxu0 0.0
    %5512 = vmatprep.subr.mxu0 0.0
    %5513 = vmatpush1.msra.mxu0 0.0
    %5514 = vmatprep.mubr.f32.mxu0 0.0
    %5515 = vmatmul.mubr.f32.gmra.mrb[0].mxu0 %v5448
    %v5516 = vpop.f32.mrb[0].mxu0
    %v5517 = vadd.f32 %v5444, %v5516
    %v5518 = vpop.f32.mrb[0].mxu0
    %5519 = vdwg.mxu0
    %5520 = vrot.lane.b32.xlu0 %v5038, 112
    %v5521 = vpop.permute.xlu0 %5520
    %5522 = vrot.lane.b32.xlu0 %v5038, 80
    %v5523 = vpop.permute.xlu0 %5522
    %v5524 = vsel %vm1317, %v5521, 0
    %v5526 = vsel %vm1317, %v5523, 0
    %5528 = vmatprep.subr.mxu0 0.0
    %5529 = vmatpush1.xpose.msra.mxu0 %v5526
    %5530 = vmatprep.subr.mxu0 0.0
    %5531 = vmatpush1.xpose.msra.mxu0 0.0
    %5532 = vmatprep.subr.mxu0 0.0
    %5533 = vmatpush1.xpose.msra.mxu0 0.0
    %5534 = vmatprep.subr.mxu0 0.0
    %5535 = vmatpush1.xpose.msra.mxu0 0.0
    %5536 = vmatprep.subr.mxu0 0.0
    %5537 = vmatpush1.xpose.msra.mxu0 0.0
    %5538 = vmatprep.subr.mxu0 0.0
    %5539 = vmatpush1.xpose.msra.mxu0 0.0
    %5540 = vmatprep.subr.mxu0 0.0
    %5541 = vmatpush1.xpose.msra.mxu0 0.0
    %5542 = vmatprep.subr.mxu0 0.0
    %5543 = vmatpush1.xpose.msra.mxu0 0.0
    %5544 = vmatprep.subr.mxu0 0.0
    %5545 = vmatpush1.xpose.msra.mxu0 0.0
    %5546 = vmatprep.subr.mxu0 0.0
    %5547 = vmatpush1.xpose.msra.mxu0 0.0
    %5548 = vmatprep.subr.mxu0 0.0
    %5549 = vmatpush1.xpose.msra.mxu0 0.0
    %5550 = vmatprep.subr.mxu0 0.0
    %5551 = vmatpush1.xpose.msra.mxu0 0.0
    %5552 = vmatprep.subr.mxu0 0.0
    %5553 = vmatpush1.xpose.msra.mxu0 0.0
    %5554 = vmatprep.subr.mxu0 0.0
    %5555 = vmatpush1.xpose.msra.mxu0 0.0
    %5556 = vmatprep.subr.mxu0 0.0
    %5557 = vmatpush1.xpose.msra.mxu0 0.0
    %5558 = vmatprep.subr.mxu0 0.0
    %5559 = vmatpush1.xpose.msra.mxu0 0.0
    %5560 = vmatprep.subr.mxu0 0.0
    %5561 = vmatpush1.xpose.msra.mxu0 0.0
    %5562 = vmatprep.subr.mxu0 0.0
    %5563 = vmatpush1.xpose.msra.mxu0 0.0
    %5564 = vmatprep.subr.mxu0 0.0
    %5565 = vmatpush1.xpose.msra.mxu0 0.0
    %5566 = vmatprep.subr.mxu0 0.0
    %5567 = vmatpush1.xpose.msra.mxu0 0.0
    %5568 = vmatprep.subr.mxu0 0.0
    %5569 = vmatpush1.xpose.msra.mxu0 0.0
    %5570 = vmatprep.subr.mxu0 0.0
    %5571 = vmatpush1.xpose.msra.mxu0 0.0
    %5572 = vmatprep.subr.mxu0 0.0
    %5573 = vmatpush1.xpose.msra.mxu0 0.0
    %5574 = vmatprep.subr.mxu0 0.0
    %5575 = vmatpush1.xpose.msra.mxu0 0.0
    %5576 = vmatprep.subr.mxu0 0.0
    %5577 = vmatpush1.xpose.msra.mxu0 0.0
    %5578 = vmatprep.subr.mxu0 0.0
    %5579 = vmatpush1.xpose.msra.mxu0 0.0
    %5580 = vmatprep.subr.mxu0 0.0
    %5581 = vmatpush1.xpose.msra.mxu0 0.0
    %5582 = vmatprep.subr.mxu0 0.0
    %5583 = vmatpush1.xpose.msra.mxu0 0.0
    %5584 = vmatprep.subr.mxu0 0.0
    %5585 = vmatpush1.xpose.msra.mxu0 0.0
    %5586 = vmatprep.subr.mxu0 0.0
    %5587 = vmatpush1.xpose.msra.mxu0 0.0
    %5588 = vmatprep.subr.mxu0 0.0
    %5589 = vmatpush1.xpose.msra.mxu0 0.0
    %5590 = vmatprep.subr.mxu0 0.0
    %5591 = vmatpush1.xpose.msra.mxu0 0.0
    %5592 = vmatprep.mubr.f32.mxu0 0.0
    %5593 = vmatmul.mubr.f32.gmra.mrb[0].mxu0 %v5524
    %v5594 = vpop.f32.mrb[0].mxu0
    %v5595 = vadd.f32 0.0, %v5594
    %v5596 = vpop.f32.mrb[0].mxu0
    %5597 = vdwg.mxu0
    %v5598 = vmul.f32 %v5595, 0.35355338
    %v5599 = vsel %vm1393, %v5598, -inf
    %5600 = vmax.xlane.f32.xlu0 %v5599
    %v5601 = vpop.xlane.xlu0 %5600
    %v5602 = vsub.f32 %v5598, %v5601
    %v5603 = vmul.f32 %v5602, 1.442695
    %v5604 = vpow.pop %v5603
    %v5605 = vsel %vm1393, %v5604, 0.0
    %5606 = vadd.xlane.f32.xlu0 %v5605
    %v5607 = vpop.xlane.xlu0 %5606
    %v5608 = vrcp.pop %v5607
    %v5609 = vmul.f32 %v5604, %v5608
    %5610 = vrot.lane.b32.xlu0 %v5038, 48
    %v5611 = vpop.permute.xlu0 %5610
    %v5613 = vsel %vm1407, %v5609, 0
    %v5615 = vsel %vm1411, %v5611, 0
    %5617 = vmatprep.subr.mxu0 0.0
    %5618 = vmatpush1.msra.mxu0 %v5615
    %5619 = vmatprep.subr.mxu0 0.0
    %5620 = vmatpush1.msra.mxu0 0.0
    %5621 = vmatprep.subr.mxu0 0.0
    %5622 = vmatpush1.msra.mxu0 0.0
    %5623 = vmatprep.subr.mxu0 0.0
    %5624 = vmatpush1.msra.mxu0 0.0
    %5625 = vmatprep.subr.mxu0 0.0
    %5626 = vmatpush1.msra.mxu0 0.0
    %5627 = vmatprep.subr.mxu0 0.0
    %5628 = vmatpush1.msra.mxu0 0.0
    %5629 = vmatprep.subr.mxu0 0.0
    %5630 = vmatpush1.msra.mxu0 0.0
    %5631 = vmatprep.subr.mxu0 0.0
    %5632 = vmatpush1.msra.mxu0 0.0
    %5633 = vmatprep.subr.mxu0 0.0
    %5634 = vmatpush1.msra.mxu0 0.0
    %5635 = vmatprep.subr.mxu0 0.0
    %5636 = vmatpush1.msra.mxu0 0.0
    %5637 = vmatprep.subr.mxu0 0.0
    %5638 = vmatpush1.msra.mxu0 0.0
    %5639 = vmatprep.subr.mxu0 0.0
    %5640 = vmatpush1.msra.mxu0 0.0
    %5641 = vmatprep.subr.mxu0 0.0
    %5642 = vmatpush1.msra.mxu0 0.0
    %5643 = vmatprep.subr.mxu0 0.0
    %5644 = vmatpush1.msra.mxu0 0.0
    %5645 = vmatprep.subr.mxu0 0.0
    %5646 = vmatpush1.msra.mxu0 0.0
    %5647 = vmatprep.subr.mxu0 0.0
    %5648 = vmatpush1.msra.mxu0 0.0
    %5649 = vmatprep.subr.mxu0 0.0
    %5650 = vmatpush1.msra.mxu0 0.0
    %5651 = vmatprep.subr.mxu0 0.0
    %5652 = vmatpush1.msra.mxu0 0.0
    %5653 = vmatprep.subr.mxu0 0.0
    %5654 = vmatpush1.msra.mxu0 0.0
    %5655 = vmatprep.subr.mxu0 0.0
    %5656 = vmatpush1.msra.mxu0 0.0
    %5657 = vmatprep.subr.mxu0 0.0
    %5658 = vmatpush1.msra.mxu0 0.0
    %5659 = vmatprep.subr.mxu0 0.0
    %5660 = vmatpush1.msra.mxu0 0.0
    %5661 = vmatprep.subr.mxu0 0.0
    %5662 = vmatpush1.msra.mxu0 0.0
    %5663 = vmatprep.subr.mxu0 0.0
    %5664 = vmatpush1.msra.mxu0 0.0
    %5665 = vmatprep.subr.mxu0 0.0
    %5666 = vmatpush1.msra.mxu0 0.0
    %5667 = vmatprep.subr.mxu0 0.0
    %5668 = vmatpush1.msra.mxu0 0.0
    %5669 = vmatprep.subr.mxu0 0.0
    %5670 = vmatpush1.msra.mxu0 0.0
    %5671 = vmatprep.subr.mxu0 0.0
    %5672 = vmatpush1.msra.mxu0 0.0
    %5673 = vmatprep.subr.mxu0 0.0
    %5674 = vmatpush1.msra.mxu0 0.0
    %5675 = vmatprep.subr.mxu0 0.0
    %5676 = vmatpush1.msra.mxu0 0.0
    %5677 = vmatprep.subr.mxu0 0.0
    %5678 = vmatpush1.msra.mxu0 0.0
    %5679 = vmatprep.subr.mxu0 0.0
    %5680 = vmatpush1.msra.mxu0 0.0
    %5681 = vmatprep.mubr.f32.mxu0 0.0
    %5682 = vmatmul.mubr.f32.gmra.mrb[0].mxu0 %v5613
    %v5683 = vpop.f32.mrb[0].mxu0
    %v5684 = vadd.f32 0.0, %v5683
    %v5685 = vpop.f32.mrb[0].mxu0
    %5686 = vdwg.mxu0
    %v5688 = vsel %vm1317, %v5684, 0
    %5690 = vmatprep.subr.mxu0 0.0
    %5691 = vmatpush1.msra.mxu0 %v1009
    %5692 = vmatprep.subr.mxu0 0.0
    %5693 = vmatpush1.msra.mxu0 0.0
    %5694 = vmatprep.subr.mxu0 0.0
    %5695 = vmatpush1.msra.mxu0 0.0
    %5696 = vmatprep.subr.mxu0 0.0
    %5697 = vmatpush1.msra.mxu0 0.0
    %5698 = vmatprep.subr.mxu0 0.0
    %5699 = vmatpush1.msra.mxu0 0.0
    %5700 = vmatprep.subr.mxu0 0.0
    %5701 = vmatpush1.msra.mxu0 0.0
    %5702 = vmatprep.subr.mxu0 0.0
    %5703 = vmatpush1.msra.mxu0 0.0
    %5704 = vmatprep.subr.mxu0 0.0
    %5705 = vmatpush1.msra.mxu0 0.0
    %5706 = vmatprep.subr.mxu0 0.0
    %5707 = vmatpush1.msra.mxu0 0.0
    %5708 = vmatprep.subr.mxu0 0.0
    %5709 = vmatpush1.msra.mxu0 0.0
    %5710 = vmatprep.subr.mxu0 0.0
    %5711 = vmatpush1.msra.mxu0 0.0
    %5712 = vmatprep.subr.mxu0 0.0
    %5713 = vmatpush1.msra.mxu0 0.0
    %5714 = vmatprep.subr.mxu0 0.0
    %5715 = vmatpush1.msra.mxu0 0.0
    %5716 = vmatprep.subr.mxu0 0.0
    %5717 = vmatpush1.msra.mxu0 0.0
    %5718 = vmatprep.subr.mxu0 0.0
    %5719 = vmatpush1.msra.mxu0 0.0
    %5720 = vmatprep.subr.mxu0 0.0
    %5721 = vmatpush1.msra.mxu0 0.0
    %5722 = vmatprep.subr.mxu0 0.0
    %5723 = vmatpush1.msra.mxu0 0.0
    %5724 = vmatprep.subr.mxu0 0.0
    %5725 = vmatpush1.msra.mxu0 0.0
    %5726 = vmatprep.subr.mxu0 0.0
    %5727 = vmatpush1.msra.mxu0 0.0
    %5728 = vmatprep.subr.mxu0 0.0
    %5729 = vmatpush1.msra.mxu0 0.0
    %5730 = vmatprep.subr.mxu0 0.0
    %5731 = vmatpush1.msra.mxu0 0.0
    %5732 = vmatprep.subr.mxu0 0.0
    %5733 = vmatpush1.msra.mxu0 0.0
    %5734 = vmatprep.subr.mxu0 0.0
    %5735 = vmatpush1.msra.mxu0 0.0
    %5736 = vmatprep.subr.mxu0 0.0
    %5737 = vmatpush1.msra.mxu0 0.0
    %5738 = vmatprep.subr.mxu0 0.0
    %5739 = vmatpush1.msra.mxu0 0.0
    %5740 = vmatprep.subr.mxu0 0.0
    %5741 = vmatpush1.msra.mxu0 0.0
    %5742 = vmatprep.subr.mxu0 0.0
    %5743 = vmatpush1.msra.mxu0 0.0
    %5744 = vmatprep.subr.mxu0 0.0
    %5745 = vmatpush1.msra.mxu0 0.0
    %5746 = vmatprep.subr.mxu0 0.0
    %5747 = vmatpush1.msra.mxu0 0.0
    %5748 = vmatprep.subr.mxu0 0.0
    %5749 = vmatpush1.msra.mxu0 0.0
    %5750 = vmatprep.subr.mxu0 0.0
    %5751 = vmatpush1.msra.mxu0 0.0
    %5752 = vmatprep.subr.mxu0 0.0
    %5753 = vmatpush1.msra.mxu0 0.0
    %5754 = vmatprep.mubr.f32.mxu0 0.0
    %5755 = vmatmul.mubr.f32.gmra.mrb[0].mxu0 %v5688
    %v5756 = vpop.f32.mrb[0].mxu0
    %v5757 = vadd.f32 0.0, %v5756
    %v5758 = vpop.f32.mrb[0].mxu0
    %5759 = vdwg.mxu0
    %v5760 = vadd.f32 %v5517, %v5757
    %5761 = vrot.lane.b32.xlu0 %v5038, 104
    %v5762 = vpop.permute.xlu0 %5761
    %5763 = vrot.lane.b32.xlu0 %v5038, 72
    %v5764 = vpop.permute.xlu0 %5763
    %v5765 = vsel %vm1317, %v5762, 0
    %v5767 = vsel %vm1317, %v5764, 0
    %5769 = vmatprep.subr.mxu0 0.0
    %5770 = vmatpush1.xpose.msra.mxu0 %v5767
    %5771 = vmatprep.subr.mxu0 0.0
    %5772 = vmatpush1.xpose.msra.mxu0 0.0
    %5773 = vmatprep.subr.mxu0 0.0
    %5774 = vmatpush1.xpose.msra.mxu0 0.0
    %5775 = vmatprep.subr.mxu0 0.0
    %5776 = vmatpush1.xpose.msra.mxu0 0.0
    %5777 = vmatprep.subr.mxu0 0.0
    %5778 = vmatpush1.xpose.msra.mxu0 0.0
    %5779 = vmatprep.subr.mxu0 0.0
    %5780 = vmatpush1.xpose.msra.mxu0 0.0
    %5781 = vmatprep.subr.mxu0 0.0
    %5782 = vmatpush1.xpose.msra.mxu0 0.0
    %5783 = vmatprep.subr.mxu0 0.0
    %5784 = vmatpush1.xpose.msra.mxu0 0.0
    %5785 = vmatprep.subr.mxu0 0.0
    %5786 = vmatpush1.xpose.msra.mxu0 0.0
    %5787 = vmatprep.subr.mxu0 0.0
    %5788 = vmatpush1.xpose.msra.mxu0 0.0
    %5789 = vmatprep.subr.mxu0 0.0
    %5790 = vmatpush1.xpose.msra.mxu0 0.0
    %5791 = vmatprep.subr.mxu0 0.0
    %5792 = vmatpush1.xpose.msra.mxu0 0.0
    %5793 = vmatprep.subr.mxu0 0.0
    %5794 = vmatpush1.xpose.msra.mxu0 0.0
    %5795 = vmatprep.subr.mxu0 0.0
    %5796 = vmatpush1.xpose.msra.mxu0 0.0
    %5797 = vmatprep.subr.mxu0 0.0
    %5798 = vmatpush1.xpose.msra.mxu0 0.0
    %5799 = vmatprep.subr.mxu0 0.0
    %5800 = vmatpush1.xpose.msra.mxu0 0.0
    %5801 = vmatprep.subr.mxu0 0.0
    %5802 = vmatpush1.xpose.msra.mxu0 0.0
    %5803 = vmatprep.subr.mxu0 0.0
    %5804 = vmatpush1.xpose.msra.mxu0 0.0
    %5805 = vmatprep.subr.mxu0 0.0
    %5806 = vmatpush1.xpose.msra.mxu0 0.0
    %5807 = vmatprep.subr.mxu0 0.0
    %5808 = vmatpush1.xpose.msra.mxu0 0.0
    %5809 = vmatprep.subr.mxu0 0.0
    %5810 = vmatpush1.xpose.msra.mxu0 0.0
    %5811 = vmatprep.subr.mxu0 0.0
    %5812 = vmatpush1.xpose.msra.mxu0 0.0
    %5813 = vmatprep.subr.mxu0 0.0
    %5814 = vmatpush1.xpose.msra.mxu0 0.0
    %5815 = vmatprep.subr.mxu0 0.0
    %5816 = vmatpush1.xpose.msra.mxu0 0.0
    %5817 = vmatprep.subr.mxu0 0.0
    %5818 = vmatpush1.xpose.msra.mxu0 0.0
    %5819 = vmatprep.subr.mxu0 0.0
    %5820 = vmatpush1.xpose.msra.mxu0 0.0
    %5821 = vmatprep.subr.mxu0 0.0
    %5822 = vmatpush1.xpose.msra.mxu0 0.0
    %5823 = vmatprep.subr.mxu0 0.0
    %5824 = vmatpush1.xpose.msra.mxu0 0.0
    %5825 = vmatprep.subr.mxu0 0.0
    %5826 = vmatpush1.xpose.msra.mxu0 0.0
    %5827 = vmatprep.subr.mxu0 0.0
    %5828 = vmatpush1.xpose.msra.mxu0 0.0
    %5829 = vmatprep.subr.mxu0 0.0
    %5830 = vmatpush1.xpose.msra.mxu0 0.0
    %5831 = vmatprep.subr.mxu0 0.0
    %5832 = vmatpush1.xpose.msra.mxu0 0.0
    %5833 = vmatprep.mubr.f32.mxu0 0.0
    %5834 = vmatmul.mubr.f32.gmra.mrb[0].mxu0 %v5765
    %v5835 = vpop.f32.mrb[0].mxu0
    %v5836 = vadd.f32 0.0, %v5835
    %v5837 = vpop.f32.mrb[0].mxu0
    %5838 = vdwg.mxu0
    %v5839 = vmul.f32 %v5836, 0.35355338
    %v5840 = vsel %vm1393, %v5839, -inf
    %5841 = vmax.xlane.f32.xlu0 %v5840
    %v5842 = vpop.xlane.xlu0 %5841
    %v5843 = vsub.f32 %v5839, %v5842
    %v5844 = vmul.f32 %v5843, 1.442695
    %v5845 = vpow.pop %v5844
    %v5846 = vsel %vm1393, %v5845, 0.0
    %5847 = vadd.xlane.f32.xlu0 %v5846
    %v5848 = vpop.xlane.xlu0 %5847
    %v5849 = vrcp.pop %v5848
    %v5850 = vmul.f32 %v5845, %v5849
    %5851 = vrot.lane.b32.xlu0 %v5038, 40
    %v5852 = vpop.permute.xlu0 %5851
    %v5854 = vsel %vm1407, %v5850, 0
    %v5856 = vsel %vm1411, %v5852, 0
    %5858 = vmatprep.subr.mxu0 0.0
    %5859 = vmatpush1.msra.mxu0 %v5856
    %5860 = vmatprep.subr.mxu0 0.0
    %5861 = vmatpush1.msra.mxu0 0.0
    %5862 = vmatprep.subr.mxu0 0.0
    %5863 = vmatpush1.msra.mxu0 0.0
    %5864 = vmatprep.subr.mxu0 0.0
    %5865 = vmatpush1.msra.mxu0 0.0
    %5866 = vmatprep.subr.mxu0 0.0
    %5867 = vmatpush1.msra.mxu0 0.0
    %5868 = vmatprep.subr.mxu0 0.0
    %5869 = vmatpush1.msra.mxu0 0.0
    %5870 = vmatprep.subr.mxu0 0.0
    %5871 = vmatpush1.msra.mxu0 0.0
    %5872 = vmatprep.subr.mxu0 0.0
    %5873 = vmatpush1.msra.mxu0 0.0
    %5874 = vmatprep.subr.mxu0 0.0
    %5875 = vmatpush1.msra.mxu0 0.0
    %5876 = vmatprep.subr.mxu0 0.0
    %5877 = vmatpush1.msra.mxu0 0.0
    %5878 = vmatprep.subr.mxu0 0.0
    %5879 = vmatpush1.msra.mxu0 0.0
    %5880 = vmatprep.subr.mxu0 0.0
    %5881 = vmatpush1.msra.mxu0 0.0
    %5882 = vmatprep.subr.mxu0 0.0
    %5883 = vmatpush1.msra.mxu0 0.0
    %5884 = vmatprep.subr.mxu0 0.0
    %5885 = vmatpush1.msra.mxu0 0.0
    %5886 = vmatprep.subr.mxu0 0.0
    %5887 = vmatpush1.msra.mxu0 0.0
    %5888 = vmatprep.subr.mxu0 0.0
    %5889 = vmatpush1.msra.mxu0 0.0
    %5890 = vmatprep.subr.mxu0 0.0
    %5891 = vmatpush1.msra.mxu0 0.0
    %5892 = vmatprep.subr.mxu0 0.0
    %5893 = vmatpush1.msra.mxu0 0.0
    %5894 = vmatprep.subr.mxu0 0.0
    %5895 = vmatpush1.msra.mxu0 0.0
    %5896 = vmatprep.subr.mxu0 0.0
    %5897 = vmatpush1.msra.mxu0 0.0
    %5898 = vmatprep.subr.mxu0 0.0
    %5899 = vmatpush1.msra.mxu0 0.0
    %5900 = vmatprep.subr.mxu0 0.0
    %5901 = vmatpush1.msra.mxu0 0.0
    %5902 = vmatprep.subr.mxu0 0.0
    %5903 = vmatpush1.msra.mxu0 0.0
    %5904 = vmatprep.subr.mxu0 0.0
    %5905 = vmatpush1.msra.mxu0 0.0
    %5906 = vmatprep.subr.mxu0 0.0
    %5907 = vmatpush1.msra.mxu0 0.0
    %5908 = vmatprep.subr.mxu0 0.0
    %5909 = vmatpush1.msra.mxu0 0.0
    %5910 = vmatprep.subr.mxu0 0.0
    %5911 = vmatpush1.msra.mxu0 0.0
    %5912 = vmatprep.subr.mxu0 0.0
    %5913 = vmatpush1.msra.mxu0 0.0
    %5914 = vmatprep.subr.mxu0 0.0
    %5915 = vmatpush1.msra.mxu0 0.0
    %5916 = vmatprep.subr.mxu0 0.0
    %5917 = vmatpush1.msra.mxu0 0.0
    %5918 = vmatprep.subr.mxu0 0.0
    %5919 = vmatpush1.msra.mxu0 0.0
    %5920 = vmatprep.subr.mxu0 0.0
    %5921 = vmatpush1.msra.mxu0 0.0
    %5922 = vmatprep.mubr.f32.mxu0 0.0
    %5923 = vmatmul.mubr.f32.gmra.mrb[0].mxu0 %v5854
    %v5924 = vpop.f32.mrb[0].mxu0
    %v5925 = vadd.f32 0.0, %v5924
    %v5926 = vpop.f32.mrb[0].mxu0
    %5927 = vdwg.mxu0
    %v5929 = vsel %vm1317, %v5925, 0
    %5931 = vmatprep.subr.mxu0 0.0
    %5932 = vmatpush1.msra.mxu0 %v1010
    %5933 = vmatprep.subr.mxu0 0.0
    %5934 = vmatpush1.msra.mxu0 0.0
    %5935 = vmatprep.subr.mxu0 0.0
    %5936 = vmatpush1.msra.mxu0 0.0
    %5937 = vmatprep.subr.mxu0 0.0
    %5938 = vmatpush1.msra.mxu0 0.0
    %5939 = vmatprep.subr.mxu0 0.0
    %5940 = vmatpush1.msra.mxu0 0.0
    %5941 = vmatprep.subr.mxu0 0.0
    %5942 = vmatpush1.msra.mxu0 0.0
    %5943 = vmatprep.subr.mxu0 0.0
    %5944 = vmatpush1.msra.mxu0 0.0
    %5945 = vmatprep.subr.mxu0 0.0
    %5946 = vmatpush1.msra.mxu0 0.0
    %5947 = vmatprep.subr.mxu0 0.0
    %5948 = vmatpush1.msra.mxu0 0.0
    %5949 = vmatprep.subr.mxu0 0.0
    %5950 = vmatpush1.msra.mxu0 0.0
    %5951 = vmatprep.subr.mxu0 0.0
    %5952 = vmatpush1.msra.mxu0 0.0
    %5953 = vmatprep.subr.mxu0 0.0
    %5954 = vmatpush1.msra.mxu0 0.0
    %5955 = vmatprep.subr.mxu0 0.0
    %5956 = vmatpush1.msra.mxu0 0.0
    %5957 = vmatprep.subr.mxu0 0.0
    %5958 = vmatpush1.msra.mxu0 0.0
    %5959 = vmatprep.subr.mxu0 0.0
    %5960 = vmatpush1.msra.mxu0 0.0
    %5961 = vmatprep.subr.mxu0 0.0
    %5962 = vmatpush1.msra.mxu0 0.0
    %5963 = vmatprep.subr.mxu0 0.0
    %5964 = vmatpush1.msra.mxu0 0.0
    %5965 = vmatprep.subr.mxu0 0.0
    %5966 = vmatpush1.msra.mxu0 0.0
    %5967 = vmatprep.subr.mxu0 0.0
    %5968 = vmatpush1.msra.mxu0 0.0
    %5969 = vmatprep.subr.mxu0 0.0
    %5970 = vmatpush1.msra.mxu0 0.0
    %5971 = vmatprep.subr.mxu0 0.0
    %5972 = vmatpush1.msra.mxu0 0.0
    %5973 = vmatprep.subr.mxu0 0.0
    %5974 = vmatpush1.msra.mxu0 0.0
    %5975 = vmatprep.subr.mxu0 0.0
    %5976 = vmatpush1.msra.mxu0 0.0
    %5977 = vmatprep.subr.mxu0 0.0
    %5978 = vmatpush1.msra.mxu0 0.0
    %5979 = vmatprep.subr.mxu0 0.0
    %5980 = vmatpush1.msra.mxu0 0.0
    %5981 = vmatprep.subr.mxu0 0.0
    %5982 = vmatpush1.msra.mxu0 0.0
    %5983 = vmatprep.subr.mxu0 0.0
    %5984 = vmatpush1.msra.mxu0 0.0
    %5985 = vmatprep.subr.mxu0 0.0
    %5986 = vmatpush1.msra.mxu0 0.0
    %5987 = vmatprep.subr.mxu0 0.0
    %5988 = vmatpush1.msra.mxu0 0.0
    %5989 = vmatprep.subr.mxu0 0.0
    %5990 = vmatpush1.msra.mxu0 0.0
    %5991 = vmatprep.subr.mxu0 0.0
    %5992 = vmatpush1.msra.mxu0 0.0
    %5993 = vmatprep.subr.mxu0 0.0
    %5994 = vmatpush1.msra.mxu0 0.0
    %5995 = vmatprep.mubr.f32.mxu0 0.0
    %5996 = vmatmul.mubr.f32.gmra.mrb[0].mxu0 %v5929
    %v5997 = vpop.f32.mrb[0].mxu0
    %v5998 = vadd.f32 0.0, %v5997
    %v5999 = vpop.f32.mrb[0].mxu0
    %6000 = vdwg.mxu0
    %v6001 = vadd.f32 %v5760, %v5998
    %v6002 = vadd.f32 %v3689, %v6001
    %v6003 = vadd.f32 %v6002, %v4762
    %v6004 = vsel %vm1205, %v6003, 0.0
    %6005 = vadd.xlane.f32.xlu0 %v6004
    %v6006 = vpop.xlane.xlu0 %6005
    %v6007 = vmul.f32 %v6006, %v1209
    %v6008 = vsub.f32 %v6003, %v6007
    %v6009 = vmul.f32 %v6008, %v6008
    %v6010 = vsel %vm1205, %v6009, 0.0
    %6011 = vadd.xlane.f32.xlu0 %v6010
    %v6012 = vpop.xlane.xlu0 %6011
    %v6013 = vmul.f32 %v6012, %v1209
    %v6014 = vadd.f32 %v6013, 1e-06
    %v6015 = vrsqrt.pop %v6014
    %v6016 = vmul.f32 %v6008, %v6015
    %v6017 = vmul.f32 %v6016, %v4782
    %v6018 = vadd.f32 %v6017, %v4789
    %v6020 = vsel %vm1240, %v6018, 0
    %6022 = vmatprep.subr.mxu0 0.0
    %6023 = vmatpush1.msra.mxu0 %v986
    %6024 = vmatprep.subr.mxu0 0.0
    %6025 = vmatpush1.msra.mxu0 %v987
    %6026 = vmatprep.subr.mxu0 0.0
    %6027 = vmatpush1.msra.mxu0 %v988
    %6028 = vmatprep.subr.mxu0 0.0
    %6029 = vmatpush1.msra.mxu0 %v989
    %6030 = vmatprep.subr.mxu0 0.0
    %6031 = vmatpush1.msra.mxu0 0.0
    %6032 = vmatprep.subr.mxu0 0.0
    %6033 = vmatpush1.msra.mxu0 0.0
    %6034 = vmatprep.subr.mxu0 0.0
    %6035 = vmatpush1.msra.mxu0 0.0
    %6036 = vmatprep.subr.mxu0 0.0
    %6037 = vmatpush1.msra.mxu0 0.0
    %6038 = vmatprep.subr.mxu0 0.0
    %6039 = vmatpush1.msra.mxu0 0.0
    %6040 = vmatprep.subr.mxu0 0.0
    %6041 = vmatpush1.msra.mxu0 0.0
    %6042 = vmatprep.subr.mxu0 0.0
    %6043 = vmatpush1.msra.mxu0 0.0
    %6044 = vmatprep.subr.mxu0 0.0
    %6045 = vmatpush1.msra.mxu0 0.0
    %6046 = vmatprep.subr.mxu0 0.0
    %6047 = vmatpush1.msra.mxu0 0.0
    %6048 = vmatprep.subr.mxu0 0.0
    %6049 = vmatpush1.msra.mxu0 0.0
    %6050 = vmatprep.subr.mxu0 0.0
    %6051 = vmatpush1.msra.mxu0 0.0
    %6052 = vmatprep.subr.mxu0 0.0
    %6053 = vmatpush1.msra.mxu0 0.0
    %6054 = vmatprep.subr.mxu0 0.0
    %6055 = vmatpush1.msra.mxu0 0.0
    %6056 = vmatprep.subr.mxu0 0.0
    %6057 = vmatpush1.msra.mxu0 0.0
    %6058 = vmatprep.subr.mxu0 0.0
    %6059 = vmatpush1.msra.mxu0 0.0
    %6060 = vmatprep.subr.mxu0 0.0
    %6061 = vmatpush1.msra.mxu0 0.0
    %6062 = vmatprep.subr.mxu0 0.0
    %6063 = vmatpush1.msra.mxu0 0.0
    %6064 = vmatprep.subr.mxu0 0.0
    %6065 = vmatpush1.msra.mxu0 0.0
    %6066 = vmatprep.subr.mxu0 0.0
    %6067 = vmatpush1.msra.mxu0 0.0
    %6068 = vmatprep.subr.mxu0 0.0
    %6069 = vmatpush1.msra.mxu0 0.0
    %6070 = vmatprep.subr.mxu0 0.0
    %6071 = vmatpush1.msra.mxu0 0.0
    %6072 = vmatprep.subr.mxu0 0.0
    %6073 = vmatpush1.msra.mxu0 0.0
    %6074 = vmatprep.subr.mxu0 0.0
    %6075 = vmatpush1.msra.mxu0 0.0
    %6076 = vmatprep.subr.mxu0 0.0
    %6077 = vmatpush1.msra.mxu0 0.0
    %6078 = vmatprep.subr.mxu0 0.0
    %6079 = vmatpush1.msra.mxu0 0.0
    %6080 = vmatprep.subr.mxu0 0.0
    %6081 = vmatpush1.msra.mxu0 0.0
    %6082 = vmatprep.subr.mxu0 0.0
    %6083 = vmatpush1.msra.mxu0 0.0
    %6084 = vmatprep.subr.mxu0 0.0
    %6085 = vmatpush1.msra.mxu0 0.0
    %6086 = vmatprep.mubr.f32.mxu0 0.0
    %6087 = vmatmul.mubr.f32.gmra.mrb[0].mxu0 %v6020
    %v6088 = vpop.f32.mrb[0].mxu0
    %v6089 = vadd.f32 %v4796, %v6088
    %v6090 = vpop.f32.mrb[0].mxu0
    %6091 = vdwg.mxu0
    %v6092 = vmul.f32 %v6089, 0.5
    %v6093 = vmul.f32 %v6089, 0.70710677
    %v6094 = verf.f32.pop %v6093
    %v6095 = vadd.f32 %v6094, 1.0
    %v6096 = vmul.f32 %v6092, %v6095
    %6097 = vmatprep.subr.mxu0 0.0
    %6098 = vmatpush1.msra.mxu0 %v991
    %6099 = vmatprep.subr.mxu0 0.0
    %6100 = vmatpush1.msra.mxu0 %v992
    %6101 = vmatprep.subr.mxu0 0.0
    %6102 = vmatpush1.msra.mxu0 %v993
    %6103 = vmatprep.subr.mxu0 0.0
    %6104 = vmatpush1.msra.mxu0 %v994
    %6105 = vmatprep.subr.mxu0 0.0
    %6106 = vmatpush1.msra.mxu0 %v995
    %6107 = vmatprep.subr.mxu0 0.0
    %6108 = vmatpush1.msra.mxu0 %v996
    %6109 = vmatprep.subr.mxu0 0.0
    %6110 = vmatpush1.msra.mxu0 %v997
    %6111 = vmatprep.subr.mxu0 0.0
    %6112 = vmatpush1.msra.mxu0 %v998
    %6113 = vmatprep.subr.mxu0 0.0
    %6114 = vmatpush1.msra.mxu0 %v999
    %6115 = vmatprep.subr.mxu0 0.0
    %6116 = vmatpush1.msra.mxu0 %v1000
    %6117 = vmatprep.subr.mxu0 0.0
    %6118 = vmatpush1.msra.mxu0 %v1001
    %6119 = vmatprep.subr.mxu0 0.0
    %6120 = vmatpush1.msra.mxu0 %v1002
    %6121 = vmatprep.subr.mxu0 0.0
    %6122 = vmatpush1.msra.mxu0 %v1003
    %6123 = vmatprep.subr.mxu0 0.0
    %6124 = vmatpush1.msra.mxu0 %v1004
    %6125 = vmatprep.subr.mxu0 0.0
    %6126 = vmatpush1.msra.mxu0 %v1005
    %6127 = vmatprep.subr.mxu0 0.0
    %6128 = vmatpush1.msra.mxu0 %v1006
    %6129 = vmatprep.subr.mxu0 0.0
    %6130 = vmatpush1.msra.mxu0 0.0
    %6131 = vmatprep.subr.mxu0 0.0
    %6132 = vmatpush1.msra.mxu0 0.0
    %6133 = vmatprep.subr.mxu0 0.0
    %6134 = vmatpush1.msra.mxu0 0.0
    %6135 = vmatprep.subr.mxu0 0.0
    %6136 = vmatpush1.msra.mxu0 0.0
    %6137 = vmatprep.subr.mxu0 0.0
    %6138 = vmatpush1.msra.mxu0 0.0
    %6139 = vmatprep.subr.mxu0 0.0
    %6140 = vmatpush1.msra.mxu0 0.0
    %6141 = vmatprep.subr.mxu0 0.0
    %6142 = vmatpush1.msra.mxu0 0.0
    %6143 = vmatprep.subr.mxu0 0.0
    %6144 = vmatpush1.msra.mxu0 0.0
    %6145 = vmatprep.subr.mxu0 0.0
    %6146 = vmatpush1.msra.mxu0 0.0
    %6147 = vmatprep.subr.mxu0 0.0
    %6148 = vmatpush1.msra.mxu0 0.0
    %6149 = vmatprep.subr.mxu0 0.0
    %6150 = vmatpush1.msra.mxu0 0.0
    %6151 = vmatprep.subr.mxu0 0.0
    %6152 = vmatpush1.msra.mxu0 0.0
    %6153 = vmatprep.subr.mxu0 0.0
    %6154 = vmatpush1.msra.mxu0 0.0
    %6155 = vmatprep.subr.mxu0 0.0
    %6156 = vmatpush1.msra.mxu0 0.0
    %6157 = vmatprep.subr.mxu0 0.0
    %6158 = vmatpush1.msra.mxu0 0.0
    %6159 = vmatprep.subr.mxu0 0.0
    %6160 = vmatpush1.msra.mxu0 0.0
    %6161 = vmatprep.mubr.f32.mxu0 0.0
    %6162 = vmatmul.mubr.f32.gmra.mrb[0].mxu0 %v6096
    %v6163 = vpop.f32.mrb[0].mxu0
    %v6164 = vadd.f32 %v4880, %v6163
    %v6165 = vpop.f32.mrb[0].mxu0
    %6166 = vdwg.mxu0
    %v6167 = vadd.f32 %v6003, %v6164
    %v6168 = vsel %vm1205, %v4952, 0.0
    %6169 = vadd.xlane.f32.xlu0 %v6168
    %v6170 = vpop.xlane.xlu0 %6169
    %v6171 = vmul.f32 %v6170, %v1209
    %v6172 = vsub.f32 %v4952, %v6171
    %v6173 = vmul.f32 %v6172, %v6172
    %v6174 = vsel %vm1205, %v6173, 0.0
    %6175 = vadd.xlane.f32.xlu0 %v6174
    %v6176 = vpop.xlane.xlu0 %6175
    %v6177 = vmul.f32 %v6176, %v1209
    %v6178 = vadd.f32 %v6177, 1e-06
    %v6179 = vrsqrt.pop %v6178
    %v6180 = vmul.f32 %v6172, %v6179
    %v6182 = vlaneseq
    %v6183 = vshrl.u32 %v6182, 7
    %v6184 = vsub.s32 0, %v6183
    %v6185 = vrot.slane %v1016, %v6184
    %v6187 = vmul.f32 %v6180, %v6185
    %v6189 = vlaneseq
    %v6190 = vshrl.u32 %v6189, 7
    %v6191 = vsub.s32 0, %v6190
    %v6192 = vrot.slane %v1015, %v6191
    %v6194 = vadd.f32 %v6187, %v6192
    %v6195 = vld [vmem:[%s5] sm:$0x1]
    %vm6196 = vcmask 31744
    %v6198 = vsel %vm6196, %v6195, 0
    %vm6200 = vcmask 1043456
    %v6202 = vsel %vm6200, %v1018, 0
    %6204 = vmatprep.subr.mxu0 0.0
    %6205 = vmatpush1.msra.mxu0 %v6202
    %6206 = vmatprep.subr.mxu0 0.0
    %6207 = vmatpush1.msra.mxu0 0.0
    %6208 = vmatprep.subr.mxu0 0.0
    %6209 = vmatpush1.msra.mxu0 0.0
    %6210 = vmatprep.subr.mxu0 0.0
    %6211 = vmatpush1.msra.mxu0 0.0
    %6212 = vmatprep.subr.mxu0 0.0
    %6213 = vmatpush1.msra.mxu0 0.0
    %6214 = vmatprep.subr.mxu0 0.0
    %6215 = vmatpush1.msra.mxu0 0.0
    %6216 = vmatprep.subr.mxu0 0.0
    %6217 = vmatpush1.msra.mxu0 0.0
    %6218 = vmatprep.subr.mxu0 0.0
    %6219 = vmatpush1.msra.mxu0 0.0
    %6220 = vmatprep.subr.mxu0 0.0
    %6221 = vmatpush1.msra.mxu0 0.0
    %6222 = vmatprep.subr.mxu0 0.0
    %6223 = vmatpush1.msra.mxu0 0.0
    %6224 = vmatprep.subr.mxu0 0.0
    %6225 = vmatpush1.msra.mxu0 0.0
    %6226 = vmatprep.subr.mxu0 0.0
    %6227 = vmatpush1.msra.mxu0 0.0
    %6228 = vmatprep.subr.mxu0 0.0
    %6229 = vmatpush1.msra.mxu0 0.0
    %6230 = vmatprep.subr.mxu0 0.0
    %6231 = vmatpush1.msra.mxu0 0.0
    %6232 = vmatprep.subr.mxu0 0.0
    %6233 = vmatpush1.msra.mxu0 0.0
    %6234 = vmatprep.subr.mxu0 0.0
    %6235 = vmatpush1.msra.mxu0 0.0
    %6236 = vmatprep.subr.mxu0 0.0
    %6237 = vmatpush1.msra.mxu0 0.0
    %6238 = vmatprep.subr.mxu0 0.0
    %6239 = vmatpush1.msra.mxu0 0.0
    %6240 = vmatprep.subr.mxu0 0.0
    %6241 = vmatpush1.msra.mxu0 0.0
    %6242 = vmatprep.subr.mxu0 0.0
    %6243 = vmatpush1.msra.mxu0 0.0
    %6244 = vmatprep.subr.mxu0 0.0
    %6245 = vmatpush1.msra.mxu0 0.0
    %6246 = vmatprep.subr.mxu0 0.0
    %6247 = vmatpush1.msra.mxu0 0.0
    %6248 = vmatprep.subr.mxu0 0.0
    %6249 = vmatpush1.msra.mxu0 0.0
    %6250 = vmatprep.subr.mxu0 0.0
    %6251 = vmatpush1.msra.mxu0 0.0
    %6252 = vmatprep.subr.mxu0 0.0
    %6253 = vmatpush1.msra.mxu0 0.0
    %6254 = vmatprep.subr.mxu0 0.0
    %6255 = vmatpush1.msra.mxu0 0.0
    %6256 = vmatprep.subr.mxu0 0.0
    %6257 = vmatpush1.msra.mxu0 0.0
    %6258 = vmatprep.subr.mxu0 0.0
    %6259 = vmatpush1.msra.mxu0 0.0
    %6260 = vmatprep.subr.mxu0 0.0
    %6261 = vmatpush1.msra.mxu0 0.0
    %6262 = vmatprep.subr.mxu0 0.0
    %6263 = vmatpush1.msra.mxu0 0.0
    %6264 = vmatprep.subr.mxu0 0.0
    %6265 = vmatpush1.msra.mxu0 0.0
    %6266 = vmatprep.subr.mxu0 0.0
    %6267 = vmatpush1.msra.mxu0 0.0
    %6268 = vmatprep.mubr.f32.mxu0 0.0
    %6269 = vmatmul.mubr.f32.gmra.mrb[0].mxu0 %v6198
    %v6270 = vpop.f32.mrb[0].mxu0
    %v6271 = vadd.f32 %v1017, %v6270
    %v6272 = vpop.f32.mrb[0].mxu0
    %6273 = vdwg.mxu0
    %v6274 = vmax.f32 %v6271, 0.0
    %v6276 = vsel %vm1055, %v6274, 0
    %6278 = vmatprep.subr.mxu0 0.0
    %6279 = vmatpush1.msra.mxu0 %v1020
    %6280 = vmatprep.subr.mxu0 0.0
    %6281 = vmatpush1.msra.mxu0 %v1021
    %6282 = vmatprep.subr.mxu0 0.0
    %6283 = vmatpush1.msra.mxu0 %v1022
    %6284 = vmatprep.subr.mxu0 0.0
    %6285 = vmatpush1.msra.mxu0 %v1023
    %6286 = vmatprep.subr.mxu0 0.0
    %6287 = vmatpush1.msra.mxu0 %v1024
    %6288 = vmatprep.subr.mxu0 0.0
    %6289 = vmatpush1.msra.mxu0 %v1025
    %6290 = vmatprep.subr.mxu0 0.0
    %6291 = vmatpush1.msra.mxu0 %v1026
    %6292 = vmatprep.subr.mxu0 0.0
    %6293 = vmatpush1.msra.mxu0 %v1027
    %6294 = vmatprep.subr.mxu0 0.0
    %6295 = vmatpush1.msra.mxu0 0.0
    %6296 = vmatprep.subr.mxu0 0.0
    %6297 = vmatpush1.msra.mxu0 0.0
    %6298 = vmatprep.subr.mxu0 0.0
    %6299 = vmatpush1.msra.mxu0 0.0
    %6300 = vmatprep.subr.mxu0 0.0
    %6301 = vmatpush1.msra.mxu0 0.0
    %6302 = vmatprep.subr.mxu0 0.0
    %6303 = vmatpush1.msra.mxu0 0.0
    %6304 = vmatprep.subr.mxu0 0.0
    %6305 = vmatpush1.msra.mxu0 0.0
    %6306 = vmatprep.subr.mxu0 0.0
    %6307 = vmatpush1.msra.mxu0 0.0
    %6308 = vmatprep.subr.mxu0 0.0
    %6309 = vmatpush1.msra.mxu0 0.0
    %6310 = vmatprep.subr.mxu0 0.0
    %6311 = vmatpush1.msra.mxu0 0.0
    %6312 = vmatprep.subr.mxu0 0.0
    %6313 = vmatpush1.msra.mxu0 0.0
    %6314 = vmatprep.subr.mxu0 0.0
    %6315 = vmatpush1.msra.mxu0 0.0
    %6316 = vmatprep.subr.mxu0 0.0
    %6317 = vmatpush1.msra.mxu0 0.0
    %6318 = vmatprep.subr.mxu0 0.0
    %6319 = vmatpush1.msra.mxu0 0.0
    %6320 = vmatprep.subr.mxu0 0.0
    %6321 = vmatpush1.msra.mxu0 0.0
    %6322 = vmatprep.subr.mxu0 0.0
    %6323 = vmatpush1.msra.mxu0 0.0
    %6324 = vmatprep.subr.mxu0 0.0
    %6325 = vmatpush1.msra.mxu0 0.0
    %6326 = vmatprep.subr.mxu0 0.0
    %6327 = vmatpush1.msra.mxu0 0.0
    %6328 = vmatprep.subr.mxu0 0.0
    %6329 = vmatpush1.msra.mxu0 0.0
    %6330 = vmatprep.subr.mxu0 0.0
    %6331 = vmatpush1.msra.mxu0 0.0
    %6332 = vmatprep.subr.mxu0 0.0
    %6333 = vmatpush1.msra.mxu0 0.0
    %6334 = vmatprep.subr.mxu0 0.0
    %6335 = vmatpush1.msra.mxu0 0.0
    %6336 = vmatprep.subr.mxu0 0.0
    %6337 = vmatpush1.msra.mxu0 0.0
    %6338 = vmatprep.subr.mxu0 0.0
    %6339 = vmatpush1.msra.mxu0 0.0
    %6340 = vmatprep.subr.mxu0 0.0
    %6341 = vmatpush1.msra.mxu0 0.0
    %6342 = vmatprep.mubr.f32.mxu0 0.0
    %6343 = vmatmul.mubr.f32.gmra.mrb[0].mxu0 %v6276
    %v6344 = vpop.f32.mrb[0].mxu0
    %v6345 = vadd.f32 %v1019, %v6344
    %v6346 = vpop.f32.mrb[0].mxu0
    %6347 = vdwg.mxu0
    %v6348 = vmax.f32 %v6345, 0.0
    %6349 = vmatprep.subr.mxu0 %v912
    %6350 = vmatpush1.msra.mxu0 %v911
    %6351 = vmatprep.subr.mxu0 %v914
    %6352 = vmatpush1.msra.mxu0 %v913
    %6353 = vmatprep.subr.mxu0 %v916
    %6354 = vmatpush1.msra.mxu0 %v915
    %6355 = vmatprep.subr.mxu0 %v918
    %6356 = vmatpush1.msra.mxu0 %v917
    %6357 = vmatprep.subr.mxu0 %v920
    %6358 = vmatpush1.msra.mxu0 %v919
    %6359 = vmatprep.subr.mxu0 %v922
    %6360 = vmatpush1.msra.mxu0 %v921
    %6361 = vmatprep.subr.mxu0 %v924
    %6362 = vmatpush1.msra.mxu0 %v923
    %6363 = vmatprep.subr.mxu0 %v926
    %6364 = vmatpush1.msra.mxu0 %v925
    %6365 = vmatprep.subr.mxu0 %v928
    %6366 = vmatpush1.msra.mxu0 %v927
    %6367 = vmatprep.subr.mxu0 %v930
    %6368 = vmatpush1.msra.mxu0 %v929
    %6369 = vmatprep.subr.mxu0 %v932
    %6370 = vmatpush1.msra.mxu0 %v931
    %6371 = vmatprep.subr.mxu0 %v934
    %6372 = vmatpush1.msra.mxu0 %v933
    %6373 = vmatprep.subr.mxu0 %v936
    %6374 = vmatpush1.msra.mxu0 %v935
    %6375 = vmatprep.subr.mxu0 %v938
    %6376 = vmatpush1.msra.mxu0 %v937
    %6377 = vmatprep.subr.mxu0 %v940
    %6378 = vmatpush1.msra.mxu0 %v939
    %6379 = vmatprep.subr.mxu0 %v942
    %6380 = vmatpush1.msra.mxu0 %v941
    %6381 = vmatprep.subr.mxu0 0.0
    %6382 = vmatpush1.msra.mxu0 0.0
    %6383 = vmatprep.subr.mxu0 0.0
    %6384 = vmatpush1.msra.mxu0 0.0
    %6385 = vmatprep.subr.mxu0 0.0
    %6386 = vmatpush1.msra.mxu0 0.0
    %6387 = vmatprep.subr.mxu0 0.0
    %6388 = vmatpush1.msra.mxu0 0.0
    %6389 = vmatprep.subr.mxu0 0.0
    %6390 = vmatpush1.msra.mxu0 0.0
    %6391 = vmatprep.subr.mxu0 0.0
    %6392 = vmatpush1.msra.mxu0 0.0
    %6393 = vmatprep.subr.mxu0 0.0
    %6394 = vmatpush1.msra.mxu0 0.0
    %6395 = vmatprep.subr.mxu0 0.0
    %6396 = vmatpush1.msra.mxu0 0.0
    %6397 = vmatprep.subr.mxu0 0.0
    %6398 = vmatpush1.msra.mxu0 0.0
    %6399 = vmatprep.subr.mxu0 0.0
    %6400 = vmatpush1.msra.mxu0 0.0
    %6401 = vmatprep.subr.mxu0 0.0
    %6402 = vmatpush1.msra.mxu0 0.0
    %6403 = vmatprep.subr.mxu0 0.0
    %6404 = vmatpush1.msra.mxu0 0.0
    %6405 = vmatprep.subr.mxu0 0.0
    %6406 = vmatpush1.msra.mxu0 0.0
    %6407 = vmatprep.subr.mxu0 0.0
    %6408 = vmatpush1.msra.mxu0 0.0
    %6409 = vmatprep.subr.mxu0 0.0
    %6410 = vmatpush1.msra.mxu0 0.0
    %6411 = vmatprep.subr.mxu0 0.0
    %6412 = vmatpush1.msra.mxu0 0.0
    %6413 = vmatprep.mubr.f32.mxu0 0.0
    %6414 = vmatmul.mubr.f32.gmra.mrb[0].mxu0 %v6348
    %v6415 = vpop.f32.mrb[0].mxu0
    %v6416 = vadd.f32 0.0, %v6415
    %v6417 = vpop.f32.mrb[0].mxu0
    %v6418 = vadd.f32 0.0, %v6417
    %6419 = vdwg.mxu0
    %v6421 = vsel %vm1240, %v6194, 0
    %6423 = vmatprep.subr.mxu0 %v904
    %6424 = vmatpush1.msra.mxu0 %v903
    %6425 = vmatprep.subr.mxu0 %v906
    %6426 = vmatpush1.msra.mxu0 %v905
    %6427 = vmatprep.subr.mxu0 %v908
    %6428 = vmatpush1.msra.mxu0 %v907
    %6429 = vmatprep.subr.mxu0 %v910
    %6430 = vmatpush1.msra.mxu0 %v909
    %6431 = vmatprep.subr.mxu0 0.0
    %6432 = vmatpush1.msra.mxu0 0.0
    %6433 = vmatprep.subr.mxu0 0.0
    %6434 = vmatpush1.msra.mxu0 0.0
    %6435 = vmatprep.subr.mxu0 0.0
    %6436 = vmatpush1.msra.mxu0 0.0
    %6437 = vmatprep.subr.mxu0 0.0
    %6438 = vmatpush1.msra.mxu0 0.0
    %6439 = vmatprep.subr.mxu0 0.0
    %6440 = vmatpush1.msra.mxu0 0.0
    %6441 = vmatprep.subr.mxu0 0.0
    %6442 = vmatpush1.msra.mxu0 0.0
    %6443 = vmatprep.subr.mxu0 0.0
    %6444 = vmatpush1.msra.mxu0 0.0
    %6445 = vmatprep.subr.mxu0 0.0
    %6446 = vmatpush1.msra.mxu0 0.0
    %6447 = vmatprep.subr.mxu0 0.0
    %6448 = vmatpush1.msra.mxu0 0.0
    %6449 = vmatprep.subr.mxu0 0.0
    %6450 = vmatpush1.msra.mxu0 0.0
    %6451 = vmatprep.subr.mxu0 0.0
    %6452 = vmatpush1.msra.mxu0 0.0
    %6453 = vmatprep.subr.mxu0 0.0
    %6454 = vmatpush1.msra.mxu0 0.0
    %6455 = vmatprep.subr.mxu0 0.0
    %6456 = vmatpush1.msra.mxu0 0.0
    %6457 = vmatprep.subr.mxu0 0.0
    %6458 = vmatpush1.msra.mxu0 0.0
    %6459 = vmatprep.subr.mxu0 0.0
    %6460 = vmatpush1.msra.mxu0 0.0
    %6461 = vmatprep.subr.mxu0 0.0
    %6462 = vmatpush1.msra.mxu0 0.0
    %6463 = vmatprep.subr.mxu0 0.0
    %6464 = vmatpush1.msra.mxu0 0.0
    %6465 = vmatprep.subr.mxu0 0.0
    %6466 = vmatpush1.msra.mxu0 0.0
    %6467 = vmatprep.subr.mxu0 0.0
    %6468 = vmatpush1.msra.mxu0 0.0
    %6469 = vmatprep.subr.mxu0 0.0
    %6470 = vmatpush1.msra.mxu0 0.0
    %6471 = vmatprep.subr.mxu0 0.0
    %6472 = vmatpush1.msra.mxu0 0.0
    %6473 = vmatprep.subr.mxu0 0.0
    %6474 = vmatpush1.msra.mxu0 0.0
    %6475 = vmatprep.subr.mxu0 0.0
    %6476 = vmatpush1.msra.mxu0 0.0
    %6477 = vmatprep.subr.mxu0 0.0
    %6478 = vmatpush1.msra.mxu0 0.0
    %6479 = vmatprep.subr.mxu0 0.0
    %6480 = vmatpush1.msra.mxu0 0.0
    %6481 = vmatprep.subr.mxu0 0.0
    %6482 = vmatpush1.msra.mxu0 0.0
    %6483 = vmatprep.subr.mxu0 0.0
    %6484 = vmatpush1.msra.mxu0 0.0
    %6485 = vmatprep.subr.mxu0 0.0
    %6486 = vmatpush1.msra.mxu0 0.0
    %6487 = vmatprep.mubr.f32.mxu0 0.0
    %6488 = vmatmul.mubr.f32.gmra.mrb[0].mxu0 %v6421
    %v6489 = vpop.f32.mrb[0].mxu0
    %v6490 = vadd.f32 %v6416, %v6489
    %v6491 = vpop.f32.mrb[0].mxu0
    %v6492 = vadd.f32 %v6418, %v6491
    %6493 = vdwg.mxu0
    %v6495 = vlaneseq
    %v6496 = vshrl.u32 %v6495, 7
    %v6497 = vsub.s32 0, %v6496
    %v6498 = vrot.slane %v862, %v6497
    %v6499 = vlaneseq
    %v6500 = vshrl.u32 %v6499, 7
    %v6501 = vsub.s32 1, %v6500
    %v6502 = vrot.slane %v862, %v6501
    %v6505 = vadd.f32 %v6490, %v6498
    %v6506 = vadd.f32 %v6492, %v6502
    %v6508 = vlaneseq
    %v6509 = vshrl.u32 %v6508, 7
    %v6510 = vsub.s32 0, %v6509
    %v6511 = vrot.slane %v861, %v6510
    %v6512 = vlaneseq
    %v6513 = vshrl.u32 %v6512, 7
    %v6514 = vsub.s32 1, %v6513
    %v6515 = vrot.slane %v861, %v6514
    %v6519 = vsel %vm1240, %v6506, 0
    %6521 = vmatprep.subr.mxu0 %v864
    %6522 = vmatpush1.msra.mxu0 %v863
    %6523 = vmatprep.subr.mxu0 %v866
    %6524 = vmatpush1.msra.mxu0 %v865
    %6525 = vmatprep.subr.mxu0 %v868
    %6526 = vmatpush1.msra.mxu0 %v867
    %6527 = vmatprep.subr.mxu0 %v870
    %6528 = vmatpush1.msra.mxu0 %v869
    %6529 = vmatprep.subr.mxu0 %v872
    %6530 = vmatpush1.msra.mxu0 %v871
    %6531 = vmatprep.subr.mxu0 %v874
    %6532 = vmatpush1.msra.mxu0 %v873
    %6533 = vmatprep.subr.mxu0 %v876
    %6534 = vmatpush1.msra.mxu0 %v875
    %6535 = vmatprep.subr.mxu0 %v878
    %6536 = vmatpush1.msra.mxu0 %v877
    %6537 = vmatprep.subr.mxu0 %v880
    %6538 = vmatpush1.msra.mxu0 %v879
    %6539 = vmatprep.subr.mxu0 %v882
    %6540 = vmatpush1.msra.mxu0 %v881
    %6541 = vmatprep.subr.mxu0 %v884
    %6542 = vmatpush1.msra.mxu0 %v883
    %6543 = vmatprep.subr.mxu0 %v886
    %6544 = vmatpush1.msra.mxu0 %v885
    %6545 = vmatprep.subr.mxu0 %v888
    %6546 = vmatpush1.msra.mxu0 %v887
    %6547 = vmatprep.subr.mxu0 %v890
    %6548 = vmatpush1.msra.mxu0 %v889
    %6549 = vmatprep.subr.mxu0 %v892
    %6550 = vmatpush1.msra.mxu0 %v891
    %6551 = vmatprep.subr.mxu0 %v894
    %6552 = vmatpush1.msra.mxu0 %v893
    %6553 = vmatprep.subr.mxu0 %v896
    %6554 = vmatpush1.msra.mxu0 %v895
    %6555 = vmatprep.subr.mxu0 %v898
    %6556 = vmatpush1.msra.mxu0 %v897
    %6557 = vmatprep.subr.mxu0 %v900
    %6558 = vmatpush1.msra.mxu0 %v899
    %6559 = vmatprep.subr.mxu0 %v902
    %6560 = vmatpush1.msra.mxu0 %v901
    %6561 = vmatprep.subr.mxu0 0.0
    %6562 = vmatpush1.msra.mxu0 0.0
    %6563 = vmatprep.subr.mxu0 0.0
    %6564 = vmatpush1.msra.mxu0 0.0
    %6565 = vmatprep.subr.mxu0 0.0
    %6566 = vmatpush1.msra.mxu0 0.0
    %6567 = vmatprep.subr.mxu0 0.0
    %6568 = vmatpush1.msra.mxu0 0.0
    %6569 = vmatprep.subr.mxu0 0.0
    %6570 = vmatpush1.msra.mxu0 0.0
    %6571 = vmatprep.subr.mxu0 0.0
    %6572 = vmatpush1.msra.mxu0 0.0
    %6573 = vmatprep.subr.mxu0 0.0
    %6574 = vmatpush1.msra.mxu0 0.0
    %6575 = vmatprep.subr.mxu0 0.0
    %6576 = vmatpush1.msra.mxu0 0.0
    %6577 = vmatprep.subr.mxu0 0.0
    %6578 = vmatpush1.msra.mxu0 0.0
    %6579 = vmatprep.subr.mxu0 0.0
    %6580 = vmatpush1.msra.mxu0 0.0
    %6581 = vmatprep.subr.mxu0 0.0
    %6582 = vmatpush1.msra.mxu0 0.0
    %6583 = vmatprep.subr.mxu0 0.0
    %6584 = vmatpush1.msra.mxu0 0.0
    %6585 = vmatprep.mubr.f32.mxu0 %v6519
    %6586 = vmatmul.mubr.f32.gmra.mrb[0].mxu0 %v6505
    %v6587 = vpop.f32.mrb[0].mxu0
    %v6588 = vadd.f32 %v6511, %v6587
    %v6589 = vpop.f32.mrb[0].mxu0
    %v6590 = vadd.f32 %v6515, %v6589
    %6591 = vdwg.mxu0
    %v6593 = vlaneseq
    %v6594 = vshrl.u32 %v6593, 7
    %v6595 = vsub.s32 0, %v6594
    %v6596 = vrot.slane %v618, %v6595
    %v6597 = vlaneseq
    %v6598 = vshrl.u32 %v6597, 7
    %v6599 = vsub.s32 1, %v6598
    %v6600 = vrot.slane %v618, %v6599
    %v6601 = vlaneseq
    %v6602 = vshrl.u32 %v6601, 7
    %v6603 = vsub.s32 2, %v6602
    %v6604 = vrot.slane %v618, %v6603
    %v6605 = vlaneseq
    %v6606 = vshrl.u32 %v6605, 7
    %v6607 = vsub.s32 3, %v6606
    %v6608 = vrot.slane %v618, %v6607
    %v6614 = vsel %vm1240, %v6590, 0
    %6616 = vmatprep.subr.mxu0 %v620
    %6617 = vmatpush1.msra.mxu0 %v619
    %6618 = vmatprep.subr.mxu0 %v624
    %6619 = vmatpush1.msra.mxu0 %v623
    %6620 = vmatprep.subr.mxu0 %v628
    %6621 = vmatpush1.msra.mxu0 %v627
    %6622 = vmatprep.subr.mxu0 %v632
    %6623 = vmatpush1.msra.mxu0 %v631
    %6624 = vmatprep.subr.mxu0 %v636
    %6625 = vmatpush1.msra.mxu0 %v635
    %6626 = vmatprep.subr.mxu0 %v640
    %6627 = vmatpush1.msra.mxu0 %v639
    %6628 = vmatprep.subr.mxu0 %v644
    %6629 = vmatpush1.msra.mxu0 %v643
    %6630 = vmatprep.subr.mxu0 %v648
    %6631 = vmatpush1.msra.mxu0 %v647
    %6632 = vmatprep.subr.mxu0 %v652
    %6633 = vmatpush1.msra.mxu0 %v651
    %6634 = vmatprep.subr.mxu0 %v656
    %6635 = vmatpush1.msra.mxu0 %v655
    %6636 = vmatprep.subr.mxu0 %v660
    %6637 = vmatpush1.msra.mxu0 %v659
    %6638 = vmatprep.subr.mxu0 %v664
    %6639 = vmatpush1.msra.mxu0 %v663
    %6640 = vmatprep.subr.mxu0 %v668
    %6641 = vmatpush1.msra.mxu0 %v667
    %6642 = vmatprep.subr.mxu0 %v672
    %6643 = vmatpush1.msra.mxu0 %v671
    %6644 = vmatprep.subr.mxu0 %v676
    %6645 = vmatpush1.msra.mxu0 %v675
    %6646 = vmatprep.subr.mxu0 %v680
    %6647 = vmatpush1.msra.mxu0 %v679
    %6648 = vmatprep.subr.mxu0 %v684
    %6649 = vmatpush1.msra.mxu0 %v683
    %6650 = vmatprep.subr.mxu0 %v688
    %6651 = vmatpush1.msra.mxu0 %v687
    %6652 = vmatprep.subr.mxu0 %v692
    %6653 = vmatpush1.msra.mxu0 %v691
    %6654 = vmatprep.subr.mxu0 %v696
    %6655 = vmatpush1.msra.mxu0 %v695
    %6656 = vmatprep.subr.mxu0 0.0
    %6657 = vmatpush1.msra.mxu0 0.0
    %6658 = vmatprep.subr.mxu0 0.0
    %6659 = vmatpush1.msra.mxu0 0.0
    %6660 = vmatprep.subr.mxu0 0.0
    %6661 = vmatpush1.msra.mxu0 0.0
    %6662 = vmatprep.subr.mxu0 0.0
    %6663 = vmatpush1.msra.mxu0 0.0
    %6664 = vmatprep.subr.mxu0 0.0
    %6665 = vmatpush1.msra.mxu0 0.0
    %6666 = vmatprep.subr.mxu0 0.0
    %6667 = vmatpush1.msra.mxu0 0.0
    %6668 = vmatprep.subr.mxu0 0.0
    %6669 = vmatpush1.msra.mxu0 0.0
    %6670 = vmatprep.subr.mxu0 0.0
    %6671 = vmatpush1.msra.mxu0 0.0
    %6672 = vmatprep.subr.mxu0 0.0
    %6673 = vmatpush1.msra.mxu0 0.0
    %6674 = vmatprep.subr.mxu0 0.0
    %6675 = vmatpush1.msra.mxu0 0.0
    %6676 = vmatprep.subr.mxu0 0.0
    %6677 = vmatpush1.msra.mxu0 0.0
    %6678 = vmatprep.subr.mxu0 0.0
    %6679 = vmatpush1.msra.mxu0 0.0
    %6680 = vmatprep.mubr.f32.mxu0 %v6614
    %6681 = vmatmul.mubr.f32.gmra.mrb[0].mxu0 %v6588
    %v6682 = vpop.f32.mrb[0].mxu0
    %v6683 = vadd.f32 %v6596, %v6682
    %v6684 = vpop.f32.mrb[0].mxu0
    %v6685 = vadd.f32 %v6600, %v6684
    %6686 = vdwg.mxu0
    %6687 = vmatprep.subr.mxu0 %v622
    %6688 = vmatpush1.msra.mxu0 %v621
    %6689 = vmatprep.subr.mxu0 %v626
    %6690 = vmatpush1.msra.mxu0 %v625
    %6691 = vmatprep.subr.mxu0 %v630
    %6692 = vmatpush1.msra.mxu0 %v629
    %6693 = vmatprep.subr.mxu0 %v634
    %6694 = vmatpush1.msra.mxu0 %v633
    %6695 = vmatprep.subr.mxu0 %v638
    %6696 = vmatpush1.msra.mxu0 %v637
    %6697 = vmatprep.subr.mxu0 %v642
    %6698 = vmatpush1.msra.mxu0 %v641
    %6699 = vmatprep.subr.mxu0 %v646
    %6700 = vmatpush1.msra.mxu0 %v645
    %6701 = vmatprep.subr.mxu0 %v650
    %6702 = vmatpush1.msra.mxu0 %v649
    %6703 = vmatprep.subr.mxu0 %v654
    %6704 = vmatpush1.msra.mxu0 %v653
    %6705 = vmatprep.subr.mxu0 %v658
    %6706 = vmatpush1.msra.mxu0 %v657
    %6707 = vmatprep.subr.mxu0 %v662
    %6708 = vmatpush1.msra.mxu0 %v661
    %6709 = vmatprep.subr.mxu0 %v666
    %6710 = vmatpush1.msra.mxu0 %v665
    %6711 = vmatprep.subr.mxu0 %v670
    %6712 = vmatpush1.msra.mxu0 %v669
    %6713 = vmatprep.subr.mxu0 %v674
    %6714 = vmatpush1.msra.mxu0 %v673
    %6715 = vmatprep.subr.mxu0 %v678
    %6716 = vmatpush1.msra.mxu0 %v677
    %6717 = vmatprep.subr.mxu0 %v682
    %6718 = vmatpush1.msra.mxu0 %v681
    %6719 = vmatprep.subr.mxu0 %v686
    %6720 = vmatpush1.msra.mxu0 %v685
    %6721 = vmatprep.subr.mxu0 %v690
    %6722 = vmatpush1.msra.mxu0 %v689
    %6723 = vmatprep.subr.mxu0 %v694
    %6724 = vmatpush1.msra.mxu0 %v693
    %6725 = vmatprep.subr.mxu0 %v698
    %6726 = vmatpush1.msra.mxu0 %v697
    %6727 = vmatprep.subr.mxu0 0.0
    %6728 = vmatpush1.msra.mxu0 0.0
    %6729 = vmatprep.subr.mxu0 0.0
    %6730 = vmatpush1.msra.mxu0 0.0
    %6731 = vmatprep.subr.mxu0 0.0
    %6732 = vmatpush1.msra.mxu0 0.0
    %6733 = vmatprep.subr.mxu0 0.0
    %6734 = vmatpush1.msra.mxu0 0.0
    %6735 = vmatprep.subr.mxu0 0.0
    %6736 = vmatpush1.msra.mxu0 0.0
    %6737 = vmatprep.subr.mxu0 0.0
    %6738 = vmatpush1.msra.mxu0 0.0
    %6739 = vmatprep.subr.mxu0 0.0
    %6740 = vmatpush1.msra.mxu0 0.0
    %6741 = vmatprep.subr.mxu0 0.0
    %6742 = vmatpush1.msra.mxu0 0.0
    %6743 = vmatprep.subr.mxu0 0.0
    %6744 = vmatpush1.msra.mxu0 0.0
    %6745 = vmatprep.subr.mxu0 0.0
    %6746 = vmatpush1.msra.mxu0 0.0
    %6747 = vmatprep.subr.mxu0 0.0
    %6748 = vmatpush1.msra.mxu0 0.0
    %6749 = vmatprep.subr.mxu0 0.0
    %6750 = vmatpush1.msra.mxu0 0.0
    %6751 = vmatprep.mubr.f32.mxu0 %v6614
    %6752 = vmatmul.mubr.f32.gmra.mrb[0].mxu0 %v6588
    %v6753 = vpop.f32.mrb[0].mxu0
    %v6754 = vadd.f32 %v6604, %v6753
    %v6755 = vpop.f32.mrb[0].mxu0
    %v6756 = vadd.f32 %v6608, %v6755
    %6757 = vdwg.mxu0
    %v6758 = vmax.f32 %v6683, 0.0
    %v6759 = vmax.f32 %v6685, 0.0
    %v6760 = vmax.f32 %v6754, 0.0
    %v6761 = vmax.f32 %v6756, 0.0
    %v6763 = vlaneseq
    %v6764 = vshrl.u32 %v6763, 7
    %v6765 = vsub.s32 0, %v6764
    %v6766 = vrot.slane %v699, %v6765
    %v6767 = vlaneseq
    %v6768 = vshrl.u32 %v6767, 7
    %v6769 = vsub.s32 1, %v6768
    %v6770 = vrot.slane %v699, %v6769
    %6773 = vmatprep.subr.mxu0 %v701
    %6774 = vmatpush1.msra.mxu0 %v700
    %6775 = vmatprep.subr.mxu0 %v703
    %6776 = vmatpush1.msra.mxu0 %v702
    %6777 = vmatprep.subr.mxu0 %v705
    %6778 = vmatpush1.msra.mxu0 %v704
    %6779 = vmatprep.subr.mxu0 %v707
    %6780 = vmatpush1.msra.mxu0 %v706
    %6781 = vmatprep.subr.mxu0 %v709
    %6782 = vmatpush1.msra.mxu0 %v708
    %6783 = vmatprep.subr.mxu0 %v711
    %6784 = vmatpush1.msra.mxu0 %v710
    %6785 = vmatprep.subr.mxu0 %v713
    %6786 = vmatpush1.msra.mxu0 %v712
    %6787 = vmatprep.subr.mxu0 %v715
    %6788 = vmatpush1.msra.mxu0 %v714
    %6789 = vmatprep.subr.mxu0 %v717
    %6790 = vmatpush1.msra.mxu0 %v716
    %6791 = vmatprep.subr.mxu0 %v719
    %6792 = vmatpush1.msra.mxu0 %v718
    %6793 = vmatprep.subr.mxu0 %v721
    %6794 = vmatpush1.msra.mxu0 %v720
    %6795 = vmatprep.subr.mxu0 %v723
    %6796 = vmatpush1.msra.mxu0 %v722
    %6797 = vmatprep.subr.mxu0 %v725
    %6798 = vmatpush1.msra.mxu0 %v724
    %6799 = vmatprep.subr.mxu0 %v727
    %6800 = vmatpush1.msra.mxu0 %v726
    %6801 = vmatprep.subr.mxu0 %v729
    %6802 = vmatpush1.msra.mxu0 %v728
    %6803 = vmatprep.subr.mxu0 %v731
    %6804 = vmatpush1.msra.mxu0 %v730
    %6805 = vmatprep.subr.mxu0 %v733
    %6806 = vmatpush1.msra.mxu0 %v732
    %6807 = vmatprep.subr.mxu0 %v735
    %6808 = vmatpush1.msra.mxu0 %v734
    %6809 = vmatprep.subr.mxu0 %v737
    %6810 = vmatpush1.msra.mxu0 %v736
    %6811 = vmatprep.subr.mxu0 %v739
    %6812 = vmatpush1.msra.mxu0 %v738
    %6813 = vmatprep.subr.mxu0 %v741
    %6814 = vmatpush1.msra.mxu0 %v740
    %6815 = vmatprep.subr.mxu0 %v743
    %6816 = vmatpush1.msra.mxu0 %v742
    %6817 = vmatprep.subr.mxu0 %v745
    %6818 = vmatpush1.msra.mxu0 %v744
    %6819 = vmatprep.subr.mxu0 %v747
    %6820 = vmatpush1.msra.mxu0 %v746
    %6821 = vmatprep.subr.mxu0 %v749
    %6822 = vmatpush1.msra.mxu0 %v748
    %6823 = vmatprep.subr.mxu0 %v751
    %6824 = vmatpush1.msra.mxu0 %v750
    %6825 = vmatprep.subr.mxu0 %v753
    %6826 = vmatpush1.msra.mxu0 %v752
    %6827 = vmatprep.subr.mxu0 %v755
    %6828 = vmatpush1.msra.mxu0 %v754
    %6829 = vmatprep.subr.mxu0 %v757
    %6830 = vmatpush1.msra.mxu0 %v756
    %6831 = vmatprep.subr.mxu0 %v759
    %6832 = vmatpush1.msra.mxu0 %v758
    %6833 = vmatprep.subr.mxu0 %v761
    %6834 = vmatpush1.msra.mxu0 %v760
    %6835 = vmatprep.subr.mxu0 %v763
    %6836 = vmatpush1.msra.mxu0 %v762
    %6837 = vmatprep.mubr.f32.mxu0 %v6759
    %6838 = vmatmul.mubr.f32.gmra.mrb[0].mxu0 %v6758
    %v6839 = vpop.f32.mrb[0].mxu0
    %v6840 = vadd.f32 %v6766, %v6839
    %v6841 = vpop.f32.mrb[0].mxu0
    %v6842 = vadd.f32 %v6770, %v6841
    %6843 = vdwg.mxu0
    %6844 = vmatprep.subr.mxu0 %v765
    %6845 = vmatpush1.msra.mxu0 %v764
    %6846 = vmatprep.subr.mxu0 %v767
    %6847 = vmatpush1.msra.mxu0 %v766
    %6848 = vmatprep.subr.mxu0 %v769
    %6849 = vmatpush1.msra.mxu0 %v768
    %6850 = vmatprep.subr.mxu0 %v771
    %6851 = vmatpush1.msra.mxu0 %v770
    %6852 = vmatprep.subr.mxu0 %v773
    %6853 = vmatpush1.msra.mxu0 %v772
    %6854 = vmatprep.subr.mxu0 %v775
    %6855 = vmatpush1.msra.mxu0 %v774
    %6856 = vmatprep.subr.mxu0 %v777
    %6857 = vmatpush1.msra.mxu0 %v776
    %6858 = vmatprep.subr.mxu0 %v779
    %6859 = vmatpush1.msra.mxu0 %v778
    %6860 = vmatprep.subr.mxu0 %v781
    %6861 = vmatpush1.msra.mxu0 %v780
    %6862 = vmatprep.subr.mxu0 %v783
    %6863 = vmatpush1.msra.mxu0 %v782
    %6864 = vmatprep.subr.mxu0 %v785
    %6865 = vmatpush1.msra.mxu0 %v784
    %6866 = vmatprep.subr.mxu0 %v787
    %6867 = vmatpush1.msra.mxu0 %v786
    %6868 = vmatprep.subr.mxu0 %v789
    %6869 = vmatpush1.msra.mxu0 %v788
    %6870 = vmatprep.subr.mxu0 %v791
    %6871 = vmatpush1.msra.mxu0 %v790
    %6872 = vmatprep.subr.mxu0 %v793
    %6873 = vmatpush1.msra.mxu0 %v792
    %6874 = vmatprep.subr.mxu0 %v795
    %6875 = vmatpush1.msra.mxu0 %v794
    %6876 = vmatprep.subr.mxu0 %v797
    %6877 = vmatpush1.msra.mxu0 %v796
    %6878 = vmatprep.subr.mxu0 %v799
    %6879 = vmatpush1.msra.mxu0 %v798
    %6880 = vmatprep.subr.mxu0 %v801
    %6881 = vmatpush1.msra.mxu0 %v800
    %6882 = vmatprep.subr.mxu0 %v803
    %6883 = vmatpush1.msra.mxu0 %v802
    %6884 = vmatprep.subr.mxu0 %v805
    %6885 = vmatpush1.msra.mxu0 %v804
    %6886 = vmatprep.subr.mxu0 %v807
    %6887 = vmatpush1.msra.mxu0 %v806
    %6888 = vmatprep.subr.mxu0 %v809
    %6889 = vmatpush1.msra.mxu0 %v808
    %6890 = vmatprep.subr.mxu0 %v811
    %6891 = vmatpush1.msra.mxu0 %v810
    %6892 = vmatprep.subr.mxu0 %v813
    %6893 = vmatpush1.msra.mxu0 %v812
    %6894 = vmatprep.subr.mxu0 %v815
    %6895 = vmatpush1.msra.mxu0 %v814
    %6896 = vmatprep.subr.mxu0 %v817
    %6897 = vmatpush1.msra.mxu0 %v816
    %6898 = vmatprep.subr.mxu0 %v819
    %6899 = vmatpush1.msra.mxu0 %v818
    %6900 = vmatprep.subr.mxu0 %v821
    %6901 = vmatpush1.msra.mxu0 %v820
    %6902 = vmatprep.subr.mxu0 %v823
    %6903 = vmatpush1.msra.mxu0 %v822
    %6904 = vmatprep.subr.mxu0 %v825
    %6905 = vmatpush1.msra.mxu0 %v824
    %6906 = vmatprep.subr.mxu0 %v827
    %6907 = vmatpush1.msra.mxu0 %v826
    %6908 = vmatprep.mubr.f32.mxu0 %v6761
    %6909 = vmatmul.mubr.f32.gmra.mrb[0].mxu0 %v6760
    %v6910 = vpop.f32.mrb[0].mxu0
    %v6911 = vadd.f32 %v6840, %v6910
    %v6912 = vpop.f32.mrb[0].mxu0
    %v6913 = vadd.f32 %v6842, %v6912
    %6914 = vdwg.mxu0
    %v6915 = vmax.f32 %v6911, 0.0
    %v6916 = vmax.f32 %v6913, 0.0
    %6917 = vmatprep.subr.mxu0 0.0
    %6918 = vmatpush1.msra.mxu0 %v829
    %6919 = vmatprep.subr.mxu0 0.0
    %6920 = vmatpush1.msra.mxu0 %v830
    %6921 = vmatprep.subr.mxu0 0.0
    %6922 = vmatpush1.msra.mxu0 %v831
    %6923 = vmatprep.subr.mxu0 0.0
    %6924 = vmatpush1.msra.mxu0 %v832
    %6925 = vmatprep.subr.mxu0 0.0
    %6926 = vmatpush1.msra.mxu0 %v833
    %6927 = vmatprep.subr.mxu0 0.0
    %6928 = vmatpush1.msra.mxu0 %v834
    %6929 = vmatprep.subr.mxu0 0.0
    %6930 = vmatpush1.msra.mxu0 %v835
    %6931 = vmatprep.subr.mxu0 0.0
    %6932 = vmatpush1.msra.mxu0 %v836
    %6933 = vmatprep.subr.mxu0 0.0
    %6934 = vmatpush1.msra.mxu0 %v837
    %6935 = vmatprep.subr.mxu0 0.0
    %6936 = vmatpush1.msra.mxu0 %v838
    %6937 = vmatprep.subr.mxu0 0.0
    %6938 = vmatpush1.msra.mxu0 %v839
    %6939 = vmatprep.subr.mxu0 0.0
    %6940 = vmatpush1.msra.mxu0 %v840
    %6941 = vmatprep.subr.mxu0 0.0
    %6942 = vmatpush1.msra.mxu0 %v841
    %6943 = vmatprep.subr.mxu0 0.0
    %6944 = vmatpush1.msra.mxu0 %v842
    %6945 = vmatprep.subr.mxu0 0.0
    %6946 = vmatpush1.msra.mxu0 %v843
    %6947 = vmatprep.subr.mxu0 0.0
    %6948 = vmatpush1.msra.mxu0 %v844
    %6949 = vmatprep.subr.mxu0 0.0
    %6950 = vmatpush1.msra.mxu0 %v845
    %6951 = vmatprep.subr.mxu0 0.0
    %6952 = vmatpush1.msra.mxu0 %v846
    %6953 = vmatprep.subr.mxu0 0.0
    %6954 = vmatpush1.msra.mxu0 %v847
    %6955 = vmatprep.subr.mxu0 0.0
    %6956 = vmatpush1.msra.mxu0 %v848
    %6957 = vmatprep.subr.mxu0 0.0
    %6958 = vmatpush1.msra.mxu0 %v849
    %6959 = vmatprep.subr.mxu0 0.0
    %6960 = vmatpush1.msra.mxu0 %v850
    %6961 = vmatprep.subr.mxu0 0.0
    %6962 = vmatpush1.msra.mxu0 %v851
    %6963 = vmatprep.subr.mxu0 0.0
    %6964 = vmatpush1.msra.mxu0 %v852
    %6965 = vmatprep.subr.mxu0 0.0
    %6966 = vmatpush1.msra.mxu0 %v853
    %6967 = vmatprep.subr.mxu0 0.0
    %6968 = vmatpush1.msra.mxu0 %v854
    %6969 = vmatprep.subr.mxu0 0.0
    %6970 = vmatpush1.msra.mxu0 %v855
    %6971 = vmatprep.subr.mxu0 0.0
    %6972 = vmatpush1.msra.mxu0 %v856
    %6973 = vmatprep.subr.mxu0 0.0
    %6974 = vmatpush1.msra.mxu0 %v857
    %6975 = vmatprep.subr.mxu0 0.0
    %6976 = vmatpush1.msra.mxu0 %v858
    %6977 = vmatprep.subr.mxu0 0.0
    %6978 = vmatpush1.msra.mxu0 %v859
    %6979 = vmatprep.subr.mxu0 0.0
    %6980 = vmatpush1.msra.mxu0 %v860
    %6981 = vmatprep.mubr.f32.mxu0 %v6916
    %6982 = vmatmul.mubr.f32.gmra.mrb[0].mxu0 %v6915
    %v6983 = vpop.f32.mrb[0].mxu0
    %v6984 = vadd.f32 %v828, %v6983
    %v6985 = vpop.f32.mrb[0].mxu0
    %6986 = vdwg.mxu0
    %6987 = vst [vmem:[#allocation56] sm:$0x1] %v6984
    %v6988 = vsel %vm1205, %v6167, 0.0
    %6989 = vadd.xlane.f32.xlu0 %v6988
    %v6990 = vpop.xlane.xlu0 %6989
    %v6991 = vmul.f32 %v6990, %v1209
    %v6992 = vsub.f32 %v6167, %v6991
    %v6993 = vmul.f32 %v6992, %v6992
    %v6994 = vsel %vm1205, %v6993, 0.0
    %6995 = vadd.xlane.f32.xlu0 %v6994
    %v6996 = vpop.xlane.xlu0 %6995
    %v6997 = vmul.f32 %v6996, %v1209
    %v6998 = vadd.f32 %v6997, 1e-06
    %v6999 = vrsqrt.pop %v6998
    %v7000 = vmul.f32 %v6992, %v6999
    %v7001 = vmul.f32 %v7000, %v6185
    %v7002 = vadd.f32 %v7001, %v6192
    %s7003 = scalar_lea.vmem %s5, 1
    %v7004 = vld [vmem:[%s7003] sm:$0x1]
    %v7006 = vsel %vm6196, %v7004, 0
    %7008 = vmatprep.subr.mxu0 0.0
    %7009 = vmatpush1.msra.mxu0 %v6202
    %7010 = vmatprep.subr.mxu0 0.0
    %7011 = vmatpush1.msra.mxu0 0.0
    %7012 = vmatprep.subr.mxu0 0.0
    %7013 = vmatpush1.msra.mxu0 0.0
    %7014 = vmatprep.subr.mxu0 0.0
    %7015 = vmatpush1.msra.mxu0 0.0
    %7016 = vmatprep.subr.mxu0 0.0
    %7017 = vmatpush1.msra.mxu0 0.0
    %7018 = vmatprep.subr.mxu0 0.0
    %7019 = vmatpush1.msra.mxu0 0.0
    %7020 = vmatprep.subr.mxu0 0.0
    %7021 = vmatpush1.msra.mxu0 0.0
    %7022 = vmatprep.subr.mxu0 0.0
    %7023 = vmatpush1.msra.mxu0 0.0
    %7024 = vmatprep.subr.mxu0 0.0
    %7025 = vmatpush1.msra.mxu0 0.0
    %7026 = vmatprep.subr.mxu0 0.0
    %7027 = vmatpush1.msra.mxu0 0.0
    %7028 = vmatprep.subr.mxu0 0.0
    %7029 = vmatpush1.msra.mxu0 0.0
    %7030 = vmatprep.subr.mxu0 0.0
    %7031 = vmatpush1.msra.mxu0 0.0
    %7032 = vmatprep.subr.mxu0 0.0
    %7033 = vmatpush1.msra.mxu0 0.0
    %7034 = vmatprep.subr.mxu0 0.0
    %7035 = vmatpush1.msra.mxu0 0.0
    %7036 = vmatprep.subr.mxu0 0.0
    %7037 = vmatpush1.msra.mxu0 0.0
    %7038 = vmatprep.subr.mxu0 0.0
    %7039 = vmatpush1.msra.mxu0 0.0
    %7040 = vmatprep.subr.mxu0 0.0
    %7041 = vmatpush1.msra.mxu0 0.0
    %7042 = vmatprep.subr.mxu0 0.0
    %7043 = vmatpush1.msra.mxu0 0.0
    %7044 = vmatprep.subr.mxu0 0.0
    %7045 = vmatpush1.msra.mxu0 0.0
    %7046 = vmatprep.subr.mxu0 0.0
    %7047 = vmatpush1.msra.mxu0 0.0
    %7048 = vmatprep.subr.mxu0 0.0
    %7049 = vmatpush1.msra.mxu0 0.0
    %7050 = vmatprep.subr.mxu0 0.0
    %7051 = vmatpush1.msra.mxu0 0.0
    %7052 = vmatprep.subr.mxu0 0.0
    %7053 = vmatpush1.msra.mxu0 0.0
    %7054 = vmatprep.subr.mxu0 0.0
    %7055 = vmatpush1.msra.mxu0 0.0
    %7056 = vmatprep.subr.mxu0 0.0
    %7057 = vmatpush1.msra.mxu0 0.0
    %7058 = vmatprep.subr.mxu0 0.0
    %7059 = vmatpush1.msra.mxu0 0.0
    %7060 = vmatprep.subr.mxu0 0.0
    %7061 = vmatpush1.msra.mxu0 0.0
    %7062 = vmatprep.subr.mxu0 0.0
    %7063 = vmatpush1.msra.mxu0 0.0
    %7064 = vmatprep.subr.mxu0 0.0
    %7065 = vmatpush1.msra.mxu0 0.0
    %7066 = vmatprep.subr.mxu0 0.0
    %7067 = vmatpush1.msra.mxu0 0.0
    %7068 = vmatprep.subr.mxu0 0.0
    %7069 = vmatpush1.msra.mxu0 0.0
    %7070 = vmatprep.subr.mxu0 0.0
    %7071 = vmatpush1.msra.mxu0 0.0
    %7072 = vmatprep.mubr.f32.mxu0 0.0
    %7073 = vmatmul.mubr.f32.gmra.mrb[0].mxu0 %v7006
    %v7074 = vpop.f32.mrb[0].mxu0
    %v7075 = vadd.f32 %v1017, %v7074
    %v7076 = vpop.f32.mrb[0].mxu0
    %7077 = vdwg.mxu0
    %v7078 = vmax.f32 %v7075, 0.0
    %v7080 = vsel %vm1055, %v7078, 0
    %7082 = vmatprep.subr.mxu0 0.0
    %7083 = vmatpush1.msra.mxu0 %v1020
    %7084 = vmatprep.subr.mxu0 0.0
    %7085 = vmatpush1.msra.mxu0 %v1021
    %7086 = vmatprep.subr.mxu0 0.0
    %7087 = vmatpush1.msra.mxu0 %v1022
    %7088 = vmatprep.subr.mxu0 0.0
    %7089 = vmatpush1.msra.mxu0 %v1023
    %7090 = vmatprep.subr.mxu0 0.0
    %7091 = vmatpush1.msra.mxu0 %v1024
    %7092 = vmatprep.subr.mxu0 0.0
    %7093 = vmatpush1.msra.mxu0 %v1025
    %7094 = vmatprep.subr.mxu0 0.0
    %7095 = vmatpush1.msra.mxu0 %v1026
    %7096 = vmatprep.subr.mxu0 0.0
    %7097 = vmatpush1.msra.mxu0 %v1027
    %7098 = vmatprep.subr.mxu0 0.0
    %7099 = vmatpush1.msra.mxu0 0.0
    %7100 = vmatprep.subr.mxu0 0.0
    %7101 = vmatpush1.msra.mxu0 0.0
    %7102 = vmatprep.subr.mxu0 0.0
    %7103 = vmatpush1.msra.mxu0 0.0
    %7104 = vmatprep.subr.mxu0 0.0
    %7105 = vmatpush1.msra.mxu0 0.0
    %7106 = vmatprep.subr.mxu0 0.0
    %7107 = vmatpush1.msra.mxu0 0.0
    %7108 = vmatprep.subr.mxu0 0.0
    %7109 = vmatpush1.msra.mxu0 0.0
    %7110 = vmatprep.subr.mxu0 0.0
    %7111 = vmatpush1.msra.mxu0 0.0
    %7112 = vmatprep.subr.mxu0 0.0
    %7113 = vmatpush1.msra.mxu0 0.0
    %7114 = vmatprep.subr.mxu0 0.0
    %7115 = vmatpush1.msra.mxu0 0.0
    %7116 = vmatprep.subr.mxu0 0.0
    %7117 = vmatpush1.msra.mxu0 0.0
    %7118 = vmatprep.subr.mxu0 0.0
    %7119 = vmatpush1.msra.mxu0 0.0
    %7120 = vmatprep.subr.mxu0 0.0
    %7121 = vmatpush1.msra.mxu0 0.0
    %7122 = vmatprep.subr.mxu0 0.0
    %7123 = vmatpush1.msra.mxu0 0.0
    %7124 = vmatprep.subr.mxu0 0.0
    %7125 = vmatpush1.msra.mxu0 0.0
    %7126 = vmatprep.subr.mxu0 0.0
    %7127 = vmatpush1.msra.mxu0 0.0
    %7128 = vmatprep.subr.mxu0 0.0
    %7129 = vmatpush1.msra.mxu0 0.0
    %7130 = vmatprep.subr.mxu0 0.0
    %7131 = vmatpush1.msra.mxu0 0.0
    %7132 = vmatprep.subr.mxu0 0.0
    %7133 = vmatpush1.msra.mxu0 0.0
    %7134 = vmatprep.subr.mxu0 0.0
    %7135 = vmatpush1.msra.mxu0 0.0
    %7136 = vmatprep.subr.mxu0 0.0
    %7137 = vmatpush1.msra.mxu0 0.0
    %7138 = vmatprep.subr.mxu0 0.0
    %7139 = vmatpush1.msra.mxu0 0.0
    %7140 = vmatprep.subr.mxu0 0.0
    %7141 = vmatpush1.msra.mxu0 0.0
    %7142 = vmatprep.subr.mxu0 0.0
    %7143 = vmatpush1.msra.mxu0 0.0
    %7144 = vmatprep.subr.mxu0 0.0
    %7145 = vmatpush1.msra.mxu0 0.0
    %7146 = vmatprep.mubr.f32.mxu0 0.0
    %7147 = vmatmul.mubr.f32.gmra.mrb[0].mxu0 %v7080
    %v7148 = vpop.f32.mrb[0].mxu0
    %v7149 = vadd.f32 %v1019, %v7148
    %v7150 = vpop.f32.mrb[0].mxu0
    %7151 = vdwg.mxu0
    %v7152 = vmax.f32 %v7149, 0.0
    %7153 = vmatprep.subr.mxu0 %v912
    %7154 = vmatpush1.msra.mxu0 %v911
    %7155 = vmatprep.subr.mxu0 %v914
    %7156 = vmatpush1.msra.mxu0 %v913
    %7157 = vmatprep.subr.mxu0 %v916
    %7158 = vmatpush1.msra.mxu0 %v915
    %7159 = vmatprep.subr.mxu0 %v918
    %7160 = vmatpush1.msra.mxu0 %v917
    %7161 = vmatprep.subr.mxu0 %v920
    %7162 = vmatpush1.msra.mxu0 %v919
    %7163 = vmatprep.subr.mxu0 %v922
    %7164 = vmatpush1.msra.mxu0 %v921
    %7165 = vmatprep.subr.mxu0 %v924
    %7166 = vmatpush1.msra.mxu0 %v923
    %7167 = vmatprep.subr.mxu0 %v926
    %7168 = vmatpush1.msra.mxu0 %v925
    %7169 = vmatprep.subr.mxu0 %v928
    %7170 = vmatpush1.msra.mxu0 %v927
    %7171 = vmatprep.subr.mxu0 %v930
    %7172 = vmatpush1.msra.mxu0 %v929
    %7173 = vmatprep.subr.mxu0 %v932
    %7174 = vmatpush1.msra.mxu0 %v931
    %7175 = vmatprep.subr.mxu0 %v934
    %7176 = vmatpush1.msra.mxu0 %v933
    %7177 = vmatprep.subr.mxu0 %v936
    %7178 = vmatpush1.msra.mxu0 %v935
    %7179 = vmatprep.subr.mxu0 %v938
    %7180 = vmatpush1.msra.mxu0 %v937
    %7181 = vmatprep.subr.mxu0 %v940
    %7182 = vmatpush1.msra.mxu0 %v939
    %7183 = vmatprep.subr.mxu0 %v942
    %7184 = vmatpush1.msra.mxu0 %v941
    %7185 = vmatprep.subr.mxu0 0.0
    %7186 = vmatpush1.msra.mxu0 0.0
    %7187 = vmatprep.subr.mxu0 0.0
    %7188 = vmatpush1.msra.mxu0 0.0
    %7189 = vmatprep.subr.mxu0 0.0
    %7190 = vmatpush1.msra.mxu0 0.0
    %7191 = vmatprep.subr.mxu0 0.0
    %7192 = vmatpush1.msra.mxu0 0.0
    %7193 = vmatprep.subr.mxu0 0.0
    %7194 = vmatpush1.msra.mxu0 0.0
    %7195 = vmatprep.subr.mxu0 0.0
    %7196 = vmatpush1.msra.mxu0 0.0
    %7197 = vmatprep.subr.mxu0 0.0
    %7198 = vmatpush1.msra.mxu0 0.0
    %7199 = vmatprep.subr.mxu0 0.0
    %7200 = vmatpush1.msra.mxu0 0.0
    %7201 = vmatprep.subr.mxu0 0.0
    %7202 = vmatpush1.msra.mxu0 0.0
    %7203 = vmatprep.subr.mxu0 0.0
    %7204 = vmatpush1.msra.mxu0 0.0
    %7205 = vmatprep.subr.mxu0 0.0
    %7206 = vmatpush1.msra.mxu0 0.0
    %7207 = vmatprep.subr.mxu0 0.0
    %7208 = vmatpush1.msra.mxu0 0.0
    %7209 = vmatprep.subr.mxu0 0.0
    %7210 = vmatpush1.msra.mxu0 0.0
    %7211 = vmatprep.subr.mxu0 0.0
    %7212 = vmatpush1.msra.mxu0 0.0
    %7213 = vmatprep.subr.mxu0 0.0
    %7214 = vmatpush1.msra.mxu0 0.0
    %7215 = vmatprep.subr.mxu0 0.0
    %7216 = vmatpush1.msra.mxu0 0.0
    %7217 = vmatprep.mubr.f32.mxu0 0.0
    %7218 = vmatmul.mubr.f32.gmra.mrb[0].mxu0 %v7152
    %v7219 = vpop.f32.mrb[0].mxu0
    %v7220 = vadd.f32 0.0, %v7219
    %v7221 = vpop.f32.mrb[0].mxu0
    %v7222 = vadd.f32 0.0, %v7221
    %7223 = vdwg.mxu0
    %v7225 = vsel %vm1240, %v7002, 0
    %7227 = vmatprep.subr.mxu0 %v904
    %7228 = vmatpush1.msra.mxu0 %v903
    %7229 = vmatprep.subr.mxu0 %v906
    %7230 = vmatpush1.msra.mxu0 %v905
    %7231 = vmatprep.subr.mxu0 %v908
    %7232 = vmatpush1.msra.mxu0 %v907
    %7233 = vmatprep.subr.mxu0 %v910
    %7234 = vmatpush1.msra.mxu0 %v909
    %7235 = vmatprep.subr.mxu0 0.0
    %7236 = vmatpush1.msra.mxu0 0.0
    %7237 = vmatprep.subr.mxu0 0.0
    %7238 = vmatpush1.msra.mxu0 0.0
    %7239 = vmatprep.subr.mxu0 0.0
    %7240 = vmatpush1.msra.mxu0 0.0
    %7241 = vmatprep.subr.mxu0 0.0
    %7242 = vmatpush1.msra.mxu0 0.0
    %7243 = vmatprep.subr.mxu0 0.0
    %7244 = vmatpush1.msra.mxu0 0.0
    %7245 = vmatprep.subr.mxu0 0.0
    %7246 = vmatpush1.msra.mxu0 0.0
    %7247 = vmatprep.subr.mxu0 0.0
    %7248 = vmatpush1.msra.mxu0 0.0
    %7249 = vmatprep.subr.mxu0 0.0
    %7250 = vmatpush1.msra.mxu0 0.0
    %7251 = vmatprep.subr.mxu0 0.0
    %7252 = vmatpush1.msra.mxu0 0.0
    %7253 = vmatprep.subr.mxu0 0.0
    %7254 = vmatpush1.msra.mxu0 0.0
    %7255 = vmatprep.subr.mxu0 0.0
    %7256 = vmatpush1.msra.mxu0 0.0
    %7257 = vmatprep.subr.mxu0 0.0
    %7258 = vmatpush1.msra.mxu0 0.0
    %7259 = vmatprep.subr.mxu0 0.0
    %7260 = vmatpush1.msra.mxu0 0.0
    %7261 = vmatprep.subr.mxu0 0.0
    %7262 = vmatpush1.msra.mxu0 0.0
    %7263 = vmatprep.subr.mxu0 0.0
    %7264 = vmatpush1.msra.mxu0 0.0
    %7265 = vmatprep.subr.mxu0 0.0
    %7266 = vmatpush1.msra.mxu0 0.0
    %7267 = vmatprep.subr.mxu0 0.0
    %7268 = vmatpush1.msra.mxu0 0.0
    %7269 = vmatprep.subr.mxu0 0.0
    %7270 = vmatpush1.msra.mxu0 0.0
    %7271 = vmatprep.subr.mxu0 0.0
    %7272 = vmatpush1.msra.mxu0 0.0
    %7273 = vmatprep.subr.mxu0 0.0
    %7274 = vmatpush1.msra.mxu0 0.0
    %7275 = vmatprep.subr.mxu0 0.0
    %7276 = vmatpush1.msra.mxu0 0.0
    %7277 = vmatprep.subr.mxu0 0.0
    %7278 = vmatpush1.msra.mxu0 0.0
    %7279 = vmatprep.subr.mxu0 0.0
    %7280 = vmatpush1.msra.mxu0 0.0
    %7281 = vmatprep.subr.mxu0 0.0
    %7282 = vmatpush1.msra.mxu0 0.0
    %7283 = vmatprep.subr.mxu0 0.0
    %7284 = vmatpush1.msra.mxu0 0.0
    %7285 = vmatprep.subr.mxu0 0.0
    %7286 = vmatpush1.msra.mxu0 0.0
    %7287 = vmatprep.subr.mxu0 0.0
    %7288 = vmatpush1.msra.mxu0 0.0
    %7289 = vmatprep.subr.mxu0 0.0
    %7290 = vmatpush1.msra.mxu0 0.0
    %7291 = vmatprep.mubr.f32.mxu0 0.0
    %7292 = vmatmul.mubr.f32.gmra.mrb[0].mxu0 %v7225
    %v7293 = vpop.f32.mrb[0].mxu0
    %v7294 = vadd.f32 %v7220, %v7293
    %v7295 = vpop.f32.mrb[0].mxu0
    %v7296 = vadd.f32 %v7222, %v7295
    %7297 = vdwg.mxu0
    %v7298 = vadd.f32 %v7294, %v6498
    %v7299 = vadd.f32 %v7296, %v6502
    %v7301 = vsel %vm1240, %v7299, 0
    %7303 = vmatprep.subr.mxu0 %v864
    %7304 = vmatpush1.msra.mxu0 %v863
    %7305 = vmatprep.subr.mxu0 %v866
    %7306 = vmatpush1.msra.mxu0 %v865
    %7307 = vmatprep.subr.mxu0 %v868
    %7308 = vmatpush1.msra.mxu0 %v867
    %7309 = vmatprep.subr.mxu0 %v870
    %7310 = vmatpush1.msra.mxu0 %v869
    %7311 = vmatprep.subr.mxu0 %v872
    %7312 = vmatpush1.msra.mxu0 %v871
    %7313 = vmatprep.subr.mxu0 %v874
    %7314 = vmatpush1.msra.mxu0 %v873
    %7315 = vmatprep.subr.mxu0 %v876
    %7316 = vmatpush1.msra.mxu0 %v875
    %7317 = vmatprep.subr.mxu0 %v878
    %7318 = vmatpush1.msra.mxu0 %v877
    %7319 = vmatprep.subr.mxu0 %v880
    %7320 = vmatpush1.msra.mxu0 %v879
    %7321 = vmatprep.subr.mxu0 %v882
    %7322 = vmatpush1.msra.mxu0 %v881
    %7323 = vmatprep.subr.mxu0 %v884
    %7324 = vmatpush1.msra.mxu0 %v883
    %7325 = vmatprep.subr.mxu0 %v886
    %7326 = vmatpush1.msra.mxu0 %v885
    %7327 = vmatprep.subr.mxu0 %v888
    %7328 = vmatpush1.msra.mxu0 %v887
    %7329 = vmatprep.subr.mxu0 %v890
    %7330 = vmatpush1.msra.mxu0 %v889
    %7331 = vmatprep.subr.mxu0 %v892
    %7332 = vmatpush1.msra.mxu0 %v891
    %7333 = vmatprep.subr.mxu0 %v894
    %7334 = vmatpush1.msra.mxu0 %v893
    %7335 = vmatprep.subr.mxu0 %v896
    %7336 = vmatpush1.msra.mxu0 %v895
    %7337 = vmatprep.subr.mxu0 %v898
    %7338 = vmatpush1.msra.mxu0 %v897
    %7339 = vmatprep.subr.mxu0 %v900
    %7340 = vmatpush1.msra.mxu0 %v899
    %7341 = vmatprep.subr.mxu0 %v902
    %7342 = vmatpush1.msra.mxu0 %v901
    %7343 = vmatprep.subr.mxu0 0.0
    %7344 = vmatpush1.msra.mxu0 0.0
    %7345 = vmatprep.subr.mxu0 0.0
    %7346 = vmatpush1.msra.mxu0 0.0
    %7347 = vmatprep.subr.mxu0 0.0
    %7348 = vmatpush1.msra.mxu0 0.0
    %7349 = vmatprep.subr.mxu0 0.0
    %7350 = vmatpush1.msra.mxu0 0.0
    %7351 = vmatprep.subr.mxu0 0.0
    %7352 = vmatpush1.msra.mxu0 0.0
    %7353 = vmatprep.subr.mxu0 0.0
    %7354 = vmatpush1.msra.mxu0 0.0
    %7355 = vmatprep.subr.mxu0 0.0
    %7356 = vmatpush1.msra.mxu0 0.0
    %7357 = vmatprep.subr.mxu0 0.0
    %7358 = vmatpush1.msra.mxu0 0.0
    %7359 = vmatprep.subr.mxu0 0.0
    %7360 = vmatpush1.msra.mxu0 0.0
    %7361 = vmatprep.subr.mxu0 0.0
    %7362 = vmatpush1.msra.mxu0 0.0
    %7363 = vmatprep.subr.mxu0 0.0
    %7364 = vmatpush1.msra.mxu0 0.0
    %7365 = vmatprep.subr.mxu0 0.0
    %7366 = vmatpush1.msra.mxu0 0.0
    %7367 = vmatprep.mubr.f32.mxu0 %v7301
    %7368 = vmatmul.mubr.f32.gmra.mrb[0].mxu0 %v7298
    %v7369 = vpop.f32.mrb[0].mxu0
    %v7370 = vadd.f32 %v6511, %v7369
    %v7371 = vpop.f32.mrb[0].mxu0
    %v7372 = vadd.f32 %v6515, %v7371
    %7373 = vdwg.mxu0
    %v7375 = vsel %vm1240, %v7372, 0
    %7377 = vmatprep.subr.mxu0 %v620
    %7378 = vmatpush1.msra.mxu0 %v619
    %7379 = vmatprep.subr.mxu0 %v624
    %7380 = vmatpush1.msra.mxu0 %v623
    %7381 = vmatprep.subr.mxu0 %v628
    %7382 = vmatpush1.msra.mxu0 %v627
    %7383 = vmatprep.subr.mxu0 %v632
    %7384 = vmatpush1.msra.mxu0 %v631
    %7385 = vmatprep.subr.mxu0 %v636
    %7386 = vmatpush1.msra.mxu0 %v635
    %7387 = vmatprep.subr.mxu0 %v640
    %7388 = vmatpush1.msra.mxu0 %v639
    %7389 = vmatprep.subr.mxu0 %v644
    %7390 = vmatpush1.msra.mxu0 %v643
    %7391 = vmatprep.subr.mxu0 %v648
    %7392 = vmatpush1.msra.mxu0 %v647
    %7393 = vmatprep.subr.mxu0 %v652
    %7394 = vmatpush1.msra.mxu0 %v651
    %7395 = vmatprep.subr.mxu0 %v656
    %7396 = vmatpush1.msra.mxu0 %v655
    %7397 = vmatprep.subr.mxu0 %v660
    %7398 = vmatpush1.msra.mxu0 %v659
    %7399 = vmatprep.subr.mxu0 %v664
    %7400 = vmatpush1.msra.mxu0 %v663
    %7401 = vmatprep.subr.mxu0 %v668
    %7402 = vmatpush1.msra.mxu0 %v667
    %7403 = vmatprep.subr.mxu0 %v672
    %7404 = vmatpush1.msra.mxu0 %v671
    %7405 = vmatprep.subr.mxu0 %v676
    %7406 = vmatpush1.msra.mxu0 %v675
    %7407 = vmatprep.subr.mxu0 %v680
    %7408 = vmatpush1.msra.mxu0 %v679
    %7409 = vmatprep.subr.mxu0 %v684
    %7410 = vmatpush1.msra.mxu0 %v683
    %7411 = vmatprep.subr.mxu0 %v688
    %7412 = vmatpush1.msra.mxu0 %v687
    %7413 = vmatprep.subr.mxu0 %v692
    %7414 = vmatpush1.msra.mxu0 %v691
    %7415 = vmatprep.subr.mxu0 %v696
    %7416 = vmatpush1.msra.mxu0 %v695
    %7417 = vmatprep.subr.mxu0 0.0
    %7418 = vmatpush1.msra.mxu0 0.0
    %7419 = vmatprep.subr.mxu0 0.0
    %7420 = vmatpush1.msra.mxu0 0.0
    %7421 = vmatprep.subr.mxu0 0.0
    %7422 = vmatpush1.msra.mxu0 0.0
    %7423 = vmatprep.subr.mxu0 0.0
    %7424 = vmatpush1.msra.mxu0 0.0
    %7425 = vmatprep.subr.mxu0 0.0
    %7426 = vmatpush1.msra.mxu0 0.0
    %7427 = vmatprep.subr.mxu0 0.0
    %7428 = vmatpush1.msra.mxu0 0.0
    %7429 = vmatprep.subr.mxu0 0.0
    %7430 = vmatpush1.msra.mxu0 0.0
    %7431 = vmatprep.subr.mxu0 0.0
    %7432 = vmatpush1.msra.mxu0 0.0
    %7433 = vmatprep.subr.mxu0 0.0
    %7434 = vmatpush1.msra.mxu0 0.0
    %7435 = vmatprep.subr.mxu0 0.0
    %7436 = vmatpush1.msra.mxu0 0.0
    %7437 = vmatprep.subr.mxu0 0.0
    %7438 = vmatpush1.msra.mxu0 0.0
    %7439 = vmatprep.subr.mxu0 0.0
    %7440 = vmatpush1.msra.mxu0 0.0
    %7441 = vmatprep.mubr.f32.mxu0 %v7375
    %7442 = vmatmul.mubr.f32.gmra.mrb[0].mxu0 %v7370
    %v7443 = vpop.f32.mrb[0].mxu0
    %v7444 = vadd.f32 %v6596, %v7443
    %v7445 = vpop.f32.mrb[0].mxu0
    %v7446 = vadd.f32 %v6600, %v7445
    %7447 = vdwg.mxu0
    %7448 = vmatprep.subr.mxu0 %v622
    %7449 = vmatpush1.msra.mxu0 %v621
    %7450 = vmatprep.subr.mxu0 %v626
    %7451 = vmatpush1.msra.mxu0 %v625
    %7452 = vmatprep.subr.mxu0 %v630
    %7453 = vmatpush1.msra.mxu0 %v629
    %7454 = vmatprep.subr.mxu0 %v634
    %7455 = vmatpush1.msra.mxu0 %v633
    %7456 = vmatprep.subr.mxu0 %v638
    %7457 = vmatpush1.msra.mxu0 %v637
    %7458 = vmatprep.subr.mxu0 %v642
    %7459 = vmatpush1.msra.mxu0 %v641
    %7460 = vmatprep.subr.mxu0 %v646
    %7461 = vmatpush1.msra.mxu0 %v645
    %7462 = vmatprep.subr.mxu0 %v650
    %7463 = vmatpush1.msra.mxu0 %v649
    %7464 = vmatprep.subr.mxu0 %v654
    %7465 = vmatpush1.msra.mxu0 %v653
    %7466 = vmatprep.subr.mxu0 %v658
    %7467 = vmatpush1.msra.mxu0 %v657
    %7468 = vmatprep.subr.mxu0 %v662
    %7469 = vmatpush1.msra.mxu0 %v661
    %7470 = vmatprep.subr.mxu0 %v666
    %7471 = vmatpush1.msra.mxu0 %v665
    %7472 = vmatprep.subr.mxu0 %v670
    %7473 = vmatpush1.msra.mxu0 %v669
    %7474 = vmatprep.subr.mxu0 %v674
    %7475 = vmatpush1.msra.mxu0 %v673
    %7476 = vmatprep.subr.mxu0 %v678
    %7477 = vmatpush1.msra.mxu0 %v677
    %7478 = vmatprep.subr.mxu0 %v682
    %7479 = vmatpush1.msra.mxu0 %v681
    %7480 = vmatprep.subr.mxu0 %v686
    %7481 = vmatpush1.msra.mxu0 %v685
    %7482 = vmatprep.subr.mxu0 %v690
    %7483 = vmatpush1.msra.mxu0 %v689
    %7484 = vmatprep.subr.mxu0 %v694
    %7485 = vmatpush1.msra.mxu0 %v693
    %7486 = vmatprep.subr.mxu0 %v698
    %7487 = vmatpush1.msra.mxu0 %v697
    %7488 = vmatprep.subr.mxu0 0.0
    %7489 = vmatpush1.msra.mxu0 0.0
    %7490 = vmatprep.subr.mxu0 0.0
    %7491 = vmatpush1.msra.mxu0 0.0
    %7492 = vmatprep.subr.mxu0 0.0
    %7493 = vmatpush1.msra.mxu0 0.0
    %7494 = vmatprep.subr.mxu0 0.0
    %7495 = vmatpush1.msra.mxu0 0.0
    %7496 = vmatprep.subr.mxu0 0.0
    %7497 = vmatpush1.msra.mxu0 0.0
    %7498 = vmatprep.subr.mxu0 0.0
    %7499 = vmatpush1.msra.mxu0 0.0
    %7500 = vmatprep.subr.mxu0 0.0
    %7501 = vmatpush1.msra.mxu0 0.0
    %7502 = vmatprep.subr.mxu0 0.0
    %7503 = vmatpush1.msra.mxu0 0.0
    %7504 = vmatprep.subr.mxu0 0.0
    %7505 = vmatpush1.msra.mxu0 0.0
    %7506 = vmatprep.subr.mxu0 0.0
    %7507 = vmatpush1.msra.mxu0 0.0
    %7508 = vmatprep.subr.mxu0 0.0
    %7509 = vmatpush1.msra.mxu0 0.0
    %7510 = vmatprep.subr.mxu0 0.0
    %7511 = vmatpush1.msra.mxu0 0.0
    %7512 = vmatprep.mubr.f32.mxu0 %v7375
    %7513 = vmatmul.mubr.f32.gmra.mrb[0].mxu0 %v7370
    %v7514 = vpop.f32.mrb[0].mxu0
    %v7515 = vadd.f32 %v6604, %v7514
    %v7516 = vpop.f32.mrb[0].mxu0
    %v7517 = vadd.f32 %v6608, %v7516
    %7518 = vdwg.mxu0
    %v7519 = vmax.f32 %v7444, 0.0
    %v7520 = vmax.f32 %v7446, 0.0
    %v7521 = vmax.f32 %v7515, 0.0
    %v7522 = vmax.f32 %v7517, 0.0
    %7523 = vmatprep.subr.mxu0 %v701
    %7524 = vmatpush1.msra.mxu0 %v700
    %7525 = vmatprep.subr.mxu0 %v703
    %7526 = vmatpush1.msra.mxu0 %v702
    %7527 = vmatprep.subr.mxu0 %v705
    %7528 = vmatpush1.msra.mxu0 %v704
    %7529 = vmatprep.subr.mxu0 %v707
    %7530 = vmatpush1.msra.mxu0 %v706
    %7531 = vmatprep.subr.mxu0 %v709
    %7532 = vmatpush1.msra.mxu0 %v708
    %7533 = vmatprep.subr.mxu0 %v711
    %7534 = vmatpush1.msra.mxu0 %v710
    %7535 = vmatprep.subr.mxu0 %v713
    %7536 = vmatpush1.msra.mxu0 %v712
    %7537 = vmatprep.subr.mxu0 %v715
    %7538 = vmatpush1.msra.mxu0 %v714
    %7539 = vmatprep.subr.mxu0 %v717
    %7540 = vmatpush1.msra.mxu0 %v716
    %7541 = vmatprep.subr.mxu0 %v719
    %7542 = vmatpush1.msra.mxu0 %v718
    %7543 = vmatprep.subr.mxu0 %v721
    %7544 = vmatpush1.msra.mxu0 %v720
    %7545 = vmatprep.subr.mxu0 %v723
    %7546 = vmatpush1.msra.mxu0 %v722
    %7547 = vmatprep.subr.mxu0 %v725
    %7548 = vmatpush1.msra.mxu0 %v724
    %7549 = vmatprep.subr.mxu0 %v727
    %7550 = vmatpush1.msra.mxu0 %v726
    %7551 = vmatprep.subr.mxu0 %v729
    %7552 = vmatpush1.msra.mxu0 %v728
    %7553 = vmatprep.subr.mxu0 %v731
    %7554 = vmatpush1.msra.mxu0 %v730
    %7555 = vmatprep.subr.mxu0 %v733
    %7556 = vmatpush1.msra.mxu0 %v732
    %7557 = vmatprep.subr.mxu0 %v735
    %7558 = vmatpush1.msra.mxu0 %v734
    %7559 = vmatprep.subr.mxu0 %v737
    %7560 = vmatpush1.msra.mxu0 %v736
    %7561 = vmatprep.subr.mxu0 %v739
    %7562 = vmatpush1.msra.mxu0 %v738
    %7563 = vmatprep.subr.mxu0 %v741
    %7564 = vmatpush1.msra.mxu0 %v740
    %7565 = vmatprep.subr.mxu0 %v743
    %7566 = vmatpush1.msra.mxu0 %v742
    %7567 = vmatprep.subr.mxu0 %v745
    %7568 = vmatpush1.msra.mxu0 %v744
    %7569 = vmatprep.subr.mxu0 %v747
    %7570 = vmatpush1.msra.mxu0 %v746
    %7571 = vmatprep.subr.mxu0 %v749
    %7572 = vmatpush1.msra.mxu0 %v748
    %7573 = vmatprep.subr.mxu0 %v751
    %7574 = vmatpush1.msra.mxu0 %v750
    %7575 = vmatprep.subr.mxu0 %v753
    %7576 = vmatpush1.msra.mxu0 %v752
    %7577 = vmatprep.subr.mxu0 %v755
    %7578 = vmatpush1.msra.mxu0 %v754
    %7579 = vmatprep.subr.mxu0 %v757
    %7580 = vmatpush1.msra.mxu0 %v756
    %7581 = vmatprep.subr.mxu0 %v759
    %7582 = vmatpush1.msra.mxu0 %v758
    %7583 = vmatprep.subr.mxu0 %v761
    %7584 = vmatpush1.msra.mxu0 %v760
    %7585 = vmatprep.subr.mxu0 %v763
    %7586 = vmatpush1.msra.mxu0 %v762
    %7587 = vmatprep.mubr.f32.mxu0 %v7520
    %7588 = vmatmul.mubr.f32.gmra.mrb[0].mxu0 %v7519
    %v7589 = vpop.f32.mrb[0].mxu0
    %v7590 = vadd.f32 %v6766, %v7589
    %v7591 = vpop.f32.mrb[0].mxu0
    %v7592 = vadd.f32 %v6770, %v7591
    %7593 = vdwg.mxu0
    %7594 = vmatprep.subr.mxu0 %v765
    %7595 = vmatpush1.msra.mxu0 %v764
    %7596 = vmatprep.subr.mxu0 %v767
    %7597 = vmatpush1.msra.mxu0 %v766
    %7598 = vmatprep.subr.mxu0 %v769
    %7599 = vmatpush1.msra.mxu0 %v768
    %7600 = vmatprep.subr.mxu0 %v771
    %7601 = vmatpush1.msra.mxu0 %v770
    %7602 = vmatprep.subr.mxu0 %v773
    %7603 = vmatpush1.msra.mxu0 %v772
    %7604 = vmatprep.subr.mxu0 %v775
    %7605 = vmatpush1.msra.mxu0 %v774
    %7606 = vmatprep.subr.mxu0 %v777
    %7607 = vmatpush1.msra.mxu0 %v776
    %7608 = vmatprep.subr.mxu0 %v779
    %7609 = vmatpush1.msra.mxu0 %v778
    %7610 = vmatprep.subr.mxu0 %v781
    %7611 = vmatpush1.msra.mxu0 %v780
    %7612 = vmatprep.subr.mxu0 %v783
    %7613 = vmatpush1.msra.mxu0 %v782
    %7614 = vmatprep.subr.mxu0 %v785
    %7615 = vmatpush1.msra.mxu0 %v784
    %7616 = vmatprep.subr.mxu0 %v787
    %7617 = vmatpush1.msra.mxu0 %v786
    %7618 = vmatprep.subr.mxu0 %v789
    %7619 = vmatpush1.msra.mxu0 %v788
    %7620 = vmatprep.subr.mxu0 %v791
    %7621 = vmatpush1.msra.mxu0 %v790
    %7622 = vmatprep.subr.mxu0 %v793
    %7623 = vmatpush1.msra.mxu0 %v792
    %7624 = vmatprep.subr.mxu0 %v795
    %7625 = vmatpush1.msra.mxu0 %v794
    %7626 = vmatprep.subr.mxu0 %v797
    %7627 = vmatpush1.msra.mxu0 %v796
    %7628 = vmatprep.subr.mxu0 %v799
    %7629 = vmatpush1.msra.mxu0 %v798
    %7630 = vmatprep.subr.mxu0 %v801
    %7631 = vmatpush1.msra.mxu0 %v800
    %7632 = vmatprep.subr.mxu0 %v803
    %7633 = vmatpush1.msra.mxu0 %v802
    %7634 = vmatprep.subr.mxu0 %v805
    %7635 = vmatpush1.msra.mxu0 %v804
    %7636 = vmatprep.subr.mxu0 %v807
    %7637 = vmatpush1.msra.mxu0 %v806
    %7638 = vmatprep.subr.mxu0 %v809
    %7639 = vmatpush1.msra.mxu0 %v808
    %7640 = vmatprep.subr.mxu0 %v811
    %7641 = vmatpush1.msra.mxu0 %v810
    %7642 = vmatprep.subr.mxu0 %v813
    %7643 = vmatpush1.msra.mxu0 %v812
    %7644 = vmatprep.subr.mxu0 %v815
    %7645 = vmatpush1.msra.mxu0 %v814
    %7646 = vmatprep.subr.mxu0 %v817
    %7647 = vmatpush1.msra.mxu0 %v816
    %7648 = vmatprep.subr.mxu0 %v819
    %7649 = vmatpush1.msra.mxu0 %v818
    %7650 = vmatprep.subr.mxu0 %v821
    %7651 = vmatpush1.msra.mxu0 %v820
    %7652 = vmatprep.subr.mxu0 %v823
    %7653 = vmatpush1.msra.mxu0 %v822
    %7654 = vmatprep.subr.mxu0 %v825
    %7655 = vmatpush1.msra.mxu0 %v824
    %7656 = vmatprep.subr.mxu0 %v827
    %7657 = vmatpush1.msra.mxu0 %v826
    %7658 = vmatprep.mubr.f32.mxu0 %v7522
    %7659 = vmatmul.mubr.f32.gmra.mrb[0].mxu0 %v7521
    %v7660 = vpop.f32.mrb[0].mxu0
    %v7661 = vadd.f32 %v7590, %v7660
    %v7662 = vpop.f32.mrb[0].mxu0
    %v7663 = vadd.f32 %v7592, %v7662
    %7664 = vdwg.mxu0
    %v7665 = vmax.f32 %v7661, 0.0
    %v7666 = vmax.f32 %v7663, 0.0
    %7667 = vmatprep.subr.mxu0 0.0
    %7668 = vmatpush1.msra.mxu0 %v829
    %7669 = vmatprep.subr.mxu0 0.0
    %7670 = vmatpush1.msra.mxu0 %v830
    %7671 = vmatprep.subr.mxu0 0.0
    %7672 = vmatpush1.msra.mxu0 %v831
    %7673 = vmatprep.subr.mxu0 0.0
    %7674 = vmatpush1.msra.mxu0 %v832
    %7675 = vmatprep.subr.mxu0 0.0
    %7676 = vmatpush1.msra.mxu0 %v833
    %7677 = vmatprep.subr.mxu0 0.0
    %7678 = vmatpush1.msra.mxu0 %v834
    %7679 = vmatprep.subr.mxu0 0.0
    %7680 = vmatpush1.msra.mxu0 %v835
    %7681 = vmatprep.subr.mxu0 0.0
    %7682 = vmatpush1.msra.mxu0 %v836
    %7683 = vmatprep.subr.mxu0 0.0
    %7684 = vmatpush1.msra.mxu0 %v837
    %7685 = vmatprep.subr.mxu0 0.0
    %7686 = vmatpush1.msra.mxu0 %v838
    %7687 = vmatprep.subr.mxu0 0.0
    %7688 = vmatpush1.msra.mxu0 %v839
    %7689 = vmatprep.subr.mxu0 0.0
    %7690 = vmatpush1.msra.mxu0 %v840
    %7691 = vmatprep.subr.mxu0 0.0
    %7692 = vmatpush1.msra.mxu0 %v841
    %7693 = vmatprep.subr.mxu0 0.0
    %7694 = vmatpush1.msra.mxu0 %v842
    %7695 = vmatprep.subr.mxu0 0.0
    %7696 = vmatpush1.msra.mxu0 %v843
    %7697 = vmatprep.subr.mxu0 0.0
    %7698 = vmatpush1.msra.mxu0 %v844
    %7699 = vmatprep.subr.mxu0 0.0
    %7700 = vmatpush1.msra.mxu0 %v845
    %7701 = vmatprep.subr.mxu0 0.0
    %7702 = vmatpush1.msra.mxu0 %v846
    %7703 = vmatprep.subr.mxu0 0.0
    %7704 = vmatpush1.msra.mxu0 %v847
    %7705 = vmatprep.subr.mxu0 0.0
    %7706 = vmatpush1.msra.mxu0 %v848
    %7707 = vmatprep.subr.mxu0 0.0
    %7708 = vmatpush1.msra.mxu0 %v849
    %7709 = vmatprep.subr.mxu0 0.0
    %7710 = vmatpush1.msra.mxu0 %v850
    %7711 = vmatprep.subr.mxu0 0.0
    %7712 = vmatpush1.msra.mxu0 %v851
    %7713 = vmatprep.subr.mxu0 0.0
    %7714 = vmatpush1.msra.mxu0 %v852
    %7715 = vmatprep.subr.mxu0 0.0
    %7716 = vmatpush1.msra.mxu0 %v853
    %7717 = vmatprep.subr.mxu0 0.0
    %7718 = vmatpush1.msra.mxu0 %v854
    %7719 = vmatprep.subr.mxu0 0.0
    %7720 = vmatpush1.msra.mxu0 %v855
    %7721 = vmatprep.subr.mxu0 0.0
    %7722 = vmatpush1.msra.mxu0 %v856
    %7723 = vmatprep.subr.mxu0 0.0
    %7724 = vmatpush1.msra.mxu0 %v857
    %7725 = vmatprep.subr.mxu0 0.0
    %7726 = vmatpush1.msra.mxu0 %v858
    %7727 = vmatprep.subr.mxu0 0.0
    %7728 = vmatpush1.msra.mxu0 %v859
    %7729 = vmatprep.subr.mxu0 0.0
    %7730 = vmatpush1.msra.mxu0 %v860
    %7731 = vmatprep.mubr.f32.mxu0 %v7666
    %7732 = vmatmul.mubr.f32.gmra.mrb[0].mxu0 %v7665
    %v7733 = vpop.f32.mrb[0].mxu0
    %v7734 = vadd.f32 %v828, %v7733
    %v7735 = vpop.f32.mrb[0].mxu0
    %7736 = vdwg.mxu0
    %s7737 = scalar_lea.vmem [#allocation56], 1
    %7738 = vst [vmem:[%s7737] sm:$0x1] %v7734
    // Predicated region
    $region330: #{forward.1} parent=1 // pred_check
      _
    $region331: #{forward.1} parent=1 // pred_check_branch
      %7740 = sbr.rel (0) target = $region333
    $region332: #{forward.1} parent=1 // pred_region
      %s7742 = ssub.s32 32, 32
      %7743 = vsyncadd [#allocation4], %s7742
      %s7744 = sshll.u32 [#allocation56], 4
      %s7745 = int_to_ptr.vmem [resolvable:$true] %s7744
      %7750 = dma.vmem_to_hbm [thread:$0]  %s7745, 32, %s95, [#allocation4], 16, 16, 1
    $region333: #{forward.1} parent=1 // pred_fallthru
      _
    // Predicated region
    $region334: #{forward.1} parent=1 // pred_check
      _
    $region335: #{forward.1} parent=1 // pred_check_branch
      %7752 = sbr.rel (0) target = $region337
    $region336: #{forward.1} parent=1 // pred_region
      %7753 = dma.done [#allocation4], 32
    $region337: #{forward.1} parent=1 // pred_fallthru
      _
    %7754 = vsyncpa [#allocation3], 1
    %7755 = vsyncpa [#allocation6], 1
    %7756 = vsyncpa [#allocation9], 1
    %7757 = vsyncpa [#allocation12], 1
    %7758 = vsyncpa [#allocation15], 1
    %7759 = vsyncpa [#allocation18], 1
    %7760 = vsyncpa [#allocation21], 1
    %7761 = vsyncpa [#allocation24], 1
    %7762 = vsyncpa [#allocation27], 1
    %7763 = vsyncpa [#allocation30], 1
    %7764 = vsyncpa [#allocation33], 1
    %7765 = vsyncpa [#allocation36], 1
    %7766 = vsyncpa [#allocation39], 1
    %7767 = vsyncpa [#allocation42], 1
    %7768 = vsyncpa [#allocation45], 1
    %7769 = vsyncpa [#allocation48], 1
    %7770 = vsyncpa [#allocation51], 1
    %7771 = vsyncpa [#allocation54], 1
    %7772 = vsyncpa [#allocation4], 1

</llo_original>
